<compile_context>
chip_gen: v7x
topology: tpu7x:2x2x1
jax: 0.10.0
libtpu: 0.0.40
codegen_flags: <defaults>
</compile_context>

<pallas_src>
import math

import jax
import jax.numpy as jnp
from jax.experimental import pallas as pl
from jax.experimental.pallas import tpu as pltpu


def _latent_kernel(z_ref, e_ref,          # inputs  (TN, D+2), (D+2, TK)
                   mat_ref, lse_ref,      # outputs (TN, TK), (1, TK)
                   m_sc, l_sc):           # scratch (1, TK), (1, TK)
    i = pl.program_id(1)                  # N (row / reduction) axis, innermost

    @pl.when(i == 0)
    def _():
        m_sc[...] = jnp.full_like(m_sc, -jnp.inf)
        l_sc[...] = jnp.zeros_like(l_sc)

    # Single MXU contraction produces scale*||z - e||^2 directly (norm terms
    # and the -2*scale factor are folded into the augmented operands).
    mat = jnp.dot(z_ref[...], e_ref[...],
                  preferred_element_type=jnp.float32,
                  precision=jax.lax.Precision.HIGHEST)        # (TN, TK)
    mat_ref[...] = mat

    # Online logsumexp over the N axis (rows), per codebook column.
    m_new = jnp.maximum(m_sc[...], jnp.max(mat, axis=0, keepdims=True))
    l_sc[...] = (l_sc[...] * jnp.exp(m_sc[...] - m_new)
                 + jnp.sum(jnp.exp(mat - m_new), axis=0, keepdims=True))
    m_sc[...] = m_new

    @pl.when(i == pl.num_programs(1) - 1)
    def _():
        lse_ref[...] = m_sc[...] + jnp.log(l_sc[...])


def _round_up(x, m):
    return ((x + m - 1) // m) * m


def _choose_tiles(n, k, d_aug, block_budget_bytes):
    # K tile: multiple of 128 (lane-dense, unmasked vst), prefer large, but
    # keep >= 2 K blocks whenever K allows so the "parallel" axis can be
    # sharded across both v7x TensorCores.
    tk_cap = _round_up(pl.cdiv(k, 2), 128) if k > 128 else 128
    tk = 128
    for c in (2048, 1024, 512, 256, 128):
        if c <= tk_cap:
            tk = c
            break

    def blocks_bytes(tn):
        # double-buffered in/out blocks (f32)
        return 4 * 2 * (tn * d_aug + d_aug * tk + tn * tk + tk)

    # N tile: one full-height tile when small enough, else the largest
    # power-of-two tile whose double-buffered blocks fit the VMEM budget.
    n_full = max(_round_up(n, 8), 8)
    if n_full <= 1024 and blocks_bytes(n_full) <= block_budget_bytes:
        return n_full, tk
    tn = 8
    for c in (1024, 512, 256, 128, 64, 32, 16, 8):
        if blocks_bytes(c) <= block_budget_bytes:
            tn = c
            break
    return tn, tk


def _latent_pallas(z_flat, e, scale):
    """z_flat: (N, D) f32, e: (K, D) f32, scale: () f32 == alpha / T.

    Returns (matrix (N, K) f32, lse (1, K) f32 = logsumexp over the N axis).
    """
    N, D = z_flat.shape
    K = e.shape[0]
    D_aug = D + 2

    try:
        vmem_cap = int(pltpu.get_tpu_info().vmem_capacity_bytes)
    except Exception:
        vmem_cap = 64 << 20  # conservative (v7x per-TC VMEM)

    block_budget = min(24 << 20, vmem_cap // 3)
    tn, tk = _choose_tiles(N, K, D_aug, block_budget)
    N_pad = _round_up(N, tn)
    K_pad = _round_up(K, tk)

    # Build augmented operands (XLA fuses this into the surrounding reshape).
    z2s = scale * jnp.sum(z_flat * z_flat, axis=1, keepdims=True)      # (N, 1)
    z_aug = jnp.concatenate(
        [z_flat * (-2.0 * scale), z2s, jnp.ones((N, 1), jnp.float32)], axis=1)
    if N_pad > N:
        # Pad rows get a huge negative bias in the "||z||^2" column so every
        # padded mat entry is -1e30 -> exp underflows to 0 in the LSE.
        pad = jnp.zeros((N_pad - N, D_aug), jnp.float32).at[:, D].set(-1e30)
        z_aug = jnp.concatenate([z_aug, pad], axis=0)

    e2s = (scale * jnp.sum(e * e, axis=1))[None, :]                    # (1, K)
    e_aug = jnp.concatenate(
        [e.T, jnp.ones((1, K), jnp.float32), e2s], axis=0)             # (D+2, K)
    if K_pad > K:
        e_aug = jnp.concatenate(
            [e_aug, jnp.zeros((D_aug, K_pad - K), jnp.float32)], axis=1)

    vmem_needed = 4 * (2 * (tn * D_aug + D_aug * tk + tn * tk + tk) + 2 * tk)
    vmem_limit = int(max(min(vmem_needed + (8 << 20), (vmem_cap * 3) // 4),
                         16 << 20))

    cost = pl.CostEstimate(
        flops=2 * N_pad * K_pad * D_aug + 5 * N_pad * K_pad,
        transcendentals=N_pad * K_pad,                 # exp in the online LSE
        bytes_accessed=4 * (N_pad * D_aug * (K_pad // tk)   # z re-read per K block
                            + D_aug * K_pad                 # e_aug
                            + N_pad * K_pad                 # matrix writeback
                            + K_pad),                       # lse
    )

    grid_spec = pltpu.PrefetchScalarGridSpec(
        num_scalar_prefetch=0,
        grid=(K_pad // tk, N_pad // tn),               # (parallel K, reduction N)
        in_specs=[
            pl.BlockSpec((tn, D_aug), lambda j, i: (i, 0)),
            pl.BlockSpec((D_aug, tk), lambda j, i: (0, j)),
        ],
        out_specs=[
            pl.BlockSpec((tn, tk), lambda j, i: (i, j)),
            pl.BlockSpec((1, tk), lambda j, i: (0, j)),
        ],
        scratch_shapes=[
            pltpu.VMEM((1, tk), jnp.float32),          # m (running max)
            pltpu.VMEM((1, tk), jnp.float32),          # l (running sum)
        ],
    )

    matrix, lse = pl.pallas_call(
        _latent_kernel,
        out_shape=(
            jax.ShapeDtypeStruct((N_pad, K_pad), jnp.float32),
            jax.ShapeDtypeStruct((1, K_pad), jnp.float32),
        ),
        grid_spec=grid_spec,
        compiler_params=pltpu.CompilerParams(
            dimension_semantics=("parallel", "arbitrary"),
            vmem_limit_bytes=vmem_limit),
        cost_estimate=cost,
    )(z_aug, e_aug)

    return matrix[:N, :K], lse[:, :K]


class Latent:
    """JAX/Pallas port of the PyTorch `Latent` module (forward only)."""

    def __init__(self, init_log_sigma, const_sigma, **kwargs):
        # nn.Parameter(torch.ones(1) * init_log_sigma); deterministic init.
        self.log_sigma = jnp.ones((1,), jnp.float32) * jnp.float32(init_log_sigma)
        self.const_sigma = const_sigma  # grad flag — irrelevant for forward

    def forward(self, data, **kwargs):
        z_nchw = data['z']                                    # (B, D, H, W)
        z_dim = z_nchw.shape[1]
        z = (jnp.transpose(z_nchw, (0, 2, 3, 1))
             .reshape(-1, z_dim).astype(jnp.float32))         # (N, D)
        N = z.shape[0]
        T = kwargs['latent_temp'] if 'latent_temp' in kwargs else 1.0

        alpha = -1.0 / (2.0 * jnp.exp(self.log_sigma) ** 2)   # (1,)
        scale = (alpha / T).astype(jnp.float32).reshape(())   # alpha / T, scalar

        matrix, lse = _latent_pallas(z, data['e'].astype(jnp.float32), scale)
        data['matrix'] = matrix

        loss = -jnp.mean(T * lse[0])                          # mean over K columns
        # np.log(np.e) == 1.0
        loss = loss + 0.5 * z_dim * (2.0 * self.log_sigma - 1.0) + math.log(N)
        data['lse_loss'] = loss                               # shape (1,), like torch
        return data


def _reference(data, log_sigma, T=1.0):
    z_nchw = data['z']
    z_dim = z_nchw.shape[1]
    z = jnp.transpose(z_nchw, (0, 2, 3, 1)).reshape(-1, z_dim)
    N = z.shape[0]
    diff = z[:, None, :] - data['e'][None, :, :]
    distance = jnp.sum(diff * diff, axis=2)
    alpha = -1.0 / (2.0 * jnp.exp(log_sigma) ** 2)
    matrix = alpha * distance / T
    loss = -jnp.mean(T * jax.scipy.special.logsumexp(matrix, axis=0))
    loss = loss + 0.5 * z_dim * (2.0 * log_sigma - 1.0) + math.log(N)
    return matrix, loss


if __name__ == "__main__":
    key = jax.random.PRNGKey(0)
    k_z, k_e = jax.random.split(key)

    B, D, H, W = 4, 8, 18, 16          # N = 1152 -> exercises the multi-step
    K = 300                            # online-LSE carry and N/K padding paths

    data = {
        'z': jax.random.normal(k_z, (B, D, H, W), jnp.float32),
        'e': jax.random.normal(k_e, (K, D), jnp.float32),
    }

    module = Latent(init_log_sigma=0.0, const_sigma=True)
    out = module.forward(data, latent_temp=1.0)

    matrix = jax.block_until_ready(out['matrix'])
    loss = jax.block_until_ready(out['lse_loss'])

    ref_matrix, ref_loss = _reference(data, module.log_sigma, T=1.0)
    assert matrix.shape == (B * H * W, K)
    assert loss.shape == (1,)
    assert jnp.allclose(matrix, ref_matrix, rtol=2e-3, atol=2e-3)
    assert jnp.allclose(loss, ref_loss, rtol=2e-3, atol=2e-3)

    print("KERNEL_OK")
</pallas_src>

<mosaic_0001>
module attributes {stable_mosaic.version = 11 : i64} {
  func.func @_latent_kernel(%arg0: i32, %arg1: i32, %arg2: memref<1024x10xf32, #tpu.memory_space<vmem>>, %arg3: memref<10x256xf32, #tpu.memory_space<vmem>>, %arg4: memref<1024x256xf32, #tpu.memory_space<vmem>>, %arg5: memref<1x256xf32, #tpu.memory_space<vmem>>, %arg6: memref<1x256xf32, #tpu.memory_space<vmem>>, %arg7: memref<1x256xf32, #tpu.memory_space<vmem>>) attributes {dimension_semantics = [#tpu.dimension_semantics<parallel>, #tpu.dimension_semantics<arbitrary>], iteration_bounds = array<i64: 2, 2>, scalar_prefetch = 0 : i64, scratch_operands = 2 : i64, tpu.core_type = #tpu.core_type<tc>, window_params = [{transform_indices = @transform_0, window_bounds = array<i64: 1024, 10>}, {transform_indices = @transform_1, window_bounds = array<i64: 10, 256>}, {transform_indices = @transform_2, window_bounds = array<i64: 1024, 256>}, {transform_indices = @transform_3, window_bounds = array<i64: 1, 256>}]} {
    %c0_i32 = arith.constant 0 : i32
    %0 = arith.cmpi eq, %arg1, %c0_i32 : i32
    %1 = arith.extui %0 : i1 to i32
    %c0_i32_0 = arith.constant 0 : i32
    %2 = arith.cmpi ne, %1, %c0_i32_0 : i32
    scf.if %2 {
      %cst_19 = arith.constant 0xFF800000 : f32
      %27 = vector.broadcast %cst_19 : f32 to vector<1x256xf32>
      %c0_20 = arith.constant 0 : index
      %c0_21 = arith.constant 0 : index
      %28 = vector.load %arg6[%c0_20, %c0_21] : memref<1x256xf32, #tpu.memory_space<vmem>>, vector<1x256xf32>
      tpu.vector_store %arg6[%c0_20, %c0_21], %27 {strides = array<i32>} : memref<1x256xf32, #tpu.memory_space<vmem>>, vector<1x256xf32>,
      %cst_22 = arith.constant 0.000000e+00 : f32
      %29 = vector.broadcast %cst_22 : f32 to vector<1x256xf32>
      %c0_23 = arith.constant 0 : index
      %c0_24 = arith.constant 0 : index
      %30 = vector.load %arg7[%c0_23, %c0_24] : memref<1x256xf32, #tpu.memory_space<vmem>>, vector<1x256xf32>
      tpu.vector_store %arg7[%c0_23, %c0_24], %29 {strides = array<i32>} : memref<1x256xf32, #tpu.memory_space<vmem>>, vector<1x256xf32>,
    } else {
    }
    %c0 = arith.constant 0 : index
    %c0_1 = arith.constant 0 : index
    %3 = vector.load %arg2[%c0, %c0_1] : memref<1024x10xf32, #tpu.memory_space<vmem>>, vector<1024x10xf32>
    %c0_2 = arith.constant 0 : index
    %c0_3 = arith.constant 0 : index
    %4 = vector.load %arg3[%c0_2, %c0_3] : memref<10x256xf32, #tpu.memory_space<vmem>>, vector<10x256xf32>
    %cst = arith.constant dense<0.000000e+00> : vector<1024x256xf32>
    %5 = tpu.matmul %3, %4, %cst {dimension_numbers = #tpu.dot_dimension_numbers<[1], [0], [0], [1], [0, 0, 1, 1], [], []>, precision = #tpu.contract_precision<fp32>} : vector<1024x10xf32>, vector<10x256xf32>, vector<1024x256xf32> -> vector<1024x256xf32>
    %c0_4 = arith.constant 0 : index
    %c0_5 = arith.constant 0 : index
    %6 = vector.load %arg4[%c0_4, %c0_5] : memref<1024x256xf32, #tpu.memory_space<vmem>>, vector<1024x256xf32>
    tpu.vector_store %arg4[%c0_4, %c0_5], %5 {strides = array<i32>} : memref<1024x256xf32, #tpu.memory_space<vmem>>, vector<1024x256xf32>,
    %c0_6 = arith.constant 0 : index
    %c0_7 = arith.constant 0 : index
    %7 = vector.load %arg6[%c0_6, %c0_7] : memref<1x256xf32, #tpu.memory_space<vmem>>, vector<1x256xf32>
    %cst_8 = arith.constant dense<0xFF800000> : vector<256xf32>
    %8 = vector.multi_reduction <maximumf>, %5, %cst_8 [0] : vector<1024x256xf32> to vector<256xf32>
    %9 = vector.shape_cast %8 : vector<256xf32> to vector<1x256xf32>
    %10 = arith.maximumf %7, %9 : vector<1x256xf32>
    %c0_9 = arith.constant 0 : index
    %c0_10 = arith.constant 0 : index
    %11 = vector.load %arg7[%c0_9, %c0_10] : memref<1x256xf32, #tpu.memory_space<vmem>>, vector<1x256xf32>
    %c0_11 = arith.constant 0 : index
    %c0_12 = arith.constant 0 : index
    %12 = vector.load %arg6[%c0_11, %c0_12] : memref<1x256xf32, #tpu.memory_space<vmem>>, vector<1x256xf32>
    %13 = arith.subf %12, %10 : vector<1x256xf32>
    %14 = math.exp %13 : vector<1x256xf32>
    %15 = arith.mulf %11, %14 : vector<1x256xf32>
    %16 = vector.broadcast %10 : vector<1x256xf32> to vector<1024x256xf32>
    %17 = arith.subf %5, %16 : vector<1024x256xf32>
    %18 = math.exp %17 : vector<1024x256xf32>
    %cst_13 = arith.constant dense<0.000000e+00> : vector<256xf32>
    %19 = vector.multi_reduction <add>, %18, %cst_13 [0] : vector<1024x256xf32> to vector<256xf32>
    %20 = vector.shape_cast %19 : vector<256xf32> to vector<1x256xf32>
    %21 = arith.addf %15, %20 : vector<1x256xf32>
    %c0_14 = arith.constant 0 : index
    %c0_15 = arith.constant 0 : index
    %22 = vector.load %arg7[%c0_14, %c0_15] : memref<1x256xf32, #tpu.memory_space<vmem>>, vector<1x256xf32>
    tpu.vector_store %arg7[%c0_14, %c0_15], %21 {strides = array<i32>} : memref<1x256xf32, #tpu.memory_space<vmem>>, vector<1x256xf32>,
    %c0_16 = arith.constant 0 : index
    %c0_17 = arith.constant 0 : index
    %23 = vector.load %arg6[%c0_16, %c0_17] : memref<1x256xf32, #tpu.memory_space<vmem>>, vector<1x256xf32>
    tpu.vector_store %arg6[%c0_16, %c0_17], %10 {strides = array<i32>} : memref<1x256xf32, #tpu.memory_space<vmem>>, vector<1x256xf32>,
    %c1_i32 = arith.constant 1 : i32
    %24 = arith.cmpi eq, %arg1, %c1_i32 : i32
    %25 = arith.extui %24 : i1 to i32
    %c0_i32_18 = arith.constant 0 : i32
    %26 = arith.cmpi ne, %25, %c0_i32_18 : i32
    scf.if %26 {
      %c0_19 = arith.constant 0 : index
      %c0_20 = arith.constant 0 : index
      %27 = vector.load %arg6[%c0_19, %c0_20] : memref<1x256xf32, #tpu.memory_space<vmem>>, vector<1x256xf32>
      %c0_21 = arith.constant 0 : index
      %c0_22 = arith.constant 0 : index
      %28 = vector.load %arg7[%c0_21, %c0_22] : memref<1x256xf32, #tpu.memory_space<vmem>>, vector<1x256xf32>
      %29 = math.log %28 : vector<1x256xf32>
      %30 = arith.addf %27, %29 : vector<1x256xf32>
      %c0_23 = arith.constant 0 : index
      %c0_24 = arith.constant 0 : index
      %31 = vector.load %arg5[%c0_23, %c0_24] : memref<1x256xf32, #tpu.memory_space<vmem>>, vector<1x256xf32>
      tpu.vector_store %arg5[%c0_23, %c0_24], %30 {strides = array<i32>} : memref<1x256xf32, #tpu.memory_space<vmem>>, vector<1x256xf32>,
    } else {
    }
    return
  }
  func.func @transform_0(%arg0: i32, %arg1: i32) -> (i32, i32) {
    %c0_i32 = arith.constant 0 : i32
    %c0_i32_0 = arith.constant 0 : i32
    return %arg1, %c0_i32 : i32, i32
  }
  func.func @transform_1(%arg0: i32, %arg1: i32) -> (i32, i32) {
    %c0_i32 = arith.constant 0 : i32
    %c0_i32_0 = arith.constant 0 : i32
    return %c0_i32, %arg0 : i32, i32
  }
  func.func @transform_2(%arg0: i32, %arg1: i32) -> (i32, i32) {
    %c0_i32 = arith.constant 0 : i32
    return %arg1, %arg0 : i32, i32
  }
  func.func @transform_3(%arg0: i32, %arg1: i32) -> (i32, i32) {
    %c0_i32 = arith.constant 0 : i32
    %c0_i32_0 = arith.constant 0 : i32
    return %c0_i32, %arg0 : i32, i32
  }
}

</mosaic_0001>

<llo_original>
// kernel: tpu_custom_call.1
$region0: #{tpu_custom_call.1}
  #allocation0 [shape = 'u32[]', space=smem, size = 0x4, offset = 0x4, fixed_abs, tag = 'smem constant byte address 0x4 - core index']
  #allocation1 [shape = 'u32[144,128]{1,0:T(1,128)}', space=vmem, size = 0x12000, scoped, tag = 'internal scratch']
  #allocation2 [shape = 'f32[1,256]{1,0:T(1,128)}', space=vmem, size = 0x400, scoped, tag = 'scratch operand']
  #allocation3 [shape = 'f32[1,256]{1,0:T(1,128)}', space=vmem, size = 0x400, scoped, tag = 'scratch operand']
  %s0 = inlined_call_operand.vmem [shape: f32[2048,10], index: 0, kind: input, shape index: {}]
  %s1 = inlined_call_operand.hbm [shape: f32[10,512], index: 1, kind: input, shape index: {}]
  %s2 = inlined_call_operand.hbm [shape: f32[2048,512], index: 2, kind: output, shape index: {0}]
  %s3 = inlined_call_operand.hbm [shape: f32[1,512], index: 3, kind: output, shape index: {1}]
  %4 = xla_tuple %s2, %s3
  %s5 = sld [smem:[#allocation0]]
  $region61: #{tpu_custom_call.1} parent=0
    _
  %s7 = ssub.s32 1, %s5
  %s8 = scalar_select 0, %s7, %s5
  $region1: #{tpu_custom_call.1} parent=0
    #allocation4 [shape = 'u8[32768]{0}', space=vmem, size = 0x8000, scoped, tag = 'input window, operand 1']
    #allocation5 [shape = 's32[2]{0}', space=sflag, size = 0x8, scoped, tag = 'scoped memory for tpu_custom_call.1']
    #allocation6 [shape = 's32[2]{0}', space=sflag, size = 0x8, scoped, tag = 'scoped memory for tpu_custom_call.1']
    #allocation7 [shape = 'u8[2097152]{0}', space=vmem, size = 0x200000, scoped, tag = 'output window, operand 0']
    #allocation8 [shape = 'u8[2048]{0}', space=vmem, size = 0x800, scoped, tag = 'output window, operand 1']
    #allocation9 [shape = 's32[2]{0}', space=sflag, size = 0x8, scoped, tag = 'scoped memory for tpu_custom_call.1']
    %9 = vsyncpa [#allocation5], 0
    %s10 = scalar_lea.sflag [#allocation5], 1
    %11 = vsyncpa %s10, 0
    %12 = vsyncpa [#allocation6], 0
    %s13 = scalar_lea.sflag [#allocation6], 1
    %14 = vsyncpa %s13, 0
    %15 = vsyncpa [#allocation9], 0
    %s16 = scalar_lea.sflag [#allocation9], 1
    %17 = vsyncpa %s16, 0
    loop: start=0, step=1, limit=6
    $region2: #{tpu_custom_call.1} parent=1 // loop_pre_header
      _
    $region3: #{tpu_custom_call.1} parent=1 // loop_header
      %s19 = sphi 0, %s23
      %p20 = scmp.ge.s32.totalorder %s19, 6
      %s26 = sphi 0, %s38
      %s27 = sphi 0, %s34
      %s28 = sphi 0, %s26
      %s29 = sphi 0, %s27
      %s30 = sphi 0, %s28
      %s31 = sphi 0, %s29
      %s41 = sphi 0, %s43
      %s44 = sphi 0, %s41
      %s45 = sphi 0, %s44
      %s61 = sphi 0, %s45
      %s67 = sphi 0, %s69
      %s70 = sphi 0, %s67
      %s71 = sphi 0, %s70
      %s87 = sphi 0, %s71
      %s95 = sphi 0, %s97
      %s98 = sphi 0, %s95
      %s99 = sphi 0, %s98
      %s115 = sphi 0, %s99
      %s121 = sphi 0, %s123
      %s124 = sphi 0, %s121
      %s125 = sphi 0, %s124
      %s141 = sphi 0, %s125
    $region4: #{tpu_custom_call.1} parent=1 // loop_header_branch
      %22 = sbr.rel (%p20) target = $region8
    $region5: #{tpu_custom_call.1} parent=1 // loop_body
      %s24 = ssub.s32 %s19, 1
      %s25 = ssub.s32 %s19, 2
      %s32 = sadd.s32 1, %s27
      %p33 = scmp.ge.s32.totalorder %s32, 2
      %s34 = scalar_select %p33, 0, %s32
      %s35 = sadd.s32 1, %s26
      %s36 = scalar_select %p33, %s35, %s26
      %p37 = scmp.ge.s32.totalorder %s36, 2
      %s38 = scalar_select %p37, 0, %s36
      %s39 = ssub.s32 %s27, %s34
      %p40 = scmp.eq.s32.totalorder %s39, 0
      %s42 = sadd.s32 %s41, 1
      %s43 = scalar_select %p40, %s41, %s42
      %p46 = pneg %p40
      %p47 = scmp.eq.s32.totalorder %s19, 3
      %p48 = por %p46, %p47
      %p49 = scmp.ne.s32.totalorder %s41, %s44
      %p50 = scmp.eq.s32.totalorder %s19, 0
      %p51 = por %p49, %p50
      %p52 = scmp.ne.s32.totalorder %s41, %s44
      %p53 = scmp.eq.s32.totalorder %s24, 3
      %p54 = por %p52, %p53
      %p55 = scmp.ne.s32.totalorder %s44, %s45
      %p56 = scmp.eq.s32.totalorder %s24, 0
      %p57 = por %p55, %p56
      %p58 = scmp.ne.s32.totalorder %s44, %s45
      %p59 = scmp.eq.s32.totalorder %s25, 3
      %p60 = por %p58, %p59
      %p62 = scmp.ne.s32.totalorder %s45, %s61
      %p63 = scmp.eq.s32.totalorder %s25, 0
      %p64 = por %p62, %p63
      %s65 = ssub.s32 %s26, %s38
      %p66 = scmp.eq.s32.totalorder %s65, 0
      %s68 = sadd.s32 %s67, 1
      %s69 = scalar_select %p66, %s67, %s68
      %p72 = pneg %p66
      %p73 = scmp.eq.s32.totalorder %s19, 3
      %p74 = por %p72, %p73
      %p75 = scmp.ne.s32.totalorder %s67, %s70
      %p76 = scmp.eq.s32.totalorder %s19, 0
      %p77 = por %p75, %p76
      %p78 = scmp.ne.s32.totalorder %s67, %s70
      %p79 = scmp.eq.s32.totalorder %s24, 3
      %p80 = por %p78, %p79
      %p81 = scmp.ne.s32.totalorder %s70, %s71
      %p82 = scmp.eq.s32.totalorder %s24, 0
      %p83 = por %p81, %p82
      %p84 = scmp.ne.s32.totalorder %s70, %s71
      %p85 = scmp.eq.s32.totalorder %s25, 3
      %p86 = por %p84, %p85
      %p88 = scmp.ne.s32.totalorder %s71, %s87
      %p89 = scmp.eq.s32.totalorder %s25, 0
      %p90 = por %p88, %p89
      %s91 = ssub.s32 %s27, %s34
      %s92 = ssub.s32 %s26, %s38
      %s93 = sor.u32 %s91, %s92
      %p94 = scmp.eq.s32.totalorder %s93, 0
      %s96 = sadd.s32 %s95, 1
      %s97 = scalar_select %p94, %s95, %s96
      %p100 = pneg %p94
      %p101 = scmp.eq.s32.totalorder %s19, 3
      %p102 = por %p100, %p101
      %p103 = scmp.ne.s32.totalorder %s95, %s98
      %p104 = scmp.eq.s32.totalorder %s19, 0
      %p105 = por %p103, %p104
      %p106 = scmp.ne.s32.totalorder %s95, %s98
      %p107 = scmp.eq.s32.totalorder %s24, 3
      %p108 = por %p106, %p107
      %p109 = scmp.ne.s32.totalorder %s98, %s99
      %p110 = scmp.eq.s32.totalorder %s24, 0
      %p111 = por %p109, %p110
      %p112 = scmp.ne.s32.totalorder %s98, %s99
      %p113 = scmp.eq.s32.totalorder %s25, 3
      %p114 = por %p112, %p113
      %p116 = scmp.ne.s32.totalorder %s99, %s115
      %p117 = scmp.eq.s32.totalorder %s25, 0
      %p118 = por %p116, %p117
      %s119 = ssub.s32 %s26, %s38
      %p120 = scmp.eq.s32.totalorder %s119, 0
      %s122 = sadd.s32 %s121, 1
      %s123 = scalar_select %p120, %s121, %s122
      %p126 = pneg %p120
      %p127 = scmp.eq.s32.totalorder %s19, 3
      %p128 = por %p126, %p127
      %p129 = scmp.ne.s32.totalorder %s121, %s124
      %p130 = scmp.eq.s32.totalorder %s19, 0
      %p131 = por %p129, %p130
      %p132 = scmp.ne.s32.totalorder %s121, %s124
      %p133 = scmp.eq.s32.totalorder %s24, 3
      %p134 = por %p132, %p133
      %p135 = scmp.ne.s32.totalorder %s124, %s125
      %p136 = scmp.eq.s32.totalorder %s24, 0
      %p137 = por %p135, %p136
      %p138 = scmp.ne.s32.totalorder %s124, %s125
      %p139 = scmp.eq.s32.totalorder %s25, 3
      %p140 = por %p138, %p139
      %p142 = scmp.ne.s32.totalorder %s125, %s141
      %p143 = scmp.eq.s32.totalorder %s25, 0
      %p144 = por %p142, %p143
      %p145 = scmp.le.s32.totalorder 1, %s19
      %p146 = scmp.lt.s32.totalorder %s19, 5
      %p147 = pnand %p145, %p146
      %p148 = pneg %p147
      // Predicated region
      $region9: #{tpu_custom_call.1} parent=5 // pred_check
        _
      $region10: #{tpu_custom_call.1} parent=5 // pred_check_branch
        %150 = sbr.rel (%p147) target = $region12
      $region11: #{tpu_custom_call.1} parent=5 // pred_region
        %s151 = ssub.s32 %s19, 1
      $region12: #{tpu_custom_call.1} parent=5 // pred_fallthru
        _
      %p152 = scmp.lt.s32.totalorder %s19, 4
      // Predicated region
      $region13: #{tpu_custom_call.1} parent=5 // pred_check
        %p153 = pneg %p152
      $region14: #{tpu_custom_call.1} parent=5 // pred_check_branch
        %155 = sbr.rel (%p153) target = $region16
      $region15: #{tpu_custom_call.1} parent=5 // pred_region
        // Predicated region
        $region17: #{tpu_custom_call.1} parent=15 // pred_check
          %p156 = pneg %p51
        $region18: #{tpu_custom_call.1} parent=15 // pred_check_branch
          %158 = sbr.rel (%p156) target = $region20
        $region19: #{tpu_custom_call.1} parent=15 // pred_region
          %s159 = smul.u32 128, %s27
          %p160 = scmp.lt.s32.totalorder %s159, 255
          %s161 = scalar_select %p160, %s159, 255
          %s162 = smul.addr %s161, 8
          %s163 = scalar_lea.vmem %s0, %s162
          %s164 = smul.u32 128, %s27
        $region20: #{tpu_custom_call.1} parent=15 // pred_fallthru
          _
        // Predicated region
        $region21: #{tpu_custom_call.1} parent=15 // pred_check
          %p165 = pneg %p77
        $region22: #{tpu_custom_call.1} parent=15 // pred_check_branch
          %167 = sbr.rel (%p165) target = $region24
        $region23: #{tpu_custom_call.1} parent=15 // pred_region
          %s168 = sand.u32 %s67, 1
          %s169 = scalar_lea.sflag [#allocation5], %s168
          %s170 = sand.u32 %s67, 1
          %s171 = smul.addr %s170, 32
          %s172 = scalar_lea.vmem [#allocation4], %s171
          %s173 = smul.u32 2, %s26
          %s175 = ssub.s32 512, 512
          %176 = vsyncadd %s169, %s175
          %s177 = smul.addr %s173, 128
          %s178 = scalar_lea.hbm %s1, %s177
          %s179 = sshll.u32 %s172, 4
          %s180 = int_to_ptr.vmem [resolvable:$true] %s179
          %185 = dma.hbm_to_vmem [thread:$0]  %s178, 512, %s180, %s169, 512, 256, 16
        $region24: #{tpu_custom_call.1} parent=15 // pred_fallthru
          _
      $region16: #{tpu_custom_call.1} parent=5 // pred_fallthru
        _
      %p186 = scmp.le.s32.totalorder 1, %s19
      %p187 = scmp.lt.s32.totalorder %s19, 5
      %p188 = pnand %p186, %p187
      %p189 = pneg %p188
      // Predicated region
      $region25: #{tpu_custom_call.1} parent=5 // pred_check
        _
      $region26: #{tpu_custom_call.1} parent=5 // pred_check_branch
        %191 = sbr.rel (%p188) target = $region28
      $region27: #{tpu_custom_call.1} parent=5 // pred_region
        %s192 = ssub.s32 %s19, 1
        %s193 = sand.u32 %s70, 1
        %s194 = scalar_lea.sflag [#allocation5], %s193
        %s195 = sand.u32 %s70, 1
        %s196 = smul.addr %s195, 32
        %s197 = scalar_lea.vmem [#allocation4], %s196
        // Predicated region
        $region29: #{tpu_custom_call.1} parent=27 // pred_check
          %p198 = pneg %p83
        $region30: #{tpu_custom_call.1} parent=27 // pred_check_branch
          %200 = sbr.rel (%p198) target = $region32
        $region31: #{tpu_custom_call.1} parent=27 // pred_region
          %201 = dma.done %s194, 512
        $region32: #{tpu_custom_call.1} parent=27 // pred_fallthru
          _
        %s202 = smul.u32 128, %s29
        %p203 = scmp.lt.s32.totalorder %s202, 255
        %s204 = scalar_select %p203, %s202, 255
        %s205 = smul.addr %s204, 8
        %s206 = scalar_lea.vmem %s0, %s205
        %p207 = pneg %p57
        %p208 = pneg %p54
        %s209 = sand.u32 %s70, 1
        %s210 = scalar_lea.sflag [#allocation5], %s209
        %s211 = sand.u32 %s70, 1
        %s212 = smul.addr %s211, 32
        %s213 = scalar_lea.vmem [#allocation4], %s212
        %p214 = pneg %p83
        %p215 = pneg %p80
        %p216 = pneg %p111
        %p217 = pneg %p108
        %s218 = sand.u32 %s98, 1
        %s219 = scalar_lea.sflag [#allocation6], %s218
        %s220 = sand.u32 %s98, 1
        %s221 = smul.addr %s220, 2048
        %s222 = scalar_lea.vmem [#allocation7], %s221
        %p223 = pneg %p137
        %p224 = pneg %p134
        %s225 = sand.u32 %s124, 1
        %s226 = scalar_lea.sflag [#allocation9], %s225
        %s227 = sand.u32 %s124, 1
        %s228 = smul.addr %s227, 2
        %s229 = scalar_lea.vmem [#allocation8], %s228
        %s230 = smul.u32 128, %s29
        %p231 = scmp.lt.s32.totalorder %s230, 255
        %s232 = scalar_select %p231, %s230, 255
        %s233 = smul.addr %s232, 8
        %s234 = scalar_lea.vmem %s0, %s233
        %s235 = smul.u32 128, %s29
        %s236 = smul.u32 2, %s28
        %s237 = smul.u32 128, %s29
        %s238 = smul.u32 2, %s28
        %s239 = smul.u32 2, %s28
        %p240 = scmp.eq.s32.totalorder %s29, 0
        // Predicated region
        $region33: #{tpu_custom_call.1} parent=27 // pred_check
          %p241 = pneg %p240
        $region34: #{tpu_custom_call.1} parent=27 // pred_check_branch
          %243 = sbr.rel (%p241) target = $region36
        $region35: #{tpu_custom_call.1} parent=27 // pred_region
          %v244 = vlaneseq
          %vm245 = vcmp.ge.s32.totalorder %v244, 0
          %vm246 = vcmp.lt.s32.totalorder %v244, 256
          %vm247 = vmand %vm245, %vm246
          %248 = vst.msk [vmem:[#allocation2] sm:$0x3] %vm247, -inf
          %249 = vst.msk [vmem:[#allocation3] sm:$0x3] %vm247, 0.0
        $region36: #{tpu_custom_call.1} parent=27 // pred_fallthru
          _
        %v250 = vld [vmem:[%s234] sm:$0xff]
        %v251 = vld [vmem:[%s234 + $0x8] sm:$0xff]
        %v252 = vld [vmem:[%s234 + $0x10] sm:$0xff]
        %v253 = vld [vmem:[%s234 + $0x18] sm:$0xff]
        %v254 = vld [vmem:[%s234 + $0x20] sm:$0xff]
        %v255 = vld [vmem:[%s234 + $0x28] sm:$0xff]
        %v256 = vld [vmem:[%s234 + $0x30] sm:$0xff]
        %v257 = vld [vmem:[%s234 + $0x38] sm:$0xff]
        %v258 = vld [vmem:[%s234 + $0x40] sm:$0xff]
        %v259 = vld [vmem:[%s234 + $0x48] sm:$0xff]
        %v260 = vld [vmem:[%s234 + $0x50] sm:$0xff]
        %v261 = vld [vmem:[%s234 + $0x58] sm:$0xff]
        %v262 = vld [vmem:[%s234 + $0x60] sm:$0xff]
        %v263 = vld [vmem:[%s234 + $0x68] sm:$0xff]
        %v264 = vld [vmem:[%s234 + $0x70] sm:$0xff]
        %v265 = vld [vmem:[%s234 + $0x78] sm:$0xff]
        %v266 = vld [vmem:[%s234 + $0x80] sm:$0xff]
        %v267 = vld [vmem:[%s234 + $0x88] sm:$0xff]
        %v268 = vld [vmem:[%s234 + $0x90] sm:$0xff]
        %v269 = vld [vmem:[%s234 + $0x98] sm:$0xff]
        %v270 = vld [vmem:[%s234 + $0xa0] sm:$0xff]
        %v271 = vld [vmem:[%s234 + $0xa8] sm:$0xff]
        %v272 = vld [vmem:[%s234 + $0xb0] sm:$0xff]
        %v273 = vld [vmem:[%s234 + $0xb8] sm:$0xff]
        %v274 = vld [vmem:[%s234 + $0xc0] sm:$0xff]
        %v275 = vld [vmem:[%s234 + $0xc8] sm:$0xff]
        %v276 = vld [vmem:[%s234 + $0xd0] sm:$0xff]
        %v277 = vld [vmem:[%s234 + $0xd8] sm:$0xff]
        %v278 = vld [vmem:[%s234 + $0xe0] sm:$0xff]
        %v279 = vld [vmem:[%s234 + $0xe8] sm:$0xff]
        %v280 = vld [vmem:[%s234 + $0xf0] sm:$0xff]
        %v281 = vld [vmem:[%s234 + $0xf8] sm:$0xff]
        %v282 = vld [vmem:[%s234 + $0x100] sm:$0xff]
        %v283 = vld [vmem:[%s234 + $0x108] sm:$0xff]
        %v284 = vld [vmem:[%s234 + $0x110] sm:$0xff]
        %v285 = vld [vmem:[%s234 + $0x118] sm:$0xff]
        %v286 = vld [vmem:[%s234 + $0x120] sm:$0xff]
        %v287 = vld [vmem:[%s234 + $0x128] sm:$0xff]
        %v288 = vld [vmem:[%s234 + $0x130] sm:$0xff]
        %v289 = vld [vmem:[%s234 + $0x138] sm:$0xff]
        %v290 = vld [vmem:[%s234 + $0x140] sm:$0xff]
        %v291 = vld [vmem:[%s234 + $0x148] sm:$0xff]
        %v292 = vld [vmem:[%s234 + $0x150] sm:$0xff]
        %v293 = vld [vmem:[%s234 + $0x158] sm:$0xff]
        %v294 = vld [vmem:[%s234 + $0x160] sm:$0xff]
        %v295 = vld [vmem:[%s234 + $0x168] sm:$0xff]
        %v296 = vld [vmem:[%s234 + $0x170] sm:$0xff]
        %v297 = vld [vmem:[%s234 + $0x178] sm:$0xff]
        %v298 = vld [vmem:[%s234 + $0x180] sm:$0xff]
        %v299 = vld [vmem:[%s234 + $0x188] sm:$0xff]
        %v300 = vld [vmem:[%s234 + $0x190] sm:$0xff]
        %v301 = vld [vmem:[%s234 + $0x198] sm:$0xff]
        %v302 = vld [vmem:[%s234 + $0x1a0] sm:$0xff]
        %v303 = vld [vmem:[%s234 + $0x1a8] sm:$0xff]
        %v304 = vld [vmem:[%s234 + $0x1b0] sm:$0xff]
        %v305 = vld [vmem:[%s234 + $0x1b8] sm:$0xff]
        %v306 = vld [vmem:[%s234 + $0x1c0] sm:$0xff]
        %v307 = vld [vmem:[%s234 + $0x1c8] sm:$0xff]
        %v308 = vld [vmem:[%s234 + $0x1d0] sm:$0xff]
        %v309 = vld [vmem:[%s234 + $0x1d8] sm:$0xff]
        %v310 = vld [vmem:[%s234 + $0x1e0] sm:$0xff]
        %v311 = vld [vmem:[%s234 + $0x1e8] sm:$0xff]
        %v312 = vld [vmem:[%s234 + $0x1f0] sm:$0xff]
        %v313 = vld [vmem:[%s234 + $0x1f8] sm:$0xff]
        %v314 = vld [vmem:[%s234 + $0x200] sm:$0xff]
        %v315 = vld [vmem:[%s234 + $0x208] sm:$0xff]
        %v316 = vld [vmem:[%s234 + $0x210] sm:$0xff]
        %v317 = vld [vmem:[%s234 + $0x218] sm:$0xff]
        %v318 = vld [vmem:[%s234 + $0x220] sm:$0xff]
        %v319 = vld [vmem:[%s234 + $0x228] sm:$0xff]
        %v320 = vld [vmem:[%s234 + $0x230] sm:$0xff]
        %v321 = vld [vmem:[%s234 + $0x238] sm:$0xff]
        %v322 = vld [vmem:[%s234 + $0x240] sm:$0xff]
        %v323 = vld [vmem:[%s234 + $0x248] sm:$0xff]
        %v324 = vld [vmem:[%s234 + $0x250] sm:$0xff]
        %v325 = vld [vmem:[%s234 + $0x258] sm:$0xff]
        %v326 = vld [vmem:[%s234 + $0x260] sm:$0xff]
        %v327 = vld [vmem:[%s234 + $0x268] sm:$0xff]
        %v328 = vld [vmem:[%s234 + $0x270] sm:$0xff]
        %v329 = vld [vmem:[%s234 + $0x278] sm:$0xff]
        %v330 = vld [vmem:[%s234 + $0x280] sm:$0xff]
        %v331 = vld [vmem:[%s234 + $0x288] sm:$0xff]
        %v332 = vld [vmem:[%s234 + $0x290] sm:$0xff]
        %v333 = vld [vmem:[%s234 + $0x298] sm:$0xff]
        %v334 = vld [vmem:[%s234 + $0x2a0] sm:$0xff]
        %v335 = vld [vmem:[%s234 + $0x2a8] sm:$0xff]
        %v336 = vld [vmem:[%s234 + $0x2b0] sm:$0xff]
        %v337 = vld [vmem:[%s234 + $0x2b8] sm:$0xff]
        %v338 = vld [vmem:[%s234 + $0x2c0] sm:$0xff]
        %v339 = vld [vmem:[%s234 + $0x2c8] sm:$0xff]
        %v340 = vld [vmem:[%s234 + $0x2d0] sm:$0xff]
        %v341 = vld [vmem:[%s234 + $0x2d8] sm:$0xff]
        %v342 = vld [vmem:[%s234 + $0x2e0] sm:$0xff]
        %v343 = vld [vmem:[%s234 + $0x2e8] sm:$0xff]
        %v344 = vld [vmem:[%s234 + $0x2f0] sm:$0xff]
        %v345 = vld [vmem:[%s234 + $0x2f8] sm:$0xff]
        %v346 = vld [vmem:[%s234 + $0x300] sm:$0xff]
        %v347 = vld [vmem:[%s234 + $0x308] sm:$0xff]
        %v348 = vld [vmem:[%s234 + $0x310] sm:$0xff]
        %v349 = vld [vmem:[%s234 + $0x318] sm:$0xff]
        %v350 = vld [vmem:[%s234 + $0x320] sm:$0xff]
        %v351 = vld [vmem:[%s234 + $0x328] sm:$0xff]
        %v352 = vld [vmem:[%s234 + $0x330] sm:$0xff]
        %v353 = vld [vmem:[%s234 + $0x338] sm:$0xff]
        %v354 = vld [vmem:[%s234 + $0x340] sm:$0xff]
        %v355 = vld [vmem:[%s234 + $0x348] sm:$0xff]
        %v356 = vld [vmem:[%s234 + $0x350] sm:$0xff]
        %v357 = vld [vmem:[%s234 + $0x358] sm:$0xff]
        %v358 = vld [vmem:[%s234 + $0x360] sm:$0xff]
        %v359 = vld [vmem:[%s234 + $0x368] sm:$0xff]
        %v360 = vld [vmem:[%s234 + $0x370] sm:$0xff]
        %v361 = vld [vmem:[%s234 + $0x378] sm:$0xff]
        %v362 = vld [vmem:[%s234 + $0x380] sm:$0xff]
        %v363 = vld [vmem:[%s234 + $0x388] sm:$0xff]
        %v364 = vld [vmem:[%s234 + $0x390] sm:$0xff]
        %v365 = vld [vmem:[%s234 + $0x398] sm:$0xff]
        %v366 = vld [vmem:[%s234 + $0x3a0] sm:$0xff]
        %v367 = vld [vmem:[%s234 + $0x3a8] sm:$0xff]
        %v368 = vld [vmem:[%s234 + $0x3b0] sm:$0xff]
        %v369 = vld [vmem:[%s234 + $0x3b8] sm:$0xff]
        %v370 = vld [vmem:[%s234 + $0x3c0] sm:$0xff]
        %v371 = vld [vmem:[%s234 + $0x3c8] sm:$0xff]
        %v372 = vld [vmem:[%s234 + $0x3d0] sm:$0xff]
        %v373 = vld [vmem:[%s234 + $0x3d8] sm:$0xff]
        %v374 = vld [vmem:[%s234 + $0x3e0] sm:$0xff]
        %v375 = vld [vmem:[%s234 + $0x3e8] sm:$0xff]
        %v376 = vld [vmem:[%s234 + $0x3f0] sm:$0xff]
        %v377 = vld [vmem:[%s234 + $0x3f8] sm:$0xff]
        %v378 = vld [vmem:[%s197] sm:$0xff]
        %v379 = vld [vmem:[%s197 + $0x8] sm:$0xff]
        %v380 = vld [vmem:[%s197 + $0x10] sm:$0x3]
        %v381 = vld [vmem:[%s197 + $0x18] sm:$0x3]
        %vm382 = vcmask 80896
        %v384 = vsel %vm382, %v250, 0
        %v387 = vsel %vm382, %v251, 0
        %v390 = vsel %vm382, %v252, 0
        %v393 = vsel %vm382, %v253, 0
        %v396 = vsel %vm382, %v254, 0
        %v399 = vsel %vm382, %v255, 0
        %v402 = vsel %vm382, %v256, 0
        %v405 = vsel %vm382, %v257, 0
        %v408 = vsel %vm382, %v258, 0
        %v411 = vsel %vm382, %v259, 0
        %v414 = vsel %vm382, %v260, 0
        %v417 = vsel %vm382, %v261, 0
        %v420 = vsel %vm382, %v262, 0
        %v423 = vsel %vm382, %v263, 0
        %v426 = vsel %vm382, %v264, 0
        %v429 = vsel %vm382, %v265, 0
        %v432 = vsel %vm382, %v266, 0
        %v435 = vsel %vm382, %v267, 0
        %v438 = vsel %vm382, %v268, 0
        %v441 = vsel %vm382, %v269, 0
        %v444 = vsel %vm382, %v270, 0
        %v447 = vsel %vm382, %v271, 0
        %v450 = vsel %vm382, %v272, 0
        %v453 = vsel %vm382, %v273, 0
        %v456 = vsel %vm382, %v274, 0
        %v459 = vsel %vm382, %v275, 0
        %v462 = vsel %vm382, %v276, 0
        %v465 = vsel %vm382, %v277, 0
        %v468 = vsel %vm382, %v278, 0
        %v471 = vsel %vm382, %v279, 0
        %v474 = vsel %vm382, %v280, 0
        %v477 = vsel %vm382, %v281, 0
        %v480 = vsel %vm382, %v282, 0
        %v483 = vsel %vm382, %v283, 0
        %v486 = vsel %vm382, %v284, 0
        %v489 = vsel %vm382, %v285, 0
        %v492 = vsel %vm382, %v286, 0
        %v495 = vsel %vm382, %v287, 0
        %v498 = vsel %vm382, %v288, 0
        %v501 = vsel %vm382, %v289, 0
        %v504 = vsel %vm382, %v290, 0
        %v507 = vsel %vm382, %v291, 0
        %v510 = vsel %vm382, %v292, 0
        %v513 = vsel %vm382, %v293, 0
        %v516 = vsel %vm382, %v294, 0
        %v519 = vsel %vm382, %v295, 0
        %v522 = vsel %vm382, %v296, 0
        %v525 = vsel %vm382, %v297, 0
        %v528 = vsel %vm382, %v298, 0
        %v531 = vsel %vm382, %v299, 0
        %v534 = vsel %vm382, %v300, 0
        %v537 = vsel %vm382, %v301, 0
        %v540 = vsel %vm382, %v302, 0
        %v543 = vsel %vm382, %v303, 0
        %v546 = vsel %vm382, %v304, 0
        %v549 = vsel %vm382, %v305, 0
        %v552 = vsel %vm382, %v306, 0
        %v555 = vsel %vm382, %v307, 0
        %v558 = vsel %vm382, %v308, 0
        %v561 = vsel %vm382, %v309, 0
        %v564 = vsel %vm382, %v310, 0
        %v567 = vsel %vm382, %v311, 0
        %v570 = vsel %vm382, %v312, 0
        %v573 = vsel %vm382, %v313, 0
        %v576 = vsel %vm382, %v314, 0
        %v579 = vsel %vm382, %v315, 0
        %v582 = vsel %vm382, %v316, 0
        %v585 = vsel %vm382, %v317, 0
        %v588 = vsel %vm382, %v318, 0
        %v591 = vsel %vm382, %v319, 0
        %v594 = vsel %vm382, %v320, 0
        %v597 = vsel %vm382, %v321, 0
        %v600 = vsel %vm382, %v322, 0
        %v603 = vsel %vm382, %v323, 0
        %v606 = vsel %vm382, %v324, 0
        %v609 = vsel %vm382, %v325, 0
        %v612 = vsel %vm382, %v326, 0
        %v615 = vsel %vm382, %v327, 0
        %v618 = vsel %vm382, %v328, 0
        %v621 = vsel %vm382, %v329, 0
        %v624 = vsel %vm382, %v330, 0
        %v627 = vsel %vm382, %v331, 0
        %v630 = vsel %vm382, %v332, 0
        %v633 = vsel %vm382, %v333, 0
        %v636 = vsel %vm382, %v334, 0
        %v639 = vsel %vm382, %v335, 0
        %v642 = vsel %vm382, %v336, 0
        %v645 = vsel %vm382, %v337, 0
        %v648 = vsel %vm382, %v338, 0
        %v651 = vsel %vm382, %v339, 0
        %v654 = vsel %vm382, %v340, 0
        %v657 = vsel %vm382, %v341, 0
        %v660 = vsel %vm382, %v342, 0
        %v663 = vsel %vm382, %v343, 0
        %v666 = vsel %vm382, %v344, 0
        %v669 = vsel %vm382, %v345, 0
        %v672 = vsel %vm382, %v346, 0
        %v675 = vsel %vm382, %v347, 0
        %v678 = vsel %vm382, %v348, 0
        %v681 = vsel %vm382, %v349, 0
        %v684 = vsel %vm382, %v350, 0
        %v687 = vsel %vm382, %v351, 0
        %v690 = vsel %vm382, %v352, 0
        %v693 = vsel %vm382, %v353, 0
        %v696 = vsel %vm382, %v354, 0
        %v699 = vsel %vm382, %v355, 0
        %v702 = vsel %vm382, %v356, 0
        %v705 = vsel %vm382, %v357, 0
        %v708 = vsel %vm382, %v358, 0
        %v711 = vsel %vm382, %v359, 0
        %v714 = vsel %vm382, %v360, 0
        %v717 = vsel %vm382, %v361, 0
        %v720 = vsel %vm382, %v362, 0
        %v723 = vsel %vm382, %v363, 0
        %v726 = vsel %vm382, %v364, 0
        %v729 = vsel %vm382, %v365, 0
        %v732 = vsel %vm382, %v366, 0
        %v735 = vsel %vm382, %v367, 0
        %v738 = vsel %vm382, %v368, 0
        %v741 = vsel %vm382, %v369, 0
        %v744 = vsel %vm382, %v370, 0
        %v747 = vsel %vm382, %v371, 0
        %v750 = vsel %vm382, %v372, 0
        %v753 = vsel %vm382, %v373, 0
        %v756 = vsel %vm382, %v374, 0
        %v759 = vsel %vm382, %v375, 0
        %v762 = vsel %vm382, %v376, 0
        %v765 = vsel %vm382, %v377, 0
        %vm767 = vcmask 1041408
        %v769 = vsel %vm767, %v380, 0
        %v772 = vsel %vm767, %v381, 0
        %v774 = vand.u32 %v379, 4294901760
        %775 = vmatprep.subr.mxu0 %v774
        %v776 = vand.u32 %v378, 4294901760
        %777 = vmatpush1.msra.mxu0 %v776
        %v778 = vand.u32 %v772, 4294901760
        %779 = vmatprep.subr.mxu0 %v778
        %v780 = vand.u32 %v769, 4294901760
        %781 = vmatpush1.msra.mxu0 %v780
        %782 = vmatprep.subr.mxu0 0.0
        %783 = vmatpush1.msra.mxu0 0.0
        %784 = vmatprep.subr.mxu0 0.0
        %785 = vmatpush1.msra.mxu0 0.0
        %786 = vmatprep.subr.mxu0 0.0
        %787 = vmatpush1.msra.mxu0 0.0
        %788 = vmatprep.subr.mxu0 0.0
        %789 = vmatpush1.msra.mxu0 0.0
        %790 = vmatprep.subr.mxu0 0.0
        %791 = vmatpush1.msra.mxu0 0.0
        %792 = vmatprep.subr.mxu0 0.0
        %793 = vmatpush1.msra.mxu0 0.0
        %794 = vmatprep.subr.mxu0 0.0
        %795 = vmatpush1.msra.mxu0 0.0
        %796 = vmatprep.subr.mxu0 0.0
        %797 = vmatpush1.msra.mxu0 0.0
        %798 = vmatprep.subr.mxu0 0.0
        %799 = vmatpush1.msra.mxu0 0.0
        %800 = vmatprep.subr.mxu0 0.0
        %801 = vmatpush1.msra.mxu0 0.0
        %802 = vmatprep.subr.mxu0 0.0
        %803 = vmatpush1.msra.mxu0 0.0
        %804 = vmatprep.subr.mxu0 0.0
        %805 = vmatpush1.msra.mxu0 0.0
        %806 = vmatprep.subr.mxu0 0.0
        %807 = vmatpush1.msra.mxu0 0.0
        %808 = vmatprep.subr.mxu0 0.0
        %809 = vmatpush1.msra.mxu0 0.0
        %810 = vmatprep.subr.mxu0 0.0
        %811 = vmatpush1.msra.mxu0 0.0
        %812 = vmatprep.subr.mxu0 0.0
        %813 = vmatpush1.msra.mxu0 0.0
        %814 = vmatprep.subr.mxu0 0.0
        %815 = vmatpush1.msra.mxu0 0.0
        %816 = vmatprep.subr.mxu0 0.0
        %817 = vmatpush1.msra.mxu0 0.0
        %818 = vmatprep.subr.mxu0 0.0
        %819 = vmatpush1.msra.mxu0 0.0
        %820 = vmatprep.subr.mxu0 0.0
        %821 = vmatpush1.msra.mxu0 0.0
        %822 = vmatprep.subr.mxu0 0.0
        %823 = vmatpush1.msra.mxu0 0.0
        %824 = vmatprep.subr.mxu0 0.0
        %825 = vmatpush1.msra.mxu0 0.0
        %826 = vmatprep.subr.mxu0 0.0
        %827 = vmatpush1.msra.mxu0 0.0
        %828 = vmatprep.subr.mxu0 0.0
        %829 = vmatpush1.msra.mxu0 0.0
        %830 = vmatprep.subr.mxu0 0.0
        %831 = vmatpush1.msra.mxu0 0.0
        %832 = vmatprep.subr.mxu0 0.0
        %833 = vmatpush1.msra.mxu0 0.0
        %834 = vmatprep.subr.mxu0 0.0
        %835 = vmatpush1.msra.mxu0 0.0
        %836 = vmatprep.subr.mxu0 0.0
        %837 = vmatpush1.msra.mxu0 0.0
        %838 = vmatprep.subr.mxu0 0.0
        %839 = vmatpush1.msra.mxu0 0.0
        %840 = vmatprep.subr.mxu0 0.0
        %841 = vmatpush1.msra.mxu0 0.0
        %842 = vmatprep.mubr.f32.mxu0 0.0
        %v843 = vand.u32 %v384, 4294901760
        %v844 = vsub.f32 %v384, %v843
        %v845 = vand.u32 %v844, 4294901760
        %v846 = vsub.f32 %v844, %v845
        %v847 = vand.u32 %v846, 4294901760
        %848 = vmatmul.mubr.f32.gmra.mrb[0].mxu0 %v847
        %v849 = vpop.f32.mrb[0].mxu0
        %v850 = vadd.f32 0.0, %v849
        %v851 = vpop.f32.mrb[0].mxu0
        %v852 = vadd.f32 0.0, %v851
        %853 = vmatprep.mubr.f32.mxu0 0.0
        %v854 = vand.u32 %v387, 4294901760
        %v855 = vsub.f32 %v387, %v854
        %v856 = vand.u32 %v855, 4294901760
        %v857 = vsub.f32 %v855, %v856
        %v858 = vand.u32 %v857, 4294901760
        %859 = vmatmul.mubr.f32.gmra.mrb[0].mxu0 %v858
        %v860 = vpop.f32.mrb[0].mxu0
        %v861 = vadd.f32 0.0, %v860
        %v862 = vpop.f32.mrb[0].mxu0
        %v863 = vadd.f32 0.0, %v862
        %864 = vmatprep.mubr.f32.mxu0 0.0
        %v865 = vand.u32 %v390, 4294901760
        %v866 = vsub.f32 %v390, %v865
        %v867 = vand.u32 %v866, 4294901760
        %v868 = vsub.f32 %v866, %v867
        %v869 = vand.u32 %v868, 4294901760
        %870 = vmatmul.mubr.f32.gmra.mrb[0].mxu0 %v869
        %v871 = vpop.f32.mrb[0].mxu0
        %v872 = vadd.f32 0.0, %v871
        %v873 = vpop.f32.mrb[0].mxu0
        %v874 = vadd.f32 0.0, %v873
        %875 = vmatprep.mubr.f32.mxu0 0.0
        %v876 = vand.u32 %v393, 4294901760
        %v877 = vsub.f32 %v393, %v876
        %v878 = vand.u32 %v877, 4294901760
        %v879 = vsub.f32 %v877, %v878
        %v880 = vand.u32 %v879, 4294901760
        %881 = vmatmul.mubr.f32.gmra.mrb[0].mxu0 %v880
        %v882 = vpop.f32.mrb[0].mxu0
        %v883 = vadd.f32 0.0, %v882
        %v884 = vpop.f32.mrb[0].mxu0
        %v885 = vadd.f32 0.0, %v884
        %886 = vmatprep.mubr.f32.mxu0 0.0
        %v887 = vand.u32 %v396, 4294901760
        %v888 = vsub.f32 %v396, %v887
        %v889 = vand.u32 %v888, 4294901760
        %v890 = vsub.f32 %v888, %v889
        %v891 = vand.u32 %v890, 4294901760
        %892 = vmatmul.mubr.f32.gmra.mrb[0].mxu0 %v891
        %v893 = vpop.f32.mrb[0].mxu0
        %v894 = vadd.f32 0.0, %v893
        %v895 = vpop.f32.mrb[0].mxu0
        %v896 = vadd.f32 0.0, %v895
        %897 = vmatprep.mubr.f32.mxu0 0.0
        %v898 = vand.u32 %v399, 4294901760
        %v899 = vsub.f32 %v399, %v898
        %v900 = vand.u32 %v899, 4294901760
        %v901 = vsub.f32 %v899, %v900
        %v902 = vand.u32 %v901, 4294901760
        %903 = vmatmul.mubr.f32.gmra.mrb[0].mxu0 %v902
        %v904 = vpop.f32.mrb[0].mxu0
        %v905 = vadd.f32 0.0, %v904
        %v906 = vpop.f32.mrb[0].mxu0
        %v907 = vadd.f32 0.0, %v906
        %908 = vmatprep.mubr.f32.mxu0 0.0
        %v909 = vand.u32 %v402, 4294901760
        %v910 = vsub.f32 %v402, %v909
        %v911 = vand.u32 %v910, 4294901760
        %v912 = vsub.f32 %v910, %v911
        %v913 = vand.u32 %v912, 4294901760
        %914 = vmatmul.mubr.f32.gmra.mrb[0].mxu0 %v913
        %v915 = vpop.f32.mrb[0].mxu0
        %v916 = vadd.f32 0.0, %v915
        %v917 = vpop.f32.mrb[0].mxu0
        %v918 = vadd.f32 0.0, %v917
        %919 = vmatprep.mubr.f32.mxu0 0.0
        %v920 = vand.u32 %v405, 4294901760
        %v921 = vsub.f32 %v405, %v920
        %v922 = vand.u32 %v921, 4294901760
        %v923 = vsub.f32 %v921, %v922
        %v924 = vand.u32 %v923, 4294901760
        %925 = vmatmul.mubr.f32.gmra.mrb[0].mxu0 %v924
        %v926 = vpop.f32.mrb[0].mxu0
        %v927 = vadd.f32 0.0, %v926
        %v928 = vpop.f32.mrb[0].mxu0
        %v929 = vadd.f32 0.0, %v928
        %930 = vmatprep.mubr.f32.mxu0 0.0
        %v931 = vand.u32 %v408, 4294901760
        %v932 = vsub.f32 %v408, %v931
        %v933 = vand.u32 %v932, 4294901760
        %v934 = vsub.f32 %v932, %v933
        %v935 = vand.u32 %v934, 4294901760
        %936 = vmatmul.mubr.f32.gmra.mrb[0].mxu0 %v935
        %v937 = vpop.f32.mrb[0].mxu0
        %v938 = vadd.f32 0.0, %v937
        %v939 = vpop.f32.mrb[0].mxu0
        %v940 = vadd.f32 0.0, %v939
        %941 = vmatprep.mubr.f32.mxu0 0.0
        %v942 = vand.u32 %v411, 4294901760
        %v943 = vsub.f32 %v411, %v942
        %v944 = vand.u32 %v943, 4294901760
        %v945 = vsub.f32 %v943, %v944
        %v946 = vand.u32 %v945, 4294901760
        %947 = vmatmul.mubr.f32.gmra.mrb[0].mxu0 %v946
        %v948 = vpop.f32.mrb[0].mxu0
        %v949 = vadd.f32 0.0, %v948
        %v950 = vpop.f32.mrb[0].mxu0
        %v951 = vadd.f32 0.0, %v950
        %952 = vmatprep.mubr.f32.mxu0 0.0
        %v953 = vand.u32 %v414, 4294901760
        %v954 = vsub.f32 %v414, %v953
        %v955 = vand.u32 %v954, 4294901760
        %v956 = vsub.f32 %v954, %v955
        %v957 = vand.u32 %v956, 4294901760
        %958 = vmatmul.mubr.f32.gmra.mrb[0].mxu0 %v957
        %v959 = vpop.f32.mrb[0].mxu0
        %v960 = vadd.f32 0.0, %v959
        %v961 = vpop.f32.mrb[0].mxu0
        %v962 = vadd.f32 0.0, %v961
        %963 = vmatprep.mubr.f32.mxu0 0.0
        %v964 = vand.u32 %v417, 4294901760
        %v965 = vsub.f32 %v417, %v964
        %v966 = vand.u32 %v965, 4294901760
        %v967 = vsub.f32 %v965, %v966
        %v968 = vand.u32 %v967, 4294901760
        %969 = vmatmul.mubr.f32.gmra.mrb[0].mxu0 %v968
        %v970 = vpop.f32.mrb[0].mxu0
        %v971 = vadd.f32 0.0, %v970
        %v972 = vpop.f32.mrb[0].mxu0
        %v973 = vadd.f32 0.0, %v972
        %974 = vmatprep.mubr.f32.mxu0 0.0
        %v975 = vand.u32 %v420, 4294901760
        %v976 = vsub.f32 %v420, %v975
        %v977 = vand.u32 %v976, 4294901760
        %v978 = vsub.f32 %v976, %v977
        %v979 = vand.u32 %v978, 4294901760
        %980 = vmatmul.mubr.f32.gmra.mrb[0].mxu0 %v979
        %v981 = vpop.f32.mrb[0].mxu0
        %v982 = vadd.f32 0.0, %v981
        %v983 = vpop.f32.mrb[0].mxu0
        %v984 = vadd.f32 0.0, %v983
        %985 = vmatprep.mubr.f32.mxu0 0.0
        %v986 = vand.u32 %v423, 4294901760
        %v987 = vsub.f32 %v423, %v986
        %v988 = vand.u32 %v987, 4294901760
        %v989 = vsub.f32 %v987, %v988
        %v990 = vand.u32 %v989, 4294901760
        %991 = vmatmul.mubr.f32.gmra.mrb[0].mxu0 %v990
        %v992 = vpop.f32.mrb[0].mxu0
        %v993 = vadd.f32 0.0, %v992
        %v994 = vpop.f32.mrb[0].mxu0
        %v995 = vadd.f32 0.0, %v994
        %996 = vmatprep.mubr.f32.mxu0 0.0
        %v997 = vand.u32 %v426, 4294901760
        %v998 = vsub.f32 %v426, %v997
        %v999 = vand.u32 %v998, 4294901760
        %v1000 = vsub.f32 %v998, %v999
        %v1001 = vand.u32 %v1000, 4294901760
        %1002 = vmatmul.mubr.f32.gmra.mrb[0].mxu0 %v1001
        %v1003 = vpop.f32.mrb[0].mxu0
        %v1004 = vadd.f32 0.0, %v1003
        %v1005 = vpop.f32.mrb[0].mxu0
        %v1006 = vadd.f32 0.0, %v1005
        %1007 = vmatprep.mubr.f32.mxu0 0.0
        %v1008 = vand.u32 %v429, 4294901760
        %v1009 = vsub.f32 %v429, %v1008
        %v1010 = vand.u32 %v1009, 4294901760
        %v1011 = vsub.f32 %v1009, %v1010
        %v1012 = vand.u32 %v1011, 4294901760
        %1013 = vmatmul.mubr.f32.gmra.mrb[0].mxu0 %v1012
        %v1014 = vpop.f32.mrb[0].mxu0
        %v1015 = vadd.f32 0.0, %v1014
        %v1016 = vpop.f32.mrb[0].mxu0
        %v1017 = vadd.f32 0.0, %v1016
        %1018 = vmatprep.mubr.f32.mxu0 0.0
        %v1019 = vand.u32 %v432, 4294901760
        %v1020 = vsub.f32 %v432, %v1019
        %v1021 = vand.u32 %v1020, 4294901760
        %v1022 = vsub.f32 %v1020, %v1021
        %v1023 = vand.u32 %v1022, 4294901760
        %1024 = vmatmul.mubr.f32.gmra.mrb[0].mxu0 %v1023
        %v1025 = vpop.f32.mrb[0].mxu0
        %v1026 = vadd.f32 0.0, %v1025
        %v1027 = vpop.f32.mrb[0].mxu0
        %v1028 = vadd.f32 0.0, %v1027
        %1029 = vmatprep.mubr.f32.mxu0 0.0
        %v1030 = vand.u32 %v435, 4294901760
        %v1031 = vsub.f32 %v435, %v1030
        %v1032 = vand.u32 %v1031, 4294901760
        %v1033 = vsub.f32 %v1031, %v1032
        %v1034 = vand.u32 %v1033, 4294901760
        %1035 = vmatmul.mubr.f32.gmra.mrb[0].mxu0 %v1034
        %v1036 = vpop.f32.mrb[0].mxu0
        %v1037 = vadd.f32 0.0, %v1036
        %v1038 = vpop.f32.mrb[0].mxu0
        %v1039 = vadd.f32 0.0, %v1038
        %1040 = vmatprep.mubr.f32.mxu0 0.0
        %v1041 = vand.u32 %v438, 4294901760
        %v1042 = vsub.f32 %v438, %v1041
        %v1043 = vand.u32 %v1042, 4294901760
        %v1044 = vsub.f32 %v1042, %v1043
        %v1045 = vand.u32 %v1044, 4294901760
        %1046 = vmatmul.mubr.f32.gmra.mrb[0].mxu0 %v1045
        %v1047 = vpop.f32.mrb[0].mxu0
        %v1048 = vadd.f32 0.0, %v1047
        %v1049 = vpop.f32.mrb[0].mxu0
        %v1050 = vadd.f32 0.0, %v1049
        %1051 = vmatprep.mubr.f32.mxu0 0.0
        %v1052 = vand.u32 %v441, 4294901760
        %v1053 = vsub.f32 %v441, %v1052
        %v1054 = vand.u32 %v1053, 4294901760
        %v1055 = vsub.f32 %v1053, %v1054
        %v1056 = vand.u32 %v1055, 4294901760
        %1057 = vmatmul.mubr.f32.gmra.mrb[0].mxu0 %v1056
        %v1058 = vpop.f32.mrb[0].mxu0
        %v1059 = vadd.f32 0.0, %v1058
        %v1060 = vpop.f32.mrb[0].mxu0
        %v1061 = vadd.f32 0.0, %v1060
        %1062 = vmatprep.mubr.f32.mxu0 0.0
        %v1063 = vand.u32 %v444, 4294901760
        %v1064 = vsub.f32 %v444, %v1063
        %v1065 = vand.u32 %v1064, 4294901760
        %v1066 = vsub.f32 %v1064, %v1065
        %v1067 = vand.u32 %v1066, 4294901760
        %1068 = vmatmul.mubr.f32.gmra.mrb[0].mxu0 %v1067
        %v1069 = vpop.f32.mrb[0].mxu0
        %v1070 = vadd.f32 0.0, %v1069
        %v1071 = vpop.f32.mrb[0].mxu0
        %v1072 = vadd.f32 0.0, %v1071
        %1073 = vmatprep.mubr.f32.mxu0 0.0
        %v1074 = vand.u32 %v447, 4294901760
        %v1075 = vsub.f32 %v447, %v1074
        %v1076 = vand.u32 %v1075, 4294901760
        %v1077 = vsub.f32 %v1075, %v1076
        %v1078 = vand.u32 %v1077, 4294901760
        %1079 = vmatmul.mubr.f32.gmra.mrb[0].mxu0 %v1078
        %v1080 = vpop.f32.mrb[0].mxu0
        %v1081 = vadd.f32 0.0, %v1080
        %v1082 = vpop.f32.mrb[0].mxu0
        %v1083 = vadd.f32 0.0, %v1082
        %1084 = vmatprep.mubr.f32.mxu0 0.0
        %v1085 = vand.u32 %v450, 4294901760
        %v1086 = vsub.f32 %v450, %v1085
        %v1087 = vand.u32 %v1086, 4294901760
        %v1088 = vsub.f32 %v1086, %v1087
        %v1089 = vand.u32 %v1088, 4294901760
        %1090 = vmatmul.mubr.f32.gmra.mrb[0].mxu0 %v1089
        %v1091 = vpop.f32.mrb[0].mxu0
        %v1092 = vadd.f32 0.0, %v1091
        %v1093 = vpop.f32.mrb[0].mxu0
        %v1094 = vadd.f32 0.0, %v1093
        %1095 = vmatprep.mubr.f32.mxu0 0.0
        %v1096 = vand.u32 %v453, 4294901760
        %v1097 = vsub.f32 %v453, %v1096
        %v1098 = vand.u32 %v1097, 4294901760
        %v1099 = vsub.f32 %v1097, %v1098
        %v1100 = vand.u32 %v1099, 4294901760
        %1101 = vmatmul.mubr.f32.gmra.mrb[0].mxu0 %v1100
        %v1102 = vpop.f32.mrb[0].mxu0
        %v1103 = vadd.f32 0.0, %v1102
        %v1104 = vpop.f32.mrb[0].mxu0
        %v1105 = vadd.f32 0.0, %v1104
        %1106 = vmatprep.mubr.f32.mxu0 0.0
        %v1107 = vand.u32 %v456, 4294901760
        %v1108 = vsub.f32 %v456, %v1107
        %v1109 = vand.u32 %v1108, 4294901760
        %v1110 = vsub.f32 %v1108, %v1109
        %v1111 = vand.u32 %v1110, 4294901760
        %1112 = vmatmul.mubr.f32.gmra.mrb[0].mxu0 %v1111
        %v1113 = vpop.f32.mrb[0].mxu0
        %v1114 = vadd.f32 0.0, %v1113
        %v1115 = vpop.f32.mrb[0].mxu0
        %v1116 = vadd.f32 0.0, %v1115
        %1117 = vmatprep.mubr.f32.mxu0 0.0
        %v1118 = vand.u32 %v459, 4294901760
        %v1119 = vsub.f32 %v459, %v1118
        %v1120 = vand.u32 %v1119, 4294901760
        %v1121 = vsub.f32 %v1119, %v1120
        %v1122 = vand.u32 %v1121, 4294901760
        %1123 = vmatmul.mubr.f32.gmra.mrb[0].mxu0 %v1122
        %v1124 = vpop.f32.mrb[0].mxu0
        %v1125 = vadd.f32 0.0, %v1124
        %v1126 = vpop.f32.mrb[0].mxu0
        %v1127 = vadd.f32 0.0, %v1126
        %1128 = vmatprep.mubr.f32.mxu0 0.0
        %v1129 = vand.u32 %v462, 4294901760
        %v1130 = vsub.f32 %v462, %v1129
        %v1131 = vand.u32 %v1130, 4294901760
        %v1132 = vsub.f32 %v1130, %v1131
        %v1133 = vand.u32 %v1132, 4294901760
        %1134 = vmatmul.mubr.f32.gmra.mrb[0].mxu0 %v1133
        %v1135 = vpop.f32.mrb[0].mxu0
        %v1136 = vadd.f32 0.0, %v1135
        %v1137 = vpop.f32.mrb[0].mxu0
        %v1138 = vadd.f32 0.0, %v1137
        %1139 = vmatprep.mubr.f32.mxu0 0.0
        %v1140 = vand.u32 %v465, 4294901760
        %v1141 = vsub.f32 %v465, %v1140
        %v1142 = vand.u32 %v1141, 4294901760
        %v1143 = vsub.f32 %v1141, %v1142
        %v1144 = vand.u32 %v1143, 4294901760
        %1145 = vmatmul.mubr.f32.gmra.mrb[0].mxu0 %v1144
        %v1146 = vpop.f32.mrb[0].mxu0
        %v1147 = vadd.f32 0.0, %v1146
        %v1148 = vpop.f32.mrb[0].mxu0
        %v1149 = vadd.f32 0.0, %v1148
        %1150 = vmatprep.mubr.f32.mxu0 0.0
        %v1151 = vand.u32 %v468, 4294901760
        %v1152 = vsub.f32 %v468, %v1151
        %v1153 = vand.u32 %v1152, 4294901760
        %v1154 = vsub.f32 %v1152, %v1153
        %v1155 = vand.u32 %v1154, 4294901760
        %1156 = vmatmul.mubr.f32.gmra.mrb[0].mxu0 %v1155
        %v1157 = vpop.f32.mrb[0].mxu0
        %v1158 = vadd.f32 0.0, %v1157
        %v1159 = vpop.f32.mrb[0].mxu0
        %v1160 = vadd.f32 0.0, %v1159
        %1161 = vmatprep.mubr.f32.mxu0 0.0
        %v1162 = vand.u32 %v471, 4294901760
        %v1163 = vsub.f32 %v471, %v1162
        %v1164 = vand.u32 %v1163, 4294901760
        %v1165 = vsub.f32 %v1163, %v1164
        %v1166 = vand.u32 %v1165, 4294901760
        %1167 = vmatmul.mubr.f32.gmra.mrb[0].mxu0 %v1166
        %v1168 = vpop.f32.mrb[0].mxu0
        %v1169 = vadd.f32 0.0, %v1168
        %v1170 = vpop.f32.mrb[0].mxu0
        %v1171 = vadd.f32 0.0, %v1170
        %1172 = vmatprep.mubr.f32.mxu0 0.0
        %v1173 = vand.u32 %v474, 4294901760
        %v1174 = vsub.f32 %v474, %v1173
        %v1175 = vand.u32 %v1174, 4294901760
        %v1176 = vsub.f32 %v1174, %v1175
        %v1177 = vand.u32 %v1176, 4294901760
        %1178 = vmatmul.mubr.f32.gmra.mrb[0].mxu0 %v1177
        %v1179 = vpop.f32.mrb[0].mxu0
        %v1180 = vadd.f32 0.0, %v1179
        %v1181 = vpop.f32.mrb[0].mxu0
        %v1182 = vadd.f32 0.0, %v1181
        %1183 = vmatprep.mubr.f32.mxu0 0.0
        %v1184 = vand.u32 %v477, 4294901760
        %v1185 = vsub.f32 %v477, %v1184
        %v1186 = vand.u32 %v1185, 4294901760
        %v1187 = vsub.f32 %v1185, %v1186
        %v1188 = vand.u32 %v1187, 4294901760
        %1189 = vmatmul.mubr.f32.gmra.mrb[0].mxu0 %v1188
        %v1190 = vpop.f32.mrb[0].mxu0
        %v1191 = vadd.f32 0.0, %v1190
        %v1192 = vpop.f32.mrb[0].mxu0
        %v1193 = vadd.f32 0.0, %v1192
        %1194 = vmatprep.mubr.f32.mxu0 0.0
        %v1195 = vand.u32 %v480, 4294901760
        %v1196 = vsub.f32 %v480, %v1195
        %v1197 = vand.u32 %v1196, 4294901760
        %v1198 = vsub.f32 %v1196, %v1197
        %v1199 = vand.u32 %v1198, 4294901760
        %1200 = vmatmul.mubr.f32.gmra.mrb[0].mxu0 %v1199
        %v1201 = vpop.f32.mrb[0].mxu0
        %v1202 = vadd.f32 0.0, %v1201
        %v1203 = vpop.f32.mrb[0].mxu0
        %v1204 = vadd.f32 0.0, %v1203
        %1205 = vmatprep.mubr.f32.mxu0 0.0
        %v1206 = vand.u32 %v483, 4294901760
        %v1207 = vsub.f32 %v483, %v1206
        %v1208 = vand.u32 %v1207, 4294901760
        %v1209 = vsub.f32 %v1207, %v1208
        %v1210 = vand.u32 %v1209, 4294901760
        %1211 = vmatmul.mubr.f32.gmra.mrb[0].mxu0 %v1210
        %v1212 = vpop.f32.mrb[0].mxu0
        %v1213 = vadd.f32 0.0, %v1212
        %v1214 = vpop.f32.mrb[0].mxu0
        %v1215 = vadd.f32 0.0, %v1214
        %1216 = vmatprep.mubr.f32.mxu0 0.0
        %v1217 = vand.u32 %v486, 4294901760
        %v1218 = vsub.f32 %v486, %v1217
        %v1219 = vand.u32 %v1218, 4294901760
        %v1220 = vsub.f32 %v1218, %v1219
        %v1221 = vand.u32 %v1220, 4294901760
        %1222 = vmatmul.mubr.f32.gmra.mrb[0].mxu0 %v1221
        %v1223 = vpop.f32.mrb[0].mxu0
        %v1224 = vadd.f32 0.0, %v1223
        %v1225 = vpop.f32.mrb[0].mxu0
        %v1226 = vadd.f32 0.0, %v1225
        %1227 = vmatprep.mubr.f32.mxu0 0.0
        %v1228 = vand.u32 %v489, 4294901760
        %v1229 = vsub.f32 %v489, %v1228
        %v1230 = vand.u32 %v1229, 4294901760
        %v1231 = vsub.f32 %v1229, %v1230
        %v1232 = vand.u32 %v1231, 4294901760
        %1233 = vmatmul.mubr.f32.gmra.mrb[0].mxu0 %v1232
        %v1234 = vpop.f32.mrb[0].mxu0
        %v1235 = vadd.f32 0.0, %v1234
        %v1236 = vpop.f32.mrb[0].mxu0
        %v1237 = vadd.f32 0.0, %v1236
        %1238 = vmatprep.mubr.f32.mxu0 0.0
        %v1239 = vand.u32 %v492, 4294901760
        %v1240 = vsub.f32 %v492, %v1239
        %v1241 = vand.u32 %v1240, 4294901760
        %v1242 = vsub.f32 %v1240, %v1241
        %v1243 = vand.u32 %v1242, 4294901760
        %1244 = vmatmul.mubr.f32.gmra.mrb[0].mxu0 %v1243
        %v1245 = vpop.f32.mrb[0].mxu0
        %v1246 = vadd.f32 0.0, %v1245
        %v1247 = vpop.f32.mrb[0].mxu0
        %v1248 = vadd.f32 0.0, %v1247
        %1249 = vmatprep.mubr.f32.mxu0 0.0
        %v1250 = vand.u32 %v495, 4294901760
        %v1251 = vsub.f32 %v495, %v1250
        %v1252 = vand.u32 %v1251, 4294901760
        %v1253 = vsub.f32 %v1251, %v1252
        %v1254 = vand.u32 %v1253, 4294901760
        %1255 = vmatmul.mubr.f32.gmra.mrb[0].mxu0 %v1254
        %v1256 = vpop.f32.mrb[0].mxu0
        %v1257 = vadd.f32 0.0, %v1256
        %v1258 = vpop.f32.mrb[0].mxu0
        %v1259 = vadd.f32 0.0, %v1258
        %1260 = vmatprep.mubr.f32.mxu0 0.0
        %v1261 = vand.u32 %v498, 4294901760
        %v1262 = vsub.f32 %v498, %v1261
        %v1263 = vand.u32 %v1262, 4294901760
        %v1264 = vsub.f32 %v1262, %v1263
        %v1265 = vand.u32 %v1264, 4294901760
        %1266 = vmatmul.mubr.f32.gmra.mrb[0].mxu0 %v1265
        %v1267 = vpop.f32.mrb[0].mxu0
        %v1268 = vadd.f32 0.0, %v1267
        %v1269 = vpop.f32.mrb[0].mxu0
        %v1270 = vadd.f32 0.0, %v1269
        %1271 = vmatprep.mubr.f32.mxu0 0.0
        %v1272 = vand.u32 %v501, 4294901760
        %v1273 = vsub.f32 %v501, %v1272
        %v1274 = vand.u32 %v1273, 4294901760
        %v1275 = vsub.f32 %v1273, %v1274
        %v1276 = vand.u32 %v1275, 4294901760
        %1277 = vmatmul.mubr.f32.gmra.mrb[0].mxu0 %v1276
        %v1278 = vpop.f32.mrb[0].mxu0
        %v1279 = vadd.f32 0.0, %v1278
        %v1280 = vpop.f32.mrb[0].mxu0
        %v1281 = vadd.f32 0.0, %v1280
        %1282 = vmatprep.mubr.f32.mxu0 0.0
        %v1283 = vand.u32 %v504, 4294901760
        %v1284 = vsub.f32 %v504, %v1283
        %v1285 = vand.u32 %v1284, 4294901760
        %v1286 = vsub.f32 %v1284, %v1285
        %v1287 = vand.u32 %v1286, 4294901760
        %1288 = vmatmul.mubr.f32.gmra.mrb[0].mxu0 %v1287
        %v1289 = vpop.f32.mrb[0].mxu0
        %v1290 = vadd.f32 0.0, %v1289
        %v1291 = vpop.f32.mrb[0].mxu0
        %v1292 = vadd.f32 0.0, %v1291
        %1293 = vmatprep.mubr.f32.mxu0 0.0
        %v1294 = vand.u32 %v507, 4294901760
        %v1295 = vsub.f32 %v507, %v1294
        %v1296 = vand.u32 %v1295, 4294901760
        %v1297 = vsub.f32 %v1295, %v1296
        %v1298 = vand.u32 %v1297, 4294901760
        %1299 = vmatmul.mubr.f32.gmra.mrb[0].mxu0 %v1298
        %v1300 = vpop.f32.mrb[0].mxu0
        %v1301 = vadd.f32 0.0, %v1300
        %v1302 = vpop.f32.mrb[0].mxu0
        %v1303 = vadd.f32 0.0, %v1302
        %1304 = vmatprep.mubr.f32.mxu0 0.0
        %v1305 = vand.u32 %v510, 4294901760
        %v1306 = vsub.f32 %v510, %v1305
        %v1307 = vand.u32 %v1306, 4294901760
        %v1308 = vsub.f32 %v1306, %v1307
        %v1309 = vand.u32 %v1308, 4294901760
        %1310 = vmatmul.mubr.f32.gmra.mrb[0].mxu0 %v1309
        %v1311 = vpop.f32.mrb[0].mxu0
        %v1312 = vadd.f32 0.0, %v1311
        %v1313 = vpop.f32.mrb[0].mxu0
        %v1314 = vadd.f32 0.0, %v1313
        %1315 = vmatprep.mubr.f32.mxu0 0.0
        %v1316 = vand.u32 %v513, 4294901760
        %v1317 = vsub.f32 %v513, %v1316
        %v1318 = vand.u32 %v1317, 4294901760
        %v1319 = vsub.f32 %v1317, %v1318
        %v1320 = vand.u32 %v1319, 4294901760
        %1321 = vmatmul.mubr.f32.gmra.mrb[0].mxu0 %v1320
        %v1322 = vpop.f32.mrb[0].mxu0
        %v1323 = vadd.f32 0.0, %v1322
        %v1324 = vpop.f32.mrb[0].mxu0
        %v1325 = vadd.f32 0.0, %v1324
        %1326 = vmatprep.mubr.f32.mxu0 0.0
        %v1327 = vand.u32 %v516, 4294901760
        %v1328 = vsub.f32 %v516, %v1327
        %v1329 = vand.u32 %v1328, 4294901760
        %v1330 = vsub.f32 %v1328, %v1329
        %v1331 = vand.u32 %v1330, 4294901760
        %1332 = vmatmul.mubr.f32.gmra.mrb[0].mxu0 %v1331
        %v1333 = vpop.f32.mrb[0].mxu0
        %v1334 = vadd.f32 0.0, %v1333
        %v1335 = vpop.f32.mrb[0].mxu0
        %v1336 = vadd.f32 0.0, %v1335
        %1337 = vmatprep.mubr.f32.mxu0 0.0
        %v1338 = vand.u32 %v519, 4294901760
        %v1339 = vsub.f32 %v519, %v1338
        %v1340 = vand.u32 %v1339, 4294901760
        %v1341 = vsub.f32 %v1339, %v1340
        %v1342 = vand.u32 %v1341, 4294901760
        %1343 = vmatmul.mubr.f32.gmra.mrb[0].mxu0 %v1342
        %v1344 = vpop.f32.mrb[0].mxu0
        %v1345 = vadd.f32 0.0, %v1344
        %v1346 = vpop.f32.mrb[0].mxu0
        %v1347 = vadd.f32 0.0, %v1346
        %1348 = vmatprep.mubr.f32.mxu0 0.0
        %v1349 = vand.u32 %v522, 4294901760
        %v1350 = vsub.f32 %v522, %v1349
        %v1351 = vand.u32 %v1350, 4294901760
        %v1352 = vsub.f32 %v1350, %v1351
        %v1353 = vand.u32 %v1352, 4294901760
        %1354 = vmatmul.mubr.f32.gmra.mrb[0].mxu0 %v1353
        %v1355 = vpop.f32.mrb[0].mxu0
        %v1356 = vadd.f32 0.0, %v1355
        %v1357 = vpop.f32.mrb[0].mxu0
        %v1358 = vadd.f32 0.0, %v1357
        %1359 = vmatprep.mubr.f32.mxu0 0.0
        %v1360 = vand.u32 %v525, 4294901760
        %v1361 = vsub.f32 %v525, %v1360
        %v1362 = vand.u32 %v1361, 4294901760
        %v1363 = vsub.f32 %v1361, %v1362
        %v1364 = vand.u32 %v1363, 4294901760
        %1365 = vmatmul.mubr.f32.gmra.mrb[0].mxu0 %v1364
        %v1366 = vpop.f32.mrb[0].mxu0
        %v1367 = vadd.f32 0.0, %v1366
        %v1368 = vpop.f32.mrb[0].mxu0
        %v1369 = vadd.f32 0.0, %v1368
        %1370 = vmatprep.mubr.f32.mxu0 0.0
        %v1371 = vand.u32 %v528, 4294901760
        %v1372 = vsub.f32 %v528, %v1371
        %v1373 = vand.u32 %v1372, 4294901760
        %v1374 = vsub.f32 %v1372, %v1373
        %v1375 = vand.u32 %v1374, 4294901760
        %1376 = vmatmul.mubr.f32.gmra.mrb[0].mxu0 %v1375
        %v1377 = vpop.f32.mrb[0].mxu0
        %v1378 = vadd.f32 0.0, %v1377
        %v1379 = vpop.f32.mrb[0].mxu0
        %v1380 = vadd.f32 0.0, %v1379
        %1381 = vmatprep.mubr.f32.mxu0 0.0
        %v1382 = vand.u32 %v531, 4294901760
        %v1383 = vsub.f32 %v531, %v1382
        %v1384 = vand.u32 %v1383, 4294901760
        %v1385 = vsub.f32 %v1383, %v1384
        %v1386 = vand.u32 %v1385, 4294901760
        %1387 = vmatmul.mubr.f32.gmra.mrb[0].mxu0 %v1386
        %v1388 = vpop.f32.mrb[0].mxu0
        %v1389 = vadd.f32 0.0, %v1388
        %v1390 = vpop.f32.mrb[0].mxu0
        %v1391 = vadd.f32 0.0, %v1390
        %1392 = vmatprep.mubr.f32.mxu0 0.0
        %v1393 = vand.u32 %v534, 4294901760
        %v1394 = vsub.f32 %v534, %v1393
        %v1395 = vand.u32 %v1394, 4294901760
        %v1396 = vsub.f32 %v1394, %v1395
        %v1397 = vand.u32 %v1396, 4294901760
        %1398 = vmatmul.mubr.f32.gmra.mrb[0].mxu0 %v1397
        %v1399 = vpop.f32.mrb[0].mxu0
        %v1400 = vadd.f32 0.0, %v1399
        %v1401 = vpop.f32.mrb[0].mxu0
        %v1402 = vadd.f32 0.0, %v1401
        %1403 = vmatprep.mubr.f32.mxu0 0.0
        %v1404 = vand.u32 %v537, 4294901760
        %v1405 = vsub.f32 %v537, %v1404
        %v1406 = vand.u32 %v1405, 4294901760
        %v1407 = vsub.f32 %v1405, %v1406
        %v1408 = vand.u32 %v1407, 4294901760
        %1409 = vmatmul.mubr.f32.gmra.mrb[0].mxu0 %v1408
        %v1410 = vpop.f32.mrb[0].mxu0
        %v1411 = vadd.f32 0.0, %v1410
        %v1412 = vpop.f32.mrb[0].mxu0
        %v1413 = vadd.f32 0.0, %v1412
        %1414 = vmatprep.mubr.f32.mxu0 0.0
        %v1415 = vand.u32 %v540, 4294901760
        %v1416 = vsub.f32 %v540, %v1415
        %v1417 = vand.u32 %v1416, 4294901760
        %v1418 = vsub.f32 %v1416, %v1417
        %v1419 = vand.u32 %v1418, 4294901760
        %1420 = vmatmul.mubr.f32.gmra.mrb[0].mxu0 %v1419
        %v1421 = vpop.f32.mrb[0].mxu0
        %v1422 = vadd.f32 0.0, %v1421
        %v1423 = vpop.f32.mrb[0].mxu0
        %v1424 = vadd.f32 0.0, %v1423
        %1425 = vmatprep.mubr.f32.mxu0 0.0
        %v1426 = vand.u32 %v543, 4294901760
        %v1427 = vsub.f32 %v543, %v1426
        %v1428 = vand.u32 %v1427, 4294901760
        %v1429 = vsub.f32 %v1427, %v1428
        %v1430 = vand.u32 %v1429, 4294901760
        %1431 = vmatmul.mubr.f32.gmra.mrb[0].mxu0 %v1430
        %v1432 = vpop.f32.mrb[0].mxu0
        %v1433 = vadd.f32 0.0, %v1432
        %v1434 = vpop.f32.mrb[0].mxu0
        %v1435 = vadd.f32 0.0, %v1434
        %1436 = vmatprep.mubr.f32.mxu0 0.0
        %v1437 = vand.u32 %v546, 4294901760
        %v1438 = vsub.f32 %v546, %v1437
        %v1439 = vand.u32 %v1438, 4294901760
        %v1440 = vsub.f32 %v1438, %v1439
        %v1441 = vand.u32 %v1440, 4294901760
        %1442 = vmatmul.mubr.f32.gmra.mrb[0].mxu0 %v1441
        %v1443 = vpop.f32.mrb[0].mxu0
        %v1444 = vadd.f32 0.0, %v1443
        %v1445 = vpop.f32.mrb[0].mxu0
        %v1446 = vadd.f32 0.0, %v1445
        %1447 = vmatprep.mubr.f32.mxu0 0.0
        %v1448 = vand.u32 %v549, 4294901760
        %v1449 = vsub.f32 %v549, %v1448
        %v1450 = vand.u32 %v1449, 4294901760
        %v1451 = vsub.f32 %v1449, %v1450
        %v1452 = vand.u32 %v1451, 4294901760
        %1453 = vmatmul.mubr.f32.gmra.mrb[0].mxu0 %v1452
        %v1454 = vpop.f32.mrb[0].mxu0
        %v1455 = vadd.f32 0.0, %v1454
        %v1456 = vpop.f32.mrb[0].mxu0
        %v1457 = vadd.f32 0.0, %v1456
        %1458 = vmatprep.mubr.f32.mxu0 0.0
        %v1459 = vand.u32 %v552, 4294901760
        %v1460 = vsub.f32 %v552, %v1459
        %v1461 = vand.u32 %v1460, 4294901760
        %v1462 = vsub.f32 %v1460, %v1461
        %v1463 = vand.u32 %v1462, 4294901760
        %1464 = vmatmul.mubr.f32.gmra.mrb[0].mxu0 %v1463
        %v1465 = vpop.f32.mrb[0].mxu0
        %v1466 = vadd.f32 0.0, %v1465
        %v1467 = vpop.f32.mrb[0].mxu0
        %v1468 = vadd.f32 0.0, %v1467
        %1469 = vmatprep.mubr.f32.mxu0 0.0
        %v1470 = vand.u32 %v555, 4294901760
        %v1471 = vsub.f32 %v555, %v1470
        %v1472 = vand.u32 %v1471, 4294901760
        %v1473 = vsub.f32 %v1471, %v1472
        %v1474 = vand.u32 %v1473, 4294901760
        %1475 = vmatmul.mubr.f32.gmra.mrb[0].mxu0 %v1474
        %v1476 = vpop.f32.mrb[0].mxu0
        %v1477 = vadd.f32 0.0, %v1476
        %v1478 = vpop.f32.mrb[0].mxu0
        %v1479 = vadd.f32 0.0, %v1478
        %1480 = vmatprep.mubr.f32.mxu0 0.0
        %v1481 = vand.u32 %v558, 4294901760
        %v1482 = vsub.f32 %v558, %v1481
        %v1483 = vand.u32 %v1482, 4294901760
        %v1484 = vsub.f32 %v1482, %v1483
        %v1485 = vand.u32 %v1484, 4294901760
        %1486 = vmatmul.mubr.f32.gmra.mrb[0].mxu0 %v1485
        %v1487 = vpop.f32.mrb[0].mxu0
        %v1488 = vadd.f32 0.0, %v1487
        %v1489 = vpop.f32.mrb[0].mxu0
        %v1490 = vadd.f32 0.0, %v1489
        %1491 = vmatprep.mubr.f32.mxu0 0.0
        %v1492 = vand.u32 %v561, 4294901760
        %v1493 = vsub.f32 %v561, %v1492
        %v1494 = vand.u32 %v1493, 4294901760
        %v1495 = vsub.f32 %v1493, %v1494
        %v1496 = vand.u32 %v1495, 4294901760
        %1497 = vmatmul.mubr.f32.gmra.mrb[0].mxu0 %v1496
        %v1498 = vpop.f32.mrb[0].mxu0
        %v1499 = vadd.f32 0.0, %v1498
        %v1500 = vpop.f32.mrb[0].mxu0
        %v1501 = vadd.f32 0.0, %v1500
        %1502 = vmatprep.mubr.f32.mxu0 0.0
        %v1503 = vand.u32 %v564, 4294901760
        %v1504 = vsub.f32 %v564, %v1503
        %v1505 = vand.u32 %v1504, 4294901760
        %v1506 = vsub.f32 %v1504, %v1505
        %v1507 = vand.u32 %v1506, 4294901760
        %1508 = vmatmul.mubr.f32.gmra.mrb[0].mxu0 %v1507
        %v1509 = vpop.f32.mrb[0].mxu0
        %v1510 = vadd.f32 0.0, %v1509
        %v1511 = vpop.f32.mrb[0].mxu0
        %v1512 = vadd.f32 0.0, %v1511
        %1513 = vmatprep.mubr.f32.mxu0 0.0
        %v1514 = vand.u32 %v567, 4294901760
        %v1515 = vsub.f32 %v567, %v1514
        %v1516 = vand.u32 %v1515, 4294901760
        %v1517 = vsub.f32 %v1515, %v1516
        %v1518 = vand.u32 %v1517, 4294901760
        %1519 = vmatmul.mubr.f32.gmra.mrb[0].mxu0 %v1518
        %v1520 = vpop.f32.mrb[0].mxu0
        %v1521 = vadd.f32 0.0, %v1520
        %v1522 = vpop.f32.mrb[0].mxu0
        %v1523 = vadd.f32 0.0, %v1522
        %1524 = vmatprep.mubr.f32.mxu0 0.0
        %v1525 = vand.u32 %v570, 4294901760
        %v1526 = vsub.f32 %v570, %v1525
        %v1527 = vand.u32 %v1526, 4294901760
        %v1528 = vsub.f32 %v1526, %v1527
        %v1529 = vand.u32 %v1528, 4294901760
        %1530 = vmatmul.mubr.f32.gmra.mrb[0].mxu0 %v1529
        %v1531 = vpop.f32.mrb[0].mxu0
        %v1532 = vadd.f32 0.0, %v1531
        %v1533 = vpop.f32.mrb[0].mxu0
        %v1534 = vadd.f32 0.0, %v1533
        %1535 = vmatprep.mubr.f32.mxu0 0.0
        %v1536 = vand.u32 %v573, 4294901760
        %v1537 = vsub.f32 %v573, %v1536
        %v1538 = vand.u32 %v1537, 4294901760
        %v1539 = vsub.f32 %v1537, %v1538
        %v1540 = vand.u32 %v1539, 4294901760
        %1541 = vmatmul.mubr.f32.gmra.mrb[0].mxu0 %v1540
        %v1542 = vpop.f32.mrb[0].mxu0
        %v1543 = vadd.f32 0.0, %v1542
        %v1544 = vpop.f32.mrb[0].mxu0
        %v1545 = vadd.f32 0.0, %v1544
        %1546 = vmatprep.mubr.f32.mxu0 0.0
        %v1547 = vand.u32 %v576, 4294901760
        %v1548 = vsub.f32 %v576, %v1547
        %v1549 = vand.u32 %v1548, 4294901760
        %v1550 = vsub.f32 %v1548, %v1549
        %v1551 = vand.u32 %v1550, 4294901760
        %1552 = vmatmul.mubr.f32.gmra.mrb[0].mxu0 %v1551
        %v1553 = vpop.f32.mrb[0].mxu0
        %v1554 = vadd.f32 0.0, %v1553
        %v1555 = vpop.f32.mrb[0].mxu0
        %v1556 = vadd.f32 0.0, %v1555
        %1557 = vmatprep.mubr.f32.mxu0 0.0
        %v1558 = vand.u32 %v579, 4294901760
        %v1559 = vsub.f32 %v579, %v1558
        %v1560 = vand.u32 %v1559, 4294901760
        %v1561 = vsub.f32 %v1559, %v1560
        %v1562 = vand.u32 %v1561, 4294901760
        %1563 = vmatmul.mubr.f32.gmra.mrb[0].mxu0 %v1562
        %v1564 = vpop.f32.mrb[0].mxu0
        %v1565 = vadd.f32 0.0, %v1564
        %v1566 = vpop.f32.mrb[0].mxu0
        %v1567 = vadd.f32 0.0, %v1566
        %1568 = vmatprep.mubr.f32.mxu0 0.0
        %v1569 = vand.u32 %v582, 4294901760
        %v1570 = vsub.f32 %v582, %v1569
        %v1571 = vand.u32 %v1570, 4294901760
        %v1572 = vsub.f32 %v1570, %v1571
        %v1573 = vand.u32 %v1572, 4294901760
        %1574 = vmatmul.mubr.f32.gmra.mrb[0].mxu0 %v1573
        %v1575 = vpop.f32.mrb[0].mxu0
        %v1576 = vadd.f32 0.0, %v1575
        %v1577 = vpop.f32.mrb[0].mxu0
        %v1578 = vadd.f32 0.0, %v1577
        %1579 = vmatprep.mubr.f32.mxu0 0.0
        %v1580 = vand.u32 %v585, 4294901760
        %v1581 = vsub.f32 %v585, %v1580
        %v1582 = vand.u32 %v1581, 4294901760
        %v1583 = vsub.f32 %v1581, %v1582
        %v1584 = vand.u32 %v1583, 4294901760
        %1585 = vmatmul.mubr.f32.gmra.mrb[0].mxu0 %v1584
        %v1586 = vpop.f32.mrb[0].mxu0
        %v1587 = vadd.f32 0.0, %v1586
        %v1588 = vpop.f32.mrb[0].mxu0
        %v1589 = vadd.f32 0.0, %v1588
        %1590 = vmatprep.mubr.f32.mxu0 0.0
        %v1591 = vand.u32 %v588, 4294901760
        %v1592 = vsub.f32 %v588, %v1591
        %v1593 = vand.u32 %v1592, 4294901760
        %v1594 = vsub.f32 %v1592, %v1593
        %v1595 = vand.u32 %v1594, 4294901760
        %1596 = vmatmul.mubr.f32.gmra.mrb[0].mxu0 %v1595
        %v1597 = vpop.f32.mrb[0].mxu0
        %v1598 = vadd.f32 0.0, %v1597
        %v1599 = vpop.f32.mrb[0].mxu0
        %v1600 = vadd.f32 0.0, %v1599
        %1601 = vmatprep.mubr.f32.mxu0 0.0
        %v1602 = vand.u32 %v591, 4294901760
        %v1603 = vsub.f32 %v591, %v1602
        %v1604 = vand.u32 %v1603, 4294901760
        %v1605 = vsub.f32 %v1603, %v1604
        %v1606 = vand.u32 %v1605, 4294901760
        %1607 = vmatmul.mubr.f32.gmra.mrb[0].mxu0 %v1606
        %v1608 = vpop.f32.mrb[0].mxu0
        %v1609 = vadd.f32 0.0, %v1608
        %v1610 = vpop.f32.mrb[0].mxu0
        %v1611 = vadd.f32 0.0, %v1610
        %1612 = vmatprep.mubr.f32.mxu0 0.0
        %v1613 = vand.u32 %v594, 4294901760
        %v1614 = vsub.f32 %v594, %v1613
        %v1615 = vand.u32 %v1614, 4294901760
        %v1616 = vsub.f32 %v1614, %v1615
        %v1617 = vand.u32 %v1616, 4294901760
        %1618 = vmatmul.mubr.f32.gmra.mrb[0].mxu0 %v1617
        %v1619 = vpop.f32.mrb[0].mxu0
        %v1620 = vadd.f32 0.0, %v1619
        %v1621 = vpop.f32.mrb[0].mxu0
        %v1622 = vadd.f32 0.0, %v1621
        %1623 = vmatprep.mubr.f32.mxu0 0.0
        %v1624 = vand.u32 %v597, 4294901760
        %v1625 = vsub.f32 %v597, %v1624
        %v1626 = vand.u32 %v1625, 4294901760
        %v1627 = vsub.f32 %v1625, %v1626
        %v1628 = vand.u32 %v1627, 4294901760
        %1629 = vmatmul.mubr.f32.gmra.mrb[0].mxu0 %v1628
        %v1630 = vpop.f32.mrb[0].mxu0
        %v1631 = vadd.f32 0.0, %v1630
        %v1632 = vpop.f32.mrb[0].mxu0
        %v1633 = vadd.f32 0.0, %v1632
        %1634 = vmatprep.mubr.f32.mxu0 0.0
        %v1635 = vand.u32 %v600, 4294901760
        %v1636 = vsub.f32 %v600, %v1635
        %v1637 = vand.u32 %v1636, 4294901760
        %v1638 = vsub.f32 %v1636, %v1637
        %v1639 = vand.u32 %v1638, 4294901760
        %1640 = vmatmul.mubr.f32.gmra.mrb[0].mxu0 %v1639
        %v1641 = vpop.f32.mrb[0].mxu0
        %v1642 = vadd.f32 0.0, %v1641
        %v1643 = vpop.f32.mrb[0].mxu0
        %v1644 = vadd.f32 0.0, %v1643
        %1645 = vmatprep.mubr.f32.mxu0 0.0
        %v1646 = vand.u32 %v603, 4294901760
        %v1647 = vsub.f32 %v603, %v1646
        %v1648 = vand.u32 %v1647, 4294901760
        %v1649 = vsub.f32 %v1647, %v1648
        %v1650 = vand.u32 %v1649, 4294901760
        %1651 = vmatmul.mubr.f32.gmra.mrb[0].mxu0 %v1650
        %v1652 = vpop.f32.mrb[0].mxu0
        %v1653 = vadd.f32 0.0, %v1652
        %v1654 = vpop.f32.mrb[0].mxu0
        %v1655 = vadd.f32 0.0, %v1654
        %1656 = vmatprep.mubr.f32.mxu0 0.0
        %v1657 = vand.u32 %v606, 4294901760
        %v1658 = vsub.f32 %v606, %v1657
        %v1659 = vand.u32 %v1658, 4294901760
        %v1660 = vsub.f32 %v1658, %v1659
        %v1661 = vand.u32 %v1660, 4294901760
        %1662 = vmatmul.mubr.f32.gmra.mrb[0].mxu0 %v1661
        %v1663 = vpop.f32.mrb[0].mxu0
        %v1664 = vadd.f32 0.0, %v1663
        %v1665 = vpop.f32.mrb[0].mxu0
        %v1666 = vadd.f32 0.0, %v1665
        %1667 = vmatprep.mubr.f32.mxu0 0.0
        %v1668 = vand.u32 %v609, 4294901760
        %v1669 = vsub.f32 %v609, %v1668
        %v1670 = vand.u32 %v1669, 4294901760
        %v1671 = vsub.f32 %v1669, %v1670
        %v1672 = vand.u32 %v1671, 4294901760
        %1673 = vmatmul.mubr.f32.gmra.mrb[0].mxu0 %v1672
        %v1674 = vpop.f32.mrb[0].mxu0
        %v1675 = vadd.f32 0.0, %v1674
        %v1676 = vpop.f32.mrb[0].mxu0
        %v1677 = vadd.f32 0.0, %v1676
        %1678 = vmatprep.mubr.f32.mxu0 0.0
        %v1679 = vand.u32 %v612, 4294901760
        %v1680 = vsub.f32 %v612, %v1679
        %v1681 = vand.u32 %v1680, 4294901760
        %v1682 = vsub.f32 %v1680, %v1681
        %v1683 = vand.u32 %v1682, 4294901760
        %1684 = vmatmul.mubr.f32.gmra.mrb[0].mxu0 %v1683
        %v1685 = vpop.f32.mrb[0].mxu0
        %v1686 = vadd.f32 0.0, %v1685
        %v1687 = vpop.f32.mrb[0].mxu0
        %v1688 = vadd.f32 0.0, %v1687
        %1689 = vmatprep.mubr.f32.mxu0 0.0
        %v1690 = vand.u32 %v615, 4294901760
        %v1691 = vsub.f32 %v615, %v1690
        %v1692 = vand.u32 %v1691, 4294901760
        %v1693 = vsub.f32 %v1691, %v1692
        %v1694 = vand.u32 %v1693, 4294901760
        %1695 = vmatmul.mubr.f32.gmra.mrb[0].mxu0 %v1694
        %v1696 = vpop.f32.mrb[0].mxu0
        %v1697 = vadd.f32 0.0, %v1696
        %v1698 = vpop.f32.mrb[0].mxu0
        %v1699 = vadd.f32 0.0, %v1698
        %1700 = vmatprep.mubr.f32.mxu0 0.0
        %v1701 = vand.u32 %v618, 4294901760
        %v1702 = vsub.f32 %v618, %v1701
        %v1703 = vand.u32 %v1702, 4294901760
        %v1704 = vsub.f32 %v1702, %v1703
        %v1705 = vand.u32 %v1704, 4294901760
        %1706 = vmatmul.mubr.f32.gmra.mrb[0].mxu0 %v1705
        %v1707 = vpop.f32.mrb[0].mxu0
        %v1708 = vadd.f32 0.0, %v1707
        %v1709 = vpop.f32.mrb[0].mxu0
        %v1710 = vadd.f32 0.0, %v1709
        %1711 = vmatprep.mubr.f32.mxu0 0.0
        %v1712 = vand.u32 %v621, 4294901760
        %v1713 = vsub.f32 %v621, %v1712
        %v1714 = vand.u32 %v1713, 4294901760
        %v1715 = vsub.f32 %v1713, %v1714
        %v1716 = vand.u32 %v1715, 4294901760
        %1717 = vmatmul.mubr.f32.gmra.mrb[0].mxu0 %v1716
        %v1718 = vpop.f32.mrb[0].mxu0
        %v1719 = vadd.f32 0.0, %v1718
        %v1720 = vpop.f32.mrb[0].mxu0
        %v1721 = vadd.f32 0.0, %v1720
        %1722 = vmatprep.mubr.f32.mxu0 0.0
        %v1723 = vand.u32 %v624, 4294901760
        %v1724 = vsub.f32 %v624, %v1723
        %v1725 = vand.u32 %v1724, 4294901760
        %v1726 = vsub.f32 %v1724, %v1725
        %v1727 = vand.u32 %v1726, 4294901760
        %1728 = vmatmul.mubr.f32.gmra.mrb[0].mxu0 %v1727
        %v1729 = vpop.f32.mrb[0].mxu0
        %v1730 = vadd.f32 0.0, %v1729
        %v1731 = vpop.f32.mrb[0].mxu0
        %v1732 = vadd.f32 0.0, %v1731
        %1733 = vmatprep.mubr.f32.mxu0 0.0
        %v1734 = vand.u32 %v627, 4294901760
        %v1735 = vsub.f32 %v627, %v1734
        %v1736 = vand.u32 %v1735, 4294901760
        %v1737 = vsub.f32 %v1735, %v1736
        %v1738 = vand.u32 %v1737, 4294901760
        %1739 = vmatmul.mubr.f32.gmra.mrb[0].mxu0 %v1738
        %v1740 = vpop.f32.mrb[0].mxu0
        %v1741 = vadd.f32 0.0, %v1740
        %v1742 = vpop.f32.mrb[0].mxu0
        %v1743 = vadd.f32 0.0, %v1742
        %1744 = vmatprep.mubr.f32.mxu0 0.0
        %v1745 = vand.u32 %v630, 4294901760
        %v1746 = vsub.f32 %v630, %v1745
        %v1747 = vand.u32 %v1746, 4294901760
        %v1748 = vsub.f32 %v1746, %v1747
        %v1749 = vand.u32 %v1748, 4294901760
        %1750 = vmatmul.mubr.f32.gmra.mrb[0].mxu0 %v1749
        %v1751 = vpop.f32.mrb[0].mxu0
        %v1752 = vadd.f32 0.0, %v1751
        %v1753 = vpop.f32.mrb[0].mxu0
        %v1754 = vadd.f32 0.0, %v1753
        %1755 = vmatprep.mubr.f32.mxu0 0.0
        %v1756 = vand.u32 %v633, 4294901760
        %v1757 = vsub.f32 %v633, %v1756
        %v1758 = vand.u32 %v1757, 4294901760
        %v1759 = vsub.f32 %v1757, %v1758
        %v1760 = vand.u32 %v1759, 4294901760
        %1761 = vmatmul.mubr.f32.gmra.mrb[0].mxu0 %v1760
        %v1762 = vpop.f32.mrb[0].mxu0
        %v1763 = vadd.f32 0.0, %v1762
        %v1764 = vpop.f32.mrb[0].mxu0
        %v1765 = vadd.f32 0.0, %v1764
        %1766 = vmatprep.mubr.f32.mxu0 0.0
        %v1767 = vand.u32 %v636, 4294901760
        %v1768 = vsub.f32 %v636, %v1767
        %v1769 = vand.u32 %v1768, 4294901760
        %v1770 = vsub.f32 %v1768, %v1769
        %v1771 = vand.u32 %v1770, 4294901760
        %1772 = vmatmul.mubr.f32.gmra.mrb[0].mxu0 %v1771
        %v1773 = vpop.f32.mrb[0].mxu0
        %v1774 = vadd.f32 0.0, %v1773
        %v1775 = vpop.f32.mrb[0].mxu0
        %v1776 = vadd.f32 0.0, %v1775
        %1777 = vmatprep.mubr.f32.mxu0 0.0
        %v1778 = vand.u32 %v639, 4294901760
        %v1779 = vsub.f32 %v639, %v1778
        %v1780 = vand.u32 %v1779, 4294901760
        %v1781 = vsub.f32 %v1779, %v1780
        %v1782 = vand.u32 %v1781, 4294901760
        %1783 = vmatmul.mubr.f32.gmra.mrb[0].mxu0 %v1782
        %v1784 = vpop.f32.mrb[0].mxu0
        %v1785 = vadd.f32 0.0, %v1784
        %v1786 = vpop.f32.mrb[0].mxu0
        %v1787 = vadd.f32 0.0, %v1786
        %1788 = vmatprep.mubr.f32.mxu0 0.0
        %v1789 = vand.u32 %v642, 4294901760
        %v1790 = vsub.f32 %v642, %v1789
        %v1791 = vand.u32 %v1790, 4294901760
        %v1792 = vsub.f32 %v1790, %v1791
        %v1793 = vand.u32 %v1792, 4294901760
        %1794 = vmatmul.mubr.f32.gmra.mrb[0].mxu0 %v1793
        %v1795 = vpop.f32.mrb[0].mxu0
        %v1796 = vadd.f32 0.0, %v1795
        %v1797 = vpop.f32.mrb[0].mxu0
        %v1798 = vadd.f32 0.0, %v1797
        %1799 = vmatprep.mubr.f32.mxu0 0.0
        %v1800 = vand.u32 %v645, 4294901760
        %v1801 = vsub.f32 %v645, %v1800
        %v1802 = vand.u32 %v1801, 4294901760
        %v1803 = vsub.f32 %v1801, %v1802
        %v1804 = vand.u32 %v1803, 4294901760
        %1805 = vmatmul.mubr.f32.gmra.mrb[0].mxu0 %v1804
        %v1806 = vpop.f32.mrb[0].mxu0
        %v1807 = vadd.f32 0.0, %v1806
        %v1808 = vpop.f32.mrb[0].mxu0
        %v1809 = vadd.f32 0.0, %v1808
        %1810 = vmatprep.mubr.f32.mxu0 0.0
        %v1811 = vand.u32 %v648, 4294901760
        %v1812 = vsub.f32 %v648, %v1811
        %v1813 = vand.u32 %v1812, 4294901760
        %v1814 = vsub.f32 %v1812, %v1813
        %v1815 = vand.u32 %v1814, 4294901760
        %1816 = vmatmul.mubr.f32.gmra.mrb[0].mxu0 %v1815
        %v1817 = vpop.f32.mrb[0].mxu0
        %v1818 = vadd.f32 0.0, %v1817
        %v1819 = vpop.f32.mrb[0].mxu0
        %v1820 = vadd.f32 0.0, %v1819
        %1821 = vmatprep.mubr.f32.mxu0 0.0
        %v1822 = vand.u32 %v651, 4294901760
        %v1823 = vsub.f32 %v651, %v1822
        %v1824 = vand.u32 %v1823, 4294901760
        %v1825 = vsub.f32 %v1823, %v1824
        %v1826 = vand.u32 %v1825, 4294901760
        %1827 = vmatmul.mubr.f32.gmra.mrb[0].mxu0 %v1826
        %v1828 = vpop.f32.mrb[0].mxu0
        %v1829 = vadd.f32 0.0, %v1828
        %v1830 = vpop.f32.mrb[0].mxu0
        %v1831 = vadd.f32 0.0, %v1830
        %1832 = vmatprep.mubr.f32.mxu0 0.0
        %v1833 = vand.u32 %v654, 4294901760
        %v1834 = vsub.f32 %v654, %v1833
        %v1835 = vand.u32 %v1834, 4294901760
        %v1836 = vsub.f32 %v1834, %v1835
        %v1837 = vand.u32 %v1836, 4294901760
        %1838 = vmatmul.mubr.f32.gmra.mrb[0].mxu0 %v1837
        %v1839 = vpop.f32.mrb[0].mxu0
        %v1840 = vadd.f32 0.0, %v1839
        %v1841 = vpop.f32.mrb[0].mxu0
        %v1842 = vadd.f32 0.0, %v1841
        %1843 = vmatprep.mubr.f32.mxu0 0.0
        %v1844 = vand.u32 %v657, 4294901760
        %v1845 = vsub.f32 %v657, %v1844
        %v1846 = vand.u32 %v1845, 4294901760
        %v1847 = vsub.f32 %v1845, %v1846
        %v1848 = vand.u32 %v1847, 4294901760
        %1849 = vmatmul.mubr.f32.gmra.mrb[0].mxu0 %v1848
        %v1850 = vpop.f32.mrb[0].mxu0
        %v1851 = vadd.f32 0.0, %v1850
        %v1852 = vpop.f32.mrb[0].mxu0
        %v1853 = vadd.f32 0.0, %v1852
        %1854 = vmatprep.mubr.f32.mxu0 0.0
        %v1855 = vand.u32 %v660, 4294901760
        %v1856 = vsub.f32 %v660, %v1855
        %v1857 = vand.u32 %v1856, 4294901760
        %v1858 = vsub.f32 %v1856, %v1857
        %v1859 = vand.u32 %v1858, 4294901760
        %1860 = vmatmul.mubr.f32.gmra.mrb[0].mxu0 %v1859
        %v1861 = vpop.f32.mrb[0].mxu0
        %v1862 = vadd.f32 0.0, %v1861
        %v1863 = vpop.f32.mrb[0].mxu0
        %v1864 = vadd.f32 0.0, %v1863
        %1865 = vmatprep.mubr.f32.mxu0 0.0
        %v1866 = vand.u32 %v663, 4294901760
        %v1867 = vsub.f32 %v663, %v1866
        %v1868 = vand.u32 %v1867, 4294901760
        %v1869 = vsub.f32 %v1867, %v1868
        %v1870 = vand.u32 %v1869, 4294901760
        %1871 = vmatmul.mubr.f32.gmra.mrb[0].mxu0 %v1870
        %v1872 = vpop.f32.mrb[0].mxu0
        %v1873 = vadd.f32 0.0, %v1872
        %v1874 = vpop.f32.mrb[0].mxu0
        %v1875 = vadd.f32 0.0, %v1874
        %1876 = vmatprep.mubr.f32.mxu0 0.0
        %v1877 = vand.u32 %v666, 4294901760
        %v1878 = vsub.f32 %v666, %v1877
        %v1879 = vand.u32 %v1878, 4294901760
        %v1880 = vsub.f32 %v1878, %v1879
        %v1881 = vand.u32 %v1880, 4294901760
        %1882 = vmatmul.mubr.f32.gmra.mrb[0].mxu0 %v1881
        %v1883 = vpop.f32.mrb[0].mxu0
        %v1884 = vadd.f32 0.0, %v1883
        %v1885 = vpop.f32.mrb[0].mxu0
        %v1886 = vadd.f32 0.0, %v1885
        %1887 = vmatprep.mubr.f32.mxu0 0.0
        %v1888 = vand.u32 %v669, 4294901760
        %v1889 = vsub.f32 %v669, %v1888
        %v1890 = vand.u32 %v1889, 4294901760
        %v1891 = vsub.f32 %v1889, %v1890
        %v1892 = vand.u32 %v1891, 4294901760
        %1893 = vmatmul.mubr.f32.gmra.mrb[0].mxu0 %v1892
        %v1894 = vpop.f32.mrb[0].mxu0
        %v1895 = vadd.f32 0.0, %v1894
        %v1896 = vpop.f32.mrb[0].mxu0
        %v1897 = vadd.f32 0.0, %v1896
        %1898 = vmatprep.mubr.f32.mxu0 0.0
        %v1899 = vand.u32 %v672, 4294901760
        %v1900 = vsub.f32 %v672, %v1899
        %v1901 = vand.u32 %v1900, 4294901760
        %v1902 = vsub.f32 %v1900, %v1901
        %v1903 = vand.u32 %v1902, 4294901760
        %1904 = vmatmul.mubr.f32.gmra.mrb[0].mxu0 %v1903
        %v1905 = vpop.f32.mrb[0].mxu0
        %v1906 = vadd.f32 0.0, %v1905
        %v1907 = vpop.f32.mrb[0].mxu0
        %v1908 = vadd.f32 0.0, %v1907
        %1909 = vmatprep.mubr.f32.mxu0 0.0
        %v1910 = vand.u32 %v675, 4294901760
        %v1911 = vsub.f32 %v675, %v1910
        %v1912 = vand.u32 %v1911, 4294901760
        %v1913 = vsub.f32 %v1911, %v1912
        %v1914 = vand.u32 %v1913, 4294901760
        %1915 = vmatmul.mubr.f32.gmra.mrb[0].mxu0 %v1914
        %v1916 = vpop.f32.mrb[0].mxu0
        %v1917 = vadd.f32 0.0, %v1916
        %v1918 = vpop.f32.mrb[0].mxu0
        %v1919 = vadd.f32 0.0, %v1918
        %1920 = vmatprep.mubr.f32.mxu0 0.0
        %v1921 = vand.u32 %v678, 4294901760
        %v1922 = vsub.f32 %v678, %v1921
        %v1923 = vand.u32 %v1922, 4294901760
        %v1924 = vsub.f32 %v1922, %v1923
        %v1925 = vand.u32 %v1924, 4294901760
        %1926 = vmatmul.mubr.f32.gmra.mrb[0].mxu0 %v1925
        %v1927 = vpop.f32.mrb[0].mxu0
        %v1928 = vadd.f32 0.0, %v1927
        %v1929 = vpop.f32.mrb[0].mxu0
        %v1930 = vadd.f32 0.0, %v1929
        %1931 = vmatprep.mubr.f32.mxu0 0.0
        %v1932 = vand.u32 %v681, 4294901760
        %v1933 = vsub.f32 %v681, %v1932
        %v1934 = vand.u32 %v1933, 4294901760
        %v1935 = vsub.f32 %v1933, %v1934
        %v1936 = vand.u32 %v1935, 4294901760
        %1937 = vmatmul.mubr.f32.gmra.mrb[0].mxu0 %v1936
        %v1938 = vpop.f32.mrb[0].mxu0
        %v1939 = vadd.f32 0.0, %v1938
        %v1940 = vpop.f32.mrb[0].mxu0
        %v1941 = vadd.f32 0.0, %v1940
        %1942 = vmatprep.mubr.f32.mxu0 0.0
        %v1943 = vand.u32 %v684, 4294901760
        %v1944 = vsub.f32 %v684, %v1943
        %v1945 = vand.u32 %v1944, 4294901760
        %v1946 = vsub.f32 %v1944, %v1945
        %v1947 = vand.u32 %v1946, 4294901760
        %1948 = vmatmul.mubr.f32.gmra.mrb[0].mxu0 %v1947
        %v1949 = vpop.f32.mrb[0].mxu0
        %v1950 = vadd.f32 0.0, %v1949
        %v1951 = vpop.f32.mrb[0].mxu0
        %v1952 = vadd.f32 0.0, %v1951
        %1953 = vmatprep.mubr.f32.mxu0 0.0
        %v1954 = vand.u32 %v687, 4294901760
        %v1955 = vsub.f32 %v687, %v1954
        %v1956 = vand.u32 %v1955, 4294901760
        %v1957 = vsub.f32 %v1955, %v1956
        %v1958 = vand.u32 %v1957, 4294901760
        %1959 = vmatmul.mubr.f32.gmra.mrb[0].mxu0 %v1958
        %v1960 = vpop.f32.mrb[0].mxu0
        %v1961 = vadd.f32 0.0, %v1960
        %v1962 = vpop.f32.mrb[0].mxu0
        %v1963 = vadd.f32 0.0, %v1962
        %1964 = vmatprep.mubr.f32.mxu0 0.0
        %v1965 = vand.u32 %v690, 4294901760
        %v1966 = vsub.f32 %v690, %v1965
        %v1967 = vand.u32 %v1966, 4294901760
        %v1968 = vsub.f32 %v1966, %v1967
        %v1969 = vand.u32 %v1968, 4294901760
        %1970 = vmatmul.mubr.f32.gmra.mrb[0].mxu0 %v1969
        %v1971 = vpop.f32.mrb[0].mxu0
        %v1972 = vadd.f32 0.0, %v1971
        %v1973 = vpop.f32.mrb[0].mxu0
        %v1974 = vadd.f32 0.0, %v1973
        %1975 = vmatprep.mubr.f32.mxu0 0.0
        %v1976 = vand.u32 %v693, 4294901760
        %v1977 = vsub.f32 %v693, %v1976
        %v1978 = vand.u32 %v1977, 4294901760
        %v1979 = vsub.f32 %v1977, %v1978
        %v1980 = vand.u32 %v1979, 4294901760
        %1981 = vmatmul.mubr.f32.gmra.mrb[0].mxu0 %v1980
        %v1982 = vpop.f32.mrb[0].mxu0
        %v1983 = vadd.f32 0.0, %v1982
        %v1984 = vpop.f32.mrb[0].mxu0
        %v1985 = vadd.f32 0.0, %v1984
        %1986 = vmatprep.mubr.f32.mxu0 0.0
        %v1987 = vand.u32 %v696, 4294901760
        %v1988 = vsub.f32 %v696, %v1987
        %v1989 = vand.u32 %v1988, 4294901760
        %v1990 = vsub.f32 %v1988, %v1989
        %v1991 = vand.u32 %v1990, 4294901760
        %1992 = vmatmul.mubr.f32.gmra.mrb[0].mxu0 %v1991
        %v1993 = vpop.f32.mrb[0].mxu0
        %v1994 = vadd.f32 0.0, %v1993
        %v1995 = vpop.f32.mrb[0].mxu0
        %v1996 = vadd.f32 0.0, %v1995
        %1997 = vmatprep.mubr.f32.mxu0 0.0
        %v1998 = vand.u32 %v699, 4294901760
        %v1999 = vsub.f32 %v699, %v1998
        %v2000 = vand.u32 %v1999, 4294901760
        %v2001 = vsub.f32 %v1999, %v2000
        %v2002 = vand.u32 %v2001, 4294901760
        %2003 = vmatmul.mubr.f32.gmra.mrb[0].mxu0 %v2002
        %v2004 = vpop.f32.mrb[0].mxu0
        %v2005 = vadd.f32 0.0, %v2004
        %v2006 = vpop.f32.mrb[0].mxu0
        %v2007 = vadd.f32 0.0, %v2006
        %2008 = vmatprep.mubr.f32.mxu0 0.0
        %v2009 = vand.u32 %v702, 4294901760
        %v2010 = vsub.f32 %v702, %v2009
        %v2011 = vand.u32 %v2010, 4294901760
        %v2012 = vsub.f32 %v2010, %v2011
        %v2013 = vand.u32 %v2012, 4294901760
        %2014 = vmatmul.mubr.f32.gmra.mrb[0].mxu0 %v2013
        %v2015 = vpop.f32.mrb[0].mxu0
        %v2016 = vadd.f32 0.0, %v2015
        %v2017 = vpop.f32.mrb[0].mxu0
        %v2018 = vadd.f32 0.0, %v2017
        %2019 = vmatprep.mubr.f32.mxu0 0.0
        %v2020 = vand.u32 %v705, 4294901760
        %v2021 = vsub.f32 %v705, %v2020
        %v2022 = vand.u32 %v2021, 4294901760
        %v2023 = vsub.f32 %v2021, %v2022
        %v2024 = vand.u32 %v2023, 4294901760
        %2025 = vmatmul.mubr.f32.gmra.mrb[0].mxu0 %v2024
        %v2026 = vpop.f32.mrb[0].mxu0
        %v2027 = vadd.f32 0.0, %v2026
        %v2028 = vpop.f32.mrb[0].mxu0
        %v2029 = vadd.f32 0.0, %v2028
        %2030 = vmatprep.mubr.f32.mxu0 0.0
        %v2031 = vand.u32 %v708, 4294901760
        %v2032 = vsub.f32 %v708, %v2031
        %v2033 = vand.u32 %v2032, 4294901760
        %v2034 = vsub.f32 %v2032, %v2033
        %v2035 = vand.u32 %v2034, 4294901760
        %2036 = vmatmul.mubr.f32.gmra.mrb[0].mxu0 %v2035
        %v2037 = vpop.f32.mrb[0].mxu0
        %v2038 = vadd.f32 0.0, %v2037
        %v2039 = vpop.f32.mrb[0].mxu0
        %v2040 = vadd.f32 0.0, %v2039
        %2041 = vmatprep.mubr.f32.mxu0 0.0
        %v2042 = vand.u32 %v711, 4294901760
        %v2043 = vsub.f32 %v711, %v2042
        %v2044 = vand.u32 %v2043, 4294901760
        %v2045 = vsub.f32 %v2043, %v2044
        %v2046 = vand.u32 %v2045, 4294901760
        %2047 = vmatmul.mubr.f32.gmra.mrb[0].mxu0 %v2046
        %v2048 = vpop.f32.mrb[0].mxu0
        %v2049 = vadd.f32 0.0, %v2048
        %v2050 = vpop.f32.mrb[0].mxu0
        %v2051 = vadd.f32 0.0, %v2050
        %2052 = vmatprep.mubr.f32.mxu0 0.0
        %v2053 = vand.u32 %v714, 4294901760
        %v2054 = vsub.f32 %v714, %v2053
        %v2055 = vand.u32 %v2054, 4294901760
        %v2056 = vsub.f32 %v2054, %v2055
        %v2057 = vand.u32 %v2056, 4294901760
        %2058 = vmatmul.mubr.f32.gmra.mrb[0].mxu0 %v2057
        %v2059 = vpop.f32.mrb[0].mxu0
        %v2060 = vadd.f32 0.0, %v2059
        %v2061 = vpop.f32.mrb[0].mxu0
        %v2062 = vadd.f32 0.0, %v2061
        %2063 = vmatprep.mubr.f32.mxu0 0.0
        %v2064 = vand.u32 %v717, 4294901760
        %v2065 = vsub.f32 %v717, %v2064
        %v2066 = vand.u32 %v2065, 4294901760
        %v2067 = vsub.f32 %v2065, %v2066
        %v2068 = vand.u32 %v2067, 4294901760
        %2069 = vmatmul.mubr.f32.gmra.mrb[0].mxu0 %v2068
        %v2070 = vpop.f32.mrb[0].mxu0
        %v2071 = vadd.f32 0.0, %v2070
        %v2072 = vpop.f32.mrb[0].mxu0
        %v2073 = vadd.f32 0.0, %v2072
        %2074 = vmatprep.mubr.f32.mxu0 0.0
        %v2075 = vand.u32 %v720, 4294901760
        %v2076 = vsub.f32 %v720, %v2075
        %v2077 = vand.u32 %v2076, 4294901760
        %v2078 = vsub.f32 %v2076, %v2077
        %v2079 = vand.u32 %v2078, 4294901760
        %2080 = vmatmul.mubr.f32.gmra.mrb[0].mxu0 %v2079
        %v2081 = vpop.f32.mrb[0].mxu0
        %v2082 = vadd.f32 0.0, %v2081
        %v2083 = vpop.f32.mrb[0].mxu0
        %v2084 = vadd.f32 0.0, %v2083
        %2085 = vmatprep.mubr.f32.mxu0 0.0
        %v2086 = vand.u32 %v723, 4294901760
        %v2087 = vsub.f32 %v723, %v2086
        %v2088 = vand.u32 %v2087, 4294901760
        %v2089 = vsub.f32 %v2087, %v2088
        %v2090 = vand.u32 %v2089, 4294901760
        %2091 = vmatmul.mubr.f32.gmra.mrb[0].mxu0 %v2090
        %v2092 = vpop.f32.mrb[0].mxu0
        %v2093 = vadd.f32 0.0, %v2092
        %v2094 = vpop.f32.mrb[0].mxu0
        %v2095 = vadd.f32 0.0, %v2094
        %2096 = vmatprep.mubr.f32.mxu0 0.0
        %v2097 = vand.u32 %v726, 4294901760
        %v2098 = vsub.f32 %v726, %v2097
        %v2099 = vand.u32 %v2098, 4294901760
        %v2100 = vsub.f32 %v2098, %v2099
        %v2101 = vand.u32 %v2100, 4294901760
        %2102 = vmatmul.mubr.f32.gmra.mrb[0].mxu0 %v2101
        %v2103 = vpop.f32.mrb[0].mxu0
        %v2104 = vadd.f32 0.0, %v2103
        %v2105 = vpop.f32.mrb[0].mxu0
        %v2106 = vadd.f32 0.0, %v2105
        %2107 = vmatprep.mubr.f32.mxu0 0.0
        %v2108 = vand.u32 %v729, 4294901760
        %v2109 = vsub.f32 %v729, %v2108
        %v2110 = vand.u32 %v2109, 4294901760
        %v2111 = vsub.f32 %v2109, %v2110
        %v2112 = vand.u32 %v2111, 4294901760
        %2113 = vmatmul.mubr.f32.gmra.mrb[0].mxu0 %v2112
        %v2114 = vpop.f32.mrb[0].mxu0
        %v2115 = vadd.f32 0.0, %v2114
        %v2116 = vpop.f32.mrb[0].mxu0
        %v2117 = vadd.f32 0.0, %v2116
        %2118 = vmatprep.mubr.f32.mxu0 0.0
        %v2119 = vand.u32 %v732, 4294901760
        %v2120 = vsub.f32 %v732, %v2119
        %v2121 = vand.u32 %v2120, 4294901760
        %v2122 = vsub.f32 %v2120, %v2121
        %v2123 = vand.u32 %v2122, 4294901760
        %2124 = vmatmul.mubr.f32.gmra.mrb[0].mxu0 %v2123
        %v2125 = vpop.f32.mrb[0].mxu0
        %v2126 = vadd.f32 0.0, %v2125
        %v2127 = vpop.f32.mrb[0].mxu0
        %v2128 = vadd.f32 0.0, %v2127
        %2129 = vmatprep.mubr.f32.mxu0 0.0
        %v2130 = vand.u32 %v735, 4294901760
        %v2131 = vsub.f32 %v735, %v2130
        %v2132 = vand.u32 %v2131, 4294901760
        %v2133 = vsub.f32 %v2131, %v2132
        %v2134 = vand.u32 %v2133, 4294901760
        %2135 = vmatmul.mubr.f32.gmra.mrb[0].mxu0 %v2134
        %v2136 = vpop.f32.mrb[0].mxu0
        %v2137 = vadd.f32 0.0, %v2136
        %v2138 = vpop.f32.mrb[0].mxu0
        %v2139 = vadd.f32 0.0, %v2138
        %2140 = vmatprep.mubr.f32.mxu0 0.0
        %v2141 = vand.u32 %v738, 4294901760
        %v2142 = vsub.f32 %v738, %v2141
        %v2143 = vand.u32 %v2142, 4294901760
        %v2144 = vsub.f32 %v2142, %v2143
        %v2145 = vand.u32 %v2144, 4294901760
        %2146 = vmatmul.mubr.f32.gmra.mrb[0].mxu0 %v2145
        %v2147 = vpop.f32.mrb[0].mxu0
        %v2148 = vadd.f32 0.0, %v2147
        %v2149 = vpop.f32.mrb[0].mxu0
        %v2150 = vadd.f32 0.0, %v2149
        %2151 = vmatprep.mubr.f32.mxu0 0.0
        %v2152 = vand.u32 %v741, 4294901760
        %v2153 = vsub.f32 %v741, %v2152
        %v2154 = vand.u32 %v2153, 4294901760
        %v2155 = vsub.f32 %v2153, %v2154
        %v2156 = vand.u32 %v2155, 4294901760
        %2157 = vmatmul.mubr.f32.gmra.mrb[0].mxu0 %v2156
        %v2158 = vpop.f32.mrb[0].mxu0
        %v2159 = vadd.f32 0.0, %v2158
        %v2160 = vpop.f32.mrb[0].mxu0
        %v2161 = vadd.f32 0.0, %v2160
        %2162 = vmatprep.mubr.f32.mxu0 0.0
        %v2163 = vand.u32 %v744, 4294901760
        %v2164 = vsub.f32 %v744, %v2163
        %v2165 = vand.u32 %v2164, 4294901760
        %v2166 = vsub.f32 %v2164, %v2165
        %v2167 = vand.u32 %v2166, 4294901760
        %2168 = vmatmul.mubr.f32.gmra.mrb[0].mxu0 %v2167
        %v2169 = vpop.f32.mrb[0].mxu0
        %v2170 = vadd.f32 0.0, %v2169
        %v2171 = vpop.f32.mrb[0].mxu0
        %v2172 = vadd.f32 0.0, %v2171
        %2173 = vmatprep.mubr.f32.mxu0 0.0
        %v2174 = vand.u32 %v747, 4294901760
        %v2175 = vsub.f32 %v747, %v2174
        %v2176 = vand.u32 %v2175, 4294901760
        %v2177 = vsub.f32 %v2175, %v2176
        %v2178 = vand.u32 %v2177, 4294901760
        %2179 = vmatmul.mubr.f32.gmra.mrb[0].mxu0 %v2178
        %v2180 = vpop.f32.mrb[0].mxu0
        %v2181 = vadd.f32 0.0, %v2180
        %v2182 = vpop.f32.mrb[0].mxu0
        %v2183 = vadd.f32 0.0, %v2182
        %2184 = vmatprep.mubr.f32.mxu0 0.0
        %v2185 = vand.u32 %v750, 4294901760
        %v2186 = vsub.f32 %v750, %v2185
        %v2187 = vand.u32 %v2186, 4294901760
        %v2188 = vsub.f32 %v2186, %v2187
        %v2189 = vand.u32 %v2188, 4294901760
        %2190 = vmatmul.mubr.f32.gmra.mrb[0].mxu0 %v2189
        %v2191 = vpop.f32.mrb[0].mxu0
        %v2192 = vadd.f32 0.0, %v2191
        %v2193 = vpop.f32.mrb[0].mxu0
        %v2194 = vadd.f32 0.0, %v2193
        %2195 = vmatprep.mubr.f32.mxu0 0.0
        %v2196 = vand.u32 %v753, 4294901760
        %v2197 = vsub.f32 %v753, %v2196
        %v2198 = vand.u32 %v2197, 4294901760
        %v2199 = vsub.f32 %v2197, %v2198
        %v2200 = vand.u32 %v2199, 4294901760
        %2201 = vmatmul.mubr.f32.gmra.mrb[0].mxu0 %v2200
        %v2202 = vpop.f32.mrb[0].mxu0
        %v2203 = vadd.f32 0.0, %v2202
        %v2204 = vpop.f32.mrb[0].mxu0
        %v2205 = vadd.f32 0.0, %v2204
        %2206 = vmatprep.mubr.f32.mxu0 0.0
        %v2207 = vand.u32 %v756, 4294901760
        %v2208 = vsub.f32 %v756, %v2207
        %v2209 = vand.u32 %v2208, 4294901760
        %v2210 = vsub.f32 %v2208, %v2209
        %v2211 = vand.u32 %v2210, 4294901760
        %2212 = vmatmul.mubr.f32.gmra.mrb[0].mxu0 %v2211
        %v2213 = vpop.f32.mrb[0].mxu0
        %v2214 = vadd.f32 0.0, %v2213
        %v2215 = vpop.f32.mrb[0].mxu0
        %v2216 = vadd.f32 0.0, %v2215
        %2217 = vmatprep.mubr.f32.mxu0 0.0
        %v2218 = vand.u32 %v759, 4294901760
        %v2219 = vsub.f32 %v759, %v2218
        %v2220 = vand.u32 %v2219, 4294901760
        %v2221 = vsub.f32 %v2219, %v2220
        %v2222 = vand.u32 %v2221, 4294901760
        %2223 = vmatmul.mubr.f32.gmra.mrb[0].mxu0 %v2222
        %v2224 = vpop.f32.mrb[0].mxu0
        %v2225 = vadd.f32 0.0, %v2224
        %v2226 = vpop.f32.mrb[0].mxu0
        %v2227 = vadd.f32 0.0, %v2226
        %2228 = vmatprep.mubr.f32.mxu0 0.0
        %v2229 = vand.u32 %v762, 4294901760
        %v2230 = vsub.f32 %v762, %v2229
        %v2231 = vand.u32 %v2230, 4294901760
        %v2232 = vsub.f32 %v2230, %v2231
        %v2233 = vand.u32 %v2232, 4294901760
        %2234 = vmatmul.mubr.f32.gmra.mrb[0].mxu0 %v2233
        %v2235 = vpop.f32.mrb[0].mxu0
        %v2236 = vadd.f32 0.0, %v2235
        %v2237 = vpop.f32.mrb[0].mxu0
        %v2238 = vadd.f32 0.0, %v2237
        %2239 = vmatprep.mubr.f32.mxu0 0.0
        %v2240 = vand.u32 %v765, 4294901760
        %v2241 = vsub.f32 %v765, %v2240
        %v2242 = vand.u32 %v2241, 4294901760
        %v2243 = vsub.f32 %v2241, %v2242
        %v2244 = vand.u32 %v2243, 4294901760
        %2245 = vmatmul.mubr.f32.gmra.mrb[0].mxu0 %v2244
        %v2246 = vpop.f32.mrb[0].mxu0
        %v2247 = vadd.f32 0.0, %v2246
        %v2248 = vpop.f32.mrb[0].mxu0
        %v2249 = vadd.f32 0.0, %v2248
        %2250 = vdwg.mxu0
        %v2251 = vand.u32 %v379, 4294901760
        %v2252 = vsub.f32 %v379, %v2251
        %v2253 = vand.u32 %v2252, 4294901760
        %v2254 = vsub.f32 %v2252, %v2253
        %v2255 = vand.u32 %v2254, 4294901760
        %2256 = vmatprep.subr.mxu0 %v2255
        %v2257 = vand.u32 %v378, 4294901760
        %v2258 = vsub.f32 %v378, %v2257
        %v2259 = vand.u32 %v2258, 4294901760
        %v2260 = vsub.f32 %v2258, %v2259
        %v2261 = vand.u32 %v2260, 4294901760
        %2262 = vmatpush1.msra.mxu0 %v2261
        %v2263 = vand.u32 %v772, 4294901760
        %v2264 = vsub.f32 %v772, %v2263
        %v2265 = vand.u32 %v2264, 4294901760
        %v2266 = vsub.f32 %v2264, %v2265
        %v2267 = vand.u32 %v2266, 4294901760
        %2268 = vmatprep.subr.mxu0 %v2267
        %v2269 = vand.u32 %v769, 4294901760
        %v2270 = vsub.f32 %v769, %v2269
        %v2271 = vand.u32 %v2270, 4294901760
        %v2272 = vsub.f32 %v2270, %v2271
        %v2273 = vand.u32 %v2272, 4294901760
        %2274 = vmatpush1.msra.mxu0 %v2273
        %2275 = vmatprep.subr.mxu0 0.0
        %2276 = vmatpush1.msra.mxu0 0.0
        %2277 = vmatprep.subr.mxu0 0.0
        %2278 = vmatpush1.msra.mxu0 0.0
        %2279 = vmatprep.subr.mxu0 0.0
        %2280 = vmatpush1.msra.mxu0 0.0
        %2281 = vmatprep.subr.mxu0 0.0
        %2282 = vmatpush1.msra.mxu0 0.0
        %2283 = vmatprep.subr.mxu0 0.0
        %2284 = vmatpush1.msra.mxu0 0.0
        %2285 = vmatprep.subr.mxu0 0.0
        %2286 = vmatpush1.msra.mxu0 0.0
        %2287 = vmatprep.subr.mxu0 0.0
        %2288 = vmatpush1.msra.mxu0 0.0
        %2289 = vmatprep.subr.mxu0 0.0
        %2290 = vmatpush1.msra.mxu0 0.0
        %2291 = vmatprep.subr.mxu0 0.0
        %2292 = vmatpush1.msra.mxu0 0.0
        %2293 = vmatprep.subr.mxu0 0.0
        %2294 = vmatpush1.msra.mxu0 0.0
        %2295 = vmatprep.subr.mxu0 0.0
        %2296 = vmatpush1.msra.mxu0 0.0
        %2297 = vmatprep.subr.mxu0 0.0
        %2298 = vmatpush1.msra.mxu0 0.0
        %2299 = vmatprep.subr.mxu0 0.0
        %2300 = vmatpush1.msra.mxu0 0.0
        %2301 = vmatprep.subr.mxu0 0.0
        %2302 = vmatpush1.msra.mxu0 0.0
        %2303 = vmatprep.subr.mxu0 0.0
        %2304 = vmatpush1.msra.mxu0 0.0
        %2305 = vmatprep.subr.mxu0 0.0
        %2306 = vmatpush1.msra.mxu0 0.0
        %2307 = vmatprep.subr.mxu0 0.0
        %2308 = vmatpush1.msra.mxu0 0.0
        %2309 = vmatprep.subr.mxu0 0.0
        %2310 = vmatpush1.msra.mxu0 0.0
        %2311 = vmatprep.subr.mxu0 0.0
        %2312 = vmatpush1.msra.mxu0 0.0
        %2313 = vmatprep.subr.mxu0 0.0
        %2314 = vmatpush1.msra.mxu0 0.0
        %2315 = vmatprep.subr.mxu0 0.0
        %2316 = vmatpush1.msra.mxu0 0.0
        %2317 = vmatprep.subr.mxu0 0.0
        %2318 = vmatpush1.msra.mxu0 0.0
        %2319 = vmatprep.subr.mxu0 0.0
        %2320 = vmatpush1.msra.mxu0 0.0
        %2321 = vmatprep.subr.mxu0 0.0
        %2322 = vmatpush1.msra.mxu0 0.0
        %2323 = vmatprep.subr.mxu0 0.0
        %2324 = vmatpush1.msra.mxu0 0.0
        %2325 = vmatprep.subr.mxu0 0.0
        %2326 = vmatpush1.msra.mxu0 0.0
        %2327 = vmatprep.subr.mxu0 0.0
        %2328 = vmatpush1.msra.mxu0 0.0
        %2329 = vmatprep.subr.mxu0 0.0
        %2330 = vmatpush1.msra.mxu0 0.0
        %2331 = vmatprep.subr.mxu0 0.0
        %2332 = vmatpush1.msra.mxu0 0.0
        %2333 = vmatprep.subr.mxu0 0.0
        %2334 = vmatpush1.msra.mxu0 0.0
        %2335 = vmatprep.mubr.f32.mxu0 0.0
        %v2336 = vand.u32 %v384, 4294901760
        %2337 = vmatmul.mubr.f32.gmra.mrb[0].mxu0 %v2336
        %v2338 = vpop.f32.mrb[0].mxu0
        %v2339 = vadd.f32 %v850, %v2338
        %v2340 = vpop.f32.mrb[0].mxu0
        %v2341 = vadd.f32 %v852, %v2340
        %2342 = vmatprep.mubr.f32.mxu0 0.0
        %v2343 = vand.u32 %v387, 4294901760
        %2344 = vmatmul.mubr.f32.gmra.mrb[0].mxu0 %v2343
        %v2345 = vpop.f32.mrb[0].mxu0
        %v2346 = vadd.f32 %v861, %v2345
        %v2347 = vpop.f32.mrb[0].mxu0
        %v2348 = vadd.f32 %v863, %v2347
        %2349 = vmatprep.mubr.f32.mxu0 0.0
        %v2350 = vand.u32 %v390, 4294901760
        %2351 = vmatmul.mubr.f32.gmra.mrb[0].mxu0 %v2350
        %v2352 = vpop.f32.mrb[0].mxu0
        %v2353 = vadd.f32 %v872, %v2352
        %v2354 = vpop.f32.mrb[0].mxu0
        %v2355 = vadd.f32 %v874, %v2354
        %2356 = vmatprep.mubr.f32.mxu0 0.0
        %v2357 = vand.u32 %v393, 4294901760
        %2358 = vmatmul.mubr.f32.gmra.mrb[0].mxu0 %v2357
        %v2359 = vpop.f32.mrb[0].mxu0
        %v2360 = vadd.f32 %v883, %v2359
        %v2361 = vpop.f32.mrb[0].mxu0
        %v2362 = vadd.f32 %v885, %v2361
        %2363 = vmatprep.mubr.f32.mxu0 0.0
        %v2364 = vand.u32 %v396, 4294901760
        %2365 = vmatmul.mubr.f32.gmra.mrb[0].mxu0 %v2364
        %v2366 = vpop.f32.mrb[0].mxu0
        %v2367 = vadd.f32 %v894, %v2366
        %v2368 = vpop.f32.mrb[0].mxu0
        %v2369 = vadd.f32 %v896, %v2368
        %2370 = vmatprep.mubr.f32.mxu0 0.0
        %v2371 = vand.u32 %v399, 4294901760
        %2372 = vmatmul.mubr.f32.gmra.mrb[0].mxu0 %v2371
        %v2373 = vpop.f32.mrb[0].mxu0
        %v2374 = vadd.f32 %v905, %v2373
        %v2375 = vpop.f32.mrb[0].mxu0
        %v2376 = vadd.f32 %v907, %v2375
        %2377 = vmatprep.mubr.f32.mxu0 0.0
        %v2378 = vand.u32 %v402, 4294901760
        %2379 = vmatmul.mubr.f32.gmra.mrb[0].mxu0 %v2378
        %v2380 = vpop.f32.mrb[0].mxu0
        %v2381 = vadd.f32 %v916, %v2380
        %v2382 = vpop.f32.mrb[0].mxu0
        %v2383 = vadd.f32 %v918, %v2382
        %2384 = vmatprep.mubr.f32.mxu0 0.0
        %v2385 = vand.u32 %v405, 4294901760
        %2386 = vmatmul.mubr.f32.gmra.mrb[0].mxu0 %v2385
        %v2387 = vpop.f32.mrb[0].mxu0
        %v2388 = vadd.f32 %v927, %v2387
        %v2389 = vpop.f32.mrb[0].mxu0
        %v2390 = vadd.f32 %v929, %v2389
        %2391 = vmatprep.mubr.f32.mxu0 0.0
        %v2392 = vand.u32 %v408, 4294901760
        %2393 = vmatmul.mubr.f32.gmra.mrb[0].mxu0 %v2392
        %v2394 = vpop.f32.mrb[0].mxu0
        %v2395 = vadd.f32 %v938, %v2394
        %v2396 = vpop.f32.mrb[0].mxu0
        %v2397 = vadd.f32 %v940, %v2396
        %2398 = vmatprep.mubr.f32.mxu0 0.0
        %v2399 = vand.u32 %v411, 4294901760
        %2400 = vmatmul.mubr.f32.gmra.mrb[0].mxu0 %v2399
        %v2401 = vpop.f32.mrb[0].mxu0
        %v2402 = vadd.f32 %v949, %v2401
        %v2403 = vpop.f32.mrb[0].mxu0
        %v2404 = vadd.f32 %v951, %v2403
        %2405 = vmatprep.mubr.f32.mxu0 0.0
        %v2406 = vand.u32 %v414, 4294901760
        %2407 = vmatmul.mubr.f32.gmra.mrb[0].mxu0 %v2406
        %v2408 = vpop.f32.mrb[0].mxu0
        %v2409 = vadd.f32 %v960, %v2408
        %v2410 = vpop.f32.mrb[0].mxu0
        %v2411 = vadd.f32 %v962, %v2410
        %2412 = vmatprep.mubr.f32.mxu0 0.0
        %v2413 = vand.u32 %v417, 4294901760
        %2414 = vmatmul.mubr.f32.gmra.mrb[0].mxu0 %v2413
        %v2415 = vpop.f32.mrb[0].mxu0
        %v2416 = vadd.f32 %v971, %v2415
        %v2417 = vpop.f32.mrb[0].mxu0
        %v2418 = vadd.f32 %v973, %v2417
        %2419 = vmatprep.mubr.f32.mxu0 0.0
        %v2420 = vand.u32 %v420, 4294901760
        %2421 = vmatmul.mubr.f32.gmra.mrb[0].mxu0 %v2420
        %v2422 = vpop.f32.mrb[0].mxu0
        %v2423 = vadd.f32 %v982, %v2422
        %v2424 = vpop.f32.mrb[0].mxu0
        %v2425 = vadd.f32 %v984, %v2424
        %2426 = vmatprep.mubr.f32.mxu0 0.0
        %v2427 = vand.u32 %v423, 4294901760
        %2428 = vmatmul.mubr.f32.gmra.mrb[0].mxu0 %v2427
        %v2429 = vpop.f32.mrb[0].mxu0
        %v2430 = vadd.f32 %v993, %v2429
        %v2431 = vpop.f32.mrb[0].mxu0
        %v2432 = vadd.f32 %v995, %v2431
        %2433 = vmatprep.mubr.f32.mxu0 0.0
        %v2434 = vand.u32 %v426, 4294901760
        %2435 = vmatmul.mubr.f32.gmra.mrb[0].mxu0 %v2434
        %v2436 = vpop.f32.mrb[0].mxu0
        %v2437 = vadd.f32 %v1004, %v2436
        %v2438 = vpop.f32.mrb[0].mxu0
        %v2439 = vadd.f32 %v1006, %v2438
        %2440 = vmatprep.mubr.f32.mxu0 0.0
        %v2441 = vand.u32 %v429, 4294901760
        %2442 = vmatmul.mubr.f32.gmra.mrb[0].mxu0 %v2441
        %v2443 = vpop.f32.mrb[0].mxu0
        %v2444 = vadd.f32 %v1015, %v2443
        %v2445 = vpop.f32.mrb[0].mxu0
        %v2446 = vadd.f32 %v1017, %v2445
        %2447 = vmatprep.mubr.f32.mxu0 0.0
        %v2448 = vand.u32 %v432, 4294901760
        %2449 = vmatmul.mubr.f32.gmra.mrb[0].mxu0 %v2448
        %v2450 = vpop.f32.mrb[0].mxu0
        %v2451 = vadd.f32 %v1026, %v2450
        %v2452 = vpop.f32.mrb[0].mxu0
        %v2453 = vadd.f32 %v1028, %v2452
        %2454 = vmatprep.mubr.f32.mxu0 0.0
        %v2455 = vand.u32 %v435, 4294901760
        %2456 = vmatmul.mubr.f32.gmra.mrb[0].mxu0 %v2455
        %v2457 = vpop.f32.mrb[0].mxu0
        %v2458 = vadd.f32 %v1037, %v2457
        %v2459 = vpop.f32.mrb[0].mxu0
        %v2460 = vadd.f32 %v1039, %v2459
        %2461 = vmatprep.mubr.f32.mxu0 0.0
        %v2462 = vand.u32 %v438, 4294901760
        %2463 = vmatmul.mubr.f32.gmra.mrb[0].mxu0 %v2462
        %v2464 = vpop.f32.mrb[0].mxu0
        %v2465 = vadd.f32 %v1048, %v2464
        %v2466 = vpop.f32.mrb[0].mxu0
        %v2467 = vadd.f32 %v1050, %v2466
        %2468 = vmatprep.mubr.f32.mxu0 0.0
        %v2469 = vand.u32 %v441, 4294901760
        %2470 = vmatmul.mubr.f32.gmra.mrb[0].mxu0 %v2469
        %v2471 = vpop.f32.mrb[0].mxu0
        %v2472 = vadd.f32 %v1059, %v2471
        %v2473 = vpop.f32.mrb[0].mxu0
        %v2474 = vadd.f32 %v1061, %v2473
        %2475 = vmatprep.mubr.f32.mxu0 0.0
        %v2476 = vand.u32 %v444, 4294901760
        %2477 = vmatmul.mubr.f32.gmra.mrb[0].mxu0 %v2476
        %v2478 = vpop.f32.mrb[0].mxu0
        %v2479 = vadd.f32 %v1070, %v2478
        %v2480 = vpop.f32.mrb[0].mxu0
        %v2481 = vadd.f32 %v1072, %v2480
        %2482 = vmatprep.mubr.f32.mxu0 0.0
        %v2483 = vand.u32 %v447, 4294901760
        %2484 = vmatmul.mubr.f32.gmra.mrb[0].mxu0 %v2483
        %v2485 = vpop.f32.mrb[0].mxu0
        %v2486 = vadd.f32 %v1081, %v2485
        %v2487 = vpop.f32.mrb[0].mxu0
        %v2488 = vadd.f32 %v1083, %v2487
        %2489 = vmatprep.mubr.f32.mxu0 0.0
        %v2490 = vand.u32 %v450, 4294901760
        %2491 = vmatmul.mubr.f32.gmra.mrb[0].mxu0 %v2490
        %v2492 = vpop.f32.mrb[0].mxu0
        %v2493 = vadd.f32 %v1092, %v2492
        %v2494 = vpop.f32.mrb[0].mxu0
        %v2495 = vadd.f32 %v1094, %v2494
        %2496 = vmatprep.mubr.f32.mxu0 0.0
        %v2497 = vand.u32 %v453, 4294901760
        %2498 = vmatmul.mubr.f32.gmra.mrb[0].mxu0 %v2497
        %v2499 = vpop.f32.mrb[0].mxu0
        %v2500 = vadd.f32 %v1103, %v2499
        %v2501 = vpop.f32.mrb[0].mxu0
        %v2502 = vadd.f32 %v1105, %v2501
        %2503 = vmatprep.mubr.f32.mxu0 0.0
        %v2504 = vand.u32 %v456, 4294901760
        %2505 = vmatmul.mubr.f32.gmra.mrb[0].mxu0 %v2504
        %v2506 = vpop.f32.mrb[0].mxu0
        %v2507 = vadd.f32 %v1114, %v2506
        %v2508 = vpop.f32.mrb[0].mxu0
        %v2509 = vadd.f32 %v1116, %v2508
        %2510 = vmatprep.mubr.f32.mxu0 0.0
        %v2511 = vand.u32 %v459, 4294901760
        %2512 = vmatmul.mubr.f32.gmra.mrb[0].mxu0 %v2511
        %v2513 = vpop.f32.mrb[0].mxu0
        %v2514 = vadd.f32 %v1125, %v2513
        %v2515 = vpop.f32.mrb[0].mxu0
        %v2516 = vadd.f32 %v1127, %v2515
        %2517 = vmatprep.mubr.f32.mxu0 0.0
        %v2518 = vand.u32 %v462, 4294901760
        %2519 = vmatmul.mubr.f32.gmra.mrb[0].mxu0 %v2518
        %v2520 = vpop.f32.mrb[0].mxu0
        %v2521 = vadd.f32 %v1136, %v2520
        %v2522 = vpop.f32.mrb[0].mxu0
        %v2523 = vadd.f32 %v1138, %v2522
        %2524 = vmatprep.mubr.f32.mxu0 0.0
        %v2525 = vand.u32 %v465, 4294901760
        %2526 = vmatmul.mubr.f32.gmra.mrb[0].mxu0 %v2525
        %v2527 = vpop.f32.mrb[0].mxu0
        %v2528 = vadd.f32 %v1147, %v2527
        %v2529 = vpop.f32.mrb[0].mxu0
        %v2530 = vadd.f32 %v1149, %v2529
        %2531 = vmatprep.mubr.f32.mxu0 0.0
        %v2532 = vand.u32 %v468, 4294901760
        %2533 = vmatmul.mubr.f32.gmra.mrb[0].mxu0 %v2532
        %v2534 = vpop.f32.mrb[0].mxu0
        %v2535 = vadd.f32 %v1158, %v2534
        %v2536 = vpop.f32.mrb[0].mxu0
        %v2537 = vadd.f32 %v1160, %v2536
        %2538 = vmatprep.mubr.f32.mxu0 0.0
        %v2539 = vand.u32 %v471, 4294901760
        %2540 = vmatmul.mubr.f32.gmra.mrb[0].mxu0 %v2539
        %v2541 = vpop.f32.mrb[0].mxu0
        %v2542 = vadd.f32 %v1169, %v2541
        %v2543 = vpop.f32.mrb[0].mxu0
        %v2544 = vadd.f32 %v1171, %v2543
        %2545 = vmatprep.mubr.f32.mxu0 0.0
        %v2546 = vand.u32 %v474, 4294901760
        %2547 = vmatmul.mubr.f32.gmra.mrb[0].mxu0 %v2546
        %v2548 = vpop.f32.mrb[0].mxu0
        %v2549 = vadd.f32 %v1180, %v2548
        %v2550 = vpop.f32.mrb[0].mxu0
        %v2551 = vadd.f32 %v1182, %v2550
        %2552 = vmatprep.mubr.f32.mxu0 0.0
        %v2553 = vand.u32 %v477, 4294901760
        %2554 = vmatmul.mubr.f32.gmra.mrb[0].mxu0 %v2553
        %v2555 = vpop.f32.mrb[0].mxu0
        %v2556 = vadd.f32 %v1191, %v2555
        %v2557 = vpop.f32.mrb[0].mxu0
        %v2558 = vadd.f32 %v1193, %v2557
        %2559 = vmatprep.mubr.f32.mxu0 0.0
        %v2560 = vand.u32 %v480, 4294901760
        %2561 = vmatmul.mubr.f32.gmra.mrb[0].mxu0 %v2560
        %v2562 = vpop.f32.mrb[0].mxu0
        %v2563 = vadd.f32 %v1202, %v2562
        %v2564 = vpop.f32.mrb[0].mxu0
        %v2565 = vadd.f32 %v1204, %v2564
        %2566 = vmatprep.mubr.f32.mxu0 0.0
        %v2567 = vand.u32 %v483, 4294901760
        %2568 = vmatmul.mubr.f32.gmra.mrb[0].mxu0 %v2567
        %v2569 = vpop.f32.mrb[0].mxu0
        %v2570 = vadd.f32 %v1213, %v2569
        %v2571 = vpop.f32.mrb[0].mxu0
        %v2572 = vadd.f32 %v1215, %v2571
        %2573 = vmatprep.mubr.f32.mxu0 0.0
        %v2574 = vand.u32 %v486, 4294901760
        %2575 = vmatmul.mubr.f32.gmra.mrb[0].mxu0 %v2574
        %v2576 = vpop.f32.mrb[0].mxu0
        %v2577 = vadd.f32 %v1224, %v2576
        %v2578 = vpop.f32.mrb[0].mxu0
        %v2579 = vadd.f32 %v1226, %v2578
        %2580 = vmatprep.mubr.f32.mxu0 0.0
        %v2581 = vand.u32 %v489, 4294901760
        %2582 = vmatmul.mubr.f32.gmra.mrb[0].mxu0 %v2581
        %v2583 = vpop.f32.mrb[0].mxu0
        %v2584 = vadd.f32 %v1235, %v2583
        %v2585 = vpop.f32.mrb[0].mxu0
        %v2586 = vadd.f32 %v1237, %v2585
        %2587 = vmatprep.mubr.f32.mxu0 0.0
        %v2588 = vand.u32 %v492, 4294901760
        %2589 = vmatmul.mubr.f32.gmra.mrb[0].mxu0 %v2588
        %v2590 = vpop.f32.mrb[0].mxu0
        %v2591 = vadd.f32 %v1246, %v2590
        %v2592 = vpop.f32.mrb[0].mxu0
        %v2593 = vadd.f32 %v1248, %v2592
        %2594 = vmatprep.mubr.f32.mxu0 0.0
        %v2595 = vand.u32 %v495, 4294901760
        %2596 = vmatmul.mubr.f32.gmra.mrb[0].mxu0 %v2595
        %v2597 = vpop.f32.mrb[0].mxu0
        %v2598 = vadd.f32 %v1257, %v2597
        %v2599 = vpop.f32.mrb[0].mxu0
        %v2600 = vadd.f32 %v1259, %v2599
        %2601 = vmatprep.mubr.f32.mxu0 0.0
        %v2602 = vand.u32 %v498, 4294901760
        %2603 = vmatmul.mubr.f32.gmra.mrb[0].mxu0 %v2602
        %v2604 = vpop.f32.mrb[0].mxu0
        %v2605 = vadd.f32 %v1268, %v2604
        %v2606 = vpop.f32.mrb[0].mxu0
        %v2607 = vadd.f32 %v1270, %v2606
        %2608 = vmatprep.mubr.f32.mxu0 0.0
        %v2609 = vand.u32 %v501, 4294901760
        %2610 = vmatmul.mubr.f32.gmra.mrb[0].mxu0 %v2609
        %v2611 = vpop.f32.mrb[0].mxu0
        %v2612 = vadd.f32 %v1279, %v2611
        %v2613 = vpop.f32.mrb[0].mxu0
        %v2614 = vadd.f32 %v1281, %v2613
        %2615 = vmatprep.mubr.f32.mxu0 0.0
        %v2616 = vand.u32 %v504, 4294901760
        %2617 = vmatmul.mubr.f32.gmra.mrb[0].mxu0 %v2616
        %v2618 = vpop.f32.mrb[0].mxu0
        %v2619 = vadd.f32 %v1290, %v2618
        %v2620 = vpop.f32.mrb[0].mxu0
        %v2621 = vadd.f32 %v1292, %v2620
        %2622 = vmatprep.mubr.f32.mxu0 0.0
        %v2623 = vand.u32 %v507, 4294901760
        %2624 = vmatmul.mubr.f32.gmra.mrb[0].mxu0 %v2623
        %v2625 = vpop.f32.mrb[0].mxu0
        %v2626 = vadd.f32 %v1301, %v2625
        %v2627 = vpop.f32.mrb[0].mxu0
        %v2628 = vadd.f32 %v1303, %v2627
        %2629 = vmatprep.mubr.f32.mxu0 0.0
        %v2630 = vand.u32 %v510, 4294901760
        %2631 = vmatmul.mubr.f32.gmra.mrb[0].mxu0 %v2630
        %v2632 = vpop.f32.mrb[0].mxu0
        %v2633 = vadd.f32 %v1312, %v2632
        %v2634 = vpop.f32.mrb[0].mxu0
        %v2635 = vadd.f32 %v1314, %v2634
        %2636 = vmatprep.mubr.f32.mxu0 0.0
        %v2637 = vand.u32 %v513, 4294901760
        %2638 = vmatmul.mubr.f32.gmra.mrb[0].mxu0 %v2637
        %v2639 = vpop.f32.mrb[0].mxu0
        %v2640 = vadd.f32 %v1323, %v2639
        %v2641 = vpop.f32.mrb[0].mxu0
        %v2642 = vadd.f32 %v1325, %v2641
        %2643 = vmatprep.mubr.f32.mxu0 0.0
        %v2644 = vand.u32 %v516, 4294901760
        %2645 = vmatmul.mubr.f32.gmra.mrb[0].mxu0 %v2644
        %v2646 = vpop.f32.mrb[0].mxu0
        %v2647 = vadd.f32 %v1334, %v2646
        %v2648 = vpop.f32.mrb[0].mxu0
        %v2649 = vadd.f32 %v1336, %v2648
        %2650 = vmatprep.mubr.f32.mxu0 0.0
        %v2651 = vand.u32 %v519, 4294901760
        %2652 = vmatmul.mubr.f32.gmra.mrb[0].mxu0 %v2651
        %v2653 = vpop.f32.mrb[0].mxu0
        %v2654 = vadd.f32 %v1345, %v2653
        %v2655 = vpop.f32.mrb[0].mxu0
        %v2656 = vadd.f32 %v1347, %v2655
        %2657 = vmatprep.mubr.f32.mxu0 0.0
        %v2658 = vand.u32 %v522, 4294901760
        %2659 = vmatmul.mubr.f32.gmra.mrb[0].mxu0 %v2658
        %v2660 = vpop.f32.mrb[0].mxu0
        %v2661 = vadd.f32 %v1356, %v2660
        %v2662 = vpop.f32.mrb[0].mxu0
        %v2663 = vadd.f32 %v1358, %v2662
        %2664 = vmatprep.mubr.f32.mxu0 0.0
        %v2665 = vand.u32 %v525, 4294901760
        %2666 = vmatmul.mubr.f32.gmra.mrb[0].mxu0 %v2665
        %v2667 = vpop.f32.mrb[0].mxu0
        %v2668 = vadd.f32 %v1367, %v2667
        %v2669 = vpop.f32.mrb[0].mxu0
        %v2670 = vadd.f32 %v1369, %v2669
        %2671 = vmatprep.mubr.f32.mxu0 0.0
        %v2672 = vand.u32 %v528, 4294901760
        %2673 = vmatmul.mubr.f32.gmra.mrb[0].mxu0 %v2672
        %v2674 = vpop.f32.mrb[0].mxu0
        %v2675 = vadd.f32 %v1378, %v2674
        %v2676 = vpop.f32.mrb[0].mxu0
        %v2677 = vadd.f32 %v1380, %v2676
        %2678 = vmatprep.mubr.f32.mxu0 0.0
        %v2679 = vand.u32 %v531, 4294901760
        %2680 = vmatmul.mubr.f32.gmra.mrb[0].mxu0 %v2679
        %v2681 = vpop.f32.mrb[0].mxu0
        %v2682 = vadd.f32 %v1389, %v2681
        %v2683 = vpop.f32.mrb[0].mxu0
        %v2684 = vadd.f32 %v1391, %v2683
        %2685 = vmatprep.mubr.f32.mxu0 0.0
        %v2686 = vand.u32 %v534, 4294901760
        %2687 = vmatmul.mubr.f32.gmra.mrb[0].mxu0 %v2686
        %v2688 = vpop.f32.mrb[0].mxu0
        %v2689 = vadd.f32 %v1400, %v2688
        %v2690 = vpop.f32.mrb[0].mxu0
        %v2691 = vadd.f32 %v1402, %v2690
        %2692 = vmatprep.mubr.f32.mxu0 0.0
        %v2693 = vand.u32 %v537, 4294901760
        %2694 = vmatmul.mubr.f32.gmra.mrb[0].mxu0 %v2693
        %v2695 = vpop.f32.mrb[0].mxu0
        %v2696 = vadd.f32 %v1411, %v2695
        %v2697 = vpop.f32.mrb[0].mxu0
        %v2698 = vadd.f32 %v1413, %v2697
        %2699 = vmatprep.mubr.f32.mxu0 0.0
        %v2700 = vand.u32 %v540, 4294901760
        %2701 = vmatmul.mubr.f32.gmra.mrb[0].mxu0 %v2700
        %v2702 = vpop.f32.mrb[0].mxu0
        %v2703 = vadd.f32 %v1422, %v2702
        %v2704 = vpop.f32.mrb[0].mxu0
        %v2705 = vadd.f32 %v1424, %v2704
        %2706 = vmatprep.mubr.f32.mxu0 0.0
        %v2707 = vand.u32 %v543, 4294901760
        %2708 = vmatmul.mubr.f32.gmra.mrb[0].mxu0 %v2707
        %v2709 = vpop.f32.mrb[0].mxu0
        %v2710 = vadd.f32 %v1433, %v2709
        %v2711 = vpop.f32.mrb[0].mxu0
        %v2712 = vadd.f32 %v1435, %v2711
        %2713 = vmatprep.mubr.f32.mxu0 0.0
        %v2714 = vand.u32 %v546, 4294901760
        %2715 = vmatmul.mubr.f32.gmra.mrb[0].mxu0 %v2714
        %v2716 = vpop.f32.mrb[0].mxu0
        %v2717 = vadd.f32 %v1444, %v2716
        %v2718 = vpop.f32.mrb[0].mxu0
        %v2719 = vadd.f32 %v1446, %v2718
        %2720 = vmatprep.mubr.f32.mxu0 0.0
        %v2721 = vand.u32 %v549, 4294901760
        %2722 = vmatmul.mubr.f32.gmra.mrb[0].mxu0 %v2721
        %v2723 = vpop.f32.mrb[0].mxu0
        %v2724 = vadd.f32 %v1455, %v2723
        %v2725 = vpop.f32.mrb[0].mxu0
        %v2726 = vadd.f32 %v1457, %v2725
        %2727 = vmatprep.mubr.f32.mxu0 0.0
        %v2728 = vand.u32 %v552, 4294901760
        %2729 = vmatmul.mubr.f32.gmra.mrb[0].mxu0 %v2728
        %v2730 = vpop.f32.mrb[0].mxu0
        %v2731 = vadd.f32 %v1466, %v2730
        %v2732 = vpop.f32.mrb[0].mxu0
        %v2733 = vadd.f32 %v1468, %v2732
        %2734 = vmatprep.mubr.f32.mxu0 0.0
        %v2735 = vand.u32 %v555, 4294901760
        %2736 = vmatmul.mubr.f32.gmra.mrb[0].mxu0 %v2735
        %v2737 = vpop.f32.mrb[0].mxu0
        %v2738 = vadd.f32 %v1477, %v2737
        %v2739 = vpop.f32.mrb[0].mxu0
        %v2740 = vadd.f32 %v1479, %v2739
        %2741 = vmatprep.mubr.f32.mxu0 0.0
        %v2742 = vand.u32 %v558, 4294901760
        %2743 = vmatmul.mubr.f32.gmra.mrb[0].mxu0 %v2742
        %v2744 = vpop.f32.mrb[0].mxu0
        %v2745 = vadd.f32 %v1488, %v2744
        %v2746 = vpop.f32.mrb[0].mxu0
        %v2747 = vadd.f32 %v1490, %v2746
        %2748 = vmatprep.mubr.f32.mxu0 0.0
        %v2749 = vand.u32 %v561, 4294901760
        %2750 = vmatmul.mubr.f32.gmra.mrb[0].mxu0 %v2749
        %v2751 = vpop.f32.mrb[0].mxu0
        %v2752 = vadd.f32 %v1499, %v2751
        %v2753 = vpop.f32.mrb[0].mxu0
        %v2754 = vadd.f32 %v1501, %v2753
        %2755 = vmatprep.mubr.f32.mxu0 0.0
        %v2756 = vand.u32 %v564, 4294901760
        %2757 = vmatmul.mubr.f32.gmra.mrb[0].mxu0 %v2756
        %v2758 = vpop.f32.mrb[0].mxu0
        %v2759 = vadd.f32 %v1510, %v2758
        %v2760 = vpop.f32.mrb[0].mxu0
        %v2761 = vadd.f32 %v1512, %v2760
        %2762 = vmatprep.mubr.f32.mxu0 0.0
        %v2763 = vand.u32 %v567, 4294901760
        %2764 = vmatmul.mubr.f32.gmra.mrb[0].mxu0 %v2763
        %v2765 = vpop.f32.mrb[0].mxu0
        %v2766 = vadd.f32 %v1521, %v2765
        %v2767 = vpop.f32.mrb[0].mxu0
        %v2768 = vadd.f32 %v1523, %v2767
        %2769 = vmatprep.mubr.f32.mxu0 0.0
        %v2770 = vand.u32 %v570, 4294901760
        %2771 = vmatmul.mubr.f32.gmra.mrb[0].mxu0 %v2770
        %v2772 = vpop.f32.mrb[0].mxu0
        %v2773 = vadd.f32 %v1532, %v2772
        %v2774 = vpop.f32.mrb[0].mxu0
        %v2775 = vadd.f32 %v1534, %v2774
        %2776 = vmatprep.mubr.f32.mxu0 0.0
        %v2777 = vand.u32 %v573, 4294901760
        %2778 = vmatmul.mubr.f32.gmra.mrb[0].mxu0 %v2777
        %v2779 = vpop.f32.mrb[0].mxu0
        %v2780 = vadd.f32 %v1543, %v2779
        %v2781 = vpop.f32.mrb[0].mxu0
        %v2782 = vadd.f32 %v1545, %v2781
        %2783 = vmatprep.mubr.f32.mxu0 0.0
        %v2784 = vand.u32 %v576, 4294901760
        %2785 = vmatmul.mubr.f32.gmra.mrb[0].mxu0 %v2784
        %v2786 = vpop.f32.mrb[0].mxu0
        %v2787 = vadd.f32 %v1554, %v2786
        %v2788 = vpop.f32.mrb[0].mxu0
        %v2789 = vadd.f32 %v1556, %v2788
        %2790 = vmatprep.mubr.f32.mxu0 0.0
        %v2791 = vand.u32 %v579, 4294901760
        %2792 = vmatmul.mubr.f32.gmra.mrb[0].mxu0 %v2791
        %v2793 = vpop.f32.mrb[0].mxu0
        %v2794 = vadd.f32 %v1565, %v2793
        %v2795 = vpop.f32.mrb[0].mxu0
        %v2796 = vadd.f32 %v1567, %v2795
        %2797 = vmatprep.mubr.f32.mxu0 0.0
        %v2798 = vand.u32 %v582, 4294901760
        %2799 = vmatmul.mubr.f32.gmra.mrb[0].mxu0 %v2798
        %v2800 = vpop.f32.mrb[0].mxu0
        %v2801 = vadd.f32 %v1576, %v2800
        %v2802 = vpop.f32.mrb[0].mxu0
        %v2803 = vadd.f32 %v1578, %v2802
        %2804 = vmatprep.mubr.f32.mxu0 0.0
        %v2805 = vand.u32 %v585, 4294901760
        %2806 = vmatmul.mubr.f32.gmra.mrb[0].mxu0 %v2805
        %v2807 = vpop.f32.mrb[0].mxu0
        %v2808 = vadd.f32 %v1587, %v2807
        %v2809 = vpop.f32.mrb[0].mxu0
        %v2810 = vadd.f32 %v1589, %v2809
        %2811 = vmatprep.mubr.f32.mxu0 0.0
        %v2812 = vand.u32 %v588, 4294901760
        %2813 = vmatmul.mubr.f32.gmra.mrb[0].mxu0 %v2812
        %v2814 = vpop.f32.mrb[0].mxu0
        %v2815 = vadd.f32 %v1598, %v2814
        %v2816 = vpop.f32.mrb[0].mxu0
        %v2817 = vadd.f32 %v1600, %v2816
        %2818 = vmatprep.mubr.f32.mxu0 0.0
        %v2819 = vand.u32 %v591, 4294901760
        %2820 = vmatmul.mubr.f32.gmra.mrb[0].mxu0 %v2819
        %v2821 = vpop.f32.mrb[0].mxu0
        %v2822 = vadd.f32 %v1609, %v2821
        %v2823 = vpop.f32.mrb[0].mxu0
        %v2824 = vadd.f32 %v1611, %v2823
        %2825 = vmatprep.mubr.f32.mxu0 0.0
        %v2826 = vand.u32 %v594, 4294901760
        %2827 = vmatmul.mubr.f32.gmra.mrb[0].mxu0 %v2826
        %v2828 = vpop.f32.mrb[0].mxu0
        %v2829 = vadd.f32 %v1620, %v2828
        %v2830 = vpop.f32.mrb[0].mxu0
        %v2831 = vadd.f32 %v1622, %v2830
        %2832 = vmatprep.mubr.f32.mxu0 0.0
        %v2833 = vand.u32 %v597, 4294901760
        %2834 = vmatmul.mubr.f32.gmra.mrb[0].mxu0 %v2833
        %v2835 = vpop.f32.mrb[0].mxu0
        %v2836 = vadd.f32 %v1631, %v2835
        %v2837 = vpop.f32.mrb[0].mxu0
        %v2838 = vadd.f32 %v1633, %v2837
        %2839 = vmatprep.mubr.f32.mxu0 0.0
        %v2840 = vand.u32 %v600, 4294901760
        %2841 = vmatmul.mubr.f32.gmra.mrb[0].mxu0 %v2840
        %v2842 = vpop.f32.mrb[0].mxu0
        %v2843 = vadd.f32 %v1642, %v2842
        %v2844 = vpop.f32.mrb[0].mxu0
        %v2845 = vadd.f32 %v1644, %v2844
        %2846 = vmatprep.mubr.f32.mxu0 0.0
        %v2847 = vand.u32 %v603, 4294901760
        %2848 = vmatmul.mubr.f32.gmra.mrb[0].mxu0 %v2847
        %v2849 = vpop.f32.mrb[0].mxu0
        %v2850 = vadd.f32 %v1653, %v2849
        %v2851 = vpop.f32.mrb[0].mxu0
        %v2852 = vadd.f32 %v1655, %v2851
        %2853 = vmatprep.mubr.f32.mxu0 0.0
        %v2854 = vand.u32 %v606, 4294901760
        %2855 = vmatmul.mubr.f32.gmra.mrb[0].mxu0 %v2854
        %v2856 = vpop.f32.mrb[0].mxu0
        %v2857 = vadd.f32 %v1664, %v2856
        %v2858 = vpop.f32.mrb[0].mxu0
        %v2859 = vadd.f32 %v1666, %v2858
        %2860 = vmatprep.mubr.f32.mxu0 0.0
        %v2861 = vand.u32 %v609, 4294901760
        %2862 = vmatmul.mubr.f32.gmra.mrb[0].mxu0 %v2861
        %v2863 = vpop.f32.mrb[0].mxu0
        %v2864 = vadd.f32 %v1675, %v2863
        %v2865 = vpop.f32.mrb[0].mxu0
        %v2866 = vadd.f32 %v1677, %v2865
        %2867 = vmatprep.mubr.f32.mxu0 0.0
        %v2868 = vand.u32 %v612, 4294901760
        %2869 = vmatmul.mubr.f32.gmra.mrb[0].mxu0 %v2868
        %v2870 = vpop.f32.mrb[0].mxu0
        %v2871 = vadd.f32 %v1686, %v2870
        %v2872 = vpop.f32.mrb[0].mxu0
        %v2873 = vadd.f32 %v1688, %v2872
        %2874 = vmatprep.mubr.f32.mxu0 0.0
        %v2875 = vand.u32 %v615, 4294901760
        %2876 = vmatmul.mubr.f32.gmra.mrb[0].mxu0 %v2875
        %v2877 = vpop.f32.mrb[0].mxu0
        %v2878 = vadd.f32 %v1697, %v2877
        %v2879 = vpop.f32.mrb[0].mxu0
        %v2880 = vadd.f32 %v1699, %v2879
        %2881 = vmatprep.mubr.f32.mxu0 0.0
        %v2882 = vand.u32 %v618, 4294901760
        %2883 = vmatmul.mubr.f32.gmra.mrb[0].mxu0 %v2882
        %v2884 = vpop.f32.mrb[0].mxu0
        %v2885 = vadd.f32 %v1708, %v2884
        %v2886 = vpop.f32.mrb[0].mxu0
        %v2887 = vadd.f32 %v1710, %v2886
        %2888 = vmatprep.mubr.f32.mxu0 0.0
        %v2889 = vand.u32 %v621, 4294901760
        %2890 = vmatmul.mubr.f32.gmra.mrb[0].mxu0 %v2889
        %v2891 = vpop.f32.mrb[0].mxu0
        %v2892 = vadd.f32 %v1719, %v2891
        %v2893 = vpop.f32.mrb[0].mxu0
        %v2894 = vadd.f32 %v1721, %v2893
        %2895 = vmatprep.mubr.f32.mxu0 0.0
        %v2896 = vand.u32 %v624, 4294901760
        %2897 = vmatmul.mubr.f32.gmra.mrb[0].mxu0 %v2896
        %v2898 = vpop.f32.mrb[0].mxu0
        %v2899 = vadd.f32 %v1730, %v2898
        %v2900 = vpop.f32.mrb[0].mxu0
        %v2901 = vadd.f32 %v1732, %v2900
        %2902 = vmatprep.mubr.f32.mxu0 0.0
        %v2903 = vand.u32 %v627, 4294901760
        %2904 = vmatmul.mubr.f32.gmra.mrb[0].mxu0 %v2903
        %v2905 = vpop.f32.mrb[0].mxu0
        %v2906 = vadd.f32 %v1741, %v2905
        %v2907 = vpop.f32.mrb[0].mxu0
        %v2908 = vadd.f32 %v1743, %v2907
        %2909 = vmatprep.mubr.f32.mxu0 0.0
        %v2910 = vand.u32 %v630, 4294901760
        %2911 = vmatmul.mubr.f32.gmra.mrb[0].mxu0 %v2910
        %v2912 = vpop.f32.mrb[0].mxu0
        %v2913 = vadd.f32 %v1752, %v2912
        %v2914 = vpop.f32.mrb[0].mxu0
        %v2915 = vadd.f32 %v1754, %v2914
        %2916 = vmatprep.mubr.f32.mxu0 0.0
        %v2917 = vand.u32 %v633, 4294901760
        %2918 = vmatmul.mubr.f32.gmra.mrb[0].mxu0 %v2917
        %v2919 = vpop.f32.mrb[0].mxu0
        %v2920 = vadd.f32 %v1763, %v2919
        %v2921 = vpop.f32.mrb[0].mxu0
        %v2922 = vadd.f32 %v1765, %v2921
        %2923 = vmatprep.mubr.f32.mxu0 0.0
        %v2924 = vand.u32 %v636, 4294901760
        %2925 = vmatmul.mubr.f32.gmra.mrb[0].mxu0 %v2924
        %v2926 = vpop.f32.mrb[0].mxu0
        %v2927 = vadd.f32 %v1774, %v2926
        %v2928 = vpop.f32.mrb[0].mxu0
        %v2929 = vadd.f32 %v1776, %v2928
        %2930 = vmatprep.mubr.f32.mxu0 0.0
        %v2931 = vand.u32 %v639, 4294901760
        %2932 = vmatmul.mubr.f32.gmra.mrb[0].mxu0 %v2931
        %v2933 = vpop.f32.mrb[0].mxu0
        %v2934 = vadd.f32 %v1785, %v2933
        %v2935 = vpop.f32.mrb[0].mxu0
        %v2936 = vadd.f32 %v1787, %v2935
        %2937 = vmatprep.mubr.f32.mxu0 0.0
        %v2938 = vand.u32 %v642, 4294901760
        %2939 = vmatmul.mubr.f32.gmra.mrb[0].mxu0 %v2938
        %v2940 = vpop.f32.mrb[0].mxu0
        %v2941 = vadd.f32 %v1796, %v2940
        %v2942 = vpop.f32.mrb[0].mxu0
        %v2943 = vadd.f32 %v1798, %v2942
        %2944 = vmatprep.mubr.f32.mxu0 0.0
        %v2945 = vand.u32 %v645, 4294901760
        %2946 = vmatmul.mubr.f32.gmra.mrb[0].mxu0 %v2945
        %v2947 = vpop.f32.mrb[0].mxu0
        %v2948 = vadd.f32 %v1807, %v2947
        %v2949 = vpop.f32.mrb[0].mxu0
        %v2950 = vadd.f32 %v1809, %v2949
        %2951 = vmatprep.mubr.f32.mxu0 0.0
        %v2952 = vand.u32 %v648, 4294901760
        %2953 = vmatmul.mubr.f32.gmra.mrb[0].mxu0 %v2952
        %v2954 = vpop.f32.mrb[0].mxu0
        %v2955 = vadd.f32 %v1818, %v2954
        %v2956 = vpop.f32.mrb[0].mxu0
        %v2957 = vadd.f32 %v1820, %v2956
        %2958 = vmatprep.mubr.f32.mxu0 0.0
        %v2959 = vand.u32 %v651, 4294901760
        %2960 = vmatmul.mubr.f32.gmra.mrb[0].mxu0 %v2959
        %v2961 = vpop.f32.mrb[0].mxu0
        %v2962 = vadd.f32 %v1829, %v2961
        %v2963 = vpop.f32.mrb[0].mxu0
        %v2964 = vadd.f32 %v1831, %v2963
        %2965 = vmatprep.mubr.f32.mxu0 0.0
        %v2966 = vand.u32 %v654, 4294901760
        %2967 = vmatmul.mubr.f32.gmra.mrb[0].mxu0 %v2966
        %v2968 = vpop.f32.mrb[0].mxu0
        %v2969 = vadd.f32 %v1840, %v2968
        %v2970 = vpop.f32.mrb[0].mxu0
        %v2971 = vadd.f32 %v1842, %v2970
        %2972 = vmatprep.mubr.f32.mxu0 0.0
        %v2973 = vand.u32 %v657, 4294901760
        %2974 = vmatmul.mubr.f32.gmra.mrb[0].mxu0 %v2973
        %v2975 = vpop.f32.mrb[0].mxu0
        %v2976 = vadd.f32 %v1851, %v2975
        %v2977 = vpop.f32.mrb[0].mxu0
        %v2978 = vadd.f32 %v1853, %v2977
        %2979 = vmatprep.mubr.f32.mxu0 0.0
        %v2980 = vand.u32 %v660, 4294901760
        %2981 = vmatmul.mubr.f32.gmra.mrb[0].mxu0 %v2980
        %v2982 = vpop.f32.mrb[0].mxu0
        %v2983 = vadd.f32 %v1862, %v2982
        %v2984 = vpop.f32.mrb[0].mxu0
        %v2985 = vadd.f32 %v1864, %v2984
        %2986 = vmatprep.mubr.f32.mxu0 0.0
        %v2987 = vand.u32 %v663, 4294901760
        %2988 = vmatmul.mubr.f32.gmra.mrb[0].mxu0 %v2987
        %v2989 = vpop.f32.mrb[0].mxu0
        %v2990 = vadd.f32 %v1873, %v2989
        %v2991 = vpop.f32.mrb[0].mxu0
        %v2992 = vadd.f32 %v1875, %v2991
        %2993 = vmatprep.mubr.f32.mxu0 0.0
        %v2994 = vand.u32 %v666, 4294901760
        %2995 = vmatmul.mubr.f32.gmra.mrb[0].mxu0 %v2994
        %v2996 = vpop.f32.mrb[0].mxu0
        %v2997 = vadd.f32 %v1884, %v2996
        %v2998 = vpop.f32.mrb[0].mxu0
        %v2999 = vadd.f32 %v1886, %v2998
        %3000 = vmatprep.mubr.f32.mxu0 0.0
        %v3001 = vand.u32 %v669, 4294901760
        %3002 = vmatmul.mubr.f32.gmra.mrb[0].mxu0 %v3001
        %v3003 = vpop.f32.mrb[0].mxu0
        %v3004 = vadd.f32 %v1895, %v3003
        %v3005 = vpop.f32.mrb[0].mxu0
        %v3006 = vadd.f32 %v1897, %v3005
        %3007 = vmatprep.mubr.f32.mxu0 0.0
        %v3008 = vand.u32 %v672, 4294901760
        %3009 = vmatmul.mubr.f32.gmra.mrb[0].mxu0 %v3008
        %v3010 = vpop.f32.mrb[0].mxu0
        %v3011 = vadd.f32 %v1906, %v3010
        %v3012 = vpop.f32.mrb[0].mxu0
        %v3013 = vadd.f32 %v1908, %v3012
        %3014 = vmatprep.mubr.f32.mxu0 0.0
        %v3015 = vand.u32 %v675, 4294901760
        %3016 = vmatmul.mubr.f32.gmra.mrb[0].mxu0 %v3015
        %v3017 = vpop.f32.mrb[0].mxu0
        %v3018 = vadd.f32 %v1917, %v3017
        %v3019 = vpop.f32.mrb[0].mxu0
        %v3020 = vadd.f32 %v1919, %v3019
        %3021 = vmatprep.mubr.f32.mxu0 0.0
        %v3022 = vand.u32 %v678, 4294901760
        %3023 = vmatmul.mubr.f32.gmra.mrb[0].mxu0 %v3022
        %v3024 = vpop.f32.mrb[0].mxu0
        %v3025 = vadd.f32 %v1928, %v3024
        %v3026 = vpop.f32.mrb[0].mxu0
        %v3027 = vadd.f32 %v1930, %v3026
        %3028 = vmatprep.mubr.f32.mxu0 0.0
        %v3029 = vand.u32 %v681, 4294901760
        %3030 = vmatmul.mubr.f32.gmra.mrb[0].mxu0 %v3029
        %v3031 = vpop.f32.mrb[0].mxu0
        %v3032 = vadd.f32 %v1939, %v3031
        %v3033 = vpop.f32.mrb[0].mxu0
        %v3034 = vadd.f32 %v1941, %v3033
        %3035 = vmatprep.mubr.f32.mxu0 0.0
        %v3036 = vand.u32 %v684, 4294901760
        %3037 = vmatmul.mubr.f32.gmra.mrb[0].mxu0 %v3036
        %v3038 = vpop.f32.mrb[0].mxu0
        %v3039 = vadd.f32 %v1950, %v3038
        %v3040 = vpop.f32.mrb[0].mxu0
        %v3041 = vadd.f32 %v1952, %v3040
        %3042 = vmatprep.mubr.f32.mxu0 0.0
        %v3043 = vand.u32 %v687, 4294901760
        %3044 = vmatmul.mubr.f32.gmra.mrb[0].mxu0 %v3043
        %v3045 = vpop.f32.mrb[0].mxu0
        %v3046 = vadd.f32 %v1961, %v3045
        %v3047 = vpop.f32.mrb[0].mxu0
        %v3048 = vadd.f32 %v1963, %v3047
        %3049 = vmatprep.mubr.f32.mxu0 0.0
        %v3050 = vand.u32 %v690, 4294901760
        %3051 = vmatmul.mubr.f32.gmra.mrb[0].mxu0 %v3050
        %v3052 = vpop.f32.mrb[0].mxu0
        %v3053 = vadd.f32 %v1972, %v3052
        %v3054 = vpop.f32.mrb[0].mxu0
        %v3055 = vadd.f32 %v1974, %v3054
        %3056 = vmatprep.mubr.f32.mxu0 0.0
        %v3057 = vand.u32 %v693, 4294901760
        %3058 = vmatmul.mubr.f32.gmra.mrb[0].mxu0 %v3057
        %v3059 = vpop.f32.mrb[0].mxu0
        %v3060 = vadd.f32 %v1983, %v3059
        %v3061 = vpop.f32.mrb[0].mxu0
        %v3062 = vadd.f32 %v1985, %v3061
        %3063 = vmatprep.mubr.f32.mxu0 0.0
        %v3064 = vand.u32 %v696, 4294901760
        %3065 = vmatmul.mubr.f32.gmra.mrb[0].mxu0 %v3064
        %v3066 = vpop.f32.mrb[0].mxu0
        %v3067 = vadd.f32 %v1994, %v3066
        %v3068 = vpop.f32.mrb[0].mxu0
        %v3069 = vadd.f32 %v1996, %v3068
        %3070 = vmatprep.mubr.f32.mxu0 0.0
        %v3071 = vand.u32 %v699, 4294901760
        %3072 = vmatmul.mubr.f32.gmra.mrb[0].mxu0 %v3071
        %v3073 = vpop.f32.mrb[0].mxu0
        %v3074 = vadd.f32 %v2005, %v3073
        %v3075 = vpop.f32.mrb[0].mxu0
        %v3076 = vadd.f32 %v2007, %v3075
        %3077 = vmatprep.mubr.f32.mxu0 0.0
        %v3078 = vand.u32 %v702, 4294901760
        %3079 = vmatmul.mubr.f32.gmra.mrb[0].mxu0 %v3078
        %v3080 = vpop.f32.mrb[0].mxu0
        %v3081 = vadd.f32 %v2016, %v3080
        %v3082 = vpop.f32.mrb[0].mxu0
        %v3083 = vadd.f32 %v2018, %v3082
        %3084 = vmatprep.mubr.f32.mxu0 0.0
        %v3085 = vand.u32 %v705, 4294901760
        %3086 = vmatmul.mubr.f32.gmra.mrb[0].mxu0 %v3085
        %v3087 = vpop.f32.mrb[0].mxu0
        %v3088 = vadd.f32 %v2027, %v3087
        %v3089 = vpop.f32.mrb[0].mxu0
        %v3090 = vadd.f32 %v2029, %v3089
        %3091 = vmatprep.mubr.f32.mxu0 0.0
        %v3092 = vand.u32 %v708, 4294901760
        %3093 = vmatmul.mubr.f32.gmra.mrb[0].mxu0 %v3092
        %v3094 = vpop.f32.mrb[0].mxu0
        %v3095 = vadd.f32 %v2038, %v3094
        %v3096 = vpop.f32.mrb[0].mxu0
        %v3097 = vadd.f32 %v2040, %v3096
        %3098 = vmatprep.mubr.f32.mxu0 0.0
        %v3099 = vand.u32 %v711, 4294901760
        %3100 = vmatmul.mubr.f32.gmra.mrb[0].mxu0 %v3099
        %v3101 = vpop.f32.mrb[0].mxu0
        %v3102 = vadd.f32 %v2049, %v3101
        %v3103 = vpop.f32.mrb[0].mxu0
        %v3104 = vadd.f32 %v2051, %v3103
        %3105 = vmatprep.mubr.f32.mxu0 0.0
        %v3106 = vand.u32 %v714, 4294901760
        %3107 = vmatmul.mubr.f32.gmra.mrb[0].mxu0 %v3106
        %v3108 = vpop.f32.mrb[0].mxu0
        %v3109 = vadd.f32 %v2060, %v3108
        %v3110 = vpop.f32.mrb[0].mxu0
        %v3111 = vadd.f32 %v2062, %v3110
        %3112 = vmatprep.mubr.f32.mxu0 0.0
        %v3113 = vand.u32 %v717, 4294901760
        %3114 = vmatmul.mubr.f32.gmra.mrb[0].mxu0 %v3113
        %v3115 = vpop.f32.mrb[0].mxu0
        %v3116 = vadd.f32 %v2071, %v3115
        %v3117 = vpop.f32.mrb[0].mxu0
        %v3118 = vadd.f32 %v2073, %v3117
        %3119 = vmatprep.mubr.f32.mxu0 0.0
        %v3120 = vand.u32 %v720, 4294901760
        %3121 = vmatmul.mubr.f32.gmra.mrb[0].mxu0 %v3120
        %v3122 = vpop.f32.mrb[0].mxu0
        %v3123 = vadd.f32 %v2082, %v3122
        %v3124 = vpop.f32.mrb[0].mxu0
        %v3125 = vadd.f32 %v2084, %v3124
        %3126 = vmatprep.mubr.f32.mxu0 0.0
        %v3127 = vand.u32 %v723, 4294901760
        %3128 = vmatmul.mubr.f32.gmra.mrb[0].mxu0 %v3127
        %v3129 = vpop.f32.mrb[0].mxu0
        %v3130 = vadd.f32 %v2093, %v3129
        %v3131 = vpop.f32.mrb[0].mxu0
        %v3132 = vadd.f32 %v2095, %v3131
        %3133 = vmatprep.mubr.f32.mxu0 0.0
        %v3134 = vand.u32 %v726, 4294901760
        %3135 = vmatmul.mubr.f32.gmra.mrb[0].mxu0 %v3134
        %v3136 = vpop.f32.mrb[0].mxu0
        %v3137 = vadd.f32 %v2104, %v3136
        %v3138 = vpop.f32.mrb[0].mxu0
        %v3139 = vadd.f32 %v2106, %v3138
        %3140 = vmatprep.mubr.f32.mxu0 0.0
        %v3141 = vand.u32 %v729, 4294901760
        %3142 = vmatmul.mubr.f32.gmra.mrb[0].mxu0 %v3141
        %v3143 = vpop.f32.mrb[0].mxu0
        %v3144 = vadd.f32 %v2115, %v3143
        %v3145 = vpop.f32.mrb[0].mxu0
        %v3146 = vadd.f32 %v2117, %v3145
        %3147 = vmatprep.mubr.f32.mxu0 0.0
        %v3148 = vand.u32 %v732, 4294901760
        %3149 = vmatmul.mubr.f32.gmra.mrb[0].mxu0 %v3148
        %v3150 = vpop.f32.mrb[0].mxu0
        %v3151 = vadd.f32 %v2126, %v3150
        %v3152 = vpop.f32.mrb[0].mxu0
        %v3153 = vadd.f32 %v2128, %v3152
        %3154 = vmatprep.mubr.f32.mxu0 0.0
        %v3155 = vand.u32 %v735, 4294901760
        %3156 = vmatmul.mubr.f32.gmra.mrb[0].mxu0 %v3155
        %v3157 = vpop.f32.mrb[0].mxu0
        %v3158 = vadd.f32 %v2137, %v3157
        %v3159 = vpop.f32.mrb[0].mxu0
        %v3160 = vadd.f32 %v2139, %v3159
        %3161 = vmatprep.mubr.f32.mxu0 0.0
        %v3162 = vand.u32 %v738, 4294901760
        %3163 = vmatmul.mubr.f32.gmra.mrb[0].mxu0 %v3162
        %v3164 = vpop.f32.mrb[0].mxu0
        %v3165 = vadd.f32 %v2148, %v3164
        %v3166 = vpop.f32.mrb[0].mxu0
        %v3167 = vadd.f32 %v2150, %v3166
        %3168 = vmatprep.mubr.f32.mxu0 0.0
        %v3169 = vand.u32 %v741, 4294901760
        %3170 = vmatmul.mubr.f32.gmra.mrb[0].mxu0 %v3169
        %v3171 = vpop.f32.mrb[0].mxu0
        %v3172 = vadd.f32 %v2159, %v3171
        %v3173 = vpop.f32.mrb[0].mxu0
        %v3174 = vadd.f32 %v2161, %v3173
        %3175 = vmatprep.mubr.f32.mxu0 0.0
        %v3176 = vand.u32 %v744, 4294901760
        %3177 = vmatmul.mubr.f32.gmra.mrb[0].mxu0 %v3176
        %v3178 = vpop.f32.mrb[0].mxu0
        %v3179 = vadd.f32 %v2170, %v3178
        %v3180 = vpop.f32.mrb[0].mxu0
        %v3181 = vadd.f32 %v2172, %v3180
        %3182 = vmatprep.mubr.f32.mxu0 0.0
        %v3183 = vand.u32 %v747, 4294901760
        %3184 = vmatmul.mubr.f32.gmra.mrb[0].mxu0 %v3183
        %v3185 = vpop.f32.mrb[0].mxu0
        %v3186 = vadd.f32 %v2181, %v3185
        %v3187 = vpop.f32.mrb[0].mxu0
        %v3188 = vadd.f32 %v2183, %v3187
        %3189 = vmatprep.mubr.f32.mxu0 0.0
        %v3190 = vand.u32 %v750, 4294901760
        %3191 = vmatmul.mubr.f32.gmra.mrb[0].mxu0 %v3190
        %v3192 = vpop.f32.mrb[0].mxu0
        %v3193 = vadd.f32 %v2192, %v3192
        %v3194 = vpop.f32.mrb[0].mxu0
        %v3195 = vadd.f32 %v2194, %v3194
        %3196 = vmatprep.mubr.f32.mxu0 0.0
        %v3197 = vand.u32 %v753, 4294901760
        %3198 = vmatmul.mubr.f32.gmra.mrb[0].mxu0 %v3197
        %v3199 = vpop.f32.mrb[0].mxu0
        %v3200 = vadd.f32 %v2203, %v3199
        %v3201 = vpop.f32.mrb[0].mxu0
        %v3202 = vadd.f32 %v2205, %v3201
        %3203 = vmatprep.mubr.f32.mxu0 0.0
        %v3204 = vand.u32 %v756, 4294901760
        %3205 = vmatmul.mubr.f32.gmra.mrb[0].mxu0 %v3204
        %v3206 = vpop.f32.mrb[0].mxu0
        %v3207 = vadd.f32 %v2214, %v3206
        %v3208 = vpop.f32.mrb[0].mxu0
        %v3209 = vadd.f32 %v2216, %v3208
        %3210 = vmatprep.mubr.f32.mxu0 0.0
        %v3211 = vand.u32 %v759, 4294901760
        %3212 = vmatmul.mubr.f32.gmra.mrb[0].mxu0 %v3211
        %v3213 = vpop.f32.mrb[0].mxu0
        %v3214 = vadd.f32 %v2225, %v3213
        %v3215 = vpop.f32.mrb[0].mxu0
        %v3216 = vadd.f32 %v2227, %v3215
        %3217 = vmatprep.mubr.f32.mxu0 0.0
        %v3218 = vand.u32 %v762, 4294901760
        %3219 = vmatmul.mubr.f32.gmra.mrb[0].mxu0 %v3218
        %v3220 = vpop.f32.mrb[0].mxu0
        %v3221 = vadd.f32 %v2236, %v3220
        %v3222 = vpop.f32.mrb[0].mxu0
        %v3223 = vadd.f32 %v2238, %v3222
        %3224 = vmatprep.mubr.f32.mxu0 0.0
        %v3225 = vand.u32 %v765, 4294901760
        %3226 = vmatmul.mubr.f32.gmra.mrb[0].mxu0 %v3225
        %v3227 = vpop.f32.mrb[0].mxu0
        %v3228 = vadd.f32 %v2247, %v3227
        %v3229 = vpop.f32.mrb[0].mxu0
        %v3230 = vadd.f32 %v2249, %v3229
        %3231 = vdwg.mxu0
        %v3232 = vand.u32 %v379, 4294901760
        %v3233 = vsub.f32 %v379, %v3232
        %3234 = vmatprep.subr.mxu0 %v3233
        %v3235 = vand.u32 %v378, 4294901760
        %v3236 = vsub.f32 %v378, %v3235
        %3237 = vmatpush1.msra.mxu0 %v3236
        %v3238 = vand.u32 %v772, 4294901760
        %v3239 = vsub.f32 %v772, %v3238
        %3240 = vmatprep.subr.mxu0 %v3239
        %v3241 = vand.u32 %v769, 4294901760
        %v3242 = vsub.f32 %v769, %v3241
        %3243 = vmatpush1.msra.mxu0 %v3242
        %3244 = vmatprep.subr.mxu0 0.0
        %3245 = vmatpush1.msra.mxu0 0.0
        %3246 = vmatprep.subr.mxu0 0.0
        %3247 = vmatpush1.msra.mxu0 0.0
        %3248 = vmatprep.subr.mxu0 0.0
        %3249 = vmatpush1.msra.mxu0 0.0
        %3250 = vmatprep.subr.mxu0 0.0
        %3251 = vmatpush1.msra.mxu0 0.0
        %3252 = vmatprep.subr.mxu0 0.0
        %3253 = vmatpush1.msra.mxu0 0.0
        %3254 = vmatprep.subr.mxu0 0.0
        %3255 = vmatpush1.msra.mxu0 0.0
        %3256 = vmatprep.subr.mxu0 0.0
        %3257 = vmatpush1.msra.mxu0 0.0
        %3258 = vmatprep.subr.mxu0 0.0
        %3259 = vmatpush1.msra.mxu0 0.0
        %3260 = vmatprep.subr.mxu0 0.0
        %3261 = vmatpush1.msra.mxu0 0.0
        %3262 = vmatprep.subr.mxu0 0.0
        %3263 = vmatpush1.msra.mxu0 0.0
        %3264 = vmatprep.subr.mxu0 0.0
        %3265 = vmatpush1.msra.mxu0 0.0
        %3266 = vmatprep.subr.mxu0 0.0
        %3267 = vmatpush1.msra.mxu0 0.0
        %3268 = vmatprep.subr.mxu0 0.0
        %3269 = vmatpush1.msra.mxu0 0.0
        %3270 = vmatprep.subr.mxu0 0.0
        %3271 = vmatpush1.msra.mxu0 0.0
        %3272 = vmatprep.subr.mxu0 0.0
        %3273 = vmatpush1.msra.mxu0 0.0
        %3274 = vmatprep.subr.mxu0 0.0
        %3275 = vmatpush1.msra.mxu0 0.0
        %3276 = vmatprep.subr.mxu0 0.0
        %3277 = vmatpush1.msra.mxu0 0.0
        %3278 = vmatprep.subr.mxu0 0.0
        %3279 = vmatpush1.msra.mxu0 0.0
        %3280 = vmatprep.subr.mxu0 0.0
        %3281 = vmatpush1.msra.mxu0 0.0
        %3282 = vmatprep.subr.mxu0 0.0
        %3283 = vmatpush1.msra.mxu0 0.0
        %3284 = vmatprep.subr.mxu0 0.0
        %3285 = vmatpush1.msra.mxu0 0.0
        %3286 = vmatprep.subr.mxu0 0.0
        %3287 = vmatpush1.msra.mxu0 0.0
        %3288 = vmatprep.subr.mxu0 0.0
        %3289 = vmatpush1.msra.mxu0 0.0
        %3290 = vmatprep.subr.mxu0 0.0
        %3291 = vmatpush1.msra.mxu0 0.0
        %3292 = vmatprep.subr.mxu0 0.0
        %3293 = vmatpush1.msra.mxu0 0.0
        %3294 = vmatprep.subr.mxu0 0.0
        %3295 = vmatpush1.msra.mxu0 0.0
        %3296 = vmatprep.subr.mxu0 0.0
        %3297 = vmatpush1.msra.mxu0 0.0
        %3298 = vmatprep.subr.mxu0 0.0
        %3299 = vmatpush1.msra.mxu0 0.0
        %3300 = vmatprep.subr.mxu0 0.0
        %3301 = vmatpush1.msra.mxu0 0.0
        %3302 = vmatprep.subr.mxu0 0.0
        %3303 = vmatpush1.msra.mxu0 0.0
        %3304 = vmatprep.mubr.f32.mxu0 0.0
        %v3305 = vand.u32 %v384, 4294901760
        %v3306 = vsub.f32 %v384, %v3305
        %3307 = vmatmul.mubr.f32.gmra.mrb[0].mxu0 %v3306
        %v3308 = vpop.f32.mrb[0].mxu0
        %v3309 = vadd.f32 %v2339, %v3308
        %v3310 = vpop.f32.mrb[0].mxu0
        %v3311 = vadd.f32 %v2341, %v3310
        %3312 = vmatprep.mubr.f32.mxu0 0.0
        %v3313 = vand.u32 %v387, 4294901760
        %v3314 = vsub.f32 %v387, %v3313
        %3315 = vmatmul.mubr.f32.gmra.mrb[0].mxu0 %v3314
        %v3316 = vpop.f32.mrb[0].mxu0
        %v3317 = vadd.f32 %v2346, %v3316
        %v3318 = vpop.f32.mrb[0].mxu0
        %v3319 = vadd.f32 %v2348, %v3318
        %3320 = vmatprep.mubr.f32.mxu0 0.0
        %v3321 = vand.u32 %v390, 4294901760
        %v3322 = vsub.f32 %v390, %v3321
        %3323 = vmatmul.mubr.f32.gmra.mrb[0].mxu0 %v3322
        %v3324 = vpop.f32.mrb[0].mxu0
        %v3325 = vadd.f32 %v2353, %v3324
        %v3326 = vpop.f32.mrb[0].mxu0
        %v3327 = vadd.f32 %v2355, %v3326
        %3328 = vmatprep.mubr.f32.mxu0 0.0
        %v3329 = vand.u32 %v393, 4294901760
        %v3330 = vsub.f32 %v393, %v3329
        %3331 = vmatmul.mubr.f32.gmra.mrb[0].mxu0 %v3330
        %v3332 = vpop.f32.mrb[0].mxu0
        %v3333 = vadd.f32 %v2360, %v3332
        %v3334 = vpop.f32.mrb[0].mxu0
        %v3335 = vadd.f32 %v2362, %v3334
        %3336 = vmatprep.mubr.f32.mxu0 0.0
        %v3337 = vand.u32 %v396, 4294901760
        %v3338 = vsub.f32 %v396, %v3337
        %3339 = vmatmul.mubr.f32.gmra.mrb[0].mxu0 %v3338
        %v3340 = vpop.f32.mrb[0].mxu0
        %v3341 = vadd.f32 %v2367, %v3340
        %v3342 = vpop.f32.mrb[0].mxu0
        %v3343 = vadd.f32 %v2369, %v3342
        %3344 = vmatprep.mubr.f32.mxu0 0.0
        %v3345 = vand.u32 %v399, 4294901760
        %v3346 = vsub.f32 %v399, %v3345
        %3347 = vmatmul.mubr.f32.gmra.mrb[0].mxu0 %v3346
        %v3348 = vpop.f32.mrb[0].mxu0
        %v3349 = vadd.f32 %v2374, %v3348
        %v3350 = vpop.f32.mrb[0].mxu0
        %v3351 = vadd.f32 %v2376, %v3350
        %3352 = vmatprep.mubr.f32.mxu0 0.0
        %v3353 = vand.u32 %v402, 4294901760
        %v3354 = vsub.f32 %v402, %v3353
        %3355 = vmatmul.mubr.f32.gmra.mrb[0].mxu0 %v3354
        %v3356 = vpop.f32.mrb[0].mxu0
        %v3357 = vadd.f32 %v2381, %v3356
        %v3358 = vpop.f32.mrb[0].mxu0
        %v3359 = vadd.f32 %v2383, %v3358
        %3360 = vmatprep.mubr.f32.mxu0 0.0
        %v3361 = vand.u32 %v405, 4294901760
        %v3362 = vsub.f32 %v405, %v3361
        %3363 = vmatmul.mubr.f32.gmra.mrb[0].mxu0 %v3362
        %v3364 = vpop.f32.mrb[0].mxu0
        %v3365 = vadd.f32 %v2388, %v3364
        %v3366 = vpop.f32.mrb[0].mxu0
        %v3367 = vadd.f32 %v2390, %v3366
        %3368 = vmatprep.mubr.f32.mxu0 0.0
        %v3369 = vand.u32 %v408, 4294901760
        %v3370 = vsub.f32 %v408, %v3369
        %3371 = vmatmul.mubr.f32.gmra.mrb[0].mxu0 %v3370
        %v3372 = vpop.f32.mrb[0].mxu0
        %v3373 = vadd.f32 %v2395, %v3372
        %v3374 = vpop.f32.mrb[0].mxu0
        %v3375 = vadd.f32 %v2397, %v3374
        %3376 = vmatprep.mubr.f32.mxu0 0.0
        %v3377 = vand.u32 %v411, 4294901760
        %v3378 = vsub.f32 %v411, %v3377
        %3379 = vmatmul.mubr.f32.gmra.mrb[0].mxu0 %v3378
        %v3380 = vpop.f32.mrb[0].mxu0
        %v3381 = vadd.f32 %v2402, %v3380
        %v3382 = vpop.f32.mrb[0].mxu0
        %v3383 = vadd.f32 %v2404, %v3382
        %3384 = vmatprep.mubr.f32.mxu0 0.0
        %v3385 = vand.u32 %v414, 4294901760
        %v3386 = vsub.f32 %v414, %v3385
        %3387 = vmatmul.mubr.f32.gmra.mrb[0].mxu0 %v3386
        %v3388 = vpop.f32.mrb[0].mxu0
        %v3389 = vadd.f32 %v2409, %v3388
        %v3390 = vpop.f32.mrb[0].mxu0
        %v3391 = vadd.f32 %v2411, %v3390
        %3392 = vmatprep.mubr.f32.mxu0 0.0
        %v3393 = vand.u32 %v417, 4294901760
        %v3394 = vsub.f32 %v417, %v3393
        %3395 = vmatmul.mubr.f32.gmra.mrb[0].mxu0 %v3394
        %v3396 = vpop.f32.mrb[0].mxu0
        %v3397 = vadd.f32 %v2416, %v3396
        %v3398 = vpop.f32.mrb[0].mxu0
        %v3399 = vadd.f32 %v2418, %v3398
        %3400 = vmatprep.mubr.f32.mxu0 0.0
        %v3401 = vand.u32 %v420, 4294901760
        %v3402 = vsub.f32 %v420, %v3401
        %3403 = vmatmul.mubr.f32.gmra.mrb[0].mxu0 %v3402
        %v3404 = vpop.f32.mrb[0].mxu0
        %v3405 = vadd.f32 %v2423, %v3404
        %v3406 = vpop.f32.mrb[0].mxu0
        %v3407 = vadd.f32 %v2425, %v3406
        %3408 = vmatprep.mubr.f32.mxu0 0.0
        %v3409 = vand.u32 %v423, 4294901760
        %v3410 = vsub.f32 %v423, %v3409
        %3411 = vmatmul.mubr.f32.gmra.mrb[0].mxu0 %v3410
        %v3412 = vpop.f32.mrb[0].mxu0
        %v3413 = vadd.f32 %v2430, %v3412
        %v3414 = vpop.f32.mrb[0].mxu0
        %v3415 = vadd.f32 %v2432, %v3414
        %3416 = vmatprep.mubr.f32.mxu0 0.0
        %v3417 = vand.u32 %v426, 4294901760
        %v3418 = vsub.f32 %v426, %v3417
        %3419 = vmatmul.mubr.f32.gmra.mrb[0].mxu0 %v3418
        %v3420 = vpop.f32.mrb[0].mxu0
        %v3421 = vadd.f32 %v2437, %v3420
        %v3422 = vpop.f32.mrb[0].mxu0
        %v3423 = vadd.f32 %v2439, %v3422
        %3424 = vmatprep.mubr.f32.mxu0 0.0
        %v3425 = vand.u32 %v429, 4294901760
        %v3426 = vsub.f32 %v429, %v3425
        %3427 = vmatmul.mubr.f32.gmra.mrb[0].mxu0 %v3426
        %v3428 = vpop.f32.mrb[0].mxu0
        %v3429 = vadd.f32 %v2444, %v3428
        %v3430 = vpop.f32.mrb[0].mxu0
        %v3431 = vadd.f32 %v2446, %v3430
        %3432 = vmatprep.mubr.f32.mxu0 0.0
        %v3433 = vand.u32 %v432, 4294901760
        %v3434 = vsub.f32 %v432, %v3433
        %3435 = vmatmul.mubr.f32.gmra.mrb[0].mxu0 %v3434
        %v3436 = vpop.f32.mrb[0].mxu0
        %v3437 = vadd.f32 %v2451, %v3436
        %v3438 = vpop.f32.mrb[0].mxu0
        %v3439 = vadd.f32 %v2453, %v3438
        %3440 = vmatprep.mubr.f32.mxu0 0.0
        %v3441 = vand.u32 %v435, 4294901760
        %v3442 = vsub.f32 %v435, %v3441
        %3443 = vmatmul.mubr.f32.gmra.mrb[0].mxu0 %v3442
        %v3444 = vpop.f32.mrb[0].mxu0
        %v3445 = vadd.f32 %v2458, %v3444
        %v3446 = vpop.f32.mrb[0].mxu0
        %v3447 = vadd.f32 %v2460, %v3446
        %3448 = vmatprep.mubr.f32.mxu0 0.0
        %v3449 = vand.u32 %v438, 4294901760
        %v3450 = vsub.f32 %v438, %v3449
        %3451 = vmatmul.mubr.f32.gmra.mrb[0].mxu0 %v3450
        %v3452 = vpop.f32.mrb[0].mxu0
        %v3453 = vadd.f32 %v2465, %v3452
        %v3454 = vpop.f32.mrb[0].mxu0
        %v3455 = vadd.f32 %v2467, %v3454
        %3456 = vmatprep.mubr.f32.mxu0 0.0
        %v3457 = vand.u32 %v441, 4294901760
        %v3458 = vsub.f32 %v441, %v3457
        %3459 = vmatmul.mubr.f32.gmra.mrb[0].mxu0 %v3458
        %v3460 = vpop.f32.mrb[0].mxu0
        %v3461 = vadd.f32 %v2472, %v3460
        %v3462 = vpop.f32.mrb[0].mxu0
        %v3463 = vadd.f32 %v2474, %v3462
        %3464 = vmatprep.mubr.f32.mxu0 0.0
        %v3465 = vand.u32 %v444, 4294901760
        %v3466 = vsub.f32 %v444, %v3465
        %3467 = vmatmul.mubr.f32.gmra.mrb[0].mxu0 %v3466
        %v3468 = vpop.f32.mrb[0].mxu0
        %v3469 = vadd.f32 %v2479, %v3468
        %v3470 = vpop.f32.mrb[0].mxu0
        %v3471 = vadd.f32 %v2481, %v3470
        %3472 = vmatprep.mubr.f32.mxu0 0.0
        %v3473 = vand.u32 %v447, 4294901760
        %v3474 = vsub.f32 %v447, %v3473
        %3475 = vmatmul.mubr.f32.gmra.mrb[0].mxu0 %v3474
        %v3476 = vpop.f32.mrb[0].mxu0
        %v3477 = vadd.f32 %v2486, %v3476
        %v3478 = vpop.f32.mrb[0].mxu0
        %v3479 = vadd.f32 %v2488, %v3478
        %3480 = vmatprep.mubr.f32.mxu0 0.0
        %v3481 = vand.u32 %v450, 4294901760
        %v3482 = vsub.f32 %v450, %v3481
        %3483 = vmatmul.mubr.f32.gmra.mrb[0].mxu0 %v3482
        %v3484 = vpop.f32.mrb[0].mxu0
        %v3485 = vadd.f32 %v2493, %v3484
        %v3486 = vpop.f32.mrb[0].mxu0
        %v3487 = vadd.f32 %v2495, %v3486
        %3488 = vmatprep.mubr.f32.mxu0 0.0
        %v3489 = vand.u32 %v453, 4294901760
        %v3490 = vsub.f32 %v453, %v3489
        %3491 = vmatmul.mubr.f32.gmra.mrb[0].mxu0 %v3490
        %v3492 = vpop.f32.mrb[0].mxu0
        %v3493 = vadd.f32 %v2500, %v3492
        %v3494 = vpop.f32.mrb[0].mxu0
        %v3495 = vadd.f32 %v2502, %v3494
        %3496 = vmatprep.mubr.f32.mxu0 0.0
        %v3497 = vand.u32 %v456, 4294901760
        %v3498 = vsub.f32 %v456, %v3497
        %3499 = vmatmul.mubr.f32.gmra.mrb[0].mxu0 %v3498
        %v3500 = vpop.f32.mrb[0].mxu0
        %v3501 = vadd.f32 %v2507, %v3500
        %v3502 = vpop.f32.mrb[0].mxu0
        %v3503 = vadd.f32 %v2509, %v3502
        %3504 = vmatprep.mubr.f32.mxu0 0.0
        %v3505 = vand.u32 %v459, 4294901760
        %v3506 = vsub.f32 %v459, %v3505
        %3507 = vmatmul.mubr.f32.gmra.mrb[0].mxu0 %v3506
        %v3508 = vpop.f32.mrb[0].mxu0
        %v3509 = vadd.f32 %v2514, %v3508
        %v3510 = vpop.f32.mrb[0].mxu0
        %v3511 = vadd.f32 %v2516, %v3510
        %3512 = vmatprep.mubr.f32.mxu0 0.0
        %v3513 = vand.u32 %v462, 4294901760
        %v3514 = vsub.f32 %v462, %v3513
        %3515 = vmatmul.mubr.f32.gmra.mrb[0].mxu0 %v3514
        %v3516 = vpop.f32.mrb[0].mxu0
        %v3517 = vadd.f32 %v2521, %v3516
        %v3518 = vpop.f32.mrb[0].mxu0
        %v3519 = vadd.f32 %v2523, %v3518
        %3520 = vmatprep.mubr.f32.mxu0 0.0
        %v3521 = vand.u32 %v465, 4294901760
        %v3522 = vsub.f32 %v465, %v3521
        %3523 = vmatmul.mubr.f32.gmra.mrb[0].mxu0 %v3522
        %v3524 = vpop.f32.mrb[0].mxu0
        %v3525 = vadd.f32 %v2528, %v3524
        %v3526 = vpop.f32.mrb[0].mxu0
        %v3527 = vadd.f32 %v2530, %v3526
        %3528 = vmatprep.mubr.f32.mxu0 0.0
        %v3529 = vand.u32 %v468, 4294901760
        %v3530 = vsub.f32 %v468, %v3529
        %3531 = vmatmul.mubr.f32.gmra.mrb[0].mxu0 %v3530
        %v3532 = vpop.f32.mrb[0].mxu0
        %v3533 = vadd.f32 %v2535, %v3532
        %v3534 = vpop.f32.mrb[0].mxu0
        %v3535 = vadd.f32 %v2537, %v3534
        %3536 = vmatprep.mubr.f32.mxu0 0.0
        %v3537 = vand.u32 %v471, 4294901760
        %v3538 = vsub.f32 %v471, %v3537
        %3539 = vmatmul.mubr.f32.gmra.mrb[0].mxu0 %v3538
        %v3540 = vpop.f32.mrb[0].mxu0
        %v3541 = vadd.f32 %v2542, %v3540
        %v3542 = vpop.f32.mrb[0].mxu0
        %v3543 = vadd.f32 %v2544, %v3542
        %3544 = vmatprep.mubr.f32.mxu0 0.0
        %v3545 = vand.u32 %v474, 4294901760
        %v3546 = vsub.f32 %v474, %v3545
        %3547 = vmatmul.mubr.f32.gmra.mrb[0].mxu0 %v3546
        %v3548 = vpop.f32.mrb[0].mxu0
        %v3549 = vadd.f32 %v2549, %v3548
        %v3550 = vpop.f32.mrb[0].mxu0
        %v3551 = vadd.f32 %v2551, %v3550
        %3552 = vmatprep.mubr.f32.mxu0 0.0
        %v3553 = vand.u32 %v477, 4294901760
        %v3554 = vsub.f32 %v477, %v3553
        %3555 = vmatmul.mubr.f32.gmra.mrb[0].mxu0 %v3554
        %v3556 = vpop.f32.mrb[0].mxu0
        %v3557 = vadd.f32 %v2556, %v3556
        %v3558 = vpop.f32.mrb[0].mxu0
        %v3559 = vadd.f32 %v2558, %v3558
        %3560 = vmatprep.mubr.f32.mxu0 0.0
        %v3561 = vand.u32 %v480, 4294901760
        %v3562 = vsub.f32 %v480, %v3561
        %3563 = vmatmul.mubr.f32.gmra.mrb[0].mxu0 %v3562
        %v3564 = vpop.f32.mrb[0].mxu0
        %v3565 = vadd.f32 %v2563, %v3564
        %v3566 = vpop.f32.mrb[0].mxu0
        %v3567 = vadd.f32 %v2565, %v3566
        %3568 = vmatprep.mubr.f32.mxu0 0.0
        %v3569 = vand.u32 %v483, 4294901760
        %v3570 = vsub.f32 %v483, %v3569
        %3571 = vmatmul.mubr.f32.gmra.mrb[0].mxu0 %v3570
        %v3572 = vpop.f32.mrb[0].mxu0
        %v3573 = vadd.f32 %v2570, %v3572
        %v3574 = vpop.f32.mrb[0].mxu0
        %v3575 = vadd.f32 %v2572, %v3574
        %3576 = vmatprep.mubr.f32.mxu0 0.0
        %v3577 = vand.u32 %v486, 4294901760
        %v3578 = vsub.f32 %v486, %v3577
        %3579 = vmatmul.mubr.f32.gmra.mrb[0].mxu0 %v3578
        %v3580 = vpop.f32.mrb[0].mxu0
        %v3581 = vadd.f32 %v2577, %v3580
        %v3582 = vpop.f32.mrb[0].mxu0
        %v3583 = vadd.f32 %v2579, %v3582
        %3584 = vmatprep.mubr.f32.mxu0 0.0
        %v3585 = vand.u32 %v489, 4294901760
        %v3586 = vsub.f32 %v489, %v3585
        %3587 = vmatmul.mubr.f32.gmra.mrb[0].mxu0 %v3586
        %v3588 = vpop.f32.mrb[0].mxu0
        %v3589 = vadd.f32 %v2584, %v3588
        %v3590 = vpop.f32.mrb[0].mxu0
        %v3591 = vadd.f32 %v2586, %v3590
        %3592 = vmatprep.mubr.f32.mxu0 0.0
        %v3593 = vand.u32 %v492, 4294901760
        %v3594 = vsub.f32 %v492, %v3593
        %3595 = vmatmul.mubr.f32.gmra.mrb[0].mxu0 %v3594
        %v3596 = vpop.f32.mrb[0].mxu0
        %v3597 = vadd.f32 %v2591, %v3596
        %v3598 = vpop.f32.mrb[0].mxu0
        %v3599 = vadd.f32 %v2593, %v3598
        %3600 = vmatprep.mubr.f32.mxu0 0.0
        %v3601 = vand.u32 %v495, 4294901760
        %v3602 = vsub.f32 %v495, %v3601
        %3603 = vmatmul.mubr.f32.gmra.mrb[0].mxu0 %v3602
        %v3604 = vpop.f32.mrb[0].mxu0
        %v3605 = vadd.f32 %v2598, %v3604
        %v3606 = vpop.f32.mrb[0].mxu0
        %v3607 = vadd.f32 %v2600, %v3606
        %3608 = vmatprep.mubr.f32.mxu0 0.0
        %v3609 = vand.u32 %v498, 4294901760
        %v3610 = vsub.f32 %v498, %v3609
        %3611 = vmatmul.mubr.f32.gmra.mrb[0].mxu0 %v3610
        %v3612 = vpop.f32.mrb[0].mxu0
        %v3613 = vadd.f32 %v2605, %v3612
        %v3614 = vpop.f32.mrb[0].mxu0
        %v3615 = vadd.f32 %v2607, %v3614
        %3616 = vmatprep.mubr.f32.mxu0 0.0
        %v3617 = vand.u32 %v501, 4294901760
        %v3618 = vsub.f32 %v501, %v3617
        %3619 = vmatmul.mubr.f32.gmra.mrb[0].mxu0 %v3618
        %v3620 = vpop.f32.mrb[0].mxu0
        %v3621 = vadd.f32 %v2612, %v3620
        %v3622 = vpop.f32.mrb[0].mxu0
        %v3623 = vadd.f32 %v2614, %v3622
        %3624 = vmatprep.mubr.f32.mxu0 0.0
        %v3625 = vand.u32 %v504, 4294901760
        %v3626 = vsub.f32 %v504, %v3625
        %3627 = vmatmul.mubr.f32.gmra.mrb[0].mxu0 %v3626
        %v3628 = vpop.f32.mrb[0].mxu0
        %v3629 = vadd.f32 %v2619, %v3628
        %v3630 = vpop.f32.mrb[0].mxu0
        %v3631 = vadd.f32 %v2621, %v3630
        %3632 = vmatprep.mubr.f32.mxu0 0.0
        %v3633 = vand.u32 %v507, 4294901760
        %v3634 = vsub.f32 %v507, %v3633
        %3635 = vmatmul.mubr.f32.gmra.mrb[0].mxu0 %v3634
        %v3636 = vpop.f32.mrb[0].mxu0
        %v3637 = vadd.f32 %v2626, %v3636
        %v3638 = vpop.f32.mrb[0].mxu0
        %v3639 = vadd.f32 %v2628, %v3638
        %3640 = vmatprep.mubr.f32.mxu0 0.0
        %v3641 = vand.u32 %v510, 4294901760
        %v3642 = vsub.f32 %v510, %v3641
        %3643 = vmatmul.mubr.f32.gmra.mrb[0].mxu0 %v3642
        %v3644 = vpop.f32.mrb[0].mxu0
        %v3645 = vadd.f32 %v2633, %v3644
        %v3646 = vpop.f32.mrb[0].mxu0
        %v3647 = vadd.f32 %v2635, %v3646
        %3648 = vmatprep.mubr.f32.mxu0 0.0
        %v3649 = vand.u32 %v513, 4294901760
        %v3650 = vsub.f32 %v513, %v3649
        %3651 = vmatmul.mubr.f32.gmra.mrb[0].mxu0 %v3650
        %v3652 = vpop.f32.mrb[0].mxu0
        %v3653 = vadd.f32 %v2640, %v3652
        %v3654 = vpop.f32.mrb[0].mxu0
        %v3655 = vadd.f32 %v2642, %v3654
        %3656 = vmatprep.mubr.f32.mxu0 0.0
        %v3657 = vand.u32 %v516, 4294901760
        %v3658 = vsub.f32 %v516, %v3657
        %3659 = vmatmul.mubr.f32.gmra.mrb[0].mxu0 %v3658
        %v3660 = vpop.f32.mrb[0].mxu0
        %v3661 = vadd.f32 %v2647, %v3660
        %v3662 = vpop.f32.mrb[0].mxu0
        %v3663 = vadd.f32 %v2649, %v3662
        %3664 = vmatprep.mubr.f32.mxu0 0.0
        %v3665 = vand.u32 %v519, 4294901760
        %v3666 = vsub.f32 %v519, %v3665
        %3667 = vmatmul.mubr.f32.gmra.mrb[0].mxu0 %v3666
        %v3668 = vpop.f32.mrb[0].mxu0
        %v3669 = vadd.f32 %v2654, %v3668
        %v3670 = vpop.f32.mrb[0].mxu0
        %v3671 = vadd.f32 %v2656, %v3670
        %3672 = vmatprep.mubr.f32.mxu0 0.0
        %v3673 = vand.u32 %v522, 4294901760
        %v3674 = vsub.f32 %v522, %v3673
        %3675 = vmatmul.mubr.f32.gmra.mrb[0].mxu0 %v3674
        %v3676 = vpop.f32.mrb[0].mxu0
        %v3677 = vadd.f32 %v2661, %v3676
        %v3678 = vpop.f32.mrb[0].mxu0
        %v3679 = vadd.f32 %v2663, %v3678
        %3680 = vmatprep.mubr.f32.mxu0 0.0
        %v3681 = vand.u32 %v525, 4294901760
        %v3682 = vsub.f32 %v525, %v3681
        %3683 = vmatmul.mubr.f32.gmra.mrb[0].mxu0 %v3682
        %v3684 = vpop.f32.mrb[0].mxu0
        %v3685 = vadd.f32 %v2668, %v3684
        %v3686 = vpop.f32.mrb[0].mxu0
        %v3687 = vadd.f32 %v2670, %v3686
        %3688 = vmatprep.mubr.f32.mxu0 0.0
        %v3689 = vand.u32 %v528, 4294901760
        %v3690 = vsub.f32 %v528, %v3689
        %3691 = vmatmul.mubr.f32.gmra.mrb[0].mxu0 %v3690
        %v3692 = vpop.f32.mrb[0].mxu0
        %v3693 = vadd.f32 %v2675, %v3692
        %v3694 = vpop.f32.mrb[0].mxu0
        %v3695 = vadd.f32 %v2677, %v3694
        %3696 = vmatprep.mubr.f32.mxu0 0.0
        %v3697 = vand.u32 %v531, 4294901760
        %v3698 = vsub.f32 %v531, %v3697
        %3699 = vmatmul.mubr.f32.gmra.mrb[0].mxu0 %v3698
        %v3700 = vpop.f32.mrb[0].mxu0
        %v3701 = vadd.f32 %v2682, %v3700
        %v3702 = vpop.f32.mrb[0].mxu0
        %v3703 = vadd.f32 %v2684, %v3702
        %3704 = vmatprep.mubr.f32.mxu0 0.0
        %v3705 = vand.u32 %v534, 4294901760
        %v3706 = vsub.f32 %v534, %v3705
        %3707 = vmatmul.mubr.f32.gmra.mrb[0].mxu0 %v3706
        %v3708 = vpop.f32.mrb[0].mxu0
        %v3709 = vadd.f32 %v2689, %v3708
        %v3710 = vpop.f32.mrb[0].mxu0
        %v3711 = vadd.f32 %v2691, %v3710
        %3712 = vmatprep.mubr.f32.mxu0 0.0
        %v3713 = vand.u32 %v537, 4294901760
        %v3714 = vsub.f32 %v537, %v3713
        %3715 = vmatmul.mubr.f32.gmra.mrb[0].mxu0 %v3714
        %v3716 = vpop.f32.mrb[0].mxu0
        %v3717 = vadd.f32 %v2696, %v3716
        %v3718 = vpop.f32.mrb[0].mxu0
        %v3719 = vadd.f32 %v2698, %v3718
        %3720 = vmatprep.mubr.f32.mxu0 0.0
        %v3721 = vand.u32 %v540, 4294901760
        %v3722 = vsub.f32 %v540, %v3721
        %3723 = vmatmul.mubr.f32.gmra.mrb[0].mxu0 %v3722
        %v3724 = vpop.f32.mrb[0].mxu0
        %v3725 = vadd.f32 %v2703, %v3724
        %v3726 = vpop.f32.mrb[0].mxu0
        %v3727 = vadd.f32 %v2705, %v3726
        %3728 = vmatprep.mubr.f32.mxu0 0.0
        %v3729 = vand.u32 %v543, 4294901760
        %v3730 = vsub.f32 %v543, %v3729
        %3731 = vmatmul.mubr.f32.gmra.mrb[0].mxu0 %v3730
        %v3732 = vpop.f32.mrb[0].mxu0
        %v3733 = vadd.f32 %v2710, %v3732
        %v3734 = vpop.f32.mrb[0].mxu0
        %v3735 = vadd.f32 %v2712, %v3734
        %3736 = vmatprep.mubr.f32.mxu0 0.0
        %v3737 = vand.u32 %v546, 4294901760
        %v3738 = vsub.f32 %v546, %v3737
        %3739 = vmatmul.mubr.f32.gmra.mrb[0].mxu0 %v3738
        %v3740 = vpop.f32.mrb[0].mxu0
        %v3741 = vadd.f32 %v2717, %v3740
        %v3742 = vpop.f32.mrb[0].mxu0
        %v3743 = vadd.f32 %v2719, %v3742
        %3744 = vmatprep.mubr.f32.mxu0 0.0
        %v3745 = vand.u32 %v549, 4294901760
        %v3746 = vsub.f32 %v549, %v3745
        %3747 = vmatmul.mubr.f32.gmra.mrb[0].mxu0 %v3746
        %v3748 = vpop.f32.mrb[0].mxu0
        %v3749 = vadd.f32 %v2724, %v3748
        %v3750 = vpop.f32.mrb[0].mxu0
        %v3751 = vadd.f32 %v2726, %v3750
        %3752 = vmatprep.mubr.f32.mxu0 0.0
        %v3753 = vand.u32 %v552, 4294901760
        %v3754 = vsub.f32 %v552, %v3753
        %3755 = vmatmul.mubr.f32.gmra.mrb[0].mxu0 %v3754
        %v3756 = vpop.f32.mrb[0].mxu0
        %v3757 = vadd.f32 %v2731, %v3756
        %v3758 = vpop.f32.mrb[0].mxu0
        %v3759 = vadd.f32 %v2733, %v3758
        %3760 = vmatprep.mubr.f32.mxu0 0.0
        %v3761 = vand.u32 %v555, 4294901760
        %v3762 = vsub.f32 %v555, %v3761
        %3763 = vmatmul.mubr.f32.gmra.mrb[0].mxu0 %v3762
        %v3764 = vpop.f32.mrb[0].mxu0
        %v3765 = vadd.f32 %v2738, %v3764
        %v3766 = vpop.f32.mrb[0].mxu0
        %v3767 = vadd.f32 %v2740, %v3766
        %3768 = vmatprep.mubr.f32.mxu0 0.0
        %v3769 = vand.u32 %v558, 4294901760
        %v3770 = vsub.f32 %v558, %v3769
        %3771 = vmatmul.mubr.f32.gmra.mrb[0].mxu0 %v3770
        %v3772 = vpop.f32.mrb[0].mxu0
        %v3773 = vadd.f32 %v2745, %v3772
        %v3774 = vpop.f32.mrb[0].mxu0
        %v3775 = vadd.f32 %v2747, %v3774
        %3776 = vmatprep.mubr.f32.mxu0 0.0
        %v3777 = vand.u32 %v561, 4294901760
        %v3778 = vsub.f32 %v561, %v3777
        %3779 = vmatmul.mubr.f32.gmra.mrb[0].mxu0 %v3778
        %v3780 = vpop.f32.mrb[0].mxu0
        %v3781 = vadd.f32 %v2752, %v3780
        %v3782 = vpop.f32.mrb[0].mxu0
        %v3783 = vadd.f32 %v2754, %v3782
        %3784 = vmatprep.mubr.f32.mxu0 0.0
        %v3785 = vand.u32 %v564, 4294901760
        %v3786 = vsub.f32 %v564, %v3785
        %3787 = vmatmul.mubr.f32.gmra.mrb[0].mxu0 %v3786
        %v3788 = vpop.f32.mrb[0].mxu0
        %v3789 = vadd.f32 %v2759, %v3788
        %v3790 = vpop.f32.mrb[0].mxu0
        %v3791 = vadd.f32 %v2761, %v3790
        %3792 = vmatprep.mubr.f32.mxu0 0.0
        %v3793 = vand.u32 %v567, 4294901760
        %v3794 = vsub.f32 %v567, %v3793
        %3795 = vmatmul.mubr.f32.gmra.mrb[0].mxu0 %v3794
        %v3796 = vpop.f32.mrb[0].mxu0
        %v3797 = vadd.f32 %v2766, %v3796
        %v3798 = vpop.f32.mrb[0].mxu0
        %v3799 = vadd.f32 %v2768, %v3798
        %3800 = vmatprep.mubr.f32.mxu0 0.0
        %v3801 = vand.u32 %v570, 4294901760
        %v3802 = vsub.f32 %v570, %v3801
        %3803 = vmatmul.mubr.f32.gmra.mrb[0].mxu0 %v3802
        %v3804 = vpop.f32.mrb[0].mxu0
        %v3805 = vadd.f32 %v2773, %v3804
        %v3806 = vpop.f32.mrb[0].mxu0
        %v3807 = vadd.f32 %v2775, %v3806
        %3808 = vmatprep.mubr.f32.mxu0 0.0
        %v3809 = vand.u32 %v573, 4294901760
        %v3810 = vsub.f32 %v573, %v3809
        %3811 = vmatmul.mubr.f32.gmra.mrb[0].mxu0 %v3810
        %v3812 = vpop.f32.mrb[0].mxu0
        %v3813 = vadd.f32 %v2780, %v3812
        %v3814 = vpop.f32.mrb[0].mxu0
        %v3815 = vadd.f32 %v2782, %v3814
        %3816 = vmatprep.mubr.f32.mxu0 0.0
        %v3817 = vand.u32 %v576, 4294901760
        %v3818 = vsub.f32 %v576, %v3817
        %3819 = vmatmul.mubr.f32.gmra.mrb[0].mxu0 %v3818
        %v3820 = vpop.f32.mrb[0].mxu0
        %v3821 = vadd.f32 %v2787, %v3820
        %v3822 = vpop.f32.mrb[0].mxu0
        %v3823 = vadd.f32 %v2789, %v3822
        %3824 = vmatprep.mubr.f32.mxu0 0.0
        %v3825 = vand.u32 %v579, 4294901760
        %v3826 = vsub.f32 %v579, %v3825
        %3827 = vmatmul.mubr.f32.gmra.mrb[0].mxu0 %v3826
        %v3828 = vpop.f32.mrb[0].mxu0
        %v3829 = vadd.f32 %v2794, %v3828
        %v3830 = vpop.f32.mrb[0].mxu0
        %v3831 = vadd.f32 %v2796, %v3830
        %3832 = vmatprep.mubr.f32.mxu0 0.0
        %v3833 = vand.u32 %v582, 4294901760
        %v3834 = vsub.f32 %v582, %v3833
        %3835 = vmatmul.mubr.f32.gmra.mrb[0].mxu0 %v3834
        %v3836 = vpop.f32.mrb[0].mxu0
        %v3837 = vadd.f32 %v2801, %v3836
        %v3838 = vpop.f32.mrb[0].mxu0
        %v3839 = vadd.f32 %v2803, %v3838
        %3840 = vmatprep.mubr.f32.mxu0 0.0
        %v3841 = vand.u32 %v585, 4294901760
        %v3842 = vsub.f32 %v585, %v3841
        %3843 = vmatmul.mubr.f32.gmra.mrb[0].mxu0 %v3842
        %v3844 = vpop.f32.mrb[0].mxu0
        %v3845 = vadd.f32 %v2808, %v3844
        %v3846 = vpop.f32.mrb[0].mxu0
        %v3847 = vadd.f32 %v2810, %v3846
        %3848 = vmatprep.mubr.f32.mxu0 0.0
        %v3849 = vand.u32 %v588, 4294901760
        %v3850 = vsub.f32 %v588, %v3849
        %3851 = vmatmul.mubr.f32.gmra.mrb[0].mxu0 %v3850
        %v3852 = vpop.f32.mrb[0].mxu0
        %v3853 = vadd.f32 %v2815, %v3852
        %v3854 = vpop.f32.mrb[0].mxu0
        %v3855 = vadd.f32 %v2817, %v3854
        %3856 = vmatprep.mubr.f32.mxu0 0.0
        %v3857 = vand.u32 %v591, 4294901760
        %v3858 = vsub.f32 %v591, %v3857
        %3859 = vmatmul.mubr.f32.gmra.mrb[0].mxu0 %v3858
        %v3860 = vpop.f32.mrb[0].mxu0
        %v3861 = vadd.f32 %v2822, %v3860
        %v3862 = vpop.f32.mrb[0].mxu0
        %v3863 = vadd.f32 %v2824, %v3862
        %3864 = vmatprep.mubr.f32.mxu0 0.0
        %v3865 = vand.u32 %v594, 4294901760
        %v3866 = vsub.f32 %v594, %v3865
        %3867 = vmatmul.mubr.f32.gmra.mrb[0].mxu0 %v3866
        %v3868 = vpop.f32.mrb[0].mxu0
        %v3869 = vadd.f32 %v2829, %v3868
        %v3870 = vpop.f32.mrb[0].mxu0
        %v3871 = vadd.f32 %v2831, %v3870
        %3872 = vmatprep.mubr.f32.mxu0 0.0
        %v3873 = vand.u32 %v597, 4294901760
        %v3874 = vsub.f32 %v597, %v3873
        %3875 = vmatmul.mubr.f32.gmra.mrb[0].mxu0 %v3874
        %v3876 = vpop.f32.mrb[0].mxu0
        %v3877 = vadd.f32 %v2836, %v3876
        %v3878 = vpop.f32.mrb[0].mxu0
        %v3879 = vadd.f32 %v2838, %v3878
        %3880 = vmatprep.mubr.f32.mxu0 0.0
        %v3881 = vand.u32 %v600, 4294901760
        %v3882 = vsub.f32 %v600, %v3881
        %3883 = vmatmul.mubr.f32.gmra.mrb[0].mxu0 %v3882
        %v3884 = vpop.f32.mrb[0].mxu0
        %v3885 = vadd.f32 %v2843, %v3884
        %v3886 = vpop.f32.mrb[0].mxu0
        %v3887 = vadd.f32 %v2845, %v3886
        %3888 = vmatprep.mubr.f32.mxu0 0.0
        %v3889 = vand.u32 %v603, 4294901760
        %v3890 = vsub.f32 %v603, %v3889
        %3891 = vmatmul.mubr.f32.gmra.mrb[0].mxu0 %v3890
        %v3892 = vpop.f32.mrb[0].mxu0
        %v3893 = vadd.f32 %v2850, %v3892
        %v3894 = vpop.f32.mrb[0].mxu0
        %v3895 = vadd.f32 %v2852, %v3894
        %3896 = vmatprep.mubr.f32.mxu0 0.0
        %v3897 = vand.u32 %v606, 4294901760
        %v3898 = vsub.f32 %v606, %v3897
        %3899 = vmatmul.mubr.f32.gmra.mrb[0].mxu0 %v3898
        %v3900 = vpop.f32.mrb[0].mxu0
        %v3901 = vadd.f32 %v2857, %v3900
        %v3902 = vpop.f32.mrb[0].mxu0
        %v3903 = vadd.f32 %v2859, %v3902
        %3904 = vmatprep.mubr.f32.mxu0 0.0
        %v3905 = vand.u32 %v609, 4294901760
        %v3906 = vsub.f32 %v609, %v3905
        %3907 = vmatmul.mubr.f32.gmra.mrb[0].mxu0 %v3906
        %v3908 = vpop.f32.mrb[0].mxu0
        %v3909 = vadd.f32 %v2864, %v3908
        %v3910 = vpop.f32.mrb[0].mxu0
        %v3911 = vadd.f32 %v2866, %v3910
        %3912 = vmatprep.mubr.f32.mxu0 0.0
        %v3913 = vand.u32 %v612, 4294901760
        %v3914 = vsub.f32 %v612, %v3913
        %3915 = vmatmul.mubr.f32.gmra.mrb[0].mxu0 %v3914
        %v3916 = vpop.f32.mrb[0].mxu0
        %v3917 = vadd.f32 %v2871, %v3916
        %v3918 = vpop.f32.mrb[0].mxu0
        %v3919 = vadd.f32 %v2873, %v3918
        %3920 = vmatprep.mubr.f32.mxu0 0.0
        %v3921 = vand.u32 %v615, 4294901760
        %v3922 = vsub.f32 %v615, %v3921
        %3923 = vmatmul.mubr.f32.gmra.mrb[0].mxu0 %v3922
        %v3924 = vpop.f32.mrb[0].mxu0
        %v3925 = vadd.f32 %v2878, %v3924
        %v3926 = vpop.f32.mrb[0].mxu0
        %v3927 = vadd.f32 %v2880, %v3926
        %3928 = vmatprep.mubr.f32.mxu0 0.0
        %v3929 = vand.u32 %v618, 4294901760
        %v3930 = vsub.f32 %v618, %v3929
        %3931 = vmatmul.mubr.f32.gmra.mrb[0].mxu0 %v3930
        %v3932 = vpop.f32.mrb[0].mxu0
        %v3933 = vadd.f32 %v2885, %v3932
        %v3934 = vpop.f32.mrb[0].mxu0
        %v3935 = vadd.f32 %v2887, %v3934
        %3936 = vmatprep.mubr.f32.mxu0 0.0
        %v3937 = vand.u32 %v621, 4294901760
        %v3938 = vsub.f32 %v621, %v3937
        %3939 = vmatmul.mubr.f32.gmra.mrb[0].mxu0 %v3938
        %v3940 = vpop.f32.mrb[0].mxu0
        %v3941 = vadd.f32 %v2892, %v3940
        %v3942 = vpop.f32.mrb[0].mxu0
        %v3943 = vadd.f32 %v2894, %v3942
        %3944 = vmatprep.mubr.f32.mxu0 0.0
        %v3945 = vand.u32 %v624, 4294901760
        %v3946 = vsub.f32 %v624, %v3945
        %3947 = vmatmul.mubr.f32.gmra.mrb[0].mxu0 %v3946
        %v3948 = vpop.f32.mrb[0].mxu0
        %v3949 = vadd.f32 %v2899, %v3948
        %v3950 = vpop.f32.mrb[0].mxu0
        %v3951 = vadd.f32 %v2901, %v3950
        %3952 = vmatprep.mubr.f32.mxu0 0.0
        %v3953 = vand.u32 %v627, 4294901760
        %v3954 = vsub.f32 %v627, %v3953
        %3955 = vmatmul.mubr.f32.gmra.mrb[0].mxu0 %v3954
        %v3956 = vpop.f32.mrb[0].mxu0
        %v3957 = vadd.f32 %v2906, %v3956
        %v3958 = vpop.f32.mrb[0].mxu0
        %v3959 = vadd.f32 %v2908, %v3958
        %3960 = vmatprep.mubr.f32.mxu0 0.0
        %v3961 = vand.u32 %v630, 4294901760
        %v3962 = vsub.f32 %v630, %v3961
        %3963 = vmatmul.mubr.f32.gmra.mrb[0].mxu0 %v3962
        %v3964 = vpop.f32.mrb[0].mxu0
        %v3965 = vadd.f32 %v2913, %v3964
        %v3966 = vpop.f32.mrb[0].mxu0
        %v3967 = vadd.f32 %v2915, %v3966
        %3968 = vmatprep.mubr.f32.mxu0 0.0
        %v3969 = vand.u32 %v633, 4294901760
        %v3970 = vsub.f32 %v633, %v3969
        %3971 = vmatmul.mubr.f32.gmra.mrb[0].mxu0 %v3970
        %v3972 = vpop.f32.mrb[0].mxu0
        %v3973 = vadd.f32 %v2920, %v3972
        %v3974 = vpop.f32.mrb[0].mxu0
        %v3975 = vadd.f32 %v2922, %v3974
        %3976 = vmatprep.mubr.f32.mxu0 0.0
        %v3977 = vand.u32 %v636, 4294901760
        %v3978 = vsub.f32 %v636, %v3977
        %3979 = vmatmul.mubr.f32.gmra.mrb[0].mxu0 %v3978
        %v3980 = vpop.f32.mrb[0].mxu0
        %v3981 = vadd.f32 %v2927, %v3980
        %v3982 = vpop.f32.mrb[0].mxu0
        %v3983 = vadd.f32 %v2929, %v3982
        %3984 = vmatprep.mubr.f32.mxu0 0.0
        %v3985 = vand.u32 %v639, 4294901760
        %v3986 = vsub.f32 %v639, %v3985
        %3987 = vmatmul.mubr.f32.gmra.mrb[0].mxu0 %v3986
        %v3988 = vpop.f32.mrb[0].mxu0
        %v3989 = vadd.f32 %v2934, %v3988
        %v3990 = vpop.f32.mrb[0].mxu0
        %v3991 = vadd.f32 %v2936, %v3990
        %3992 = vmatprep.mubr.f32.mxu0 0.0
        %v3993 = vand.u32 %v642, 4294901760
        %v3994 = vsub.f32 %v642, %v3993
        %3995 = vmatmul.mubr.f32.gmra.mrb[0].mxu0 %v3994
        %v3996 = vpop.f32.mrb[0].mxu0
        %v3997 = vadd.f32 %v2941, %v3996
        %v3998 = vpop.f32.mrb[0].mxu0
        %v3999 = vadd.f32 %v2943, %v3998
        %4000 = vmatprep.mubr.f32.mxu0 0.0
        %v4001 = vand.u32 %v645, 4294901760
        %v4002 = vsub.f32 %v645, %v4001
        %4003 = vmatmul.mubr.f32.gmra.mrb[0].mxu0 %v4002
        %v4004 = vpop.f32.mrb[0].mxu0
        %v4005 = vadd.f32 %v2948, %v4004
        %v4006 = vpop.f32.mrb[0].mxu0
        %v4007 = vadd.f32 %v2950, %v4006
        %4008 = vmatprep.mubr.f32.mxu0 0.0
        %v4009 = vand.u32 %v648, 4294901760
        %v4010 = vsub.f32 %v648, %v4009
        %4011 = vmatmul.mubr.f32.gmra.mrb[0].mxu0 %v4010
        %v4012 = vpop.f32.mrb[0].mxu0
        %v4013 = vadd.f32 %v2955, %v4012
        %v4014 = vpop.f32.mrb[0].mxu0
        %v4015 = vadd.f32 %v2957, %v4014
        %4016 = vmatprep.mubr.f32.mxu0 0.0
        %v4017 = vand.u32 %v651, 4294901760
        %v4018 = vsub.f32 %v651, %v4017
        %4019 = vmatmul.mubr.f32.gmra.mrb[0].mxu0 %v4018
        %v4020 = vpop.f32.mrb[0].mxu0
        %v4021 = vadd.f32 %v2962, %v4020
        %v4022 = vpop.f32.mrb[0].mxu0
        %v4023 = vadd.f32 %v2964, %v4022
        %4024 = vmatprep.mubr.f32.mxu0 0.0
        %v4025 = vand.u32 %v654, 4294901760
        %v4026 = vsub.f32 %v654, %v4025
        %4027 = vmatmul.mubr.f32.gmra.mrb[0].mxu0 %v4026
        %v4028 = vpop.f32.mrb[0].mxu0
        %v4029 = vadd.f32 %v2969, %v4028
        %v4030 = vpop.f32.mrb[0].mxu0
        %v4031 = vadd.f32 %v2971, %v4030
        %4032 = vmatprep.mubr.f32.mxu0 0.0
        %v4033 = vand.u32 %v657, 4294901760
        %v4034 = vsub.f32 %v657, %v4033
        %4035 = vmatmul.mubr.f32.gmra.mrb[0].mxu0 %v4034
        %v4036 = vpop.f32.mrb[0].mxu0
        %v4037 = vadd.f32 %v2976, %v4036
        %v4038 = vpop.f32.mrb[0].mxu0
        %v4039 = vadd.f32 %v2978, %v4038
        %4040 = vmatprep.mubr.f32.mxu0 0.0
        %v4041 = vand.u32 %v660, 4294901760
        %v4042 = vsub.f32 %v660, %v4041
        %4043 = vmatmul.mubr.f32.gmra.mrb[0].mxu0 %v4042
        %v4044 = vpop.f32.mrb[0].mxu0
        %v4045 = vadd.f32 %v2983, %v4044
        %v4046 = vpop.f32.mrb[0].mxu0
        %v4047 = vadd.f32 %v2985, %v4046
        %4048 = vmatprep.mubr.f32.mxu0 0.0
        %v4049 = vand.u32 %v663, 4294901760
        %v4050 = vsub.f32 %v663, %v4049
        %4051 = vmatmul.mubr.f32.gmra.mrb[0].mxu0 %v4050
        %v4052 = vpop.f32.mrb[0].mxu0
        %v4053 = vadd.f32 %v2990, %v4052
        %v4054 = vpop.f32.mrb[0].mxu0
        %v4055 = vadd.f32 %v2992, %v4054
        %4056 = vmatprep.mubr.f32.mxu0 0.0
        %v4057 = vand.u32 %v666, 4294901760
        %v4058 = vsub.f32 %v666, %v4057
        %4059 = vmatmul.mubr.f32.gmra.mrb[0].mxu0 %v4058
        %v4060 = vpop.f32.mrb[0].mxu0
        %v4061 = vadd.f32 %v2997, %v4060
        %v4062 = vpop.f32.mrb[0].mxu0
        %v4063 = vadd.f32 %v2999, %v4062
        %4064 = vmatprep.mubr.f32.mxu0 0.0
        %v4065 = vand.u32 %v669, 4294901760
        %v4066 = vsub.f32 %v669, %v4065
        %4067 = vmatmul.mubr.f32.gmra.mrb[0].mxu0 %v4066
        %v4068 = vpop.f32.mrb[0].mxu0
        %v4069 = vadd.f32 %v3004, %v4068
        %v4070 = vpop.f32.mrb[0].mxu0
        %v4071 = vadd.f32 %v3006, %v4070
        %4072 = vmatprep.mubr.f32.mxu0 0.0
        %v4073 = vand.u32 %v672, 4294901760
        %v4074 = vsub.f32 %v672, %v4073
        %4075 = vmatmul.mubr.f32.gmra.mrb[0].mxu0 %v4074
        %v4076 = vpop.f32.mrb[0].mxu0
        %v4077 = vadd.f32 %v3011, %v4076
        %v4078 = vpop.f32.mrb[0].mxu0
        %v4079 = vadd.f32 %v3013, %v4078
        %4080 = vmatprep.mubr.f32.mxu0 0.0
        %v4081 = vand.u32 %v675, 4294901760
        %v4082 = vsub.f32 %v675, %v4081
        %4083 = vmatmul.mubr.f32.gmra.mrb[0].mxu0 %v4082
        %v4084 = vpop.f32.mrb[0].mxu0
        %v4085 = vadd.f32 %v3018, %v4084
        %v4086 = vpop.f32.mrb[0].mxu0
        %v4087 = vadd.f32 %v3020, %v4086
        %4088 = vmatprep.mubr.f32.mxu0 0.0
        %v4089 = vand.u32 %v678, 4294901760
        %v4090 = vsub.f32 %v678, %v4089
        %4091 = vmatmul.mubr.f32.gmra.mrb[0].mxu0 %v4090
        %v4092 = vpop.f32.mrb[0].mxu0
        %v4093 = vadd.f32 %v3025, %v4092
        %v4094 = vpop.f32.mrb[0].mxu0
        %v4095 = vadd.f32 %v3027, %v4094
        %4096 = vmatprep.mubr.f32.mxu0 0.0
        %v4097 = vand.u32 %v681, 4294901760
        %v4098 = vsub.f32 %v681, %v4097
        %4099 = vmatmul.mubr.f32.gmra.mrb[0].mxu0 %v4098
        %v4100 = vpop.f32.mrb[0].mxu0
        %v4101 = vadd.f32 %v3032, %v4100
        %v4102 = vpop.f32.mrb[0].mxu0
        %v4103 = vadd.f32 %v3034, %v4102
        %4104 = vmatprep.mubr.f32.mxu0 0.0
        %v4105 = vand.u32 %v684, 4294901760
        %v4106 = vsub.f32 %v684, %v4105
        %4107 = vmatmul.mubr.f32.gmra.mrb[0].mxu0 %v4106
        %v4108 = vpop.f32.mrb[0].mxu0
        %v4109 = vadd.f32 %v3039, %v4108
        %v4110 = vpop.f32.mrb[0].mxu0
        %v4111 = vadd.f32 %v3041, %v4110
        %4112 = vmatprep.mubr.f32.mxu0 0.0
        %v4113 = vand.u32 %v687, 4294901760
        %v4114 = vsub.f32 %v687, %v4113
        %4115 = vmatmul.mubr.f32.gmra.mrb[0].mxu0 %v4114
        %v4116 = vpop.f32.mrb[0].mxu0
        %v4117 = vadd.f32 %v3046, %v4116
        %v4118 = vpop.f32.mrb[0].mxu0
        %v4119 = vadd.f32 %v3048, %v4118
        %4120 = vmatprep.mubr.f32.mxu0 0.0
        %v4121 = vand.u32 %v690, 4294901760
        %v4122 = vsub.f32 %v690, %v4121
        %4123 = vmatmul.mubr.f32.gmra.mrb[0].mxu0 %v4122
        %v4124 = vpop.f32.mrb[0].mxu0
        %v4125 = vadd.f32 %v3053, %v4124
        %v4126 = vpop.f32.mrb[0].mxu0
        %v4127 = vadd.f32 %v3055, %v4126
        %4128 = vmatprep.mubr.f32.mxu0 0.0
        %v4129 = vand.u32 %v693, 4294901760
        %v4130 = vsub.f32 %v693, %v4129
        %4131 = vmatmul.mubr.f32.gmra.mrb[0].mxu0 %v4130
        %v4132 = vpop.f32.mrb[0].mxu0
        %v4133 = vadd.f32 %v3060, %v4132
        %v4134 = vpop.f32.mrb[0].mxu0
        %v4135 = vadd.f32 %v3062, %v4134
        %4136 = vmatprep.mubr.f32.mxu0 0.0
        %v4137 = vand.u32 %v696, 4294901760
        %v4138 = vsub.f32 %v696, %v4137
        %4139 = vmatmul.mubr.f32.gmra.mrb[0].mxu0 %v4138
        %v4140 = vpop.f32.mrb[0].mxu0
        %v4141 = vadd.f32 %v3067, %v4140
        %v4142 = vpop.f32.mrb[0].mxu0
        %v4143 = vadd.f32 %v3069, %v4142
        %4144 = vmatprep.mubr.f32.mxu0 0.0
        %v4145 = vand.u32 %v699, 4294901760
        %v4146 = vsub.f32 %v699, %v4145
        %4147 = vmatmul.mubr.f32.gmra.mrb[0].mxu0 %v4146
        %v4148 = vpop.f32.mrb[0].mxu0
        %v4149 = vadd.f32 %v3074, %v4148
        %v4150 = vpop.f32.mrb[0].mxu0
        %v4151 = vadd.f32 %v3076, %v4150
        %4152 = vmatprep.mubr.f32.mxu0 0.0
        %v4153 = vand.u32 %v702, 4294901760
        %v4154 = vsub.f32 %v702, %v4153
        %4155 = vmatmul.mubr.f32.gmra.mrb[0].mxu0 %v4154
        %v4156 = vpop.f32.mrb[0].mxu0
        %v4157 = vadd.f32 %v3081, %v4156
        %v4158 = vpop.f32.mrb[0].mxu0
        %v4159 = vadd.f32 %v3083, %v4158
        %4160 = vmatprep.mubr.f32.mxu0 0.0
        %v4161 = vand.u32 %v705, 4294901760
        %v4162 = vsub.f32 %v705, %v4161
        %4163 = vmatmul.mubr.f32.gmra.mrb[0].mxu0 %v4162
        %v4164 = vpop.f32.mrb[0].mxu0
        %v4165 = vadd.f32 %v3088, %v4164
        %v4166 = vpop.f32.mrb[0].mxu0
        %v4167 = vadd.f32 %v3090, %v4166
        %4168 = vmatprep.mubr.f32.mxu0 0.0
        %v4169 = vand.u32 %v708, 4294901760
        %v4170 = vsub.f32 %v708, %v4169
        %4171 = vmatmul.mubr.f32.gmra.mrb[0].mxu0 %v4170
        %v4172 = vpop.f32.mrb[0].mxu0
        %v4173 = vadd.f32 %v3095, %v4172
        %v4174 = vpop.f32.mrb[0].mxu0
        %v4175 = vadd.f32 %v3097, %v4174
        %4176 = vmatprep.mubr.f32.mxu0 0.0
        %v4177 = vand.u32 %v711, 4294901760
        %v4178 = vsub.f32 %v711, %v4177
        %4179 = vmatmul.mubr.f32.gmra.mrb[0].mxu0 %v4178
        %v4180 = vpop.f32.mrb[0].mxu0
        %v4181 = vadd.f32 %v3102, %v4180
        %v4182 = vpop.f32.mrb[0].mxu0
        %v4183 = vadd.f32 %v3104, %v4182
        %4184 = vmatprep.mubr.f32.mxu0 0.0
        %v4185 = vand.u32 %v714, 4294901760
        %v4186 = vsub.f32 %v714, %v4185
        %4187 = vmatmul.mubr.f32.gmra.mrb[0].mxu0 %v4186
        %v4188 = vpop.f32.mrb[0].mxu0
        %v4189 = vadd.f32 %v3109, %v4188
        %v4190 = vpop.f32.mrb[0].mxu0
        %v4191 = vadd.f32 %v3111, %v4190
        %4192 = vmatprep.mubr.f32.mxu0 0.0
        %v4193 = vand.u32 %v717, 4294901760
        %v4194 = vsub.f32 %v717, %v4193
        %4195 = vmatmul.mubr.f32.gmra.mrb[0].mxu0 %v4194
        %v4196 = vpop.f32.mrb[0].mxu0
        %v4197 = vadd.f32 %v3116, %v4196
        %v4198 = vpop.f32.mrb[0].mxu0
        %v4199 = vadd.f32 %v3118, %v4198
        %4200 = vmatprep.mubr.f32.mxu0 0.0
        %v4201 = vand.u32 %v720, 4294901760
        %v4202 = vsub.f32 %v720, %v4201
        %4203 = vmatmul.mubr.f32.gmra.mrb[0].mxu0 %v4202
        %v4204 = vpop.f32.mrb[0].mxu0
        %v4205 = vadd.f32 %v3123, %v4204
        %v4206 = vpop.f32.mrb[0].mxu0
        %v4207 = vadd.f32 %v3125, %v4206
        %4208 = vmatprep.mubr.f32.mxu0 0.0
        %v4209 = vand.u32 %v723, 4294901760
        %v4210 = vsub.f32 %v723, %v4209
        %4211 = vmatmul.mubr.f32.gmra.mrb[0].mxu0 %v4210
        %v4212 = vpop.f32.mrb[0].mxu0
        %v4213 = vadd.f32 %v3130, %v4212
        %v4214 = vpop.f32.mrb[0].mxu0
        %v4215 = vadd.f32 %v3132, %v4214
        %4216 = vmatprep.mubr.f32.mxu0 0.0
        %v4217 = vand.u32 %v726, 4294901760
        %v4218 = vsub.f32 %v726, %v4217
        %4219 = vmatmul.mubr.f32.gmra.mrb[0].mxu0 %v4218
        %v4220 = vpop.f32.mrb[0].mxu0
        %v4221 = vadd.f32 %v3137, %v4220
        %v4222 = vpop.f32.mrb[0].mxu0
        %v4223 = vadd.f32 %v3139, %v4222
        %4224 = vmatprep.mubr.f32.mxu0 0.0
        %v4225 = vand.u32 %v729, 4294901760
        %v4226 = vsub.f32 %v729, %v4225
        %4227 = vmatmul.mubr.f32.gmra.mrb[0].mxu0 %v4226
        %v4228 = vpop.f32.mrb[0].mxu0
        %v4229 = vadd.f32 %v3144, %v4228
        %v4230 = vpop.f32.mrb[0].mxu0
        %v4231 = vadd.f32 %v3146, %v4230
        %4232 = vmatprep.mubr.f32.mxu0 0.0
        %v4233 = vand.u32 %v732, 4294901760
        %v4234 = vsub.f32 %v732, %v4233
        %4235 = vmatmul.mubr.f32.gmra.mrb[0].mxu0 %v4234
        %v4236 = vpop.f32.mrb[0].mxu0
        %v4237 = vadd.f32 %v3151, %v4236
        %v4238 = vpop.f32.mrb[0].mxu0
        %v4239 = vadd.f32 %v3153, %v4238
        %4240 = vmatprep.mubr.f32.mxu0 0.0
        %v4241 = vand.u32 %v735, 4294901760
        %v4242 = vsub.f32 %v735, %v4241
        %4243 = vmatmul.mubr.f32.gmra.mrb[0].mxu0 %v4242
        %v4244 = vpop.f32.mrb[0].mxu0
        %v4245 = vadd.f32 %v3158, %v4244
        %v4246 = vpop.f32.mrb[0].mxu0
        %v4247 = vadd.f32 %v3160, %v4246
        %4248 = vmatprep.mubr.f32.mxu0 0.0
        %v4249 = vand.u32 %v738, 4294901760
        %v4250 = vsub.f32 %v738, %v4249
        %4251 = vmatmul.mubr.f32.gmra.mrb[0].mxu0 %v4250
        %v4252 = vpop.f32.mrb[0].mxu0
        %v4253 = vadd.f32 %v3165, %v4252
        %v4254 = vpop.f32.mrb[0].mxu0
        %v4255 = vadd.f32 %v3167, %v4254
        %4256 = vmatprep.mubr.f32.mxu0 0.0
        %v4257 = vand.u32 %v741, 4294901760
        %v4258 = vsub.f32 %v741, %v4257
        %4259 = vmatmul.mubr.f32.gmra.mrb[0].mxu0 %v4258
        %v4260 = vpop.f32.mrb[0].mxu0
        %v4261 = vadd.f32 %v3172, %v4260
        %v4262 = vpop.f32.mrb[0].mxu0
        %v4263 = vadd.f32 %v3174, %v4262
        %4264 = vmatprep.mubr.f32.mxu0 0.0
        %v4265 = vand.u32 %v744, 4294901760
        %v4266 = vsub.f32 %v744, %v4265
        %4267 = vmatmul.mubr.f32.gmra.mrb[0].mxu0 %v4266
        %v4268 = vpop.f32.mrb[0].mxu0
        %v4269 = vadd.f32 %v3179, %v4268
        %v4270 = vpop.f32.mrb[0].mxu0
        %v4271 = vadd.f32 %v3181, %v4270
        %4272 = vmatprep.mubr.f32.mxu0 0.0
        %v4273 = vand.u32 %v747, 4294901760
        %v4274 = vsub.f32 %v747, %v4273
        %4275 = vmatmul.mubr.f32.gmra.mrb[0].mxu0 %v4274
        %v4276 = vpop.f32.mrb[0].mxu0
        %v4277 = vadd.f32 %v3186, %v4276
        %v4278 = vpop.f32.mrb[0].mxu0
        %v4279 = vadd.f32 %v3188, %v4278
        %4280 = vmatprep.mubr.f32.mxu0 0.0
        %v4281 = vand.u32 %v750, 4294901760
        %v4282 = vsub.f32 %v750, %v4281
        %4283 = vmatmul.mubr.f32.gmra.mrb[0].mxu0 %v4282
        %v4284 = vpop.f32.mrb[0].mxu0
        %v4285 = vadd.f32 %v3193, %v4284
        %v4286 = vpop.f32.mrb[0].mxu0
        %v4287 = vadd.f32 %v3195, %v4286
        %4288 = vmatprep.mubr.f32.mxu0 0.0
        %v4289 = vand.u32 %v753, 4294901760
        %v4290 = vsub.f32 %v753, %v4289
        %4291 = vmatmul.mubr.f32.gmra.mrb[0].mxu0 %v4290
        %v4292 = vpop.f32.mrb[0].mxu0
        %v4293 = vadd.f32 %v3200, %v4292
        %v4294 = vpop.f32.mrb[0].mxu0
        %v4295 = vadd.f32 %v3202, %v4294
        %4296 = vmatprep.mubr.f32.mxu0 0.0
        %v4297 = vand.u32 %v756, 4294901760
        %v4298 = vsub.f32 %v756, %v4297
        %4299 = vmatmul.mubr.f32.gmra.mrb[0].mxu0 %v4298
        %v4300 = vpop.f32.mrb[0].mxu0
        %v4301 = vadd.f32 %v3207, %v4300
        %v4302 = vpop.f32.mrb[0].mxu0
        %v4303 = vadd.f32 %v3209, %v4302
        %4304 = vmatprep.mubr.f32.mxu0 0.0
        %v4305 = vand.u32 %v759, 4294901760
        %v4306 = vsub.f32 %v759, %v4305
        %4307 = vmatmul.mubr.f32.gmra.mrb[0].mxu0 %v4306
        %v4308 = vpop.f32.mrb[0].mxu0
        %v4309 = vadd.f32 %v3214, %v4308
        %v4310 = vpop.f32.mrb[0].mxu0
        %v4311 = vadd.f32 %v3216, %v4310
        %4312 = vmatprep.mubr.f32.mxu0 0.0
        %v4313 = vand.u32 %v762, 4294901760
        %v4314 = vsub.f32 %v762, %v4313
        %4315 = vmatmul.mubr.f32.gmra.mrb[0].mxu0 %v4314
        %v4316 = vpop.f32.mrb[0].mxu0
        %v4317 = vadd.f32 %v3221, %v4316
        %v4318 = vpop.f32.mrb[0].mxu0
        %v4319 = vadd.f32 %v3223, %v4318
        %4320 = vmatprep.mubr.f32.mxu0 0.0
        %v4321 = vand.u32 %v765, 4294901760
        %v4322 = vsub.f32 %v765, %v4321
        %4323 = vmatmul.mubr.f32.gmra.mrb[0].mxu0 %v4322
        %v4324 = vpop.f32.mrb[0].mxu0
        %v4325 = vadd.f32 %v3228, %v4324
        %v4326 = vpop.f32.mrb[0].mxu0
        %v4327 = vadd.f32 %v3230, %v4326
        %4328 = vdwg.mxu0
        %v4329 = vand.u32 %v379, 4294901760
        %4330 = vmatprep.subr.mxu0 %v4329
        %v4331 = vand.u32 %v378, 4294901760
        %4332 = vmatpush1.msra.mxu0 %v4331
        %v4333 = vand.u32 %v772, 4294901760
        %4334 = vmatprep.subr.mxu0 %v4333
        %v4335 = vand.u32 %v769, 4294901760
        %4336 = vmatpush1.msra.mxu0 %v4335
        %4337 = vmatprep.subr.mxu0 0.0
        %4338 = vmatpush1.msra.mxu0 0.0
        %4339 = vmatprep.subr.mxu0 0.0
        %4340 = vmatpush1.msra.mxu0 0.0
        %4341 = vmatprep.subr.mxu0 0.0
        %4342 = vmatpush1.msra.mxu0 0.0
        %4343 = vmatprep.subr.mxu0 0.0
        %4344 = vmatpush1.msra.mxu0 0.0
        %4345 = vmatprep.subr.mxu0 0.0
        %4346 = vmatpush1.msra.mxu0 0.0
        %4347 = vmatprep.subr.mxu0 0.0
        %4348 = vmatpush1.msra.mxu0 0.0
        %4349 = vmatprep.subr.mxu0 0.0
        %4350 = vmatpush1.msra.mxu0 0.0
        %4351 = vmatprep.subr.mxu0 0.0
        %4352 = vmatpush1.msra.mxu0 0.0
        %4353 = vmatprep.subr.mxu0 0.0
        %4354 = vmatpush1.msra.mxu0 0.0
        %4355 = vmatprep.subr.mxu0 0.0
        %4356 = vmatpush1.msra.mxu0 0.0
        %4357 = vmatprep.subr.mxu0 0.0
        %4358 = vmatpush1.msra.mxu0 0.0
        %4359 = vmatprep.subr.mxu0 0.0
        %4360 = vmatpush1.msra.mxu0 0.0
        %4361 = vmatprep.subr.mxu0 0.0
        %4362 = vmatpush1.msra.mxu0 0.0
        %4363 = vmatprep.subr.mxu0 0.0
        %4364 = vmatpush1.msra.mxu0 0.0
        %4365 = vmatprep.subr.mxu0 0.0
        %4366 = vmatpush1.msra.mxu0 0.0
        %4367 = vmatprep.subr.mxu0 0.0
        %4368 = vmatpush1.msra.mxu0 0.0
        %4369 = vmatprep.subr.mxu0 0.0
        %4370 = vmatpush1.msra.mxu0 0.0
        %4371 = vmatprep.subr.mxu0 0.0
        %4372 = vmatpush1.msra.mxu0 0.0
        %4373 = vmatprep.subr.mxu0 0.0
        %4374 = vmatpush1.msra.mxu0 0.0
        %4375 = vmatprep.subr.mxu0 0.0
        %4376 = vmatpush1.msra.mxu0 0.0
        %4377 = vmatprep.subr.mxu0 0.0
        %4378 = vmatpush1.msra.mxu0 0.0
        %4379 = vmatprep.subr.mxu0 0.0
        %4380 = vmatpush1.msra.mxu0 0.0
        %4381 = vmatprep.subr.mxu0 0.0
        %4382 = vmatpush1.msra.mxu0 0.0
        %4383 = vmatprep.subr.mxu0 0.0
        %4384 = vmatpush1.msra.mxu0 0.0
        %4385 = vmatprep.subr.mxu0 0.0
        %4386 = vmatpush1.msra.mxu0 0.0
        %4387 = vmatprep.subr.mxu0 0.0
        %4388 = vmatpush1.msra.mxu0 0.0
        %4389 = vmatprep.subr.mxu0 0.0
        %4390 = vmatpush1.msra.mxu0 0.0
        %4391 = vmatprep.subr.mxu0 0.0
        %4392 = vmatpush1.msra.mxu0 0.0
        %4393 = vmatprep.subr.mxu0 0.0
        %4394 = vmatpush1.msra.mxu0 0.0
        %4395 = vmatprep.subr.mxu0 0.0
        %4396 = vmatpush1.msra.mxu0 0.0
        %4397 = vmatprep.mubr.f32.mxu0 0.0
        %v4398 = vand.u32 %v384, 4294901760
        %v4399 = vsub.f32 %v384, %v4398
        %v4400 = vand.u32 %v4399, 4294901760
        %4401 = vmatmul.mubr.f32.gmra.mrb[0].mxu0 %v4400
        %v4402 = vpop.f32.mrb[0].mxu0
        %v4403 = vadd.f32 %v3309, %v4402
        %v4404 = vpop.f32.mrb[0].mxu0
        %v4405 = vadd.f32 %v3311, %v4404
        %4406 = vmatprep.mubr.f32.mxu0 0.0
        %v4407 = vand.u32 %v387, 4294901760
        %v4408 = vsub.f32 %v387, %v4407
        %v4409 = vand.u32 %v4408, 4294901760
        %4410 = vmatmul.mubr.f32.gmra.mrb[0].mxu0 %v4409
        %v4411 = vpop.f32.mrb[0].mxu0
        %v4412 = vadd.f32 %v3317, %v4411
        %v4413 = vpop.f32.mrb[0].mxu0
        %v4414 = vadd.f32 %v3319, %v4413
        %4415 = vmatprep.mubr.f32.mxu0 0.0
        %v4416 = vand.u32 %v390, 4294901760
        %v4417 = vsub.f32 %v390, %v4416
        %v4418 = vand.u32 %v4417, 4294901760
        %4419 = vmatmul.mubr.f32.gmra.mrb[0].mxu0 %v4418
        %v4420 = vpop.f32.mrb[0].mxu0
        %v4421 = vadd.f32 %v3325, %v4420
        %v4422 = vpop.f32.mrb[0].mxu0
        %v4423 = vadd.f32 %v3327, %v4422
        %4424 = vmatprep.mubr.f32.mxu0 0.0
        %v4425 = vand.u32 %v393, 4294901760
        %v4426 = vsub.f32 %v393, %v4425
        %v4427 = vand.u32 %v4426, 4294901760
        %4428 = vmatmul.mubr.f32.gmra.mrb[0].mxu0 %v4427
        %v4429 = vpop.f32.mrb[0].mxu0
        %v4430 = vadd.f32 %v3333, %v4429
        %v4431 = vpop.f32.mrb[0].mxu0
        %v4432 = vadd.f32 %v3335, %v4431
        %4433 = vmatprep.mubr.f32.mxu0 0.0
        %v4434 = vand.u32 %v396, 4294901760
        %v4435 = vsub.f32 %v396, %v4434
        %v4436 = vand.u32 %v4435, 4294901760
        %4437 = vmatmul.mubr.f32.gmra.mrb[0].mxu0 %v4436
        %v4438 = vpop.f32.mrb[0].mxu0
        %v4439 = vadd.f32 %v3341, %v4438
        %v4440 = vpop.f32.mrb[0].mxu0
        %v4441 = vadd.f32 %v3343, %v4440
        %4442 = vmatprep.mubr.f32.mxu0 0.0
        %v4443 = vand.u32 %v399, 4294901760
        %v4444 = vsub.f32 %v399, %v4443
        %v4445 = vand.u32 %v4444, 4294901760
        %4446 = vmatmul.mubr.f32.gmra.mrb[0].mxu0 %v4445
        %v4447 = vpop.f32.mrb[0].mxu0
        %v4448 = vadd.f32 %v3349, %v4447
        %v4449 = vpop.f32.mrb[0].mxu0
        %v4450 = vadd.f32 %v3351, %v4449
        %4451 = vmatprep.mubr.f32.mxu0 0.0
        %v4452 = vand.u32 %v402, 4294901760
        %v4453 = vsub.f32 %v402, %v4452
        %v4454 = vand.u32 %v4453, 4294901760
        %4455 = vmatmul.mubr.f32.gmra.mrb[0].mxu0 %v4454
        %v4456 = vpop.f32.mrb[0].mxu0
        %v4457 = vadd.f32 %v3357, %v4456
        %v4458 = vpop.f32.mrb[0].mxu0
        %v4459 = vadd.f32 %v3359, %v4458
        %4460 = vmatprep.mubr.f32.mxu0 0.0
        %v4461 = vand.u32 %v405, 4294901760
        %v4462 = vsub.f32 %v405, %v4461
        %v4463 = vand.u32 %v4462, 4294901760
        %4464 = vmatmul.mubr.f32.gmra.mrb[0].mxu0 %v4463
        %v4465 = vpop.f32.mrb[0].mxu0
        %v4466 = vadd.f32 %v3365, %v4465
        %v4467 = vpop.f32.mrb[0].mxu0
        %v4468 = vadd.f32 %v3367, %v4467
        %4469 = vmatprep.mubr.f32.mxu0 0.0
        %v4470 = vand.u32 %v408, 4294901760
        %v4471 = vsub.f32 %v408, %v4470
        %v4472 = vand.u32 %v4471, 4294901760
        %4473 = vmatmul.mubr.f32.gmra.mrb[0].mxu0 %v4472
        %v4474 = vpop.f32.mrb[0].mxu0
        %v4475 = vadd.f32 %v3373, %v4474
        %v4476 = vpop.f32.mrb[0].mxu0
        %v4477 = vadd.f32 %v3375, %v4476
        %4478 = vmatprep.mubr.f32.mxu0 0.0
        %v4479 = vand.u32 %v411, 4294901760
        %v4480 = vsub.f32 %v411, %v4479
        %v4481 = vand.u32 %v4480, 4294901760
        %4482 = vmatmul.mubr.f32.gmra.mrb[0].mxu0 %v4481
        %v4483 = vpop.f32.mrb[0].mxu0
        %v4484 = vadd.f32 %v3381, %v4483
        %v4485 = vpop.f32.mrb[0].mxu0
        %v4486 = vadd.f32 %v3383, %v4485
        %4487 = vmatprep.mubr.f32.mxu0 0.0
        %v4488 = vand.u32 %v414, 4294901760
        %v4489 = vsub.f32 %v414, %v4488
        %v4490 = vand.u32 %v4489, 4294901760
        %4491 = vmatmul.mubr.f32.gmra.mrb[0].mxu0 %v4490
        %v4492 = vpop.f32.mrb[0].mxu0
        %v4493 = vadd.f32 %v3389, %v4492
        %v4494 = vpop.f32.mrb[0].mxu0
        %v4495 = vadd.f32 %v3391, %v4494
        %4496 = vmatprep.mubr.f32.mxu0 0.0
        %v4497 = vand.u32 %v417, 4294901760
        %v4498 = vsub.f32 %v417, %v4497
        %v4499 = vand.u32 %v4498, 4294901760
        %4500 = vmatmul.mubr.f32.gmra.mrb[0].mxu0 %v4499
        %v4501 = vpop.f32.mrb[0].mxu0
        %v4502 = vadd.f32 %v3397, %v4501
        %v4503 = vpop.f32.mrb[0].mxu0
        %v4504 = vadd.f32 %v3399, %v4503
        %4505 = vmatprep.mubr.f32.mxu0 0.0
        %v4506 = vand.u32 %v420, 4294901760
        %v4507 = vsub.f32 %v420, %v4506
        %v4508 = vand.u32 %v4507, 4294901760
        %4509 = vmatmul.mubr.f32.gmra.mrb[0].mxu0 %v4508
        %v4510 = vpop.f32.mrb[0].mxu0
        %v4511 = vadd.f32 %v3405, %v4510
        %v4512 = vpop.f32.mrb[0].mxu0
        %v4513 = vadd.f32 %v3407, %v4512
        %4514 = vmatprep.mubr.f32.mxu0 0.0
        %v4515 = vand.u32 %v423, 4294901760
        %v4516 = vsub.f32 %v423, %v4515
        %v4517 = vand.u32 %v4516, 4294901760
        %4518 = vmatmul.mubr.f32.gmra.mrb[0].mxu0 %v4517
        %v4519 = vpop.f32.mrb[0].mxu0
        %v4520 = vadd.f32 %v3413, %v4519
        %v4521 = vpop.f32.mrb[0].mxu0
        %v4522 = vadd.f32 %v3415, %v4521
        %4523 = vmatprep.mubr.f32.mxu0 0.0
        %v4524 = vand.u32 %v426, 4294901760
        %v4525 = vsub.f32 %v426, %v4524
        %v4526 = vand.u32 %v4525, 4294901760
        %4527 = vmatmul.mubr.f32.gmra.mrb[0].mxu0 %v4526
        %v4528 = vpop.f32.mrb[0].mxu0
        %v4529 = vadd.f32 %v3421, %v4528
        %v4530 = vpop.f32.mrb[0].mxu0
        %v4531 = vadd.f32 %v3423, %v4530
        %4532 = vmatprep.mubr.f32.mxu0 0.0
        %v4533 = vand.u32 %v429, 4294901760
        %v4534 = vsub.f32 %v429, %v4533
        %v4535 = vand.u32 %v4534, 4294901760
        %4536 = vmatmul.mubr.f32.gmra.mrb[0].mxu0 %v4535
        %v4537 = vpop.f32.mrb[0].mxu0
        %v4538 = vadd.f32 %v3429, %v4537
        %v4539 = vpop.f32.mrb[0].mxu0
        %v4540 = vadd.f32 %v3431, %v4539
        %4541 = vmatprep.mubr.f32.mxu0 0.0
        %v4542 = vand.u32 %v432, 4294901760
        %v4543 = vsub.f32 %v432, %v4542
        %v4544 = vand.u32 %v4543, 4294901760
        %4545 = vmatmul.mubr.f32.gmra.mrb[0].mxu0 %v4544
        %v4546 = vpop.f32.mrb[0].mxu0
        %v4547 = vadd.f32 %v3437, %v4546
        %v4548 = vpop.f32.mrb[0].mxu0
        %v4549 = vadd.f32 %v3439, %v4548
        %4550 = vmatprep.mubr.f32.mxu0 0.0
        %v4551 = vand.u32 %v435, 4294901760
        %v4552 = vsub.f32 %v435, %v4551
        %v4553 = vand.u32 %v4552, 4294901760
        %4554 = vmatmul.mubr.f32.gmra.mrb[0].mxu0 %v4553
        %v4555 = vpop.f32.mrb[0].mxu0
        %v4556 = vadd.f32 %v3445, %v4555
        %v4557 = vpop.f32.mrb[0].mxu0
        %v4558 = vadd.f32 %v3447, %v4557
        %4559 = vmatprep.mubr.f32.mxu0 0.0
        %v4560 = vand.u32 %v438, 4294901760
        %v4561 = vsub.f32 %v438, %v4560
        %v4562 = vand.u32 %v4561, 4294901760
        %4563 = vmatmul.mubr.f32.gmra.mrb[0].mxu0 %v4562
        %v4564 = vpop.f32.mrb[0].mxu0
        %v4565 = vadd.f32 %v3453, %v4564
        %v4566 = vpop.f32.mrb[0].mxu0
        %v4567 = vadd.f32 %v3455, %v4566
        %4568 = vmatprep.mubr.f32.mxu0 0.0
        %v4569 = vand.u32 %v441, 4294901760
        %v4570 = vsub.f32 %v441, %v4569
        %v4571 = vand.u32 %v4570, 4294901760
        %4572 = vmatmul.mubr.f32.gmra.mrb[0].mxu0 %v4571
        %v4573 = vpop.f32.mrb[0].mxu0
        %v4574 = vadd.f32 %v3461, %v4573
        %v4575 = vpop.f32.mrb[0].mxu0
        %v4576 = vadd.f32 %v3463, %v4575
        %4577 = vmatprep.mubr.f32.mxu0 0.0
        %v4578 = vand.u32 %v444, 4294901760
        %v4579 = vsub.f32 %v444, %v4578
        %v4580 = vand.u32 %v4579, 4294901760
        %4581 = vmatmul.mubr.f32.gmra.mrb[0].mxu0 %v4580
        %v4582 = vpop.f32.mrb[0].mxu0
        %v4583 = vadd.f32 %v3469, %v4582
        %v4584 = vpop.f32.mrb[0].mxu0
        %v4585 = vadd.f32 %v3471, %v4584
        %4586 = vmatprep.mubr.f32.mxu0 0.0
        %v4587 = vand.u32 %v447, 4294901760
        %v4588 = vsub.f32 %v447, %v4587
        %v4589 = vand.u32 %v4588, 4294901760
        %4590 = vmatmul.mubr.f32.gmra.mrb[0].mxu0 %v4589
        %v4591 = vpop.f32.mrb[0].mxu0
        %v4592 = vadd.f32 %v3477, %v4591
        %v4593 = vpop.f32.mrb[0].mxu0
        %v4594 = vadd.f32 %v3479, %v4593
        %4595 = vmatprep.mubr.f32.mxu0 0.0
        %v4596 = vand.u32 %v450, 4294901760
        %v4597 = vsub.f32 %v450, %v4596
        %v4598 = vand.u32 %v4597, 4294901760
        %4599 = vmatmul.mubr.f32.gmra.mrb[0].mxu0 %v4598
        %v4600 = vpop.f32.mrb[0].mxu0
        %v4601 = vadd.f32 %v3485, %v4600
        %v4602 = vpop.f32.mrb[0].mxu0
        %v4603 = vadd.f32 %v3487, %v4602
        %4604 = vmatprep.mubr.f32.mxu0 0.0
        %v4605 = vand.u32 %v453, 4294901760
        %v4606 = vsub.f32 %v453, %v4605
        %v4607 = vand.u32 %v4606, 4294901760
        %4608 = vmatmul.mubr.f32.gmra.mrb[0].mxu0 %v4607
        %v4609 = vpop.f32.mrb[0].mxu0
        %v4610 = vadd.f32 %v3493, %v4609
        %v4611 = vpop.f32.mrb[0].mxu0
        %v4612 = vadd.f32 %v3495, %v4611
        %4613 = vmatprep.mubr.f32.mxu0 0.0
        %v4614 = vand.u32 %v456, 4294901760
        %v4615 = vsub.f32 %v456, %v4614
        %v4616 = vand.u32 %v4615, 4294901760
        %4617 = vmatmul.mubr.f32.gmra.mrb[0].mxu0 %v4616
        %v4618 = vpop.f32.mrb[0].mxu0
        %v4619 = vadd.f32 %v3501, %v4618
        %v4620 = vpop.f32.mrb[0].mxu0
        %v4621 = vadd.f32 %v3503, %v4620
        %4622 = vmatprep.mubr.f32.mxu0 0.0
        %v4623 = vand.u32 %v459, 4294901760
        %v4624 = vsub.f32 %v459, %v4623
        %v4625 = vand.u32 %v4624, 4294901760
        %4626 = vmatmul.mubr.f32.gmra.mrb[0].mxu0 %v4625
        %v4627 = vpop.f32.mrb[0].mxu0
        %v4628 = vadd.f32 %v3509, %v4627
        %v4629 = vpop.f32.mrb[0].mxu0
        %v4630 = vadd.f32 %v3511, %v4629
        %4631 = vmatprep.mubr.f32.mxu0 0.0
        %v4632 = vand.u32 %v462, 4294901760
        %v4633 = vsub.f32 %v462, %v4632
        %v4634 = vand.u32 %v4633, 4294901760
        %4635 = vmatmul.mubr.f32.gmra.mrb[0].mxu0 %v4634
        %v4636 = vpop.f32.mrb[0].mxu0
        %v4637 = vadd.f32 %v3517, %v4636
        %v4638 = vpop.f32.mrb[0].mxu0
        %v4639 = vadd.f32 %v3519, %v4638
        %4640 = vmatprep.mubr.f32.mxu0 0.0
        %v4641 = vand.u32 %v465, 4294901760
        %v4642 = vsub.f32 %v465, %v4641
        %v4643 = vand.u32 %v4642, 4294901760
        %4644 = vmatmul.mubr.f32.gmra.mrb[0].mxu0 %v4643
        %v4645 = vpop.f32.mrb[0].mxu0
        %v4646 = vadd.f32 %v3525, %v4645
        %v4647 = vpop.f32.mrb[0].mxu0
        %v4648 = vadd.f32 %v3527, %v4647
        %4649 = vmatprep.mubr.f32.mxu0 0.0
        %v4650 = vand.u32 %v468, 4294901760
        %v4651 = vsub.f32 %v468, %v4650
        %v4652 = vand.u32 %v4651, 4294901760
        %4653 = vmatmul.mubr.f32.gmra.mrb[0].mxu0 %v4652
        %v4654 = vpop.f32.mrb[0].mxu0
        %v4655 = vadd.f32 %v3533, %v4654
        %v4656 = vpop.f32.mrb[0].mxu0
        %v4657 = vadd.f32 %v3535, %v4656
        %4658 = vmatprep.mubr.f32.mxu0 0.0
        %v4659 = vand.u32 %v471, 4294901760
        %v4660 = vsub.f32 %v471, %v4659
        %v4661 = vand.u32 %v4660, 4294901760
        %4662 = vmatmul.mubr.f32.gmra.mrb[0].mxu0 %v4661
        %v4663 = vpop.f32.mrb[0].mxu0
        %v4664 = vadd.f32 %v3541, %v4663
        %v4665 = vpop.f32.mrb[0].mxu0
        %v4666 = vadd.f32 %v3543, %v4665
        %4667 = vmatprep.mubr.f32.mxu0 0.0
        %v4668 = vand.u32 %v474, 4294901760
        %v4669 = vsub.f32 %v474, %v4668
        %v4670 = vand.u32 %v4669, 4294901760
        %4671 = vmatmul.mubr.f32.gmra.mrb[0].mxu0 %v4670
        %v4672 = vpop.f32.mrb[0].mxu0
        %v4673 = vadd.f32 %v3549, %v4672
        %v4674 = vpop.f32.mrb[0].mxu0
        %v4675 = vadd.f32 %v3551, %v4674
        %4676 = vmatprep.mubr.f32.mxu0 0.0
        %v4677 = vand.u32 %v477, 4294901760
        %v4678 = vsub.f32 %v477, %v4677
        %v4679 = vand.u32 %v4678, 4294901760
        %4680 = vmatmul.mubr.f32.gmra.mrb[0].mxu0 %v4679
        %v4681 = vpop.f32.mrb[0].mxu0
        %v4682 = vadd.f32 %v3557, %v4681
        %v4683 = vpop.f32.mrb[0].mxu0
        %v4684 = vadd.f32 %v3559, %v4683
        %4685 = vmatprep.mubr.f32.mxu0 0.0
        %v4686 = vand.u32 %v480, 4294901760
        %v4687 = vsub.f32 %v480, %v4686
        %v4688 = vand.u32 %v4687, 4294901760
        %4689 = vmatmul.mubr.f32.gmra.mrb[0].mxu0 %v4688
        %v4690 = vpop.f32.mrb[0].mxu0
        %v4691 = vadd.f32 %v3565, %v4690
        %v4692 = vpop.f32.mrb[0].mxu0
        %v4693 = vadd.f32 %v3567, %v4692
        %4694 = vmatprep.mubr.f32.mxu0 0.0
        %v4695 = vand.u32 %v483, 4294901760
        %v4696 = vsub.f32 %v483, %v4695
        %v4697 = vand.u32 %v4696, 4294901760
        %4698 = vmatmul.mubr.f32.gmra.mrb[0].mxu0 %v4697
        %v4699 = vpop.f32.mrb[0].mxu0
        %v4700 = vadd.f32 %v3573, %v4699
        %v4701 = vpop.f32.mrb[0].mxu0
        %v4702 = vadd.f32 %v3575, %v4701
        %4703 = vmatprep.mubr.f32.mxu0 0.0
        %v4704 = vand.u32 %v486, 4294901760
        %v4705 = vsub.f32 %v486, %v4704
        %v4706 = vand.u32 %v4705, 4294901760
        %4707 = vmatmul.mubr.f32.gmra.mrb[0].mxu0 %v4706
        %v4708 = vpop.f32.mrb[0].mxu0
        %v4709 = vadd.f32 %v3581, %v4708
        %v4710 = vpop.f32.mrb[0].mxu0
        %v4711 = vadd.f32 %v3583, %v4710
        %4712 = vmatprep.mubr.f32.mxu0 0.0
        %v4713 = vand.u32 %v489, 4294901760
        %v4714 = vsub.f32 %v489, %v4713
        %v4715 = vand.u32 %v4714, 4294901760
        %4716 = vmatmul.mubr.f32.gmra.mrb[0].mxu0 %v4715
        %v4717 = vpop.f32.mrb[0].mxu0
        %v4718 = vadd.f32 %v3589, %v4717
        %v4719 = vpop.f32.mrb[0].mxu0
        %v4720 = vadd.f32 %v3591, %v4719
        %4721 = vmatprep.mubr.f32.mxu0 0.0
        %v4722 = vand.u32 %v492, 4294901760
        %v4723 = vsub.f32 %v492, %v4722
        %v4724 = vand.u32 %v4723, 4294901760
        %4725 = vmatmul.mubr.f32.gmra.mrb[0].mxu0 %v4724
        %v4726 = vpop.f32.mrb[0].mxu0
        %v4727 = vadd.f32 %v3597, %v4726
        %v4728 = vpop.f32.mrb[0].mxu0
        %v4729 = vadd.f32 %v3599, %v4728
        %4730 = vmatprep.mubr.f32.mxu0 0.0
        %v4731 = vand.u32 %v495, 4294901760
        %v4732 = vsub.f32 %v495, %v4731
        %v4733 = vand.u32 %v4732, 4294901760
        %4734 = vmatmul.mubr.f32.gmra.mrb[0].mxu0 %v4733
        %v4735 = vpop.f32.mrb[0].mxu0
        %v4736 = vadd.f32 %v3605, %v4735
        %v4737 = vpop.f32.mrb[0].mxu0
        %v4738 = vadd.f32 %v3607, %v4737
        %4739 = vmatprep.mubr.f32.mxu0 0.0
        %v4740 = vand.u32 %v498, 4294901760
        %v4741 = vsub.f32 %v498, %v4740
        %v4742 = vand.u32 %v4741, 4294901760
        %4743 = vmatmul.mubr.f32.gmra.mrb[0].mxu0 %v4742
        %v4744 = vpop.f32.mrb[0].mxu0
        %v4745 = vadd.f32 %v3613, %v4744
        %v4746 = vpop.f32.mrb[0].mxu0
        %v4747 = vadd.f32 %v3615, %v4746
        %4748 = vmatprep.mubr.f32.mxu0 0.0
        %v4749 = vand.u32 %v501, 4294901760
        %v4750 = vsub.f32 %v501, %v4749
        %v4751 = vand.u32 %v4750, 4294901760
        %4752 = vmatmul.mubr.f32.gmra.mrb[0].mxu0 %v4751
        %v4753 = vpop.f32.mrb[0].mxu0
        %v4754 = vadd.f32 %v3621, %v4753
        %v4755 = vpop.f32.mrb[0].mxu0
        %v4756 = vadd.f32 %v3623, %v4755
        %4757 = vmatprep.mubr.f32.mxu0 0.0
        %v4758 = vand.u32 %v504, 4294901760
        %v4759 = vsub.f32 %v504, %v4758
        %v4760 = vand.u32 %v4759, 4294901760
        %4761 = vmatmul.mubr.f32.gmra.mrb[0].mxu0 %v4760
        %v4762 = vpop.f32.mrb[0].mxu0
        %v4763 = vadd.f32 %v3629, %v4762
        %v4764 = vpop.f32.mrb[0].mxu0
        %v4765 = vadd.f32 %v3631, %v4764
        %4766 = vmatprep.mubr.f32.mxu0 0.0
        %v4767 = vand.u32 %v507, 4294901760
        %v4768 = vsub.f32 %v507, %v4767
        %v4769 = vand.u32 %v4768, 4294901760
        %4770 = vmatmul.mubr.f32.gmra.mrb[0].mxu0 %v4769
        %v4771 = vpop.f32.mrb[0].mxu0
        %v4772 = vadd.f32 %v3637, %v4771
        %v4773 = vpop.f32.mrb[0].mxu0
        %v4774 = vadd.f32 %v3639, %v4773
        %4775 = vmatprep.mubr.f32.mxu0 0.0
        %v4776 = vand.u32 %v510, 4294901760
        %v4777 = vsub.f32 %v510, %v4776
        %v4778 = vand.u32 %v4777, 4294901760
        %4779 = vmatmul.mubr.f32.gmra.mrb[0].mxu0 %v4778
        %v4780 = vpop.f32.mrb[0].mxu0
        %v4781 = vadd.f32 %v3645, %v4780
        %v4782 = vpop.f32.mrb[0].mxu0
        %v4783 = vadd.f32 %v3647, %v4782
        %4784 = vmatprep.mubr.f32.mxu0 0.0
        %v4785 = vand.u32 %v513, 4294901760
        %v4786 = vsub.f32 %v513, %v4785
        %v4787 = vand.u32 %v4786, 4294901760
        %4788 = vmatmul.mubr.f32.gmra.mrb[0].mxu0 %v4787
        %v4789 = vpop.f32.mrb[0].mxu0
        %v4790 = vadd.f32 %v3653, %v4789
        %v4791 = vpop.f32.mrb[0].mxu0
        %v4792 = vadd.f32 %v3655, %v4791
        %4793 = vmatprep.mubr.f32.mxu0 0.0
        %v4794 = vand.u32 %v516, 4294901760
        %v4795 = vsub.f32 %v516, %v4794
        %v4796 = vand.u32 %v4795, 4294901760
        %4797 = vmatmul.mubr.f32.gmra.mrb[0].mxu0 %v4796
        %v4798 = vpop.f32.mrb[0].mxu0
        %v4799 = vadd.f32 %v3661, %v4798
        %v4800 = vpop.f32.mrb[0].mxu0
        %v4801 = vadd.f32 %v3663, %v4800
        %4802 = vmatprep.mubr.f32.mxu0 0.0
        %v4803 = vand.u32 %v519, 4294901760
        %v4804 = vsub.f32 %v519, %v4803
        %v4805 = vand.u32 %v4804, 4294901760
        %4806 = vmatmul.mubr.f32.gmra.mrb[0].mxu0 %v4805
        %v4807 = vpop.f32.mrb[0].mxu0
        %v4808 = vadd.f32 %v3669, %v4807
        %v4809 = vpop.f32.mrb[0].mxu0
        %v4810 = vadd.f32 %v3671, %v4809
        %4811 = vmatprep.mubr.f32.mxu0 0.0
        %v4812 = vand.u32 %v522, 4294901760
        %v4813 = vsub.f32 %v522, %v4812
        %v4814 = vand.u32 %v4813, 4294901760
        %4815 = vmatmul.mubr.f32.gmra.mrb[0].mxu0 %v4814
        %v4816 = vpop.f32.mrb[0].mxu0
        %v4817 = vadd.f32 %v3677, %v4816
        %v4818 = vpop.f32.mrb[0].mxu0
        %v4819 = vadd.f32 %v3679, %v4818
        %4820 = vmatprep.mubr.f32.mxu0 0.0
        %v4821 = vand.u32 %v525, 4294901760
        %v4822 = vsub.f32 %v525, %v4821
        %v4823 = vand.u32 %v4822, 4294901760
        %4824 = vmatmul.mubr.f32.gmra.mrb[0].mxu0 %v4823
        %v4825 = vpop.f32.mrb[0].mxu0
        %v4826 = vadd.f32 %v3685, %v4825
        %v4827 = vpop.f32.mrb[0].mxu0
        %v4828 = vadd.f32 %v3687, %v4827
        %4829 = vmatprep.mubr.f32.mxu0 0.0
        %v4830 = vand.u32 %v528, 4294901760
        %v4831 = vsub.f32 %v528, %v4830
        %v4832 = vand.u32 %v4831, 4294901760
        %4833 = vmatmul.mubr.f32.gmra.mrb[0].mxu0 %v4832
        %v4834 = vpop.f32.mrb[0].mxu0
        %v4835 = vadd.f32 %v3693, %v4834
        %v4836 = vpop.f32.mrb[0].mxu0
        %v4837 = vadd.f32 %v3695, %v4836
        %4838 = vmatprep.mubr.f32.mxu0 0.0
        %v4839 = vand.u32 %v531, 4294901760
        %v4840 = vsub.f32 %v531, %v4839
        %v4841 = vand.u32 %v4840, 4294901760
        %4842 = vmatmul.mubr.f32.gmra.mrb[0].mxu0 %v4841
        %v4843 = vpop.f32.mrb[0].mxu0
        %v4844 = vadd.f32 %v3701, %v4843
        %v4845 = vpop.f32.mrb[0].mxu0
        %v4846 = vadd.f32 %v3703, %v4845
        %4847 = vmatprep.mubr.f32.mxu0 0.0
        %v4848 = vand.u32 %v534, 4294901760
        %v4849 = vsub.f32 %v534, %v4848
        %v4850 = vand.u32 %v4849, 4294901760
        %4851 = vmatmul.mubr.f32.gmra.mrb[0].mxu0 %v4850
        %v4852 = vpop.f32.mrb[0].mxu0
        %v4853 = vadd.f32 %v3709, %v4852
        %v4854 = vpop.f32.mrb[0].mxu0
        %v4855 = vadd.f32 %v3711, %v4854
        %4856 = vmatprep.mubr.f32.mxu0 0.0
        %v4857 = vand.u32 %v537, 4294901760
        %v4858 = vsub.f32 %v537, %v4857
        %v4859 = vand.u32 %v4858, 4294901760
        %4860 = vmatmul.mubr.f32.gmra.mrb[0].mxu0 %v4859
        %v4861 = vpop.f32.mrb[0].mxu0
        %v4862 = vadd.f32 %v3717, %v4861
        %v4863 = vpop.f32.mrb[0].mxu0
        %v4864 = vadd.f32 %v3719, %v4863
        %4865 = vmatprep.mubr.f32.mxu0 0.0
        %v4866 = vand.u32 %v540, 4294901760
        %v4867 = vsub.f32 %v540, %v4866
        %v4868 = vand.u32 %v4867, 4294901760
        %4869 = vmatmul.mubr.f32.gmra.mrb[0].mxu0 %v4868
        %v4870 = vpop.f32.mrb[0].mxu0
        %v4871 = vadd.f32 %v3725, %v4870
        %v4872 = vpop.f32.mrb[0].mxu0
        %v4873 = vadd.f32 %v3727, %v4872
        %4874 = vmatprep.mubr.f32.mxu0 0.0
        %v4875 = vand.u32 %v543, 4294901760
        %v4876 = vsub.f32 %v543, %v4875
        %v4877 = vand.u32 %v4876, 4294901760
        %4878 = vmatmul.mubr.f32.gmra.mrb[0].mxu0 %v4877
        %v4879 = vpop.f32.mrb[0].mxu0
        %v4880 = vadd.f32 %v3733, %v4879
        %v4881 = vpop.f32.mrb[0].mxu0
        %v4882 = vadd.f32 %v3735, %v4881
        %4883 = vmatprep.mubr.f32.mxu0 0.0
        %v4884 = vand.u32 %v546, 4294901760
        %v4885 = vsub.f32 %v546, %v4884
        %v4886 = vand.u32 %v4885, 4294901760
        %4887 = vmatmul.mubr.f32.gmra.mrb[0].mxu0 %v4886
        %v4888 = vpop.f32.mrb[0].mxu0
        %v4889 = vadd.f32 %v3741, %v4888
        %v4890 = vpop.f32.mrb[0].mxu0
        %v4891 = vadd.f32 %v3743, %v4890
        %4892 = vmatprep.mubr.f32.mxu0 0.0
        %v4893 = vand.u32 %v549, 4294901760
        %v4894 = vsub.f32 %v549, %v4893
        %v4895 = vand.u32 %v4894, 4294901760
        %4896 = vmatmul.mubr.f32.gmra.mrb[0].mxu0 %v4895
        %v4897 = vpop.f32.mrb[0].mxu0
        %v4898 = vadd.f32 %v3749, %v4897
        %v4899 = vpop.f32.mrb[0].mxu0
        %v4900 = vadd.f32 %v3751, %v4899
        %4901 = vmatprep.mubr.f32.mxu0 0.0
        %v4902 = vand.u32 %v552, 4294901760
        %v4903 = vsub.f32 %v552, %v4902
        %v4904 = vand.u32 %v4903, 4294901760
        %4905 = vmatmul.mubr.f32.gmra.mrb[0].mxu0 %v4904
        %v4906 = vpop.f32.mrb[0].mxu0
        %v4907 = vadd.f32 %v3757, %v4906
        %v4908 = vpop.f32.mrb[0].mxu0
        %v4909 = vadd.f32 %v3759, %v4908
        %4910 = vmatprep.mubr.f32.mxu0 0.0
        %v4911 = vand.u32 %v555, 4294901760
        %v4912 = vsub.f32 %v555, %v4911
        %v4913 = vand.u32 %v4912, 4294901760
        %4914 = vmatmul.mubr.f32.gmra.mrb[0].mxu0 %v4913
        %v4915 = vpop.f32.mrb[0].mxu0
        %v4916 = vadd.f32 %v3765, %v4915
        %v4917 = vpop.f32.mrb[0].mxu0
        %v4918 = vadd.f32 %v3767, %v4917
        %4919 = vmatprep.mubr.f32.mxu0 0.0
        %v4920 = vand.u32 %v558, 4294901760
        %v4921 = vsub.f32 %v558, %v4920
        %v4922 = vand.u32 %v4921, 4294901760
        %4923 = vmatmul.mubr.f32.gmra.mrb[0].mxu0 %v4922
        %v4924 = vpop.f32.mrb[0].mxu0
        %v4925 = vadd.f32 %v3773, %v4924
        %v4926 = vpop.f32.mrb[0].mxu0
        %v4927 = vadd.f32 %v3775, %v4926
        %4928 = vmatprep.mubr.f32.mxu0 0.0
        %v4929 = vand.u32 %v561, 4294901760
        %v4930 = vsub.f32 %v561, %v4929
        %v4931 = vand.u32 %v4930, 4294901760
        %4932 = vmatmul.mubr.f32.gmra.mrb[0].mxu0 %v4931
        %v4933 = vpop.f32.mrb[0].mxu0
        %v4934 = vadd.f32 %v3781, %v4933
        %v4935 = vpop.f32.mrb[0].mxu0
        %v4936 = vadd.f32 %v3783, %v4935
        %4937 = vmatprep.mubr.f32.mxu0 0.0
        %v4938 = vand.u32 %v564, 4294901760
        %v4939 = vsub.f32 %v564, %v4938
        %v4940 = vand.u32 %v4939, 4294901760
        %4941 = vmatmul.mubr.f32.gmra.mrb[0].mxu0 %v4940
        %v4942 = vpop.f32.mrb[0].mxu0
        %v4943 = vadd.f32 %v3789, %v4942
        %v4944 = vpop.f32.mrb[0].mxu0
        %v4945 = vadd.f32 %v3791, %v4944
        %4946 = vmatprep.mubr.f32.mxu0 0.0
        %v4947 = vand.u32 %v567, 4294901760
        %v4948 = vsub.f32 %v567, %v4947
        %v4949 = vand.u32 %v4948, 4294901760
        %4950 = vmatmul.mubr.f32.gmra.mrb[0].mxu0 %v4949
        %v4951 = vpop.f32.mrb[0].mxu0
        %v4952 = vadd.f32 %v3797, %v4951
        %v4953 = vpop.f32.mrb[0].mxu0
        %v4954 = vadd.f32 %v3799, %v4953
        %4955 = vmatprep.mubr.f32.mxu0 0.0
        %v4956 = vand.u32 %v570, 4294901760
        %v4957 = vsub.f32 %v570, %v4956
        %v4958 = vand.u32 %v4957, 4294901760
        %4959 = vmatmul.mubr.f32.gmra.mrb[0].mxu0 %v4958
        %v4960 = vpop.f32.mrb[0].mxu0
        %v4961 = vadd.f32 %v3805, %v4960
        %v4962 = vpop.f32.mrb[0].mxu0
        %v4963 = vadd.f32 %v3807, %v4962
        %4964 = vmatprep.mubr.f32.mxu0 0.0
        %v4965 = vand.u32 %v573, 4294901760
        %v4966 = vsub.f32 %v573, %v4965
        %v4967 = vand.u32 %v4966, 4294901760
        %4968 = vmatmul.mubr.f32.gmra.mrb[0].mxu0 %v4967
        %v4969 = vpop.f32.mrb[0].mxu0
        %v4970 = vadd.f32 %v3813, %v4969
        %v4971 = vpop.f32.mrb[0].mxu0
        %v4972 = vadd.f32 %v3815, %v4971
        %4973 = vmatprep.mubr.f32.mxu0 0.0
        %v4974 = vand.u32 %v576, 4294901760
        %v4975 = vsub.f32 %v576, %v4974
        %v4976 = vand.u32 %v4975, 4294901760
        %4977 = vmatmul.mubr.f32.gmra.mrb[0].mxu0 %v4976
        %v4978 = vpop.f32.mrb[0].mxu0
        %v4979 = vadd.f32 %v3821, %v4978
        %v4980 = vpop.f32.mrb[0].mxu0
        %v4981 = vadd.f32 %v3823, %v4980
        %4982 = vmatprep.mubr.f32.mxu0 0.0
        %v4983 = vand.u32 %v579, 4294901760
        %v4984 = vsub.f32 %v579, %v4983
        %v4985 = vand.u32 %v4984, 4294901760
        %4986 = vmatmul.mubr.f32.gmra.mrb[0].mxu0 %v4985
        %v4987 = vpop.f32.mrb[0].mxu0
        %v4988 = vadd.f32 %v3829, %v4987
        %v4989 = vpop.f32.mrb[0].mxu0
        %v4990 = vadd.f32 %v3831, %v4989
        %4991 = vmatprep.mubr.f32.mxu0 0.0
        %v4992 = vand.u32 %v582, 4294901760
        %v4993 = vsub.f32 %v582, %v4992
        %v4994 = vand.u32 %v4993, 4294901760
        %4995 = vmatmul.mubr.f32.gmra.mrb[0].mxu0 %v4994
        %v4996 = vpop.f32.mrb[0].mxu0
        %v4997 = vadd.f32 %v3837, %v4996
        %v4998 = vpop.f32.mrb[0].mxu0
        %v4999 = vadd.f32 %v3839, %v4998
        %5000 = vmatprep.mubr.f32.mxu0 0.0
        %v5001 = vand.u32 %v585, 4294901760
        %v5002 = vsub.f32 %v585, %v5001
        %v5003 = vand.u32 %v5002, 4294901760
        %5004 = vmatmul.mubr.f32.gmra.mrb[0].mxu0 %v5003
        %v5005 = vpop.f32.mrb[0].mxu0
        %v5006 = vadd.f32 %v3845, %v5005
        %v5007 = vpop.f32.mrb[0].mxu0
        %v5008 = vadd.f32 %v3847, %v5007
        %5009 = vmatprep.mubr.f32.mxu0 0.0
        %v5010 = vand.u32 %v588, 4294901760
        %v5011 = vsub.f32 %v588, %v5010
        %v5012 = vand.u32 %v5011, 4294901760
        %5013 = vmatmul.mubr.f32.gmra.mrb[0].mxu0 %v5012
        %v5014 = vpop.f32.mrb[0].mxu0
        %v5015 = vadd.f32 %v3853, %v5014
        %v5016 = vpop.f32.mrb[0].mxu0
        %v5017 = vadd.f32 %v3855, %v5016
        %5018 = vmatprep.mubr.f32.mxu0 0.0
        %v5019 = vand.u32 %v591, 4294901760
        %v5020 = vsub.f32 %v591, %v5019
        %v5021 = vand.u32 %v5020, 4294901760
        %5022 = vmatmul.mubr.f32.gmra.mrb[0].mxu0 %v5021
        %v5023 = vpop.f32.mrb[0].mxu0
        %v5024 = vadd.f32 %v3861, %v5023
        %v5025 = vpop.f32.mrb[0].mxu0
        %v5026 = vadd.f32 %v3863, %v5025
        %5027 = vmatprep.mubr.f32.mxu0 0.0
        %v5028 = vand.u32 %v594, 4294901760
        %v5029 = vsub.f32 %v594, %v5028
        %v5030 = vand.u32 %v5029, 4294901760
        %5031 = vmatmul.mubr.f32.gmra.mrb[0].mxu0 %v5030
        %v5032 = vpop.f32.mrb[0].mxu0
        %v5033 = vadd.f32 %v3869, %v5032
        %v5034 = vpop.f32.mrb[0].mxu0
        %v5035 = vadd.f32 %v3871, %v5034
        %5036 = vmatprep.mubr.f32.mxu0 0.0
        %v5037 = vand.u32 %v597, 4294901760
        %v5038 = vsub.f32 %v597, %v5037
        %v5039 = vand.u32 %v5038, 4294901760
        %5040 = vmatmul.mubr.f32.gmra.mrb[0].mxu0 %v5039
        %v5041 = vpop.f32.mrb[0].mxu0
        %v5042 = vadd.f32 %v3877, %v5041
        %v5043 = vpop.f32.mrb[0].mxu0
        %v5044 = vadd.f32 %v3879, %v5043
        %5045 = vmatprep.mubr.f32.mxu0 0.0
        %v5046 = vand.u32 %v600, 4294901760
        %v5047 = vsub.f32 %v600, %v5046
        %v5048 = vand.u32 %v5047, 4294901760
        %5049 = vmatmul.mubr.f32.gmra.mrb[0].mxu0 %v5048
        %v5050 = vpop.f32.mrb[0].mxu0
        %v5051 = vadd.f32 %v3885, %v5050
        %v5052 = vpop.f32.mrb[0].mxu0
        %v5053 = vadd.f32 %v3887, %v5052
        %5054 = vmatprep.mubr.f32.mxu0 0.0
        %v5055 = vand.u32 %v603, 4294901760
        %v5056 = vsub.f32 %v603, %v5055
        %v5057 = vand.u32 %v5056, 4294901760
        %5058 = vmatmul.mubr.f32.gmra.mrb[0].mxu0 %v5057
        %v5059 = vpop.f32.mrb[0].mxu0
        %v5060 = vadd.f32 %v3893, %v5059
        %v5061 = vpop.f32.mrb[0].mxu0
        %v5062 = vadd.f32 %v3895, %v5061
        %5063 = vmatprep.mubr.f32.mxu0 0.0
        %v5064 = vand.u32 %v606, 4294901760
        %v5065 = vsub.f32 %v606, %v5064
        %v5066 = vand.u32 %v5065, 4294901760
        %5067 = vmatmul.mubr.f32.gmra.mrb[0].mxu0 %v5066
        %v5068 = vpop.f32.mrb[0].mxu0
        %v5069 = vadd.f32 %v3901, %v5068
        %v5070 = vpop.f32.mrb[0].mxu0
        %v5071 = vadd.f32 %v3903, %v5070
        %5072 = vmatprep.mubr.f32.mxu0 0.0
        %v5073 = vand.u32 %v609, 4294901760
        %v5074 = vsub.f32 %v609, %v5073
        %v5075 = vand.u32 %v5074, 4294901760
        %5076 = vmatmul.mubr.f32.gmra.mrb[0].mxu0 %v5075
        %v5077 = vpop.f32.mrb[0].mxu0
        %v5078 = vadd.f32 %v3909, %v5077
        %v5079 = vpop.f32.mrb[0].mxu0
        %v5080 = vadd.f32 %v3911, %v5079
        %5081 = vmatprep.mubr.f32.mxu0 0.0
        %v5082 = vand.u32 %v612, 4294901760
        %v5083 = vsub.f32 %v612, %v5082
        %v5084 = vand.u32 %v5083, 4294901760
        %5085 = vmatmul.mubr.f32.gmra.mrb[0].mxu0 %v5084
        %v5086 = vpop.f32.mrb[0].mxu0
        %v5087 = vadd.f32 %v3917, %v5086
        %v5088 = vpop.f32.mrb[0].mxu0
        %v5089 = vadd.f32 %v3919, %v5088
        %5090 = vmatprep.mubr.f32.mxu0 0.0
        %v5091 = vand.u32 %v615, 4294901760
        %v5092 = vsub.f32 %v615, %v5091
        %v5093 = vand.u32 %v5092, 4294901760
        %5094 = vmatmul.mubr.f32.gmra.mrb[0].mxu0 %v5093
        %v5095 = vpop.f32.mrb[0].mxu0
        %v5096 = vadd.f32 %v3925, %v5095
        %v5097 = vpop.f32.mrb[0].mxu0
        %v5098 = vadd.f32 %v3927, %v5097
        %5099 = vmatprep.mubr.f32.mxu0 0.0
        %v5100 = vand.u32 %v618, 4294901760
        %v5101 = vsub.f32 %v618, %v5100
        %v5102 = vand.u32 %v5101, 4294901760
        %5103 = vmatmul.mubr.f32.gmra.mrb[0].mxu0 %v5102
        %v5104 = vpop.f32.mrb[0].mxu0
        %v5105 = vadd.f32 %v3933, %v5104
        %v5106 = vpop.f32.mrb[0].mxu0
        %v5107 = vadd.f32 %v3935, %v5106
        %5108 = vmatprep.mubr.f32.mxu0 0.0
        %v5109 = vand.u32 %v621, 4294901760
        %v5110 = vsub.f32 %v621, %v5109
        %v5111 = vand.u32 %v5110, 4294901760
        %5112 = vmatmul.mubr.f32.gmra.mrb[0].mxu0 %v5111
        %v5113 = vpop.f32.mrb[0].mxu0
        %v5114 = vadd.f32 %v3941, %v5113
        %v5115 = vpop.f32.mrb[0].mxu0
        %v5116 = vadd.f32 %v3943, %v5115
        %5117 = vmatprep.mubr.f32.mxu0 0.0
        %v5118 = vand.u32 %v624, 4294901760
        %v5119 = vsub.f32 %v624, %v5118
        %v5120 = vand.u32 %v5119, 4294901760
        %5121 = vmatmul.mubr.f32.gmra.mrb[0].mxu0 %v5120
        %v5122 = vpop.f32.mrb[0].mxu0
        %v5123 = vadd.f32 %v3949, %v5122
        %v5124 = vpop.f32.mrb[0].mxu0
        %v5125 = vadd.f32 %v3951, %v5124
        %5126 = vmatprep.mubr.f32.mxu0 0.0
        %v5127 = vand.u32 %v627, 4294901760
        %v5128 = vsub.f32 %v627, %v5127
        %v5129 = vand.u32 %v5128, 4294901760
        %5130 = vmatmul.mubr.f32.gmra.mrb[0].mxu0 %v5129
        %v5131 = vpop.f32.mrb[0].mxu0
        %v5132 = vadd.f32 %v3957, %v5131
        %v5133 = vpop.f32.mrb[0].mxu0
        %v5134 = vadd.f32 %v3959, %v5133
        %5135 = vmatprep.mubr.f32.mxu0 0.0
        %v5136 = vand.u32 %v630, 4294901760
        %v5137 = vsub.f32 %v630, %v5136
        %v5138 = vand.u32 %v5137, 4294901760
        %5139 = vmatmul.mubr.f32.gmra.mrb[0].mxu0 %v5138
        %v5140 = vpop.f32.mrb[0].mxu0
        %v5141 = vadd.f32 %v3965, %v5140
        %v5142 = vpop.f32.mrb[0].mxu0
        %v5143 = vadd.f32 %v3967, %v5142
        %5144 = vmatprep.mubr.f32.mxu0 0.0
        %v5145 = vand.u32 %v633, 4294901760
        %v5146 = vsub.f32 %v633, %v5145
        %v5147 = vand.u32 %v5146, 4294901760
        %5148 = vmatmul.mubr.f32.gmra.mrb[0].mxu0 %v5147
        %v5149 = vpop.f32.mrb[0].mxu0
        %v5150 = vadd.f32 %v3973, %v5149
        %v5151 = vpop.f32.mrb[0].mxu0
        %v5152 = vadd.f32 %v3975, %v5151
        %5153 = vmatprep.mubr.f32.mxu0 0.0
        %v5154 = vand.u32 %v636, 4294901760
        %v5155 = vsub.f32 %v636, %v5154
        %v5156 = vand.u32 %v5155, 4294901760
        %5157 = vmatmul.mubr.f32.gmra.mrb[0].mxu0 %v5156
        %v5158 = vpop.f32.mrb[0].mxu0
        %v5159 = vadd.f32 %v3981, %v5158
        %v5160 = vpop.f32.mrb[0].mxu0
        %v5161 = vadd.f32 %v3983, %v5160
        %5162 = vmatprep.mubr.f32.mxu0 0.0
        %v5163 = vand.u32 %v639, 4294901760
        %v5164 = vsub.f32 %v639, %v5163
        %v5165 = vand.u32 %v5164, 4294901760
        %5166 = vmatmul.mubr.f32.gmra.mrb[0].mxu0 %v5165
        %v5167 = vpop.f32.mrb[0].mxu0
        %v5168 = vadd.f32 %v3989, %v5167
        %v5169 = vpop.f32.mrb[0].mxu0
        %v5170 = vadd.f32 %v3991, %v5169
        %5171 = vmatprep.mubr.f32.mxu0 0.0
        %v5172 = vand.u32 %v642, 4294901760
        %v5173 = vsub.f32 %v642, %v5172
        %v5174 = vand.u32 %v5173, 4294901760
        %5175 = vmatmul.mubr.f32.gmra.mrb[0].mxu0 %v5174
        %v5176 = vpop.f32.mrb[0].mxu0
        %v5177 = vadd.f32 %v3997, %v5176
        %v5178 = vpop.f32.mrb[0].mxu0
        %v5179 = vadd.f32 %v3999, %v5178
        %5180 = vmatprep.mubr.f32.mxu0 0.0
        %v5181 = vand.u32 %v645, 4294901760
        %v5182 = vsub.f32 %v645, %v5181
        %v5183 = vand.u32 %v5182, 4294901760
        %5184 = vmatmul.mubr.f32.gmra.mrb[0].mxu0 %v5183
        %v5185 = vpop.f32.mrb[0].mxu0
        %v5186 = vadd.f32 %v4005, %v5185
        %v5187 = vpop.f32.mrb[0].mxu0
        %v5188 = vadd.f32 %v4007, %v5187
        %5189 = vmatprep.mubr.f32.mxu0 0.0
        %v5190 = vand.u32 %v648, 4294901760
        %v5191 = vsub.f32 %v648, %v5190
        %v5192 = vand.u32 %v5191, 4294901760
        %5193 = vmatmul.mubr.f32.gmra.mrb[0].mxu0 %v5192
        %v5194 = vpop.f32.mrb[0].mxu0
        %v5195 = vadd.f32 %v4013, %v5194
        %v5196 = vpop.f32.mrb[0].mxu0
        %v5197 = vadd.f32 %v4015, %v5196
        %5198 = vmatprep.mubr.f32.mxu0 0.0
        %v5199 = vand.u32 %v651, 4294901760
        %v5200 = vsub.f32 %v651, %v5199
        %v5201 = vand.u32 %v5200, 4294901760
        %5202 = vmatmul.mubr.f32.gmra.mrb[0].mxu0 %v5201
        %v5203 = vpop.f32.mrb[0].mxu0
        %v5204 = vadd.f32 %v4021, %v5203
        %v5205 = vpop.f32.mrb[0].mxu0
        %v5206 = vadd.f32 %v4023, %v5205
        %5207 = vmatprep.mubr.f32.mxu0 0.0
        %v5208 = vand.u32 %v654, 4294901760
        %v5209 = vsub.f32 %v654, %v5208
        %v5210 = vand.u32 %v5209, 4294901760
        %5211 = vmatmul.mubr.f32.gmra.mrb[0].mxu0 %v5210
        %v5212 = vpop.f32.mrb[0].mxu0
        %v5213 = vadd.f32 %v4029, %v5212
        %v5214 = vpop.f32.mrb[0].mxu0
        %v5215 = vadd.f32 %v4031, %v5214
        %5216 = vmatprep.mubr.f32.mxu0 0.0
        %v5217 = vand.u32 %v657, 4294901760
        %v5218 = vsub.f32 %v657, %v5217
        %v5219 = vand.u32 %v5218, 4294901760
        %5220 = vmatmul.mubr.f32.gmra.mrb[0].mxu0 %v5219
        %v5221 = vpop.f32.mrb[0].mxu0
        %v5222 = vadd.f32 %v4037, %v5221
        %v5223 = vpop.f32.mrb[0].mxu0
        %v5224 = vadd.f32 %v4039, %v5223
        %5225 = vmatprep.mubr.f32.mxu0 0.0
        %v5226 = vand.u32 %v660, 4294901760
        %v5227 = vsub.f32 %v660, %v5226
        %v5228 = vand.u32 %v5227, 4294901760
        %5229 = vmatmul.mubr.f32.gmra.mrb[0].mxu0 %v5228
        %v5230 = vpop.f32.mrb[0].mxu0
        %v5231 = vadd.f32 %v4045, %v5230
        %v5232 = vpop.f32.mrb[0].mxu0
        %v5233 = vadd.f32 %v4047, %v5232
        %5234 = vmatprep.mubr.f32.mxu0 0.0
        %v5235 = vand.u32 %v663, 4294901760
        %v5236 = vsub.f32 %v663, %v5235
        %v5237 = vand.u32 %v5236, 4294901760
        %5238 = vmatmul.mubr.f32.gmra.mrb[0].mxu0 %v5237
        %v5239 = vpop.f32.mrb[0].mxu0
        %v5240 = vadd.f32 %v4053, %v5239
        %v5241 = vpop.f32.mrb[0].mxu0
        %v5242 = vadd.f32 %v4055, %v5241
        %5243 = vmatprep.mubr.f32.mxu0 0.0
        %v5244 = vand.u32 %v666, 4294901760
        %v5245 = vsub.f32 %v666, %v5244
        %v5246 = vand.u32 %v5245, 4294901760
        %5247 = vmatmul.mubr.f32.gmra.mrb[0].mxu0 %v5246
        %v5248 = vpop.f32.mrb[0].mxu0
        %v5249 = vadd.f32 %v4061, %v5248
        %v5250 = vpop.f32.mrb[0].mxu0
        %v5251 = vadd.f32 %v4063, %v5250
        %5252 = vmatprep.mubr.f32.mxu0 0.0
        %v5253 = vand.u32 %v669, 4294901760
        %v5254 = vsub.f32 %v669, %v5253
        %v5255 = vand.u32 %v5254, 4294901760
        %5256 = vmatmul.mubr.f32.gmra.mrb[0].mxu0 %v5255
        %v5257 = vpop.f32.mrb[0].mxu0
        %v5258 = vadd.f32 %v4069, %v5257
        %v5259 = vpop.f32.mrb[0].mxu0
        %v5260 = vadd.f32 %v4071, %v5259
        %5261 = vmatprep.mubr.f32.mxu0 0.0
        %v5262 = vand.u32 %v672, 4294901760
        %v5263 = vsub.f32 %v672, %v5262
        %v5264 = vand.u32 %v5263, 4294901760
        %5265 = vmatmul.mubr.f32.gmra.mrb[0].mxu0 %v5264
        %v5266 = vpop.f32.mrb[0].mxu0
        %v5267 = vadd.f32 %v4077, %v5266
        %v5268 = vpop.f32.mrb[0].mxu0
        %v5269 = vadd.f32 %v4079, %v5268
        %5270 = vmatprep.mubr.f32.mxu0 0.0
        %v5271 = vand.u32 %v675, 4294901760
        %v5272 = vsub.f32 %v675, %v5271
        %v5273 = vand.u32 %v5272, 4294901760
        %5274 = vmatmul.mubr.f32.gmra.mrb[0].mxu0 %v5273
        %v5275 = vpop.f32.mrb[0].mxu0
        %v5276 = vadd.f32 %v4085, %v5275
        %v5277 = vpop.f32.mrb[0].mxu0
        %v5278 = vadd.f32 %v4087, %v5277
        %5279 = vmatprep.mubr.f32.mxu0 0.0
        %v5280 = vand.u32 %v678, 4294901760
        %v5281 = vsub.f32 %v678, %v5280
        %v5282 = vand.u32 %v5281, 4294901760
        %5283 = vmatmul.mubr.f32.gmra.mrb[0].mxu0 %v5282
        %v5284 = vpop.f32.mrb[0].mxu0
        %v5285 = vadd.f32 %v4093, %v5284
        %v5286 = vpop.f32.mrb[0].mxu0
        %v5287 = vadd.f32 %v4095, %v5286
        %5288 = vmatprep.mubr.f32.mxu0 0.0
        %v5289 = vand.u32 %v681, 4294901760
        %v5290 = vsub.f32 %v681, %v5289
        %v5291 = vand.u32 %v5290, 4294901760
        %5292 = vmatmul.mubr.f32.gmra.mrb[0].mxu0 %v5291
        %v5293 = vpop.f32.mrb[0].mxu0
        %v5294 = vadd.f32 %v4101, %v5293
        %v5295 = vpop.f32.mrb[0].mxu0
        %v5296 = vadd.f32 %v4103, %v5295
        %5297 = vmatprep.mubr.f32.mxu0 0.0
        %v5298 = vand.u32 %v684, 4294901760
        %v5299 = vsub.f32 %v684, %v5298
        %v5300 = vand.u32 %v5299, 4294901760
        %5301 = vmatmul.mubr.f32.gmra.mrb[0].mxu0 %v5300
        %v5302 = vpop.f32.mrb[0].mxu0
        %v5303 = vadd.f32 %v4109, %v5302
        %v5304 = vpop.f32.mrb[0].mxu0
        %v5305 = vadd.f32 %v4111, %v5304
        %5306 = vmatprep.mubr.f32.mxu0 0.0
        %v5307 = vand.u32 %v687, 4294901760
        %v5308 = vsub.f32 %v687, %v5307
        %v5309 = vand.u32 %v5308, 4294901760
        %5310 = vmatmul.mubr.f32.gmra.mrb[0].mxu0 %v5309
        %v5311 = vpop.f32.mrb[0].mxu0
        %v5312 = vadd.f32 %v4117, %v5311
        %v5313 = vpop.f32.mrb[0].mxu0
        %v5314 = vadd.f32 %v4119, %v5313
        %5315 = vmatprep.mubr.f32.mxu0 0.0
        %v5316 = vand.u32 %v690, 4294901760
        %v5317 = vsub.f32 %v690, %v5316
        %v5318 = vand.u32 %v5317, 4294901760
        %5319 = vmatmul.mubr.f32.gmra.mrb[0].mxu0 %v5318
        %v5320 = vpop.f32.mrb[0].mxu0
        %v5321 = vadd.f32 %v4125, %v5320
        %v5322 = vpop.f32.mrb[0].mxu0
        %v5323 = vadd.f32 %v4127, %v5322
        %5324 = vmatprep.mubr.f32.mxu0 0.0
        %v5325 = vand.u32 %v693, 4294901760
        %v5326 = vsub.f32 %v693, %v5325
        %v5327 = vand.u32 %v5326, 4294901760
        %5328 = vmatmul.mubr.f32.gmra.mrb[0].mxu0 %v5327
        %v5329 = vpop.f32.mrb[0].mxu0
        %v5330 = vadd.f32 %v4133, %v5329
        %v5331 = vpop.f32.mrb[0].mxu0
        %v5332 = vadd.f32 %v4135, %v5331
        %5333 = vmatprep.mubr.f32.mxu0 0.0
        %v5334 = vand.u32 %v696, 4294901760
        %v5335 = vsub.f32 %v696, %v5334
        %v5336 = vand.u32 %v5335, 4294901760
        %5337 = vmatmul.mubr.f32.gmra.mrb[0].mxu0 %v5336
        %v5338 = vpop.f32.mrb[0].mxu0
        %v5339 = vadd.f32 %v4141, %v5338
        %v5340 = vpop.f32.mrb[0].mxu0
        %v5341 = vadd.f32 %v4143, %v5340
        %5342 = vmatprep.mubr.f32.mxu0 0.0
        %v5343 = vand.u32 %v699, 4294901760
        %v5344 = vsub.f32 %v699, %v5343
        %v5345 = vand.u32 %v5344, 4294901760
        %5346 = vmatmul.mubr.f32.gmra.mrb[0].mxu0 %v5345
        %v5347 = vpop.f32.mrb[0].mxu0
        %v5348 = vadd.f32 %v4149, %v5347
        %v5349 = vpop.f32.mrb[0].mxu0
        %v5350 = vadd.f32 %v4151, %v5349
        %5351 = vmatprep.mubr.f32.mxu0 0.0
        %v5352 = vand.u32 %v702, 4294901760
        %v5353 = vsub.f32 %v702, %v5352
        %v5354 = vand.u32 %v5353, 4294901760
        %5355 = vmatmul.mubr.f32.gmra.mrb[0].mxu0 %v5354
        %v5356 = vpop.f32.mrb[0].mxu0
        %v5357 = vadd.f32 %v4157, %v5356
        %v5358 = vpop.f32.mrb[0].mxu0
        %v5359 = vadd.f32 %v4159, %v5358
        %5360 = vmatprep.mubr.f32.mxu0 0.0
        %v5361 = vand.u32 %v705, 4294901760
        %v5362 = vsub.f32 %v705, %v5361
        %v5363 = vand.u32 %v5362, 4294901760
        %5364 = vmatmul.mubr.f32.gmra.mrb[0].mxu0 %v5363
        %v5365 = vpop.f32.mrb[0].mxu0
        %v5366 = vadd.f32 %v4165, %v5365
        %v5367 = vpop.f32.mrb[0].mxu0
        %v5368 = vadd.f32 %v4167, %v5367
        %5369 = vmatprep.mubr.f32.mxu0 0.0
        %v5370 = vand.u32 %v708, 4294901760
        %v5371 = vsub.f32 %v708, %v5370
        %v5372 = vand.u32 %v5371, 4294901760
        %5373 = vmatmul.mubr.f32.gmra.mrb[0].mxu0 %v5372
        %v5374 = vpop.f32.mrb[0].mxu0
        %v5375 = vadd.f32 %v4173, %v5374
        %v5376 = vpop.f32.mrb[0].mxu0
        %v5377 = vadd.f32 %v4175, %v5376
        %5378 = vmatprep.mubr.f32.mxu0 0.0
        %v5379 = vand.u32 %v711, 4294901760
        %v5380 = vsub.f32 %v711, %v5379
        %v5381 = vand.u32 %v5380, 4294901760
        %5382 = vmatmul.mubr.f32.gmra.mrb[0].mxu0 %v5381
        %v5383 = vpop.f32.mrb[0].mxu0
        %v5384 = vadd.f32 %v4181, %v5383
        %v5385 = vpop.f32.mrb[0].mxu0
        %v5386 = vadd.f32 %v4183, %v5385
        %5387 = vmatprep.mubr.f32.mxu0 0.0
        %v5388 = vand.u32 %v714, 4294901760
        %v5389 = vsub.f32 %v714, %v5388
        %v5390 = vand.u32 %v5389, 4294901760
        %5391 = vmatmul.mubr.f32.gmra.mrb[0].mxu0 %v5390
        %v5392 = vpop.f32.mrb[0].mxu0
        %v5393 = vadd.f32 %v4189, %v5392
        %v5394 = vpop.f32.mrb[0].mxu0
        %v5395 = vadd.f32 %v4191, %v5394
        %5396 = vmatprep.mubr.f32.mxu0 0.0
        %v5397 = vand.u32 %v717, 4294901760
        %v5398 = vsub.f32 %v717, %v5397
        %v5399 = vand.u32 %v5398, 4294901760
        %5400 = vmatmul.mubr.f32.gmra.mrb[0].mxu0 %v5399
        %v5401 = vpop.f32.mrb[0].mxu0
        %v5402 = vadd.f32 %v4197, %v5401
        %v5403 = vpop.f32.mrb[0].mxu0
        %v5404 = vadd.f32 %v4199, %v5403
        %5405 = vmatprep.mubr.f32.mxu0 0.0
        %v5406 = vand.u32 %v720, 4294901760
        %v5407 = vsub.f32 %v720, %v5406
        %v5408 = vand.u32 %v5407, 4294901760
        %5409 = vmatmul.mubr.f32.gmra.mrb[0].mxu0 %v5408
        %v5410 = vpop.f32.mrb[0].mxu0
        %v5411 = vadd.f32 %v4205, %v5410
        %v5412 = vpop.f32.mrb[0].mxu0
        %v5413 = vadd.f32 %v4207, %v5412
        %5414 = vmatprep.mubr.f32.mxu0 0.0
        %v5415 = vand.u32 %v723, 4294901760
        %v5416 = vsub.f32 %v723, %v5415
        %v5417 = vand.u32 %v5416, 4294901760
        %5418 = vmatmul.mubr.f32.gmra.mrb[0].mxu0 %v5417
        %v5419 = vpop.f32.mrb[0].mxu0
        %v5420 = vadd.f32 %v4213, %v5419
        %v5421 = vpop.f32.mrb[0].mxu0
        %v5422 = vadd.f32 %v4215, %v5421
        %5423 = vmatprep.mubr.f32.mxu0 0.0
        %v5424 = vand.u32 %v726, 4294901760
        %v5425 = vsub.f32 %v726, %v5424
        %v5426 = vand.u32 %v5425, 4294901760
        %5427 = vmatmul.mubr.f32.gmra.mrb[0].mxu0 %v5426
        %v5428 = vpop.f32.mrb[0].mxu0
        %v5429 = vadd.f32 %v4221, %v5428
        %v5430 = vpop.f32.mrb[0].mxu0
        %v5431 = vadd.f32 %v4223, %v5430
        %5432 = vmatprep.mubr.f32.mxu0 0.0
        %v5433 = vand.u32 %v729, 4294901760
        %v5434 = vsub.f32 %v729, %v5433
        %v5435 = vand.u32 %v5434, 4294901760
        %5436 = vmatmul.mubr.f32.gmra.mrb[0].mxu0 %v5435
        %v5437 = vpop.f32.mrb[0].mxu0
        %v5438 = vadd.f32 %v4229, %v5437
        %v5439 = vpop.f32.mrb[0].mxu0
        %v5440 = vadd.f32 %v4231, %v5439
        %5441 = vmatprep.mubr.f32.mxu0 0.0
        %v5442 = vand.u32 %v732, 4294901760
        %v5443 = vsub.f32 %v732, %v5442
        %v5444 = vand.u32 %v5443, 4294901760
        %5445 = vmatmul.mubr.f32.gmra.mrb[0].mxu0 %v5444
        %v5446 = vpop.f32.mrb[0].mxu0
        %v5447 = vadd.f32 %v4237, %v5446
        %v5448 = vpop.f32.mrb[0].mxu0
        %v5449 = vadd.f32 %v4239, %v5448
        %5450 = vmatprep.mubr.f32.mxu0 0.0
        %v5451 = vand.u32 %v735, 4294901760
        %v5452 = vsub.f32 %v735, %v5451
        %v5453 = vand.u32 %v5452, 4294901760
        %5454 = vmatmul.mubr.f32.gmra.mrb[0].mxu0 %v5453
        %v5455 = vpop.f32.mrb[0].mxu0
        %v5456 = vadd.f32 %v4245, %v5455
        %v5457 = vpop.f32.mrb[0].mxu0
        %v5458 = vadd.f32 %v4247, %v5457
        %5459 = vmatprep.mubr.f32.mxu0 0.0
        %v5460 = vand.u32 %v738, 4294901760
        %v5461 = vsub.f32 %v738, %v5460
        %v5462 = vand.u32 %v5461, 4294901760
        %5463 = vmatmul.mubr.f32.gmra.mrb[0].mxu0 %v5462
        %v5464 = vpop.f32.mrb[0].mxu0
        %v5465 = vadd.f32 %v4253, %v5464
        %v5466 = vpop.f32.mrb[0].mxu0
        %v5467 = vadd.f32 %v4255, %v5466
        %5468 = vmatprep.mubr.f32.mxu0 0.0
        %v5469 = vand.u32 %v741, 4294901760
        %v5470 = vsub.f32 %v741, %v5469
        %v5471 = vand.u32 %v5470, 4294901760
        %5472 = vmatmul.mubr.f32.gmra.mrb[0].mxu0 %v5471
        %v5473 = vpop.f32.mrb[0].mxu0
        %v5474 = vadd.f32 %v4261, %v5473
        %v5475 = vpop.f32.mrb[0].mxu0
        %v5476 = vadd.f32 %v4263, %v5475
        %5477 = vmatprep.mubr.f32.mxu0 0.0
        %v5478 = vand.u32 %v744, 4294901760
        %v5479 = vsub.f32 %v744, %v5478
        %v5480 = vand.u32 %v5479, 4294901760
        %5481 = vmatmul.mubr.f32.gmra.mrb[0].mxu0 %v5480
        %v5482 = vpop.f32.mrb[0].mxu0
        %v5483 = vadd.f32 %v4269, %v5482
        %v5484 = vpop.f32.mrb[0].mxu0
        %v5485 = vadd.f32 %v4271, %v5484
        %5486 = vmatprep.mubr.f32.mxu0 0.0
        %v5487 = vand.u32 %v747, 4294901760
        %v5488 = vsub.f32 %v747, %v5487
        %v5489 = vand.u32 %v5488, 4294901760
        %5490 = vmatmul.mubr.f32.gmra.mrb[0].mxu0 %v5489
        %v5491 = vpop.f32.mrb[0].mxu0
        %v5492 = vadd.f32 %v4277, %v5491
        %v5493 = vpop.f32.mrb[0].mxu0
        %v5494 = vadd.f32 %v4279, %v5493
        %5495 = vmatprep.mubr.f32.mxu0 0.0
        %v5496 = vand.u32 %v750, 4294901760
        %v5497 = vsub.f32 %v750, %v5496
        %v5498 = vand.u32 %v5497, 4294901760
        %5499 = vmatmul.mubr.f32.gmra.mrb[0].mxu0 %v5498
        %v5500 = vpop.f32.mrb[0].mxu0
        %v5501 = vadd.f32 %v4285, %v5500
        %v5502 = vpop.f32.mrb[0].mxu0
        %v5503 = vadd.f32 %v4287, %v5502
        %5504 = vmatprep.mubr.f32.mxu0 0.0
        %v5505 = vand.u32 %v753, 4294901760
        %v5506 = vsub.f32 %v753, %v5505
        %v5507 = vand.u32 %v5506, 4294901760
        %5508 = vmatmul.mubr.f32.gmra.mrb[0].mxu0 %v5507
        %v5509 = vpop.f32.mrb[0].mxu0
        %v5510 = vadd.f32 %v4293, %v5509
        %v5511 = vpop.f32.mrb[0].mxu0
        %v5512 = vadd.f32 %v4295, %v5511
        %5513 = vmatprep.mubr.f32.mxu0 0.0
        %v5514 = vand.u32 %v756, 4294901760
        %v5515 = vsub.f32 %v756, %v5514
        %v5516 = vand.u32 %v5515, 4294901760
        %5517 = vmatmul.mubr.f32.gmra.mrb[0].mxu0 %v5516
        %v5518 = vpop.f32.mrb[0].mxu0
        %v5519 = vadd.f32 %v4301, %v5518
        %v5520 = vpop.f32.mrb[0].mxu0
        %v5521 = vadd.f32 %v4303, %v5520
        %5522 = vmatprep.mubr.f32.mxu0 0.0
        %v5523 = vand.u32 %v759, 4294901760
        %v5524 = vsub.f32 %v759, %v5523
        %v5525 = vand.u32 %v5524, 4294901760
        %5526 = vmatmul.mubr.f32.gmra.mrb[0].mxu0 %v5525
        %v5527 = vpop.f32.mrb[0].mxu0
        %v5528 = vadd.f32 %v4309, %v5527
        %v5529 = vpop.f32.mrb[0].mxu0
        %v5530 = vadd.f32 %v4311, %v5529
        %5531 = vmatprep.mubr.f32.mxu0 0.0
        %v5532 = vand.u32 %v762, 4294901760
        %v5533 = vsub.f32 %v762, %v5532
        %v5534 = vand.u32 %v5533, 4294901760
        %5535 = vmatmul.mubr.f32.gmra.mrb[0].mxu0 %v5534
        %v5536 = vpop.f32.mrb[0].mxu0
        %v5537 = vadd.f32 %v4317, %v5536
        %v5538 = vpop.f32.mrb[0].mxu0
        %v5539 = vadd.f32 %v4319, %v5538
        %5540 = vmatprep.mubr.f32.mxu0 0.0
        %v5541 = vand.u32 %v765, 4294901760
        %v5542 = vsub.f32 %v765, %v5541
        %v5543 = vand.u32 %v5542, 4294901760
        %5544 = vmatmul.mubr.f32.gmra.mrb[0].mxu0 %v5543
        %v5545 = vpop.f32.mrb[0].mxu0
        %v5546 = vadd.f32 %v4325, %v5545
        %v5547 = vpop.f32.mrb[0].mxu0
        %v5548 = vadd.f32 %v4327, %v5547
        %5549 = vdwg.mxu0
        %v5550 = vand.u32 %v379, 4294901760
        %v5551 = vsub.f32 %v379, %v5550
        %v5552 = vand.u32 %v5551, 4294901760
        %5553 = vmatprep.subr.mxu0 %v5552
        %v5554 = vand.u32 %v378, 4294901760
        %v5555 = vsub.f32 %v378, %v5554
        %v5556 = vand.u32 %v5555, 4294901760
        %5557 = vmatpush1.msra.mxu0 %v5556
        %v5558 = vand.u32 %v772, 4294901760
        %v5559 = vsub.f32 %v772, %v5558
        %v5560 = vand.u32 %v5559, 4294901760
        %5561 = vmatprep.subr.mxu0 %v5560
        %v5562 = vand.u32 %v769, 4294901760
        %v5563 = vsub.f32 %v769, %v5562
        %v5564 = vand.u32 %v5563, 4294901760
        %5565 = vmatpush1.msra.mxu0 %v5564
        %5566 = vmatprep.subr.mxu0 0.0
        %5567 = vmatpush1.msra.mxu0 0.0
        %5568 = vmatprep.subr.mxu0 0.0
        %5569 = vmatpush1.msra.mxu0 0.0
        %5570 = vmatprep.subr.mxu0 0.0
        %5571 = vmatpush1.msra.mxu0 0.0
        %5572 = vmatprep.subr.mxu0 0.0
        %5573 = vmatpush1.msra.mxu0 0.0
        %5574 = vmatprep.subr.mxu0 0.0
        %5575 = vmatpush1.msra.mxu0 0.0
        %5576 = vmatprep.subr.mxu0 0.0
        %5577 = vmatpush1.msra.mxu0 0.0
        %5578 = vmatprep.subr.mxu0 0.0
        %5579 = vmatpush1.msra.mxu0 0.0
        %5580 = vmatprep.subr.mxu0 0.0
        %5581 = vmatpush1.msra.mxu0 0.0
        %5582 = vmatprep.subr.mxu0 0.0
        %5583 = vmatpush1.msra.mxu0 0.0
        %5584 = vmatprep.subr.mxu0 0.0
        %5585 = vmatpush1.msra.mxu0 0.0
        %5586 = vmatprep.subr.mxu0 0.0
        %5587 = vmatpush1.msra.mxu0 0.0
        %5588 = vmatprep.subr.mxu0 0.0
        %5589 = vmatpush1.msra.mxu0 0.0
        %5590 = vmatprep.subr.mxu0 0.0
        %5591 = vmatpush1.msra.mxu0 0.0
        %5592 = vmatprep.subr.mxu0 0.0
        %5593 = vmatpush1.msra.mxu0 0.0
        %5594 = vmatprep.subr.mxu0 0.0
        %5595 = vmatpush1.msra.mxu0 0.0
        %5596 = vmatprep.subr.mxu0 0.0
        %5597 = vmatpush1.msra.mxu0 0.0
        %5598 = vmatprep.subr.mxu0 0.0
        %5599 = vmatpush1.msra.mxu0 0.0
        %5600 = vmatprep.subr.mxu0 0.0
        %5601 = vmatpush1.msra.mxu0 0.0
        %5602 = vmatprep.subr.mxu0 0.0
        %5603 = vmatpush1.msra.mxu0 0.0
        %5604 = vmatprep.subr.mxu0 0.0
        %5605 = vmatpush1.msra.mxu0 0.0
        %5606 = vmatprep.subr.mxu0 0.0
        %5607 = vmatpush1.msra.mxu0 0.0
        %5608 = vmatprep.subr.mxu0 0.0
        %5609 = vmatpush1.msra.mxu0 0.0
        %5610 = vmatprep.subr.mxu0 0.0
        %5611 = vmatpush1.msra.mxu0 0.0
        %5612 = vmatprep.subr.mxu0 0.0
        %5613 = vmatpush1.msra.mxu0 0.0
        %5614 = vmatprep.subr.mxu0 0.0
        %5615 = vmatpush1.msra.mxu0 0.0
        %5616 = vmatprep.subr.mxu0 0.0
        %5617 = vmatpush1.msra.mxu0 0.0
        %5618 = vmatprep.subr.mxu0 0.0
        %5619 = vmatpush1.msra.mxu0 0.0
        %5620 = vmatprep.subr.mxu0 0.0
        %5621 = vmatpush1.msra.mxu0 0.0
        %5622 = vmatprep.subr.mxu0 0.0
        %5623 = vmatpush1.msra.mxu0 0.0
        %5624 = vmatprep.subr.mxu0 0.0
        %5625 = vmatpush1.msra.mxu0 0.0
        %5626 = vmatprep.mubr.f32.mxu0 0.0
        %v5627 = vand.u32 %v384, 4294901760
        %5628 = vmatmul.mubr.f32.gmra.mrb[0].mxu0 %v5627
        %v5629 = vpop.f32.mrb[0].mxu0
        %v5630 = vadd.f32 %v4403, %v5629
        %v5631 = vpop.f32.mrb[0].mxu0
        %v5632 = vadd.f32 %v4405, %v5631
        %5633 = vmatprep.mubr.f32.mxu0 0.0
        %v5634 = vand.u32 %v387, 4294901760
        %5635 = vmatmul.mubr.f32.gmra.mrb[0].mxu0 %v5634
        %v5636 = vpop.f32.mrb[0].mxu0
        %v5637 = vadd.f32 %v4412, %v5636
        %v5638 = vpop.f32.mrb[0].mxu0
        %v5639 = vadd.f32 %v4414, %v5638
        %5640 = vmatprep.mubr.f32.mxu0 0.0
        %v5641 = vand.u32 %v390, 4294901760
        %5642 = vmatmul.mubr.f32.gmra.mrb[0].mxu0 %v5641
        %v5643 = vpop.f32.mrb[0].mxu0
        %v5644 = vadd.f32 %v4421, %v5643
        %v5645 = vpop.f32.mrb[0].mxu0
        %v5646 = vadd.f32 %v4423, %v5645
        %5647 = vmatprep.mubr.f32.mxu0 0.0
        %v5648 = vand.u32 %v393, 4294901760
        %5649 = vmatmul.mubr.f32.gmra.mrb[0].mxu0 %v5648
        %v5650 = vpop.f32.mrb[0].mxu0
        %v5651 = vadd.f32 %v4430, %v5650
        %v5652 = vpop.f32.mrb[0].mxu0
        %v5653 = vadd.f32 %v4432, %v5652
        %5654 = vmatprep.mubr.f32.mxu0 0.0
        %v5655 = vand.u32 %v396, 4294901760
        %5656 = vmatmul.mubr.f32.gmra.mrb[0].mxu0 %v5655
        %v5657 = vpop.f32.mrb[0].mxu0
        %v5658 = vadd.f32 %v4439, %v5657
        %v5659 = vpop.f32.mrb[0].mxu0
        %v5660 = vadd.f32 %v4441, %v5659
        %5661 = vmatprep.mubr.f32.mxu0 0.0
        %v5662 = vand.u32 %v399, 4294901760
        %5663 = vmatmul.mubr.f32.gmra.mrb[0].mxu0 %v5662
        %v5664 = vpop.f32.mrb[0].mxu0
        %v5665 = vadd.f32 %v4448, %v5664
        %v5666 = vpop.f32.mrb[0].mxu0
        %v5667 = vadd.f32 %v4450, %v5666
        %5668 = vmatprep.mubr.f32.mxu0 0.0
        %v5669 = vand.u32 %v402, 4294901760
        %5670 = vmatmul.mubr.f32.gmra.mrb[0].mxu0 %v5669
        %v5671 = vpop.f32.mrb[0].mxu0
        %v5672 = vadd.f32 %v4457, %v5671
        %v5673 = vpop.f32.mrb[0].mxu0
        %v5674 = vadd.f32 %v4459, %v5673
        %5675 = vmatprep.mubr.f32.mxu0 0.0
        %v5676 = vand.u32 %v405, 4294901760
        %5677 = vmatmul.mubr.f32.gmra.mrb[0].mxu0 %v5676
        %v5678 = vpop.f32.mrb[0].mxu0
        %v5679 = vadd.f32 %v4466, %v5678
        %v5680 = vpop.f32.mrb[0].mxu0
        %v5681 = vadd.f32 %v4468, %v5680
        %5682 = vmatprep.mubr.f32.mxu0 0.0
        %v5683 = vand.u32 %v408, 4294901760
        %5684 = vmatmul.mubr.f32.gmra.mrb[0].mxu0 %v5683
        %v5685 = vpop.f32.mrb[0].mxu0
        %v5686 = vadd.f32 %v4475, %v5685
        %v5687 = vpop.f32.mrb[0].mxu0
        %v5688 = vadd.f32 %v4477, %v5687
        %5689 = vmatprep.mubr.f32.mxu0 0.0
        %v5690 = vand.u32 %v411, 4294901760
        %5691 = vmatmul.mubr.f32.gmra.mrb[0].mxu0 %v5690
        %v5692 = vpop.f32.mrb[0].mxu0
        %v5693 = vadd.f32 %v4484, %v5692
        %v5694 = vpop.f32.mrb[0].mxu0
        %v5695 = vadd.f32 %v4486, %v5694
        %5696 = vmatprep.mubr.f32.mxu0 0.0
        %v5697 = vand.u32 %v414, 4294901760
        %5698 = vmatmul.mubr.f32.gmra.mrb[0].mxu0 %v5697
        %v5699 = vpop.f32.mrb[0].mxu0
        %v5700 = vadd.f32 %v4493, %v5699
        %v5701 = vpop.f32.mrb[0].mxu0
        %v5702 = vadd.f32 %v4495, %v5701
        %5703 = vmatprep.mubr.f32.mxu0 0.0
        %v5704 = vand.u32 %v417, 4294901760
        %5705 = vmatmul.mubr.f32.gmra.mrb[0].mxu0 %v5704
        %v5706 = vpop.f32.mrb[0].mxu0
        %v5707 = vadd.f32 %v4502, %v5706
        %v5708 = vpop.f32.mrb[0].mxu0
        %v5709 = vadd.f32 %v4504, %v5708
        %5710 = vmatprep.mubr.f32.mxu0 0.0
        %v5711 = vand.u32 %v420, 4294901760
        %5712 = vmatmul.mubr.f32.gmra.mrb[0].mxu0 %v5711
        %v5713 = vpop.f32.mrb[0].mxu0
        %v5714 = vadd.f32 %v4511, %v5713
        %v5715 = vpop.f32.mrb[0].mxu0
        %v5716 = vadd.f32 %v4513, %v5715
        %5717 = vmatprep.mubr.f32.mxu0 0.0
        %v5718 = vand.u32 %v423, 4294901760
        %5719 = vmatmul.mubr.f32.gmra.mrb[0].mxu0 %v5718
        %v5720 = vpop.f32.mrb[0].mxu0
        %v5721 = vadd.f32 %v4520, %v5720
        %v5722 = vpop.f32.mrb[0].mxu0
        %v5723 = vadd.f32 %v4522, %v5722
        %5724 = vmatprep.mubr.f32.mxu0 0.0
        %v5725 = vand.u32 %v426, 4294901760
        %5726 = vmatmul.mubr.f32.gmra.mrb[0].mxu0 %v5725
        %v5727 = vpop.f32.mrb[0].mxu0
        %v5728 = vadd.f32 %v4529, %v5727
        %v5729 = vpop.f32.mrb[0].mxu0
        %v5730 = vadd.f32 %v4531, %v5729
        %5731 = vmatprep.mubr.f32.mxu0 0.0
        %v5732 = vand.u32 %v429, 4294901760
        %5733 = vmatmul.mubr.f32.gmra.mrb[0].mxu0 %v5732
        %v5734 = vpop.f32.mrb[0].mxu0
        %v5735 = vadd.f32 %v4538, %v5734
        %v5736 = vpop.f32.mrb[0].mxu0
        %v5737 = vadd.f32 %v4540, %v5736
        %5738 = vmatprep.mubr.f32.mxu0 0.0
        %v5739 = vand.u32 %v432, 4294901760
        %5740 = vmatmul.mubr.f32.gmra.mrb[0].mxu0 %v5739
        %v5741 = vpop.f32.mrb[0].mxu0
        %v5742 = vadd.f32 %v4547, %v5741
        %v5743 = vpop.f32.mrb[0].mxu0
        %v5744 = vadd.f32 %v4549, %v5743
        %5745 = vmatprep.mubr.f32.mxu0 0.0
        %v5746 = vand.u32 %v435, 4294901760
        %5747 = vmatmul.mubr.f32.gmra.mrb[0].mxu0 %v5746
        %v5748 = vpop.f32.mrb[0].mxu0
        %v5749 = vadd.f32 %v4556, %v5748
        %v5750 = vpop.f32.mrb[0].mxu0
        %v5751 = vadd.f32 %v4558, %v5750
        %5752 = vmatprep.mubr.f32.mxu0 0.0
        %v5753 = vand.u32 %v438, 4294901760
        %5754 = vmatmul.mubr.f32.gmra.mrb[0].mxu0 %v5753
        %v5755 = vpop.f32.mrb[0].mxu0
        %v5756 = vadd.f32 %v4565, %v5755
        %v5757 = vpop.f32.mrb[0].mxu0
        %v5758 = vadd.f32 %v4567, %v5757
        %5759 = vmatprep.mubr.f32.mxu0 0.0
        %v5760 = vand.u32 %v441, 4294901760
        %5761 = vmatmul.mubr.f32.gmra.mrb[0].mxu0 %v5760
        %v5762 = vpop.f32.mrb[0].mxu0
        %v5763 = vadd.f32 %v4574, %v5762
        %v5764 = vpop.f32.mrb[0].mxu0
        %v5765 = vadd.f32 %v4576, %v5764
        %5766 = vmatprep.mubr.f32.mxu0 0.0
        %v5767 = vand.u32 %v444, 4294901760
        %5768 = vmatmul.mubr.f32.gmra.mrb[0].mxu0 %v5767
        %v5769 = vpop.f32.mrb[0].mxu0
        %v5770 = vadd.f32 %v4583, %v5769
        %v5771 = vpop.f32.mrb[0].mxu0
        %v5772 = vadd.f32 %v4585, %v5771
        %5773 = vmatprep.mubr.f32.mxu0 0.0
        %v5774 = vand.u32 %v447, 4294901760
        %5775 = vmatmul.mubr.f32.gmra.mrb[0].mxu0 %v5774
        %v5776 = vpop.f32.mrb[0].mxu0
        %v5777 = vadd.f32 %v4592, %v5776
        %v5778 = vpop.f32.mrb[0].mxu0
        %v5779 = vadd.f32 %v4594, %v5778
        %5780 = vmatprep.mubr.f32.mxu0 0.0
        %v5781 = vand.u32 %v450, 4294901760
        %5782 = vmatmul.mubr.f32.gmra.mrb[0].mxu0 %v5781
        %v5783 = vpop.f32.mrb[0].mxu0
        %v5784 = vadd.f32 %v4601, %v5783
        %v5785 = vpop.f32.mrb[0].mxu0
        %v5786 = vadd.f32 %v4603, %v5785
        %5787 = vmatprep.mubr.f32.mxu0 0.0
        %v5788 = vand.u32 %v453, 4294901760
        %5789 = vmatmul.mubr.f32.gmra.mrb[0].mxu0 %v5788
        %v5790 = vpop.f32.mrb[0].mxu0
        %v5791 = vadd.f32 %v4610, %v5790
        %v5792 = vpop.f32.mrb[0].mxu0
        %v5793 = vadd.f32 %v4612, %v5792
        %5794 = vmatprep.mubr.f32.mxu0 0.0
        %v5795 = vand.u32 %v456, 4294901760
        %5796 = vmatmul.mubr.f32.gmra.mrb[0].mxu0 %v5795
        %v5797 = vpop.f32.mrb[0].mxu0
        %v5798 = vadd.f32 %v4619, %v5797
        %v5799 = vpop.f32.mrb[0].mxu0
        %v5800 = vadd.f32 %v4621, %v5799
        %5801 = vmatprep.mubr.f32.mxu0 0.0
        %v5802 = vand.u32 %v459, 4294901760
        %5803 = vmatmul.mubr.f32.gmra.mrb[0].mxu0 %v5802
        %v5804 = vpop.f32.mrb[0].mxu0
        %v5805 = vadd.f32 %v4628, %v5804
        %v5806 = vpop.f32.mrb[0].mxu0
        %v5807 = vadd.f32 %v4630, %v5806
        %5808 = vmatprep.mubr.f32.mxu0 0.0
        %v5809 = vand.u32 %v462, 4294901760
        %5810 = vmatmul.mubr.f32.gmra.mrb[0].mxu0 %v5809
        %v5811 = vpop.f32.mrb[0].mxu0
        %v5812 = vadd.f32 %v4637, %v5811
        %v5813 = vpop.f32.mrb[0].mxu0
        %v5814 = vadd.f32 %v4639, %v5813
        %5815 = vmatprep.mubr.f32.mxu0 0.0
        %v5816 = vand.u32 %v465, 4294901760
        %5817 = vmatmul.mubr.f32.gmra.mrb[0].mxu0 %v5816
        %v5818 = vpop.f32.mrb[0].mxu0
        %v5819 = vadd.f32 %v4646, %v5818
        %v5820 = vpop.f32.mrb[0].mxu0
        %v5821 = vadd.f32 %v4648, %v5820
        %5822 = vmatprep.mubr.f32.mxu0 0.0
        %v5823 = vand.u32 %v468, 4294901760
        %5824 = vmatmul.mubr.f32.gmra.mrb[0].mxu0 %v5823
        %v5825 = vpop.f32.mrb[0].mxu0
        %v5826 = vadd.f32 %v4655, %v5825
        %v5827 = vpop.f32.mrb[0].mxu0
        %v5828 = vadd.f32 %v4657, %v5827
        %5829 = vmatprep.mubr.f32.mxu0 0.0
        %v5830 = vand.u32 %v471, 4294901760
        %5831 = vmatmul.mubr.f32.gmra.mrb[0].mxu0 %v5830
        %v5832 = vpop.f32.mrb[0].mxu0
        %v5833 = vadd.f32 %v4664, %v5832
        %v5834 = vpop.f32.mrb[0].mxu0
        %v5835 = vadd.f32 %v4666, %v5834
        %5836 = vmatprep.mubr.f32.mxu0 0.0
        %v5837 = vand.u32 %v474, 4294901760
        %5838 = vmatmul.mubr.f32.gmra.mrb[0].mxu0 %v5837
        %v5839 = vpop.f32.mrb[0].mxu0
        %v5840 = vadd.f32 %v4673, %v5839
        %v5841 = vpop.f32.mrb[0].mxu0
        %v5842 = vadd.f32 %v4675, %v5841
        %5843 = vmatprep.mubr.f32.mxu0 0.0
        %v5844 = vand.u32 %v477, 4294901760
        %5845 = vmatmul.mubr.f32.gmra.mrb[0].mxu0 %v5844
        %v5846 = vpop.f32.mrb[0].mxu0
        %v5847 = vadd.f32 %v4682, %v5846
        %v5848 = vpop.f32.mrb[0].mxu0
        %v5849 = vadd.f32 %v4684, %v5848
        %5850 = vmatprep.mubr.f32.mxu0 0.0
        %v5851 = vand.u32 %v480, 4294901760
        %5852 = vmatmul.mubr.f32.gmra.mrb[0].mxu0 %v5851
        %v5853 = vpop.f32.mrb[0].mxu0
        %v5854 = vadd.f32 %v4691, %v5853
        %v5855 = vpop.f32.mrb[0].mxu0
        %v5856 = vadd.f32 %v4693, %v5855
        %5857 = vmatprep.mubr.f32.mxu0 0.0
        %v5858 = vand.u32 %v483, 4294901760
        %5859 = vmatmul.mubr.f32.gmra.mrb[0].mxu0 %v5858
        %v5860 = vpop.f32.mrb[0].mxu0
        %v5861 = vadd.f32 %v4700, %v5860
        %v5862 = vpop.f32.mrb[0].mxu0
        %v5863 = vadd.f32 %v4702, %v5862
        %5864 = vmatprep.mubr.f32.mxu0 0.0
        %v5865 = vand.u32 %v486, 4294901760
        %5866 = vmatmul.mubr.f32.gmra.mrb[0].mxu0 %v5865
        %v5867 = vpop.f32.mrb[0].mxu0
        %v5868 = vadd.f32 %v4709, %v5867
        %v5869 = vpop.f32.mrb[0].mxu0
        %v5870 = vadd.f32 %v4711, %v5869
        %5871 = vmatprep.mubr.f32.mxu0 0.0
        %v5872 = vand.u32 %v489, 4294901760
        %5873 = vmatmul.mubr.f32.gmra.mrb[0].mxu0 %v5872
        %v5874 = vpop.f32.mrb[0].mxu0
        %v5875 = vadd.f32 %v4718, %v5874
        %v5876 = vpop.f32.mrb[0].mxu0
        %v5877 = vadd.f32 %v4720, %v5876
        %5878 = vmatprep.mubr.f32.mxu0 0.0
        %v5879 = vand.u32 %v492, 4294901760
        %5880 = vmatmul.mubr.f32.gmra.mrb[0].mxu0 %v5879
        %v5881 = vpop.f32.mrb[0].mxu0
        %v5882 = vadd.f32 %v4727, %v5881
        %v5883 = vpop.f32.mrb[0].mxu0
        %v5884 = vadd.f32 %v4729, %v5883
        %5885 = vmatprep.mubr.f32.mxu0 0.0
        %v5886 = vand.u32 %v495, 4294901760
        %5887 = vmatmul.mubr.f32.gmra.mrb[0].mxu0 %v5886
        %v5888 = vpop.f32.mrb[0].mxu0
        %v5889 = vadd.f32 %v4736, %v5888
        %v5890 = vpop.f32.mrb[0].mxu0
        %v5891 = vadd.f32 %v4738, %v5890
        %5892 = vmatprep.mubr.f32.mxu0 0.0
        %v5893 = vand.u32 %v498, 4294901760
        %5894 = vmatmul.mubr.f32.gmra.mrb[0].mxu0 %v5893
        %v5895 = vpop.f32.mrb[0].mxu0
        %v5896 = vadd.f32 %v4745, %v5895
        %v5897 = vpop.f32.mrb[0].mxu0
        %v5898 = vadd.f32 %v4747, %v5897
        %5899 = vmatprep.mubr.f32.mxu0 0.0
        %v5900 = vand.u32 %v501, 4294901760
        %5901 = vmatmul.mubr.f32.gmra.mrb[0].mxu0 %v5900
        %v5902 = vpop.f32.mrb[0].mxu0
        %v5903 = vadd.f32 %v4754, %v5902
        %v5904 = vpop.f32.mrb[0].mxu0
        %v5905 = vadd.f32 %v4756, %v5904
        %5906 = vmatprep.mubr.f32.mxu0 0.0
        %v5907 = vand.u32 %v504, 4294901760
        %5908 = vmatmul.mubr.f32.gmra.mrb[0].mxu0 %v5907
        %v5909 = vpop.f32.mrb[0].mxu0
        %v5910 = vadd.f32 %v4763, %v5909
        %v5911 = vpop.f32.mrb[0].mxu0
        %v5912 = vadd.f32 %v4765, %v5911
        %5913 = vmatprep.mubr.f32.mxu0 0.0
        %v5914 = vand.u32 %v507, 4294901760
        %5915 = vmatmul.mubr.f32.gmra.mrb[0].mxu0 %v5914
        %v5916 = vpop.f32.mrb[0].mxu0
        %v5917 = vadd.f32 %v4772, %v5916
        %v5918 = vpop.f32.mrb[0].mxu0
        %v5919 = vadd.f32 %v4774, %v5918
        %5920 = vmatprep.mubr.f32.mxu0 0.0
        %v5921 = vand.u32 %v510, 4294901760
        %5922 = vmatmul.mubr.f32.gmra.mrb[0].mxu0 %v5921
        %v5923 = vpop.f32.mrb[0].mxu0
        %v5924 = vadd.f32 %v4781, %v5923
        %v5925 = vpop.f32.mrb[0].mxu0
        %v5926 = vadd.f32 %v4783, %v5925
        %5927 = vmatprep.mubr.f32.mxu0 0.0
        %v5928 = vand.u32 %v513, 4294901760
        %5929 = vmatmul.mubr.f32.gmra.mrb[0].mxu0 %v5928
        %v5930 = vpop.f32.mrb[0].mxu0
        %v5931 = vadd.f32 %v4790, %v5930
        %v5932 = vpop.f32.mrb[0].mxu0
        %v5933 = vadd.f32 %v4792, %v5932
        %5934 = vmatprep.mubr.f32.mxu0 0.0
        %v5935 = vand.u32 %v516, 4294901760
        %5936 = vmatmul.mubr.f32.gmra.mrb[0].mxu0 %v5935
        %v5937 = vpop.f32.mrb[0].mxu0
        %v5938 = vadd.f32 %v4799, %v5937
        %v5939 = vpop.f32.mrb[0].mxu0
        %v5940 = vadd.f32 %v4801, %v5939
        %5941 = vmatprep.mubr.f32.mxu0 0.0
        %v5942 = vand.u32 %v519, 4294901760
        %5943 = vmatmul.mubr.f32.gmra.mrb[0].mxu0 %v5942
        %v5944 = vpop.f32.mrb[0].mxu0
        %v5945 = vadd.f32 %v4808, %v5944
        %v5946 = vpop.f32.mrb[0].mxu0
        %v5947 = vadd.f32 %v4810, %v5946
        %5948 = vmatprep.mubr.f32.mxu0 0.0
        %v5949 = vand.u32 %v522, 4294901760
        %5950 = vmatmul.mubr.f32.gmra.mrb[0].mxu0 %v5949
        %v5951 = vpop.f32.mrb[0].mxu0
        %v5952 = vadd.f32 %v4817, %v5951
        %v5953 = vpop.f32.mrb[0].mxu0
        %v5954 = vadd.f32 %v4819, %v5953
        %5955 = vmatprep.mubr.f32.mxu0 0.0
        %v5956 = vand.u32 %v525, 4294901760
        %5957 = vmatmul.mubr.f32.gmra.mrb[0].mxu0 %v5956
        %v5958 = vpop.f32.mrb[0].mxu0
        %v5959 = vadd.f32 %v4826, %v5958
        %v5960 = vpop.f32.mrb[0].mxu0
        %v5961 = vadd.f32 %v4828, %v5960
        %5962 = vmatprep.mubr.f32.mxu0 0.0
        %v5963 = vand.u32 %v528, 4294901760
        %5964 = vmatmul.mubr.f32.gmra.mrb[0].mxu0 %v5963
        %v5965 = vpop.f32.mrb[0].mxu0
        %v5966 = vadd.f32 %v4835, %v5965
        %v5967 = vpop.f32.mrb[0].mxu0
        %v5968 = vadd.f32 %v4837, %v5967
        %5969 = vmatprep.mubr.f32.mxu0 0.0
        %v5970 = vand.u32 %v531, 4294901760
        %5971 = vmatmul.mubr.f32.gmra.mrb[0].mxu0 %v5970
        %v5972 = vpop.f32.mrb[0].mxu0
        %v5973 = vadd.f32 %v4844, %v5972
        %v5974 = vpop.f32.mrb[0].mxu0
        %v5975 = vadd.f32 %v4846, %v5974
        %5976 = vmatprep.mubr.f32.mxu0 0.0
        %v5977 = vand.u32 %v534, 4294901760
        %5978 = vmatmul.mubr.f32.gmra.mrb[0].mxu0 %v5977
        %v5979 = vpop.f32.mrb[0].mxu0
        %v5980 = vadd.f32 %v4853, %v5979
        %v5981 = vpop.f32.mrb[0].mxu0
        %v5982 = vadd.f32 %v4855, %v5981
        %5983 = vmatprep.mubr.f32.mxu0 0.0
        %v5984 = vand.u32 %v537, 4294901760
        %5985 = vmatmul.mubr.f32.gmra.mrb[0].mxu0 %v5984
        %v5986 = vpop.f32.mrb[0].mxu0
        %v5987 = vadd.f32 %v4862, %v5986
        %v5988 = vpop.f32.mrb[0].mxu0
        %v5989 = vadd.f32 %v4864, %v5988
        %5990 = vmatprep.mubr.f32.mxu0 0.0
        %v5991 = vand.u32 %v540, 4294901760
        %5992 = vmatmul.mubr.f32.gmra.mrb[0].mxu0 %v5991
        %v5993 = vpop.f32.mrb[0].mxu0
        %v5994 = vadd.f32 %v4871, %v5993
        %v5995 = vpop.f32.mrb[0].mxu0
        %v5996 = vadd.f32 %v4873, %v5995
        %5997 = vmatprep.mubr.f32.mxu0 0.0
        %v5998 = vand.u32 %v543, 4294901760
        %5999 = vmatmul.mubr.f32.gmra.mrb[0].mxu0 %v5998
        %v6000 = vpop.f32.mrb[0].mxu0
        %v6001 = vadd.f32 %v4880, %v6000
        %v6002 = vpop.f32.mrb[0].mxu0
        %v6003 = vadd.f32 %v4882, %v6002
        %6004 = vmatprep.mubr.f32.mxu0 0.0
        %v6005 = vand.u32 %v546, 4294901760
        %6006 = vmatmul.mubr.f32.gmra.mrb[0].mxu0 %v6005
        %v6007 = vpop.f32.mrb[0].mxu0
        %v6008 = vadd.f32 %v4889, %v6007
        %v6009 = vpop.f32.mrb[0].mxu0
        %v6010 = vadd.f32 %v4891, %v6009
        %6011 = vmatprep.mubr.f32.mxu0 0.0
        %v6012 = vand.u32 %v549, 4294901760
        %6013 = vmatmul.mubr.f32.gmra.mrb[0].mxu0 %v6012
        %v6014 = vpop.f32.mrb[0].mxu0
        %v6015 = vadd.f32 %v4898, %v6014
        %v6016 = vpop.f32.mrb[0].mxu0
        %v6017 = vadd.f32 %v4900, %v6016
        %6018 = vmatprep.mubr.f32.mxu0 0.0
        %v6019 = vand.u32 %v552, 4294901760
        %6020 = vmatmul.mubr.f32.gmra.mrb[0].mxu0 %v6019
        %v6021 = vpop.f32.mrb[0].mxu0
        %v6022 = vadd.f32 %v4907, %v6021
        %v6023 = vpop.f32.mrb[0].mxu0
        %v6024 = vadd.f32 %v4909, %v6023
        %6025 = vmatprep.mubr.f32.mxu0 0.0
        %v6026 = vand.u32 %v555, 4294901760
        %6027 = vmatmul.mubr.f32.gmra.mrb[0].mxu0 %v6026
        %v6028 = vpop.f32.mrb[0].mxu0
        %v6029 = vadd.f32 %v4916, %v6028
        %v6030 = vpop.f32.mrb[0].mxu0
        %v6031 = vadd.f32 %v4918, %v6030
        %6032 = vmatprep.mubr.f32.mxu0 0.0
        %v6033 = vand.u32 %v558, 4294901760
        %6034 = vmatmul.mubr.f32.gmra.mrb[0].mxu0 %v6033
        %v6035 = vpop.f32.mrb[0].mxu0
        %v6036 = vadd.f32 %v4925, %v6035
        %v6037 = vpop.f32.mrb[0].mxu0
        %v6038 = vadd.f32 %v4927, %v6037
        %6039 = vmatprep.mubr.f32.mxu0 0.0
        %v6040 = vand.u32 %v561, 4294901760
        %6041 = vmatmul.mubr.f32.gmra.mrb[0].mxu0 %v6040
        %v6042 = vpop.f32.mrb[0].mxu0
        %v6043 = vadd.f32 %v4934, %v6042
        %v6044 = vpop.f32.mrb[0].mxu0
        %v6045 = vadd.f32 %v4936, %v6044
        %6046 = vmatprep.mubr.f32.mxu0 0.0
        %v6047 = vand.u32 %v564, 4294901760
        %6048 = vmatmul.mubr.f32.gmra.mrb[0].mxu0 %v6047
        %v6049 = vpop.f32.mrb[0].mxu0
        %v6050 = vadd.f32 %v4943, %v6049
        %v6051 = vpop.f32.mrb[0].mxu0
        %v6052 = vadd.f32 %v4945, %v6051
        %6053 = vmatprep.mubr.f32.mxu0 0.0
        %v6054 = vand.u32 %v567, 4294901760
        %6055 = vmatmul.mubr.f32.gmra.mrb[0].mxu0 %v6054
        %v6056 = vpop.f32.mrb[0].mxu0
        %v6057 = vadd.f32 %v4952, %v6056
        %v6058 = vpop.f32.mrb[0].mxu0
        %v6059 = vadd.f32 %v4954, %v6058
        %6060 = vmatprep.mubr.f32.mxu0 0.0
        %v6061 = vand.u32 %v570, 4294901760
        %6062 = vmatmul.mubr.f32.gmra.mrb[0].mxu0 %v6061
        %v6063 = vpop.f32.mrb[0].mxu0
        %v6064 = vadd.f32 %v4961, %v6063
        %v6065 = vpop.f32.mrb[0].mxu0
        %v6066 = vadd.f32 %v4963, %v6065
        %6067 = vmatprep.mubr.f32.mxu0 0.0
        %v6068 = vand.u32 %v573, 4294901760
        %6069 = vmatmul.mubr.f32.gmra.mrb[0].mxu0 %v6068
        %v6070 = vpop.f32.mrb[0].mxu0
        %v6071 = vadd.f32 %v4970, %v6070
        %v6072 = vpop.f32.mrb[0].mxu0
        %v6073 = vadd.f32 %v4972, %v6072
        %6074 = vmatprep.mubr.f32.mxu0 0.0
        %v6075 = vand.u32 %v576, 4294901760
        %6076 = vmatmul.mubr.f32.gmra.mrb[0].mxu0 %v6075
        %v6077 = vpop.f32.mrb[0].mxu0
        %v6078 = vadd.f32 %v4979, %v6077
        %v6079 = vpop.f32.mrb[0].mxu0
        %v6080 = vadd.f32 %v4981, %v6079
        %6081 = vmatprep.mubr.f32.mxu0 0.0
        %v6082 = vand.u32 %v579, 4294901760
        %6083 = vmatmul.mubr.f32.gmra.mrb[0].mxu0 %v6082
        %v6084 = vpop.f32.mrb[0].mxu0
        %v6085 = vadd.f32 %v4988, %v6084
        %v6086 = vpop.f32.mrb[0].mxu0
        %v6087 = vadd.f32 %v4990, %v6086
        %6088 = vmatprep.mubr.f32.mxu0 0.0
        %v6089 = vand.u32 %v582, 4294901760
        %6090 = vmatmul.mubr.f32.gmra.mrb[0].mxu0 %v6089
        %v6091 = vpop.f32.mrb[0].mxu0
        %v6092 = vadd.f32 %v4997, %v6091
        %v6093 = vpop.f32.mrb[0].mxu0
        %v6094 = vadd.f32 %v4999, %v6093
        %6095 = vmatprep.mubr.f32.mxu0 0.0
        %v6096 = vand.u32 %v585, 4294901760
        %6097 = vmatmul.mubr.f32.gmra.mrb[0].mxu0 %v6096
        %v6098 = vpop.f32.mrb[0].mxu0
        %v6099 = vadd.f32 %v5006, %v6098
        %v6100 = vpop.f32.mrb[0].mxu0
        %v6101 = vadd.f32 %v5008, %v6100
        %6102 = vmatprep.mubr.f32.mxu0 0.0
        %v6103 = vand.u32 %v588, 4294901760
        %6104 = vmatmul.mubr.f32.gmra.mrb[0].mxu0 %v6103
        %v6105 = vpop.f32.mrb[0].mxu0
        %v6106 = vadd.f32 %v5015, %v6105
        %v6107 = vpop.f32.mrb[0].mxu0
        %v6108 = vadd.f32 %v5017, %v6107
        %6109 = vmatprep.mubr.f32.mxu0 0.0
        %v6110 = vand.u32 %v591, 4294901760
        %6111 = vmatmul.mubr.f32.gmra.mrb[0].mxu0 %v6110
        %v6112 = vpop.f32.mrb[0].mxu0
        %v6113 = vadd.f32 %v5024, %v6112
        %v6114 = vpop.f32.mrb[0].mxu0
        %v6115 = vadd.f32 %v5026, %v6114
        %6116 = vmatprep.mubr.f32.mxu0 0.0
        %v6117 = vand.u32 %v594, 4294901760
        %6118 = vmatmul.mubr.f32.gmra.mrb[0].mxu0 %v6117
        %v6119 = vpop.f32.mrb[0].mxu0
        %v6120 = vadd.f32 %v5033, %v6119
        %v6121 = vpop.f32.mrb[0].mxu0
        %v6122 = vadd.f32 %v5035, %v6121
        %6123 = vmatprep.mubr.f32.mxu0 0.0
        %v6124 = vand.u32 %v597, 4294901760
        %6125 = vmatmul.mubr.f32.gmra.mrb[0].mxu0 %v6124
        %v6126 = vpop.f32.mrb[0].mxu0
        %v6127 = vadd.f32 %v5042, %v6126
        %v6128 = vpop.f32.mrb[0].mxu0
        %v6129 = vadd.f32 %v5044, %v6128
        %6130 = vmatprep.mubr.f32.mxu0 0.0
        %v6131 = vand.u32 %v600, 4294901760
        %6132 = vmatmul.mubr.f32.gmra.mrb[0].mxu0 %v6131
        %v6133 = vpop.f32.mrb[0].mxu0
        %v6134 = vadd.f32 %v5051, %v6133
        %v6135 = vpop.f32.mrb[0].mxu0
        %v6136 = vadd.f32 %v5053, %v6135
        %6137 = vmatprep.mubr.f32.mxu0 0.0
        %v6138 = vand.u32 %v603, 4294901760
        %6139 = vmatmul.mubr.f32.gmra.mrb[0].mxu0 %v6138
        %v6140 = vpop.f32.mrb[0].mxu0
        %v6141 = vadd.f32 %v5060, %v6140
        %v6142 = vpop.f32.mrb[0].mxu0
        %v6143 = vadd.f32 %v5062, %v6142
        %6144 = vmatprep.mubr.f32.mxu0 0.0
        %v6145 = vand.u32 %v606, 4294901760
        %6146 = vmatmul.mubr.f32.gmra.mrb[0].mxu0 %v6145
        %v6147 = vpop.f32.mrb[0].mxu0
        %v6148 = vadd.f32 %v5069, %v6147
        %v6149 = vpop.f32.mrb[0].mxu0
        %v6150 = vadd.f32 %v5071, %v6149
        %6151 = vmatprep.mubr.f32.mxu0 0.0
        %v6152 = vand.u32 %v609, 4294901760
        %6153 = vmatmul.mubr.f32.gmra.mrb[0].mxu0 %v6152
        %v6154 = vpop.f32.mrb[0].mxu0
        %v6155 = vadd.f32 %v5078, %v6154
        %v6156 = vpop.f32.mrb[0].mxu0
        %v6157 = vadd.f32 %v5080, %v6156
        %6158 = vmatprep.mubr.f32.mxu0 0.0
        %v6159 = vand.u32 %v612, 4294901760
        %6160 = vmatmul.mubr.f32.gmra.mrb[0].mxu0 %v6159
        %v6161 = vpop.f32.mrb[0].mxu0
        %v6162 = vadd.f32 %v5087, %v6161
        %v6163 = vpop.f32.mrb[0].mxu0
        %v6164 = vadd.f32 %v5089, %v6163
        %6165 = vmatprep.mubr.f32.mxu0 0.0
        %v6166 = vand.u32 %v615, 4294901760
        %6167 = vmatmul.mubr.f32.gmra.mrb[0].mxu0 %v6166
        %v6168 = vpop.f32.mrb[0].mxu0
        %v6169 = vadd.f32 %v5096, %v6168
        %v6170 = vpop.f32.mrb[0].mxu0
        %v6171 = vadd.f32 %v5098, %v6170
        %6172 = vmatprep.mubr.f32.mxu0 0.0
        %v6173 = vand.u32 %v618, 4294901760
        %6174 = vmatmul.mubr.f32.gmra.mrb[0].mxu0 %v6173
        %v6175 = vpop.f32.mrb[0].mxu0
        %v6176 = vadd.f32 %v5105, %v6175
        %v6177 = vpop.f32.mrb[0].mxu0
        %v6178 = vadd.f32 %v5107, %v6177
        %6179 = vmatprep.mubr.f32.mxu0 0.0
        %v6180 = vand.u32 %v621, 4294901760
        %6181 = vmatmul.mubr.f32.gmra.mrb[0].mxu0 %v6180
        %v6182 = vpop.f32.mrb[0].mxu0
        %v6183 = vadd.f32 %v5114, %v6182
        %v6184 = vpop.f32.mrb[0].mxu0
        %v6185 = vadd.f32 %v5116, %v6184
        %6186 = vmatprep.mubr.f32.mxu0 0.0
        %v6187 = vand.u32 %v624, 4294901760
        %6188 = vmatmul.mubr.f32.gmra.mrb[0].mxu0 %v6187
        %v6189 = vpop.f32.mrb[0].mxu0
        %v6190 = vadd.f32 %v5123, %v6189
        %v6191 = vpop.f32.mrb[0].mxu0
        %v6192 = vadd.f32 %v5125, %v6191
        %6193 = vmatprep.mubr.f32.mxu0 0.0
        %v6194 = vand.u32 %v627, 4294901760
        %6195 = vmatmul.mubr.f32.gmra.mrb[0].mxu0 %v6194
        %v6196 = vpop.f32.mrb[0].mxu0
        %v6197 = vadd.f32 %v5132, %v6196
        %v6198 = vpop.f32.mrb[0].mxu0
        %v6199 = vadd.f32 %v5134, %v6198
        %6200 = vmatprep.mubr.f32.mxu0 0.0
        %v6201 = vand.u32 %v630, 4294901760
        %6202 = vmatmul.mubr.f32.gmra.mrb[0].mxu0 %v6201
        %v6203 = vpop.f32.mrb[0].mxu0
        %v6204 = vadd.f32 %v5141, %v6203
        %v6205 = vpop.f32.mrb[0].mxu0
        %v6206 = vadd.f32 %v5143, %v6205
        %6207 = vmatprep.mubr.f32.mxu0 0.0
        %v6208 = vand.u32 %v633, 4294901760
        %6209 = vmatmul.mubr.f32.gmra.mrb[0].mxu0 %v6208
        %v6210 = vpop.f32.mrb[0].mxu0
        %v6211 = vadd.f32 %v5150, %v6210
        %v6212 = vpop.f32.mrb[0].mxu0
        %v6213 = vadd.f32 %v5152, %v6212
        %6214 = vmatprep.mubr.f32.mxu0 0.0
        %v6215 = vand.u32 %v636, 4294901760
        %6216 = vmatmul.mubr.f32.gmra.mrb[0].mxu0 %v6215
        %v6217 = vpop.f32.mrb[0].mxu0
        %v6218 = vadd.f32 %v5159, %v6217
        %v6219 = vpop.f32.mrb[0].mxu0
        %v6220 = vadd.f32 %v5161, %v6219
        %6221 = vmatprep.mubr.f32.mxu0 0.0
        %v6222 = vand.u32 %v639, 4294901760
        %6223 = vmatmul.mubr.f32.gmra.mrb[0].mxu0 %v6222
        %v6224 = vpop.f32.mrb[0].mxu0
        %v6225 = vadd.f32 %v5168, %v6224
        %v6226 = vpop.f32.mrb[0].mxu0
        %v6227 = vadd.f32 %v5170, %v6226
        %6228 = vmatprep.mubr.f32.mxu0 0.0
        %v6229 = vand.u32 %v642, 4294901760
        %6230 = vmatmul.mubr.f32.gmra.mrb[0].mxu0 %v6229
        %v6231 = vpop.f32.mrb[0].mxu0
        %v6232 = vadd.f32 %v5177, %v6231
        %v6233 = vpop.f32.mrb[0].mxu0
        %v6234 = vadd.f32 %v5179, %v6233
        %6235 = vmatprep.mubr.f32.mxu0 0.0
        %v6236 = vand.u32 %v645, 4294901760
        %6237 = vmatmul.mubr.f32.gmra.mrb[0].mxu0 %v6236
        %v6238 = vpop.f32.mrb[0].mxu0
        %v6239 = vadd.f32 %v5186, %v6238
        %v6240 = vpop.f32.mrb[0].mxu0
        %v6241 = vadd.f32 %v5188, %v6240
        %6242 = vmatprep.mubr.f32.mxu0 0.0
        %v6243 = vand.u32 %v648, 4294901760
        %6244 = vmatmul.mubr.f32.gmra.mrb[0].mxu0 %v6243
        %v6245 = vpop.f32.mrb[0].mxu0
        %v6246 = vadd.f32 %v5195, %v6245
        %v6247 = vpop.f32.mrb[0].mxu0
        %v6248 = vadd.f32 %v5197, %v6247
        %6249 = vmatprep.mubr.f32.mxu0 0.0
        %v6250 = vand.u32 %v651, 4294901760
        %6251 = vmatmul.mubr.f32.gmra.mrb[0].mxu0 %v6250
        %v6252 = vpop.f32.mrb[0].mxu0
        %v6253 = vadd.f32 %v5204, %v6252
        %v6254 = vpop.f32.mrb[0].mxu0
        %v6255 = vadd.f32 %v5206, %v6254
        %6256 = vmatprep.mubr.f32.mxu0 0.0
        %v6257 = vand.u32 %v654, 4294901760
        %6258 = vmatmul.mubr.f32.gmra.mrb[0].mxu0 %v6257
        %v6259 = vpop.f32.mrb[0].mxu0
        %v6260 = vadd.f32 %v5213, %v6259
        %v6261 = vpop.f32.mrb[0].mxu0
        %v6262 = vadd.f32 %v5215, %v6261
        %6263 = vmatprep.mubr.f32.mxu0 0.0
        %v6264 = vand.u32 %v657, 4294901760
        %6265 = vmatmul.mubr.f32.gmra.mrb[0].mxu0 %v6264
        %v6266 = vpop.f32.mrb[0].mxu0
        %v6267 = vadd.f32 %v5222, %v6266
        %v6268 = vpop.f32.mrb[0].mxu0
        %v6269 = vadd.f32 %v5224, %v6268
        %6270 = vmatprep.mubr.f32.mxu0 0.0
        %v6271 = vand.u32 %v660, 4294901760
        %6272 = vmatmul.mubr.f32.gmra.mrb[0].mxu0 %v6271
        %v6273 = vpop.f32.mrb[0].mxu0
        %v6274 = vadd.f32 %v5231, %v6273
        %v6275 = vpop.f32.mrb[0].mxu0
        %v6276 = vadd.f32 %v5233, %v6275
        %6277 = vmatprep.mubr.f32.mxu0 0.0
        %v6278 = vand.u32 %v663, 4294901760
        %6279 = vmatmul.mubr.f32.gmra.mrb[0].mxu0 %v6278
        %v6280 = vpop.f32.mrb[0].mxu0
        %v6281 = vadd.f32 %v5240, %v6280
        %v6282 = vpop.f32.mrb[0].mxu0
        %v6283 = vadd.f32 %v5242, %v6282
        %6284 = vmatprep.mubr.f32.mxu0 0.0
        %v6285 = vand.u32 %v666, 4294901760
        %6286 = vmatmul.mubr.f32.gmra.mrb[0].mxu0 %v6285
        %v6287 = vpop.f32.mrb[0].mxu0
        %v6288 = vadd.f32 %v5249, %v6287
        %v6289 = vpop.f32.mrb[0].mxu0
        %v6290 = vadd.f32 %v5251, %v6289
        %6291 = vmatprep.mubr.f32.mxu0 0.0
        %v6292 = vand.u32 %v669, 4294901760
        %6293 = vmatmul.mubr.f32.gmra.mrb[0].mxu0 %v6292
        %v6294 = vpop.f32.mrb[0].mxu0
        %v6295 = vadd.f32 %v5258, %v6294
        %v6296 = vpop.f32.mrb[0].mxu0
        %v6297 = vadd.f32 %v5260, %v6296
        %6298 = vmatprep.mubr.f32.mxu0 0.0
        %v6299 = vand.u32 %v672, 4294901760
        %6300 = vmatmul.mubr.f32.gmra.mrb[0].mxu0 %v6299
        %v6301 = vpop.f32.mrb[0].mxu0
        %v6302 = vadd.f32 %v5267, %v6301
        %v6303 = vpop.f32.mrb[0].mxu0
        %v6304 = vadd.f32 %v5269, %v6303
        %6305 = vmatprep.mubr.f32.mxu0 0.0
        %v6306 = vand.u32 %v675, 4294901760
        %6307 = vmatmul.mubr.f32.gmra.mrb[0].mxu0 %v6306
        %v6308 = vpop.f32.mrb[0].mxu0
        %v6309 = vadd.f32 %v5276, %v6308
        %v6310 = vpop.f32.mrb[0].mxu0
        %v6311 = vadd.f32 %v5278, %v6310
        %6312 = vmatprep.mubr.f32.mxu0 0.0
        %v6313 = vand.u32 %v678, 4294901760
        %6314 = vmatmul.mubr.f32.gmra.mrb[0].mxu0 %v6313
        %v6315 = vpop.f32.mrb[0].mxu0
        %v6316 = vadd.f32 %v5285, %v6315
        %v6317 = vpop.f32.mrb[0].mxu0
        %v6318 = vadd.f32 %v5287, %v6317
        %6319 = vmatprep.mubr.f32.mxu0 0.0
        %v6320 = vand.u32 %v681, 4294901760
        %6321 = vmatmul.mubr.f32.gmra.mrb[0].mxu0 %v6320
        %v6322 = vpop.f32.mrb[0].mxu0
        %v6323 = vadd.f32 %v5294, %v6322
        %v6324 = vpop.f32.mrb[0].mxu0
        %v6325 = vadd.f32 %v5296, %v6324
        %6326 = vmatprep.mubr.f32.mxu0 0.0
        %v6327 = vand.u32 %v684, 4294901760
        %6328 = vmatmul.mubr.f32.gmra.mrb[0].mxu0 %v6327
        %v6329 = vpop.f32.mrb[0].mxu0
        %v6330 = vadd.f32 %v5303, %v6329
        %v6331 = vpop.f32.mrb[0].mxu0
        %v6332 = vadd.f32 %v5305, %v6331
        %6333 = vmatprep.mubr.f32.mxu0 0.0
        %v6334 = vand.u32 %v687, 4294901760
        %6335 = vmatmul.mubr.f32.gmra.mrb[0].mxu0 %v6334
        %v6336 = vpop.f32.mrb[0].mxu0
        %v6337 = vadd.f32 %v5312, %v6336
        %v6338 = vpop.f32.mrb[0].mxu0
        %v6339 = vadd.f32 %v5314, %v6338
        %6340 = vmatprep.mubr.f32.mxu0 0.0
        %v6341 = vand.u32 %v690, 4294901760
        %6342 = vmatmul.mubr.f32.gmra.mrb[0].mxu0 %v6341
        %v6343 = vpop.f32.mrb[0].mxu0
        %v6344 = vadd.f32 %v5321, %v6343
        %v6345 = vpop.f32.mrb[0].mxu0
        %v6346 = vadd.f32 %v5323, %v6345
        %6347 = vmatprep.mubr.f32.mxu0 0.0
        %v6348 = vand.u32 %v693, 4294901760
        %6349 = vmatmul.mubr.f32.gmra.mrb[0].mxu0 %v6348
        %v6350 = vpop.f32.mrb[0].mxu0
        %v6351 = vadd.f32 %v5330, %v6350
        %v6352 = vpop.f32.mrb[0].mxu0
        %v6353 = vadd.f32 %v5332, %v6352
        %6354 = vmatprep.mubr.f32.mxu0 0.0
        %v6355 = vand.u32 %v696, 4294901760
        %6356 = vmatmul.mubr.f32.gmra.mrb[0].mxu0 %v6355
        %v6357 = vpop.f32.mrb[0].mxu0
        %v6358 = vadd.f32 %v5339, %v6357
        %v6359 = vpop.f32.mrb[0].mxu0
        %v6360 = vadd.f32 %v5341, %v6359
        %6361 = vmatprep.mubr.f32.mxu0 0.0
        %v6362 = vand.u32 %v699, 4294901760
        %6363 = vmatmul.mubr.f32.gmra.mrb[0].mxu0 %v6362
        %v6364 = vpop.f32.mrb[0].mxu0
        %v6365 = vadd.f32 %v5348, %v6364
        %v6366 = vpop.f32.mrb[0].mxu0
        %v6367 = vadd.f32 %v5350, %v6366
        %6368 = vmatprep.mubr.f32.mxu0 0.0
        %v6369 = vand.u32 %v702, 4294901760
        %6370 = vmatmul.mubr.f32.gmra.mrb[0].mxu0 %v6369
        %v6371 = vpop.f32.mrb[0].mxu0
        %v6372 = vadd.f32 %v5357, %v6371
        %v6373 = vpop.f32.mrb[0].mxu0
        %v6374 = vadd.f32 %v5359, %v6373
        %6375 = vmatprep.mubr.f32.mxu0 0.0
        %v6376 = vand.u32 %v705, 4294901760
        %6377 = vmatmul.mubr.f32.gmra.mrb[0].mxu0 %v6376
        %v6378 = vpop.f32.mrb[0].mxu0
        %v6379 = vadd.f32 %v5366, %v6378
        %v6380 = vpop.f32.mrb[0].mxu0
        %v6381 = vadd.f32 %v5368, %v6380
        %6382 = vmatprep.mubr.f32.mxu0 0.0
        %v6383 = vand.u32 %v708, 4294901760
        %6384 = vmatmul.mubr.f32.gmra.mrb[0].mxu0 %v6383
        %v6385 = vpop.f32.mrb[0].mxu0
        %v6386 = vadd.f32 %v5375, %v6385
        %v6387 = vpop.f32.mrb[0].mxu0
        %v6388 = vadd.f32 %v5377, %v6387
        %6389 = vmatprep.mubr.f32.mxu0 0.0
        %v6390 = vand.u32 %v711, 4294901760
        %6391 = vmatmul.mubr.f32.gmra.mrb[0].mxu0 %v6390
        %v6392 = vpop.f32.mrb[0].mxu0
        %v6393 = vadd.f32 %v5384, %v6392
        %v6394 = vpop.f32.mrb[0].mxu0
        %v6395 = vadd.f32 %v5386, %v6394
        %6396 = vmatprep.mubr.f32.mxu0 0.0
        %v6397 = vand.u32 %v714, 4294901760
        %6398 = vmatmul.mubr.f32.gmra.mrb[0].mxu0 %v6397
        %v6399 = vpop.f32.mrb[0].mxu0
        %v6400 = vadd.f32 %v5393, %v6399
        %v6401 = vpop.f32.mrb[0].mxu0
        %v6402 = vadd.f32 %v5395, %v6401
        %6403 = vmatprep.mubr.f32.mxu0 0.0
        %v6404 = vand.u32 %v717, 4294901760
        %6405 = vmatmul.mubr.f32.gmra.mrb[0].mxu0 %v6404
        %v6406 = vpop.f32.mrb[0].mxu0
        %v6407 = vadd.f32 %v5402, %v6406
        %v6408 = vpop.f32.mrb[0].mxu0
        %v6409 = vadd.f32 %v5404, %v6408
        %6410 = vmatprep.mubr.f32.mxu0 0.0
        %v6411 = vand.u32 %v720, 4294901760
        %6412 = vmatmul.mubr.f32.gmra.mrb[0].mxu0 %v6411
        %v6413 = vpop.f32.mrb[0].mxu0
        %v6414 = vadd.f32 %v5411, %v6413
        %v6415 = vpop.f32.mrb[0].mxu0
        %v6416 = vadd.f32 %v5413, %v6415
        %6417 = vmatprep.mubr.f32.mxu0 0.0
        %v6418 = vand.u32 %v723, 4294901760
        %6419 = vmatmul.mubr.f32.gmra.mrb[0].mxu0 %v6418
        %v6420 = vpop.f32.mrb[0].mxu0
        %v6421 = vadd.f32 %v5420, %v6420
        %v6422 = vpop.f32.mrb[0].mxu0
        %v6423 = vadd.f32 %v5422, %v6422
        %6424 = vmatprep.mubr.f32.mxu0 0.0
        %v6425 = vand.u32 %v726, 4294901760
        %6426 = vmatmul.mubr.f32.gmra.mrb[0].mxu0 %v6425
        %v6427 = vpop.f32.mrb[0].mxu0
        %v6428 = vadd.f32 %v5429, %v6427
        %v6429 = vpop.f32.mrb[0].mxu0
        %v6430 = vadd.f32 %v5431, %v6429
        %6431 = vmatprep.mubr.f32.mxu0 0.0
        %v6432 = vand.u32 %v729, 4294901760
        %6433 = vmatmul.mubr.f32.gmra.mrb[0].mxu0 %v6432
        %v6434 = vpop.f32.mrb[0].mxu0
        %v6435 = vadd.f32 %v5438, %v6434
        %v6436 = vpop.f32.mrb[0].mxu0
        %v6437 = vadd.f32 %v5440, %v6436
        %6438 = vmatprep.mubr.f32.mxu0 0.0
        %v6439 = vand.u32 %v732, 4294901760
        %6440 = vmatmul.mubr.f32.gmra.mrb[0].mxu0 %v6439
        %v6441 = vpop.f32.mrb[0].mxu0
        %v6442 = vadd.f32 %v5447, %v6441
        %v6443 = vpop.f32.mrb[0].mxu0
        %v6444 = vadd.f32 %v5449, %v6443
        %6445 = vmatprep.mubr.f32.mxu0 0.0
        %v6446 = vand.u32 %v735, 4294901760
        %6447 = vmatmul.mubr.f32.gmra.mrb[0].mxu0 %v6446
        %v6448 = vpop.f32.mrb[0].mxu0
        %v6449 = vadd.f32 %v5456, %v6448
        %v6450 = vpop.f32.mrb[0].mxu0
        %v6451 = vadd.f32 %v5458, %v6450
        %6452 = vmatprep.mubr.f32.mxu0 0.0
        %v6453 = vand.u32 %v738, 4294901760
        %6454 = vmatmul.mubr.f32.gmra.mrb[0].mxu0 %v6453
        %v6455 = vpop.f32.mrb[0].mxu0
        %v6456 = vadd.f32 %v5465, %v6455
        %v6457 = vpop.f32.mrb[0].mxu0
        %v6458 = vadd.f32 %v5467, %v6457
        %6459 = vmatprep.mubr.f32.mxu0 0.0
        %v6460 = vand.u32 %v741, 4294901760
        %6461 = vmatmul.mubr.f32.gmra.mrb[0].mxu0 %v6460
        %v6462 = vpop.f32.mrb[0].mxu0
        %v6463 = vadd.f32 %v5474, %v6462
        %v6464 = vpop.f32.mrb[0].mxu0
        %v6465 = vadd.f32 %v5476, %v6464
        %6466 = vmatprep.mubr.f32.mxu0 0.0
        %v6467 = vand.u32 %v744, 4294901760
        %6468 = vmatmul.mubr.f32.gmra.mrb[0].mxu0 %v6467
        %v6469 = vpop.f32.mrb[0].mxu0
        %v6470 = vadd.f32 %v5483, %v6469
        %v6471 = vpop.f32.mrb[0].mxu0
        %v6472 = vadd.f32 %v5485, %v6471
        %6473 = vmatprep.mubr.f32.mxu0 0.0
        %v6474 = vand.u32 %v747, 4294901760
        %6475 = vmatmul.mubr.f32.gmra.mrb[0].mxu0 %v6474
        %v6476 = vpop.f32.mrb[0].mxu0
        %v6477 = vadd.f32 %v5492, %v6476
        %v6478 = vpop.f32.mrb[0].mxu0
        %v6479 = vadd.f32 %v5494, %v6478
        %6480 = vmatprep.mubr.f32.mxu0 0.0
        %v6481 = vand.u32 %v750, 4294901760
        %6482 = vmatmul.mubr.f32.gmra.mrb[0].mxu0 %v6481
        %v6483 = vpop.f32.mrb[0].mxu0
        %v6484 = vadd.f32 %v5501, %v6483
        %v6485 = vpop.f32.mrb[0].mxu0
        %v6486 = vadd.f32 %v5503, %v6485
        %6487 = vmatprep.mubr.f32.mxu0 0.0
        %v6488 = vand.u32 %v753, 4294901760
        %6489 = vmatmul.mubr.f32.gmra.mrb[0].mxu0 %v6488
        %v6490 = vpop.f32.mrb[0].mxu0
        %v6491 = vadd.f32 %v5510, %v6490
        %v6492 = vpop.f32.mrb[0].mxu0
        %v6493 = vadd.f32 %v5512, %v6492
        %6494 = vmatprep.mubr.f32.mxu0 0.0
        %v6495 = vand.u32 %v756, 4294901760
        %6496 = vmatmul.mubr.f32.gmra.mrb[0].mxu0 %v6495
        %v6497 = vpop.f32.mrb[0].mxu0
        %v6498 = vadd.f32 %v5519, %v6497
        %v6499 = vpop.f32.mrb[0].mxu0
        %v6500 = vadd.f32 %v5521, %v6499
        %6501 = vmatprep.mubr.f32.mxu0 0.0
        %v6502 = vand.u32 %v759, 4294901760
        %6503 = vmatmul.mubr.f32.gmra.mrb[0].mxu0 %v6502
        %v6504 = vpop.f32.mrb[0].mxu0
        %v6505 = vadd.f32 %v5528, %v6504
        %v6506 = vpop.f32.mrb[0].mxu0
        %v6507 = vadd.f32 %v5530, %v6506
        %6508 = vmatprep.mubr.f32.mxu0 0.0
        %v6509 = vand.u32 %v762, 4294901760
        %6510 = vmatmul.mubr.f32.gmra.mrb[0].mxu0 %v6509
        %v6511 = vpop.f32.mrb[0].mxu0
        %v6512 = vadd.f32 %v5537, %v6511
        %v6513 = vpop.f32.mrb[0].mxu0
        %v6514 = vadd.f32 %v5539, %v6513
        %6515 = vmatprep.mubr.f32.mxu0 0.0
        %v6516 = vand.u32 %v765, 4294901760
        %6517 = vmatmul.mubr.f32.gmra.mrb[0].mxu0 %v6516
        %v6518 = vpop.f32.mrb[0].mxu0
        %v6519 = vadd.f32 %v5546, %v6518
        %v6520 = vpop.f32.mrb[0].mxu0
        %v6521 = vadd.f32 %v5548, %v6520
        %6522 = vdwg.mxu0
        %v6523 = vand.u32 %v379, 4294901760
        %6524 = vmatprep.subr.mxu0 %v6523
        %v6525 = vand.u32 %v378, 4294901760
        %6526 = vmatpush1.msra.mxu0 %v6525
        %v6527 = vand.u32 %v772, 4294901760
        %6528 = vmatprep.subr.mxu0 %v6527
        %v6529 = vand.u32 %v769, 4294901760
        %6530 = vmatpush1.msra.mxu0 %v6529
        %6531 = vmatprep.subr.mxu0 0.0
        %6532 = vmatpush1.msra.mxu0 0.0
        %6533 = vmatprep.subr.mxu0 0.0
        %6534 = vmatpush1.msra.mxu0 0.0
        %6535 = vmatprep.subr.mxu0 0.0
        %6536 = vmatpush1.msra.mxu0 0.0
        %6537 = vmatprep.subr.mxu0 0.0
        %6538 = vmatpush1.msra.mxu0 0.0
        %6539 = vmatprep.subr.mxu0 0.0
        %6540 = vmatpush1.msra.mxu0 0.0
        %6541 = vmatprep.subr.mxu0 0.0
        %6542 = vmatpush1.msra.mxu0 0.0
        %6543 = vmatprep.subr.mxu0 0.0
        %6544 = vmatpush1.msra.mxu0 0.0
        %6545 = vmatprep.subr.mxu0 0.0
        %6546 = vmatpush1.msra.mxu0 0.0
        %6547 = vmatprep.subr.mxu0 0.0
        %6548 = vmatpush1.msra.mxu0 0.0
        %6549 = vmatprep.subr.mxu0 0.0
        %6550 = vmatpush1.msra.mxu0 0.0
        %6551 = vmatprep.subr.mxu0 0.0
        %6552 = vmatpush1.msra.mxu0 0.0
        %6553 = vmatprep.subr.mxu0 0.0
        %6554 = vmatpush1.msra.mxu0 0.0
        %6555 = vmatprep.subr.mxu0 0.0
        %6556 = vmatpush1.msra.mxu0 0.0
        %6557 = vmatprep.subr.mxu0 0.0
        %6558 = vmatpush1.msra.mxu0 0.0
        %6559 = vmatprep.subr.mxu0 0.0
        %6560 = vmatpush1.msra.mxu0 0.0
        %6561 = vmatprep.subr.mxu0 0.0
        %6562 = vmatpush1.msra.mxu0 0.0
        %6563 = vmatprep.subr.mxu0 0.0
        %6564 = vmatpush1.msra.mxu0 0.0
        %6565 = vmatprep.subr.mxu0 0.0
        %6566 = vmatpush1.msra.mxu0 0.0
        %6567 = vmatprep.subr.mxu0 0.0
        %6568 = vmatpush1.msra.mxu0 0.0
        %6569 = vmatprep.subr.mxu0 0.0
        %6570 = vmatpush1.msra.mxu0 0.0
        %6571 = vmatprep.subr.mxu0 0.0
        %6572 = vmatpush1.msra.mxu0 0.0
        %6573 = vmatprep.subr.mxu0 0.0
        %6574 = vmatpush1.msra.mxu0 0.0
        %6575 = vmatprep.subr.mxu0 0.0
        %6576 = vmatpush1.msra.mxu0 0.0
        %6577 = vmatprep.subr.mxu0 0.0
        %6578 = vmatpush1.msra.mxu0 0.0
        %6579 = vmatprep.subr.mxu0 0.0
        %6580 = vmatpush1.msra.mxu0 0.0
        %6581 = vmatprep.subr.mxu0 0.0
        %6582 = vmatpush1.msra.mxu0 0.0
        %6583 = vmatprep.subr.mxu0 0.0
        %6584 = vmatpush1.msra.mxu0 0.0
        %6585 = vmatprep.subr.mxu0 0.0
        %6586 = vmatpush1.msra.mxu0 0.0
        %6587 = vmatprep.subr.mxu0 0.0
        %6588 = vmatpush1.msra.mxu0 0.0
        %6589 = vmatprep.subr.mxu0 0.0
        %6590 = vmatpush1.msra.mxu0 0.0
        %6591 = vmatprep.mubr.f32.mxu0 0.0
        %v6592 = vand.u32 %v384, 4294901760
        %6593 = vmatmul.mubr.f32.gmra.mrb[0].mxu0 %v6592
        %v6594 = vpop.f32.mrb[0].mxu0
        %v6595 = vadd.f32 %v5630, %v6594
        %v6596 = vpop.f32.mrb[0].mxu0
        %v6597 = vadd.f32 %v5632, %v6596
        %6598 = vmatprep.mubr.f32.mxu0 0.0
        %v6599 = vand.u32 %v387, 4294901760
        %6600 = vmatmul.mubr.f32.gmra.mrb[0].mxu0 %v6599
        %v6601 = vpop.f32.mrb[0].mxu0
        %v6602 = vadd.f32 %v5637, %v6601
        %v6603 = vpop.f32.mrb[0].mxu0
        %v6604 = vadd.f32 %v5639, %v6603
        %6605 = vmatprep.mubr.f32.mxu0 0.0
        %v6606 = vand.u32 %v390, 4294901760
        %6607 = vmatmul.mubr.f32.gmra.mrb[0].mxu0 %v6606
        %v6608 = vpop.f32.mrb[0].mxu0
        %v6609 = vadd.f32 %v5644, %v6608
        %v6610 = vpop.f32.mrb[0].mxu0
        %v6611 = vadd.f32 %v5646, %v6610
        %6612 = vmatprep.mubr.f32.mxu0 0.0
        %v6613 = vand.u32 %v393, 4294901760
        %6614 = vmatmul.mubr.f32.gmra.mrb[0].mxu0 %v6613
        %v6615 = vpop.f32.mrb[0].mxu0
        %v6616 = vadd.f32 %v5651, %v6615
        %v6617 = vpop.f32.mrb[0].mxu0
        %v6618 = vadd.f32 %v5653, %v6617
        %6619 = vmatprep.mubr.f32.mxu0 0.0
        %v6620 = vand.u32 %v396, 4294901760
        %6621 = vmatmul.mubr.f32.gmra.mrb[0].mxu0 %v6620
        %v6622 = vpop.f32.mrb[0].mxu0
        %v6623 = vadd.f32 %v5658, %v6622
        %v6624 = vpop.f32.mrb[0].mxu0
        %v6625 = vadd.f32 %v5660, %v6624
        %6626 = vmatprep.mubr.f32.mxu0 0.0
        %v6627 = vand.u32 %v399, 4294901760
        %6628 = vmatmul.mubr.f32.gmra.mrb[0].mxu0 %v6627
        %v6629 = vpop.f32.mrb[0].mxu0
        %v6630 = vadd.f32 %v5665, %v6629
        %v6631 = vpop.f32.mrb[0].mxu0
        %v6632 = vadd.f32 %v5667, %v6631
        %6633 = vmatprep.mubr.f32.mxu0 0.0
        %v6634 = vand.u32 %v402, 4294901760
        %6635 = vmatmul.mubr.f32.gmra.mrb[0].mxu0 %v6634
        %v6636 = vpop.f32.mrb[0].mxu0
        %v6637 = vadd.f32 %v5672, %v6636
        %v6638 = vpop.f32.mrb[0].mxu0
        %v6639 = vadd.f32 %v5674, %v6638
        %6640 = vmatprep.mubr.f32.mxu0 0.0
        %v6641 = vand.u32 %v405, 4294901760
        %6642 = vmatmul.mubr.f32.gmra.mrb[0].mxu0 %v6641
        %v6643 = vpop.f32.mrb[0].mxu0
        %v6644 = vadd.f32 %v5679, %v6643
        %v6645 = vpop.f32.mrb[0].mxu0
        %v6646 = vadd.f32 %v5681, %v6645
        %6647 = vmatprep.mubr.f32.mxu0 0.0
        %v6648 = vand.u32 %v408, 4294901760
        %6649 = vmatmul.mubr.f32.gmra.mrb[0].mxu0 %v6648
        %v6650 = vpop.f32.mrb[0].mxu0
        %v6651 = vadd.f32 %v5686, %v6650
        %v6652 = vpop.f32.mrb[0].mxu0
        %v6653 = vadd.f32 %v5688, %v6652
        %6654 = vmatprep.mubr.f32.mxu0 0.0
        %v6655 = vand.u32 %v411, 4294901760
        %6656 = vmatmul.mubr.f32.gmra.mrb[0].mxu0 %v6655
        %v6657 = vpop.f32.mrb[0].mxu0
        %v6658 = vadd.f32 %v5693, %v6657
        %v6659 = vpop.f32.mrb[0].mxu0
        %v6660 = vadd.f32 %v5695, %v6659
        %6661 = vmatprep.mubr.f32.mxu0 0.0
        %v6662 = vand.u32 %v414, 4294901760
        %6663 = vmatmul.mubr.f32.gmra.mrb[0].mxu0 %v6662
        %v6664 = vpop.f32.mrb[0].mxu0
        %v6665 = vadd.f32 %v5700, %v6664
        %v6666 = vpop.f32.mrb[0].mxu0
        %v6667 = vadd.f32 %v5702, %v6666
        %6668 = vmatprep.mubr.f32.mxu0 0.0
        %v6669 = vand.u32 %v417, 4294901760
        %6670 = vmatmul.mubr.f32.gmra.mrb[0].mxu0 %v6669
        %v6671 = vpop.f32.mrb[0].mxu0
        %v6672 = vadd.f32 %v5707, %v6671
        %v6673 = vpop.f32.mrb[0].mxu0
        %v6674 = vadd.f32 %v5709, %v6673
        %6675 = vmatprep.mubr.f32.mxu0 0.0
        %v6676 = vand.u32 %v420, 4294901760
        %6677 = vmatmul.mubr.f32.gmra.mrb[0].mxu0 %v6676
        %v6678 = vpop.f32.mrb[0].mxu0
        %v6679 = vadd.f32 %v5714, %v6678
        %v6680 = vpop.f32.mrb[0].mxu0
        %v6681 = vadd.f32 %v5716, %v6680
        %6682 = vmatprep.mubr.f32.mxu0 0.0
        %v6683 = vand.u32 %v423, 4294901760
        %6684 = vmatmul.mubr.f32.gmra.mrb[0].mxu0 %v6683
        %v6685 = vpop.f32.mrb[0].mxu0
        %v6686 = vadd.f32 %v5721, %v6685
        %v6687 = vpop.f32.mrb[0].mxu0
        %v6688 = vadd.f32 %v5723, %v6687
        %6689 = vmatprep.mubr.f32.mxu0 0.0
        %v6690 = vand.u32 %v426, 4294901760
        %6691 = vmatmul.mubr.f32.gmra.mrb[0].mxu0 %v6690
        %v6692 = vpop.f32.mrb[0].mxu0
        %v6693 = vadd.f32 %v5728, %v6692
        %v6694 = vpop.f32.mrb[0].mxu0
        %v6695 = vadd.f32 %v5730, %v6694
        %6696 = vmatprep.mubr.f32.mxu0 0.0
        %v6697 = vand.u32 %v429, 4294901760
        %6698 = vmatmul.mubr.f32.gmra.mrb[0].mxu0 %v6697
        %v6699 = vpop.f32.mrb[0].mxu0
        %v6700 = vadd.f32 %v5735, %v6699
        %v6701 = vpop.f32.mrb[0].mxu0
        %v6702 = vadd.f32 %v5737, %v6701
        %6703 = vmatprep.mubr.f32.mxu0 0.0
        %v6704 = vand.u32 %v432, 4294901760
        %6705 = vmatmul.mubr.f32.gmra.mrb[0].mxu0 %v6704
        %v6706 = vpop.f32.mrb[0].mxu0
        %v6707 = vadd.f32 %v5742, %v6706
        %v6708 = vpop.f32.mrb[0].mxu0
        %v6709 = vadd.f32 %v5744, %v6708
        %6710 = vmatprep.mubr.f32.mxu0 0.0
        %v6711 = vand.u32 %v435, 4294901760
        %6712 = vmatmul.mubr.f32.gmra.mrb[0].mxu0 %v6711
        %v6713 = vpop.f32.mrb[0].mxu0
        %v6714 = vadd.f32 %v5749, %v6713
        %v6715 = vpop.f32.mrb[0].mxu0
        %v6716 = vadd.f32 %v5751, %v6715
        %6717 = vmatprep.mubr.f32.mxu0 0.0
        %v6718 = vand.u32 %v438, 4294901760
        %6719 = vmatmul.mubr.f32.gmra.mrb[0].mxu0 %v6718
        %v6720 = vpop.f32.mrb[0].mxu0
        %v6721 = vadd.f32 %v5756, %v6720
        %v6722 = vpop.f32.mrb[0].mxu0
        %v6723 = vadd.f32 %v5758, %v6722
        %6724 = vmatprep.mubr.f32.mxu0 0.0
        %v6725 = vand.u32 %v441, 4294901760
        %6726 = vmatmul.mubr.f32.gmra.mrb[0].mxu0 %v6725
        %v6727 = vpop.f32.mrb[0].mxu0
        %v6728 = vadd.f32 %v5763, %v6727
        %v6729 = vpop.f32.mrb[0].mxu0
        %v6730 = vadd.f32 %v5765, %v6729
        %6731 = vmatprep.mubr.f32.mxu0 0.0
        %v6732 = vand.u32 %v444, 4294901760
        %6733 = vmatmul.mubr.f32.gmra.mrb[0].mxu0 %v6732
        %v6734 = vpop.f32.mrb[0].mxu0
        %v6735 = vadd.f32 %v5770, %v6734
        %v6736 = vpop.f32.mrb[0].mxu0
        %v6737 = vadd.f32 %v5772, %v6736
        %6738 = vmatprep.mubr.f32.mxu0 0.0
        %v6739 = vand.u32 %v447, 4294901760
        %6740 = vmatmul.mubr.f32.gmra.mrb[0].mxu0 %v6739
        %v6741 = vpop.f32.mrb[0].mxu0
        %v6742 = vadd.f32 %v5777, %v6741
        %v6743 = vpop.f32.mrb[0].mxu0
        %v6744 = vadd.f32 %v5779, %v6743
        %6745 = vmatprep.mubr.f32.mxu0 0.0
        %v6746 = vand.u32 %v450, 4294901760
        %6747 = vmatmul.mubr.f32.gmra.mrb[0].mxu0 %v6746
        %v6748 = vpop.f32.mrb[0].mxu0
        %v6749 = vadd.f32 %v5784, %v6748
        %v6750 = vpop.f32.mrb[0].mxu0
        %v6751 = vadd.f32 %v5786, %v6750
        %6752 = vmatprep.mubr.f32.mxu0 0.0
        %v6753 = vand.u32 %v453, 4294901760
        %6754 = vmatmul.mubr.f32.gmra.mrb[0].mxu0 %v6753
        %v6755 = vpop.f32.mrb[0].mxu0
        %v6756 = vadd.f32 %v5791, %v6755
        %v6757 = vpop.f32.mrb[0].mxu0
        %v6758 = vadd.f32 %v5793, %v6757
        %6759 = vmatprep.mubr.f32.mxu0 0.0
        %v6760 = vand.u32 %v456, 4294901760
        %6761 = vmatmul.mubr.f32.gmra.mrb[0].mxu0 %v6760
        %v6762 = vpop.f32.mrb[0].mxu0
        %v6763 = vadd.f32 %v5798, %v6762
        %v6764 = vpop.f32.mrb[0].mxu0
        %v6765 = vadd.f32 %v5800, %v6764
        %6766 = vmatprep.mubr.f32.mxu0 0.0
        %v6767 = vand.u32 %v459, 4294901760
        %6768 = vmatmul.mubr.f32.gmra.mrb[0].mxu0 %v6767
        %v6769 = vpop.f32.mrb[0].mxu0
        %v6770 = vadd.f32 %v5805, %v6769
        %v6771 = vpop.f32.mrb[0].mxu0
        %v6772 = vadd.f32 %v5807, %v6771
        %6773 = vmatprep.mubr.f32.mxu0 0.0
        %v6774 = vand.u32 %v462, 4294901760
        %6775 = vmatmul.mubr.f32.gmra.mrb[0].mxu0 %v6774
        %v6776 = vpop.f32.mrb[0].mxu0
        %v6777 = vadd.f32 %v5812, %v6776
        %v6778 = vpop.f32.mrb[0].mxu0
        %v6779 = vadd.f32 %v5814, %v6778
        %6780 = vmatprep.mubr.f32.mxu0 0.0
        %v6781 = vand.u32 %v465, 4294901760
        %6782 = vmatmul.mubr.f32.gmra.mrb[0].mxu0 %v6781
        %v6783 = vpop.f32.mrb[0].mxu0
        %v6784 = vadd.f32 %v5819, %v6783
        %v6785 = vpop.f32.mrb[0].mxu0
        %v6786 = vadd.f32 %v5821, %v6785
        %6787 = vmatprep.mubr.f32.mxu0 0.0
        %v6788 = vand.u32 %v468, 4294901760
        %6789 = vmatmul.mubr.f32.gmra.mrb[0].mxu0 %v6788
        %v6790 = vpop.f32.mrb[0].mxu0
        %v6791 = vadd.f32 %v5826, %v6790
        %v6792 = vpop.f32.mrb[0].mxu0
        %v6793 = vadd.f32 %v5828, %v6792
        %6794 = vmatprep.mubr.f32.mxu0 0.0
        %v6795 = vand.u32 %v471, 4294901760
        %6796 = vmatmul.mubr.f32.gmra.mrb[0].mxu0 %v6795
        %v6797 = vpop.f32.mrb[0].mxu0
        %v6798 = vadd.f32 %v5833, %v6797
        %v6799 = vpop.f32.mrb[0].mxu0
        %v6800 = vadd.f32 %v5835, %v6799
        %6801 = vmatprep.mubr.f32.mxu0 0.0
        %v6802 = vand.u32 %v474, 4294901760
        %6803 = vmatmul.mubr.f32.gmra.mrb[0].mxu0 %v6802
        %v6804 = vpop.f32.mrb[0].mxu0
        %v6805 = vadd.f32 %v5840, %v6804
        %v6806 = vpop.f32.mrb[0].mxu0
        %v6807 = vadd.f32 %v5842, %v6806
        %6808 = vmatprep.mubr.f32.mxu0 0.0
        %v6809 = vand.u32 %v477, 4294901760
        %6810 = vmatmul.mubr.f32.gmra.mrb[0].mxu0 %v6809
        %v6811 = vpop.f32.mrb[0].mxu0
        %v6812 = vadd.f32 %v5847, %v6811
        %v6813 = vpop.f32.mrb[0].mxu0
        %v6814 = vadd.f32 %v5849, %v6813
        %6815 = vmatprep.mubr.f32.mxu0 0.0
        %v6816 = vand.u32 %v480, 4294901760
        %6817 = vmatmul.mubr.f32.gmra.mrb[0].mxu0 %v6816
        %v6818 = vpop.f32.mrb[0].mxu0
        %v6819 = vadd.f32 %v5854, %v6818
        %v6820 = vpop.f32.mrb[0].mxu0
        %v6821 = vadd.f32 %v5856, %v6820
        %6822 = vmatprep.mubr.f32.mxu0 0.0
        %v6823 = vand.u32 %v483, 4294901760
        %6824 = vmatmul.mubr.f32.gmra.mrb[0].mxu0 %v6823
        %v6825 = vpop.f32.mrb[0].mxu0
        %v6826 = vadd.f32 %v5861, %v6825
        %v6827 = vpop.f32.mrb[0].mxu0
        %v6828 = vadd.f32 %v5863, %v6827
        %6829 = vmatprep.mubr.f32.mxu0 0.0
        %v6830 = vand.u32 %v486, 4294901760
        %6831 = vmatmul.mubr.f32.gmra.mrb[0].mxu0 %v6830
        %v6832 = vpop.f32.mrb[0].mxu0
        %v6833 = vadd.f32 %v5868, %v6832
        %v6834 = vpop.f32.mrb[0].mxu0
        %v6835 = vadd.f32 %v5870, %v6834
        %6836 = vmatprep.mubr.f32.mxu0 0.0
        %v6837 = vand.u32 %v489, 4294901760
        %6838 = vmatmul.mubr.f32.gmra.mrb[0].mxu0 %v6837
        %v6839 = vpop.f32.mrb[0].mxu0
        %v6840 = vadd.f32 %v5875, %v6839
        %v6841 = vpop.f32.mrb[0].mxu0
        %v6842 = vadd.f32 %v5877, %v6841
        %6843 = vmatprep.mubr.f32.mxu0 0.0
        %v6844 = vand.u32 %v492, 4294901760
        %6845 = vmatmul.mubr.f32.gmra.mrb[0].mxu0 %v6844
        %v6846 = vpop.f32.mrb[0].mxu0
        %v6847 = vadd.f32 %v5882, %v6846
        %v6848 = vpop.f32.mrb[0].mxu0
        %v6849 = vadd.f32 %v5884, %v6848
        %6850 = vmatprep.mubr.f32.mxu0 0.0
        %v6851 = vand.u32 %v495, 4294901760
        %6852 = vmatmul.mubr.f32.gmra.mrb[0].mxu0 %v6851
        %v6853 = vpop.f32.mrb[0].mxu0
        %v6854 = vadd.f32 %v5889, %v6853
        %v6855 = vpop.f32.mrb[0].mxu0
        %v6856 = vadd.f32 %v5891, %v6855
        %6857 = vmatprep.mubr.f32.mxu0 0.0
        %v6858 = vand.u32 %v498, 4294901760
        %6859 = vmatmul.mubr.f32.gmra.mrb[0].mxu0 %v6858
        %v6860 = vpop.f32.mrb[0].mxu0
        %v6861 = vadd.f32 %v5896, %v6860
        %v6862 = vpop.f32.mrb[0].mxu0
        %v6863 = vadd.f32 %v5898, %v6862
        %6864 = vmatprep.mubr.f32.mxu0 0.0
        %v6865 = vand.u32 %v501, 4294901760
        %6866 = vmatmul.mubr.f32.gmra.mrb[0].mxu0 %v6865
        %v6867 = vpop.f32.mrb[0].mxu0
        %v6868 = vadd.f32 %v5903, %v6867
        %v6869 = vpop.f32.mrb[0].mxu0
        %v6870 = vadd.f32 %v5905, %v6869
        %6871 = vmatprep.mubr.f32.mxu0 0.0
        %v6872 = vand.u32 %v504, 4294901760
        %6873 = vmatmul.mubr.f32.gmra.mrb[0].mxu0 %v6872
        %v6874 = vpop.f32.mrb[0].mxu0
        %v6875 = vadd.f32 %v5910, %v6874
        %v6876 = vpop.f32.mrb[0].mxu0
        %v6877 = vadd.f32 %v5912, %v6876
        %6878 = vmatprep.mubr.f32.mxu0 0.0
        %v6879 = vand.u32 %v507, 4294901760
        %6880 = vmatmul.mubr.f32.gmra.mrb[0].mxu0 %v6879
        %v6881 = vpop.f32.mrb[0].mxu0
        %v6882 = vadd.f32 %v5917, %v6881
        %v6883 = vpop.f32.mrb[0].mxu0
        %v6884 = vadd.f32 %v5919, %v6883
        %6885 = vmatprep.mubr.f32.mxu0 0.0
        %v6886 = vand.u32 %v510, 4294901760
        %6887 = vmatmul.mubr.f32.gmra.mrb[0].mxu0 %v6886
        %v6888 = vpop.f32.mrb[0].mxu0
        %v6889 = vadd.f32 %v5924, %v6888
        %v6890 = vpop.f32.mrb[0].mxu0
        %v6891 = vadd.f32 %v5926, %v6890
        %6892 = vmatprep.mubr.f32.mxu0 0.0
        %v6893 = vand.u32 %v513, 4294901760
        %6894 = vmatmul.mubr.f32.gmra.mrb[0].mxu0 %v6893
        %v6895 = vpop.f32.mrb[0].mxu0
        %v6896 = vadd.f32 %v5931, %v6895
        %v6897 = vpop.f32.mrb[0].mxu0
        %v6898 = vadd.f32 %v5933, %v6897
        %6899 = vmatprep.mubr.f32.mxu0 0.0
        %v6900 = vand.u32 %v516, 4294901760
        %6901 = vmatmul.mubr.f32.gmra.mrb[0].mxu0 %v6900
        %v6902 = vpop.f32.mrb[0].mxu0
        %v6903 = vadd.f32 %v5938, %v6902
        %v6904 = vpop.f32.mrb[0].mxu0
        %v6905 = vadd.f32 %v5940, %v6904
        %6906 = vmatprep.mubr.f32.mxu0 0.0
        %v6907 = vand.u32 %v519, 4294901760
        %6908 = vmatmul.mubr.f32.gmra.mrb[0].mxu0 %v6907
        %v6909 = vpop.f32.mrb[0].mxu0
        %v6910 = vadd.f32 %v5945, %v6909
        %v6911 = vpop.f32.mrb[0].mxu0
        %v6912 = vadd.f32 %v5947, %v6911
        %6913 = vmatprep.mubr.f32.mxu0 0.0
        %v6914 = vand.u32 %v522, 4294901760
        %6915 = vmatmul.mubr.f32.gmra.mrb[0].mxu0 %v6914
        %v6916 = vpop.f32.mrb[0].mxu0
        %v6917 = vadd.f32 %v5952, %v6916
        %v6918 = vpop.f32.mrb[0].mxu0
        %v6919 = vadd.f32 %v5954, %v6918
        %6920 = vmatprep.mubr.f32.mxu0 0.0
        %v6921 = vand.u32 %v525, 4294901760
        %6922 = vmatmul.mubr.f32.gmra.mrb[0].mxu0 %v6921
        %v6923 = vpop.f32.mrb[0].mxu0
        %v6924 = vadd.f32 %v5959, %v6923
        %v6925 = vpop.f32.mrb[0].mxu0
        %v6926 = vadd.f32 %v5961, %v6925
        %6927 = vmatprep.mubr.f32.mxu0 0.0
        %v6928 = vand.u32 %v528, 4294901760
        %6929 = vmatmul.mubr.f32.gmra.mrb[0].mxu0 %v6928
        %v6930 = vpop.f32.mrb[0].mxu0
        %v6931 = vadd.f32 %v5966, %v6930
        %v6932 = vpop.f32.mrb[0].mxu0
        %v6933 = vadd.f32 %v5968, %v6932
        %6934 = vmatprep.mubr.f32.mxu0 0.0
        %v6935 = vand.u32 %v531, 4294901760
        %6936 = vmatmul.mubr.f32.gmra.mrb[0].mxu0 %v6935
        %v6937 = vpop.f32.mrb[0].mxu0
        %v6938 = vadd.f32 %v5973, %v6937
        %v6939 = vpop.f32.mrb[0].mxu0
        %v6940 = vadd.f32 %v5975, %v6939
        %6941 = vmatprep.mubr.f32.mxu0 0.0
        %v6942 = vand.u32 %v534, 4294901760
        %6943 = vmatmul.mubr.f32.gmra.mrb[0].mxu0 %v6942
        %v6944 = vpop.f32.mrb[0].mxu0
        %v6945 = vadd.f32 %v5980, %v6944
        %v6946 = vpop.f32.mrb[0].mxu0
        %v6947 = vadd.f32 %v5982, %v6946
        %6948 = vmatprep.mubr.f32.mxu0 0.0
        %v6949 = vand.u32 %v537, 4294901760
        %6950 = vmatmul.mubr.f32.gmra.mrb[0].mxu0 %v6949
        %v6951 = vpop.f32.mrb[0].mxu0
        %v6952 = vadd.f32 %v5987, %v6951
        %v6953 = vpop.f32.mrb[0].mxu0
        %v6954 = vadd.f32 %v5989, %v6953
        %6955 = vmatprep.mubr.f32.mxu0 0.0
        %v6956 = vand.u32 %v540, 4294901760
        %6957 = vmatmul.mubr.f32.gmra.mrb[0].mxu0 %v6956
        %v6958 = vpop.f32.mrb[0].mxu0
        %v6959 = vadd.f32 %v5994, %v6958
        %v6960 = vpop.f32.mrb[0].mxu0
        %v6961 = vadd.f32 %v5996, %v6960
        %6962 = vmatprep.mubr.f32.mxu0 0.0
        %v6963 = vand.u32 %v543, 4294901760
        %6964 = vmatmul.mubr.f32.gmra.mrb[0].mxu0 %v6963
        %v6965 = vpop.f32.mrb[0].mxu0
        %v6966 = vadd.f32 %v6001, %v6965
        %v6967 = vpop.f32.mrb[0].mxu0
        %v6968 = vadd.f32 %v6003, %v6967
        %6969 = vmatprep.mubr.f32.mxu0 0.0
        %v6970 = vand.u32 %v546, 4294901760
        %6971 = vmatmul.mubr.f32.gmra.mrb[0].mxu0 %v6970
        %v6972 = vpop.f32.mrb[0].mxu0
        %v6973 = vadd.f32 %v6008, %v6972
        %v6974 = vpop.f32.mrb[0].mxu0
        %v6975 = vadd.f32 %v6010, %v6974
        %6976 = vmatprep.mubr.f32.mxu0 0.0
        %v6977 = vand.u32 %v549, 4294901760
        %6978 = vmatmul.mubr.f32.gmra.mrb[0].mxu0 %v6977
        %v6979 = vpop.f32.mrb[0].mxu0
        %v6980 = vadd.f32 %v6015, %v6979
        %v6981 = vpop.f32.mrb[0].mxu0
        %v6982 = vadd.f32 %v6017, %v6981
        %6983 = vmatprep.mubr.f32.mxu0 0.0
        %v6984 = vand.u32 %v552, 4294901760
        %6985 = vmatmul.mubr.f32.gmra.mrb[0].mxu0 %v6984
        %v6986 = vpop.f32.mrb[0].mxu0
        %v6987 = vadd.f32 %v6022, %v6986
        %v6988 = vpop.f32.mrb[0].mxu0
        %v6989 = vadd.f32 %v6024, %v6988
        %6990 = vmatprep.mubr.f32.mxu0 0.0
        %v6991 = vand.u32 %v555, 4294901760
        %6992 = vmatmul.mubr.f32.gmra.mrb[0].mxu0 %v6991
        %v6993 = vpop.f32.mrb[0].mxu0
        %v6994 = vadd.f32 %v6029, %v6993
        %v6995 = vpop.f32.mrb[0].mxu0
        %v6996 = vadd.f32 %v6031, %v6995
        %6997 = vmatprep.mubr.f32.mxu0 0.0
        %v6998 = vand.u32 %v558, 4294901760
        %6999 = vmatmul.mubr.f32.gmra.mrb[0].mxu0 %v6998
        %v7000 = vpop.f32.mrb[0].mxu0
        %v7001 = vadd.f32 %v6036, %v7000
        %v7002 = vpop.f32.mrb[0].mxu0
        %v7003 = vadd.f32 %v6038, %v7002
        %7004 = vmatprep.mubr.f32.mxu0 0.0
        %v7005 = vand.u32 %v561, 4294901760
        %7006 = vmatmul.mubr.f32.gmra.mrb[0].mxu0 %v7005
        %v7007 = vpop.f32.mrb[0].mxu0
        %v7008 = vadd.f32 %v6043, %v7007
        %v7009 = vpop.f32.mrb[0].mxu0
        %v7010 = vadd.f32 %v6045, %v7009
        %7011 = vmatprep.mubr.f32.mxu0 0.0
        %v7012 = vand.u32 %v564, 4294901760
        %7013 = vmatmul.mubr.f32.gmra.mrb[0].mxu0 %v7012
        %v7014 = vpop.f32.mrb[0].mxu0
        %v7015 = vadd.f32 %v6050, %v7014
        %v7016 = vpop.f32.mrb[0].mxu0
        %v7017 = vadd.f32 %v6052, %v7016
        %7018 = vmatprep.mubr.f32.mxu0 0.0
        %v7019 = vand.u32 %v567, 4294901760
        %7020 = vmatmul.mubr.f32.gmra.mrb[0].mxu0 %v7019
        %v7021 = vpop.f32.mrb[0].mxu0
        %v7022 = vadd.f32 %v6057, %v7021
        %v7023 = vpop.f32.mrb[0].mxu0
        %v7024 = vadd.f32 %v6059, %v7023
        %7025 = vmatprep.mubr.f32.mxu0 0.0
        %v7026 = vand.u32 %v570, 4294901760
        %7027 = vmatmul.mubr.f32.gmra.mrb[0].mxu0 %v7026
        %v7028 = vpop.f32.mrb[0].mxu0
        %v7029 = vadd.f32 %v6064, %v7028
        %v7030 = vpop.f32.mrb[0].mxu0
        %v7031 = vadd.f32 %v6066, %v7030
        %7032 = vmatprep.mubr.f32.mxu0 0.0
        %v7033 = vand.u32 %v573, 4294901760
        %7034 = vmatmul.mubr.f32.gmra.mrb[0].mxu0 %v7033
        %v7035 = vpop.f32.mrb[0].mxu0
        %v7036 = vadd.f32 %v6071, %v7035
        %v7037 = vpop.f32.mrb[0].mxu0
        %v7038 = vadd.f32 %v6073, %v7037
        %7039 = vmatprep.mubr.f32.mxu0 0.0
        %v7040 = vand.u32 %v576, 4294901760
        %7041 = vmatmul.mubr.f32.gmra.mrb[0].mxu0 %v7040
        %v7042 = vpop.f32.mrb[0].mxu0
        %v7043 = vadd.f32 %v6078, %v7042
        %v7044 = vpop.f32.mrb[0].mxu0
        %v7045 = vadd.f32 %v6080, %v7044
        %7046 = vmatprep.mubr.f32.mxu0 0.0
        %v7047 = vand.u32 %v579, 4294901760
        %7048 = vmatmul.mubr.f32.gmra.mrb[0].mxu0 %v7047
        %v7049 = vpop.f32.mrb[0].mxu0
        %v7050 = vadd.f32 %v6085, %v7049
        %v7051 = vpop.f32.mrb[0].mxu0
        %v7052 = vadd.f32 %v6087, %v7051
        %7053 = vmatprep.mubr.f32.mxu0 0.0
        %v7054 = vand.u32 %v582, 4294901760
        %7055 = vmatmul.mubr.f32.gmra.mrb[0].mxu0 %v7054
        %v7056 = vpop.f32.mrb[0].mxu0
        %v7057 = vadd.f32 %v6092, %v7056
        %v7058 = vpop.f32.mrb[0].mxu0
        %v7059 = vadd.f32 %v6094, %v7058
        %7060 = vmatprep.mubr.f32.mxu0 0.0
        %v7061 = vand.u32 %v585, 4294901760
        %7062 = vmatmul.mubr.f32.gmra.mrb[0].mxu0 %v7061
        %v7063 = vpop.f32.mrb[0].mxu0
        %v7064 = vadd.f32 %v6099, %v7063
        %v7065 = vpop.f32.mrb[0].mxu0
        %v7066 = vadd.f32 %v6101, %v7065
        %7067 = vmatprep.mubr.f32.mxu0 0.0
        %v7068 = vand.u32 %v588, 4294901760
        %7069 = vmatmul.mubr.f32.gmra.mrb[0].mxu0 %v7068
        %v7070 = vpop.f32.mrb[0].mxu0
        %v7071 = vadd.f32 %v6106, %v7070
        %v7072 = vpop.f32.mrb[0].mxu0
        %v7073 = vadd.f32 %v6108, %v7072
        %7074 = vmatprep.mubr.f32.mxu0 0.0
        %v7075 = vand.u32 %v591, 4294901760
        %7076 = vmatmul.mubr.f32.gmra.mrb[0].mxu0 %v7075
        %v7077 = vpop.f32.mrb[0].mxu0
        %v7078 = vadd.f32 %v6113, %v7077
        %v7079 = vpop.f32.mrb[0].mxu0
        %v7080 = vadd.f32 %v6115, %v7079
        %7081 = vmatprep.mubr.f32.mxu0 0.0
        %v7082 = vand.u32 %v594, 4294901760
        %7083 = vmatmul.mubr.f32.gmra.mrb[0].mxu0 %v7082
        %v7084 = vpop.f32.mrb[0].mxu0
        %v7085 = vadd.f32 %v6120, %v7084
        %v7086 = vpop.f32.mrb[0].mxu0
        %v7087 = vadd.f32 %v6122, %v7086
        %7088 = vmatprep.mubr.f32.mxu0 0.0
        %v7089 = vand.u32 %v597, 4294901760
        %7090 = vmatmul.mubr.f32.gmra.mrb[0].mxu0 %v7089
        %v7091 = vpop.f32.mrb[0].mxu0
        %v7092 = vadd.f32 %v6127, %v7091
        %v7093 = vpop.f32.mrb[0].mxu0
        %v7094 = vadd.f32 %v6129, %v7093
        %7095 = vmatprep.mubr.f32.mxu0 0.0
        %v7096 = vand.u32 %v600, 4294901760
        %7097 = vmatmul.mubr.f32.gmra.mrb[0].mxu0 %v7096
        %v7098 = vpop.f32.mrb[0].mxu0
        %v7099 = vadd.f32 %v6134, %v7098
        %v7100 = vpop.f32.mrb[0].mxu0
        %v7101 = vadd.f32 %v6136, %v7100
        %7102 = vmatprep.mubr.f32.mxu0 0.0
        %v7103 = vand.u32 %v603, 4294901760
        %7104 = vmatmul.mubr.f32.gmra.mrb[0].mxu0 %v7103
        %v7105 = vpop.f32.mrb[0].mxu0
        %v7106 = vadd.f32 %v6141, %v7105
        %v7107 = vpop.f32.mrb[0].mxu0
        %v7108 = vadd.f32 %v6143, %v7107
        %7109 = vmatprep.mubr.f32.mxu0 0.0
        %v7110 = vand.u32 %v606, 4294901760
        %7111 = vmatmul.mubr.f32.gmra.mrb[0].mxu0 %v7110
        %v7112 = vpop.f32.mrb[0].mxu0
        %v7113 = vadd.f32 %v6148, %v7112
        %v7114 = vpop.f32.mrb[0].mxu0
        %v7115 = vadd.f32 %v6150, %v7114
        %7116 = vmatprep.mubr.f32.mxu0 0.0
        %v7117 = vand.u32 %v609, 4294901760
        %7118 = vmatmul.mubr.f32.gmra.mrb[0].mxu0 %v7117
        %v7119 = vpop.f32.mrb[0].mxu0
        %v7120 = vadd.f32 %v6155, %v7119
        %v7121 = vpop.f32.mrb[0].mxu0
        %v7122 = vadd.f32 %v6157, %v7121
        %7123 = vmatprep.mubr.f32.mxu0 0.0
        %v7124 = vand.u32 %v612, 4294901760
        %7125 = vmatmul.mubr.f32.gmra.mrb[0].mxu0 %v7124
        %v7126 = vpop.f32.mrb[0].mxu0
        %v7127 = vadd.f32 %v6162, %v7126
        %v7128 = vpop.f32.mrb[0].mxu0
        %v7129 = vadd.f32 %v6164, %v7128
        %7130 = vmatprep.mubr.f32.mxu0 0.0
        %v7131 = vand.u32 %v615, 4294901760
        %7132 = vmatmul.mubr.f32.gmra.mrb[0].mxu0 %v7131
        %v7133 = vpop.f32.mrb[0].mxu0
        %v7134 = vadd.f32 %v6169, %v7133
        %v7135 = vpop.f32.mrb[0].mxu0
        %v7136 = vadd.f32 %v6171, %v7135
        %7137 = vmatprep.mubr.f32.mxu0 0.0
        %v7138 = vand.u32 %v618, 4294901760
        %7139 = vmatmul.mubr.f32.gmra.mrb[0].mxu0 %v7138
        %v7140 = vpop.f32.mrb[0].mxu0
        %v7141 = vadd.f32 %v6176, %v7140
        %v7142 = vpop.f32.mrb[0].mxu0
        %v7143 = vadd.f32 %v6178, %v7142
        %7144 = vmatprep.mubr.f32.mxu0 0.0
        %v7145 = vand.u32 %v621, 4294901760
        %7146 = vmatmul.mubr.f32.gmra.mrb[0].mxu0 %v7145
        %v7147 = vpop.f32.mrb[0].mxu0
        %v7148 = vadd.f32 %v6183, %v7147
        %v7149 = vpop.f32.mrb[0].mxu0
        %v7150 = vadd.f32 %v6185, %v7149
        %7151 = vmatprep.mubr.f32.mxu0 0.0
        %v7152 = vand.u32 %v624, 4294901760
        %7153 = vmatmul.mubr.f32.gmra.mrb[0].mxu0 %v7152
        %v7154 = vpop.f32.mrb[0].mxu0
        %v7155 = vadd.f32 %v6190, %v7154
        %v7156 = vpop.f32.mrb[0].mxu0
        %v7157 = vadd.f32 %v6192, %v7156
        %7158 = vmatprep.mubr.f32.mxu0 0.0
        %v7159 = vand.u32 %v627, 4294901760
        %7160 = vmatmul.mubr.f32.gmra.mrb[0].mxu0 %v7159
        %v7161 = vpop.f32.mrb[0].mxu0
        %v7162 = vadd.f32 %v6197, %v7161
        %v7163 = vpop.f32.mrb[0].mxu0
        %v7164 = vadd.f32 %v6199, %v7163
        %7165 = vmatprep.mubr.f32.mxu0 0.0
        %v7166 = vand.u32 %v630, 4294901760
        %7167 = vmatmul.mubr.f32.gmra.mrb[0].mxu0 %v7166
        %v7168 = vpop.f32.mrb[0].mxu0
        %v7169 = vadd.f32 %v6204, %v7168
        %v7170 = vpop.f32.mrb[0].mxu0
        %v7171 = vadd.f32 %v6206, %v7170
        %7172 = vmatprep.mubr.f32.mxu0 0.0
        %v7173 = vand.u32 %v633, 4294901760
        %7174 = vmatmul.mubr.f32.gmra.mrb[0].mxu0 %v7173
        %v7175 = vpop.f32.mrb[0].mxu0
        %v7176 = vadd.f32 %v6211, %v7175
        %v7177 = vpop.f32.mrb[0].mxu0
        %v7178 = vadd.f32 %v6213, %v7177
        %7179 = vmatprep.mubr.f32.mxu0 0.0
        %v7180 = vand.u32 %v636, 4294901760
        %7181 = vmatmul.mubr.f32.gmra.mrb[0].mxu0 %v7180
        %v7182 = vpop.f32.mrb[0].mxu0
        %v7183 = vadd.f32 %v6218, %v7182
        %v7184 = vpop.f32.mrb[0].mxu0
        %v7185 = vadd.f32 %v6220, %v7184
        %7186 = vmatprep.mubr.f32.mxu0 0.0
        %v7187 = vand.u32 %v639, 4294901760
        %7188 = vmatmul.mubr.f32.gmra.mrb[0].mxu0 %v7187
        %v7189 = vpop.f32.mrb[0].mxu0
        %v7190 = vadd.f32 %v6225, %v7189
        %v7191 = vpop.f32.mrb[0].mxu0
        %v7192 = vadd.f32 %v6227, %v7191
        %7193 = vmatprep.mubr.f32.mxu0 0.0
        %v7194 = vand.u32 %v642, 4294901760
        %7195 = vmatmul.mubr.f32.gmra.mrb[0].mxu0 %v7194
        %v7196 = vpop.f32.mrb[0].mxu0
        %v7197 = vadd.f32 %v6232, %v7196
        %v7198 = vpop.f32.mrb[0].mxu0
        %v7199 = vadd.f32 %v6234, %v7198
        %7200 = vmatprep.mubr.f32.mxu0 0.0
        %v7201 = vand.u32 %v645, 4294901760
        %7202 = vmatmul.mubr.f32.gmra.mrb[0].mxu0 %v7201
        %v7203 = vpop.f32.mrb[0].mxu0
        %v7204 = vadd.f32 %v6239, %v7203
        %v7205 = vpop.f32.mrb[0].mxu0
        %v7206 = vadd.f32 %v6241, %v7205
        %7207 = vmatprep.mubr.f32.mxu0 0.0
        %v7208 = vand.u32 %v648, 4294901760
        %7209 = vmatmul.mubr.f32.gmra.mrb[0].mxu0 %v7208
        %v7210 = vpop.f32.mrb[0].mxu0
        %v7211 = vadd.f32 %v6246, %v7210
        %v7212 = vpop.f32.mrb[0].mxu0
        %v7213 = vadd.f32 %v6248, %v7212
        %7214 = vmatprep.mubr.f32.mxu0 0.0
        %v7215 = vand.u32 %v651, 4294901760
        %7216 = vmatmul.mubr.f32.gmra.mrb[0].mxu0 %v7215
        %v7217 = vpop.f32.mrb[0].mxu0
        %v7218 = vadd.f32 %v6253, %v7217
        %v7219 = vpop.f32.mrb[0].mxu0
        %v7220 = vadd.f32 %v6255, %v7219
        %7221 = vmatprep.mubr.f32.mxu0 0.0
        %v7222 = vand.u32 %v654, 4294901760
        %7223 = vmatmul.mubr.f32.gmra.mrb[0].mxu0 %v7222
        %v7224 = vpop.f32.mrb[0].mxu0
        %v7225 = vadd.f32 %v6260, %v7224
        %v7226 = vpop.f32.mrb[0].mxu0
        %v7227 = vadd.f32 %v6262, %v7226
        %7228 = vmatprep.mubr.f32.mxu0 0.0
        %v7229 = vand.u32 %v657, 4294901760
        %7230 = vmatmul.mubr.f32.gmra.mrb[0].mxu0 %v7229
        %v7231 = vpop.f32.mrb[0].mxu0
        %v7232 = vadd.f32 %v6267, %v7231
        %v7233 = vpop.f32.mrb[0].mxu0
        %v7234 = vadd.f32 %v6269, %v7233
        %7235 = vmatprep.mubr.f32.mxu0 0.0
        %v7236 = vand.u32 %v660, 4294901760
        %7237 = vmatmul.mubr.f32.gmra.mrb[0].mxu0 %v7236
        %v7238 = vpop.f32.mrb[0].mxu0
        %v7239 = vadd.f32 %v6274, %v7238
        %v7240 = vpop.f32.mrb[0].mxu0
        %v7241 = vadd.f32 %v6276, %v7240
        %7242 = vmatprep.mubr.f32.mxu0 0.0
        %v7243 = vand.u32 %v663, 4294901760
        %7244 = vmatmul.mubr.f32.gmra.mrb[0].mxu0 %v7243
        %v7245 = vpop.f32.mrb[0].mxu0
        %v7246 = vadd.f32 %v6281, %v7245
        %v7247 = vpop.f32.mrb[0].mxu0
        %v7248 = vadd.f32 %v6283, %v7247
        %7249 = vmatprep.mubr.f32.mxu0 0.0
        %v7250 = vand.u32 %v666, 4294901760
        %7251 = vmatmul.mubr.f32.gmra.mrb[0].mxu0 %v7250
        %v7252 = vpop.f32.mrb[0].mxu0
        %v7253 = vadd.f32 %v6288, %v7252
        %v7254 = vpop.f32.mrb[0].mxu0
        %v7255 = vadd.f32 %v6290, %v7254
        %7256 = vmatprep.mubr.f32.mxu0 0.0
        %v7257 = vand.u32 %v669, 4294901760
        %7258 = vmatmul.mubr.f32.gmra.mrb[0].mxu0 %v7257
        %v7259 = vpop.f32.mrb[0].mxu0
        %v7260 = vadd.f32 %v6295, %v7259
        %v7261 = vpop.f32.mrb[0].mxu0
        %v7262 = vadd.f32 %v6297, %v7261
        %7263 = vmatprep.mubr.f32.mxu0 0.0
        %v7264 = vand.u32 %v672, 4294901760
        %7265 = vmatmul.mubr.f32.gmra.mrb[0].mxu0 %v7264
        %v7266 = vpop.f32.mrb[0].mxu0
        %v7267 = vadd.f32 %v6302, %v7266
        %v7268 = vpop.f32.mrb[0].mxu0
        %v7269 = vadd.f32 %v6304, %v7268
        %7270 = vmatprep.mubr.f32.mxu0 0.0
        %v7271 = vand.u32 %v675, 4294901760
        %7272 = vmatmul.mubr.f32.gmra.mrb[0].mxu0 %v7271
        %v7273 = vpop.f32.mrb[0].mxu0
        %v7274 = vadd.f32 %v6309, %v7273
        %v7275 = vpop.f32.mrb[0].mxu0
        %v7276 = vadd.f32 %v6311, %v7275
        %7277 = vmatprep.mubr.f32.mxu0 0.0
        %v7278 = vand.u32 %v678, 4294901760
        %7279 = vmatmul.mubr.f32.gmra.mrb[0].mxu0 %v7278
        %v7280 = vpop.f32.mrb[0].mxu0
        %v7281 = vadd.f32 %v6316, %v7280
        %v7282 = vpop.f32.mrb[0].mxu0
        %v7283 = vadd.f32 %v6318, %v7282
        %7284 = vmatprep.mubr.f32.mxu0 0.0
        %v7285 = vand.u32 %v681, 4294901760
        %7286 = vmatmul.mubr.f32.gmra.mrb[0].mxu0 %v7285
        %v7287 = vpop.f32.mrb[0].mxu0
        %v7288 = vadd.f32 %v6323, %v7287
        %v7289 = vpop.f32.mrb[0].mxu0
        %v7290 = vadd.f32 %v6325, %v7289
        %7291 = vmatprep.mubr.f32.mxu0 0.0
        %v7292 = vand.u32 %v684, 4294901760
        %7293 = vmatmul.mubr.f32.gmra.mrb[0].mxu0 %v7292
        %v7294 = vpop.f32.mrb[0].mxu0
        %v7295 = vadd.f32 %v6330, %v7294
        %v7296 = vpop.f32.mrb[0].mxu0
        %v7297 = vadd.f32 %v6332, %v7296
        %7298 = vmatprep.mubr.f32.mxu0 0.0
        %v7299 = vand.u32 %v687, 4294901760
        %7300 = vmatmul.mubr.f32.gmra.mrb[0].mxu0 %v7299
        %v7301 = vpop.f32.mrb[0].mxu0
        %v7302 = vadd.f32 %v6337, %v7301
        %v7303 = vpop.f32.mrb[0].mxu0
        %v7304 = vadd.f32 %v6339, %v7303
        %7305 = vmatprep.mubr.f32.mxu0 0.0
        %v7306 = vand.u32 %v690, 4294901760
        %7307 = vmatmul.mubr.f32.gmra.mrb[0].mxu0 %v7306
        %v7308 = vpop.f32.mrb[0].mxu0
        %v7309 = vadd.f32 %v6344, %v7308
        %v7310 = vpop.f32.mrb[0].mxu0
        %v7311 = vadd.f32 %v6346, %v7310
        %7312 = vmatprep.mubr.f32.mxu0 0.0
        %v7313 = vand.u32 %v693, 4294901760
        %7314 = vmatmul.mubr.f32.gmra.mrb[0].mxu0 %v7313
        %v7315 = vpop.f32.mrb[0].mxu0
        %v7316 = vadd.f32 %v6351, %v7315
        %v7317 = vpop.f32.mrb[0].mxu0
        %v7318 = vadd.f32 %v6353, %v7317
        %7319 = vmatprep.mubr.f32.mxu0 0.0
        %v7320 = vand.u32 %v696, 4294901760
        %7321 = vmatmul.mubr.f32.gmra.mrb[0].mxu0 %v7320
        %v7322 = vpop.f32.mrb[0].mxu0
        %v7323 = vadd.f32 %v6358, %v7322
        %v7324 = vpop.f32.mrb[0].mxu0
        %v7325 = vadd.f32 %v6360, %v7324
        %7326 = vmatprep.mubr.f32.mxu0 0.0
        %v7327 = vand.u32 %v699, 4294901760
        %7328 = vmatmul.mubr.f32.gmra.mrb[0].mxu0 %v7327
        %v7329 = vpop.f32.mrb[0].mxu0
        %v7330 = vadd.f32 %v6365, %v7329
        %v7331 = vpop.f32.mrb[0].mxu0
        %v7332 = vadd.f32 %v6367, %v7331
        %7333 = vmatprep.mubr.f32.mxu0 0.0
        %v7334 = vand.u32 %v702, 4294901760
        %7335 = vmatmul.mubr.f32.gmra.mrb[0].mxu0 %v7334
        %v7336 = vpop.f32.mrb[0].mxu0
        %v7337 = vadd.f32 %v6372, %v7336
        %v7338 = vpop.f32.mrb[0].mxu0
        %v7339 = vadd.f32 %v6374, %v7338
        %7340 = vmatprep.mubr.f32.mxu0 0.0
        %v7341 = vand.u32 %v705, 4294901760
        %7342 = vmatmul.mubr.f32.gmra.mrb[0].mxu0 %v7341
        %v7343 = vpop.f32.mrb[0].mxu0
        %v7344 = vadd.f32 %v6379, %v7343
        %v7345 = vpop.f32.mrb[0].mxu0
        %v7346 = vadd.f32 %v6381, %v7345
        %7347 = vmatprep.mubr.f32.mxu0 0.0
        %v7348 = vand.u32 %v708, 4294901760
        %7349 = vmatmul.mubr.f32.gmra.mrb[0].mxu0 %v7348
        %v7350 = vpop.f32.mrb[0].mxu0
        %v7351 = vadd.f32 %v6386, %v7350
        %v7352 = vpop.f32.mrb[0].mxu0
        %v7353 = vadd.f32 %v6388, %v7352
        %7354 = vmatprep.mubr.f32.mxu0 0.0
        %v7355 = vand.u32 %v711, 4294901760
        %7356 = vmatmul.mubr.f32.gmra.mrb[0].mxu0 %v7355
        %v7357 = vpop.f32.mrb[0].mxu0
        %v7358 = vadd.f32 %v6393, %v7357
        %v7359 = vpop.f32.mrb[0].mxu0
        %v7360 = vadd.f32 %v6395, %v7359
        %7361 = vmatprep.mubr.f32.mxu0 0.0
        %v7362 = vand.u32 %v714, 4294901760
        %7363 = vmatmul.mubr.f32.gmra.mrb[0].mxu0 %v7362
        %v7364 = vpop.f32.mrb[0].mxu0
        %v7365 = vadd.f32 %v6400, %v7364
        %v7366 = vpop.f32.mrb[0].mxu0
        %v7367 = vadd.f32 %v6402, %v7366
        %7368 = vmatprep.mubr.f32.mxu0 0.0
        %v7369 = vand.u32 %v717, 4294901760
        %7370 = vmatmul.mubr.f32.gmra.mrb[0].mxu0 %v7369
        %v7371 = vpop.f32.mrb[0].mxu0
        %v7372 = vadd.f32 %v6407, %v7371
        %v7373 = vpop.f32.mrb[0].mxu0
        %v7374 = vadd.f32 %v6409, %v7373
        %7375 = vmatprep.mubr.f32.mxu0 0.0
        %v7376 = vand.u32 %v720, 4294901760
        %7377 = vmatmul.mubr.f32.gmra.mrb[0].mxu0 %v7376
        %v7378 = vpop.f32.mrb[0].mxu0
        %v7379 = vadd.f32 %v6414, %v7378
        %v7380 = vpop.f32.mrb[0].mxu0
        %v7381 = vadd.f32 %v6416, %v7380
        %7382 = vmatprep.mubr.f32.mxu0 0.0
        %v7383 = vand.u32 %v723, 4294901760
        %7384 = vmatmul.mubr.f32.gmra.mrb[0].mxu0 %v7383
        %v7385 = vpop.f32.mrb[0].mxu0
        %v7386 = vadd.f32 %v6421, %v7385
        %v7387 = vpop.f32.mrb[0].mxu0
        %v7388 = vadd.f32 %v6423, %v7387
        %7389 = vmatprep.mubr.f32.mxu0 0.0
        %v7390 = vand.u32 %v726, 4294901760
        %7391 = vmatmul.mubr.f32.gmra.mrb[0].mxu0 %v7390
        %v7392 = vpop.f32.mrb[0].mxu0
        %v7393 = vadd.f32 %v6428, %v7392
        %v7394 = vpop.f32.mrb[0].mxu0
        %v7395 = vadd.f32 %v6430, %v7394
        %7396 = vmatprep.mubr.f32.mxu0 0.0
        %v7397 = vand.u32 %v729, 4294901760
        %7398 = vmatmul.mubr.f32.gmra.mrb[0].mxu0 %v7397
        %v7399 = vpop.f32.mrb[0].mxu0
        %v7400 = vadd.f32 %v6435, %v7399
        %v7401 = vpop.f32.mrb[0].mxu0
        %v7402 = vadd.f32 %v6437, %v7401
        %7403 = vmatprep.mubr.f32.mxu0 0.0
        %v7404 = vand.u32 %v732, 4294901760
        %7405 = vmatmul.mubr.f32.gmra.mrb[0].mxu0 %v7404
        %v7406 = vpop.f32.mrb[0].mxu0
        %v7407 = vadd.f32 %v6442, %v7406
        %v7408 = vpop.f32.mrb[0].mxu0
        %v7409 = vadd.f32 %v6444, %v7408
        %7410 = vmatprep.mubr.f32.mxu0 0.0
        %v7411 = vand.u32 %v735, 4294901760
        %7412 = vmatmul.mubr.f32.gmra.mrb[0].mxu0 %v7411
        %v7413 = vpop.f32.mrb[0].mxu0
        %v7414 = vadd.f32 %v6449, %v7413
        %v7415 = vpop.f32.mrb[0].mxu0
        %v7416 = vadd.f32 %v6451, %v7415
        %7417 = vmatprep.mubr.f32.mxu0 0.0
        %v7418 = vand.u32 %v738, 4294901760
        %7419 = vmatmul.mubr.f32.gmra.mrb[0].mxu0 %v7418
        %v7420 = vpop.f32.mrb[0].mxu0
        %v7421 = vadd.f32 %v6456, %v7420
        %v7422 = vpop.f32.mrb[0].mxu0
        %v7423 = vadd.f32 %v6458, %v7422
        %7424 = vmatprep.mubr.f32.mxu0 0.0
        %v7425 = vand.u32 %v741, 4294901760
        %7426 = vmatmul.mubr.f32.gmra.mrb[0].mxu0 %v7425
        %v7427 = vpop.f32.mrb[0].mxu0
        %v7428 = vadd.f32 %v6463, %v7427
        %v7429 = vpop.f32.mrb[0].mxu0
        %v7430 = vadd.f32 %v6465, %v7429
        %7431 = vmatprep.mubr.f32.mxu0 0.0
        %v7432 = vand.u32 %v744, 4294901760
        %7433 = vmatmul.mubr.f32.gmra.mrb[0].mxu0 %v7432
        %v7434 = vpop.f32.mrb[0].mxu0
        %v7435 = vadd.f32 %v6470, %v7434
        %v7436 = vpop.f32.mrb[0].mxu0
        %v7437 = vadd.f32 %v6472, %v7436
        %7438 = vmatprep.mubr.f32.mxu0 0.0
        %v7439 = vand.u32 %v747, 4294901760
        %7440 = vmatmul.mubr.f32.gmra.mrb[0].mxu0 %v7439
        %v7441 = vpop.f32.mrb[0].mxu0
        %v7442 = vadd.f32 %v6477, %v7441
        %v7443 = vpop.f32.mrb[0].mxu0
        %v7444 = vadd.f32 %v6479, %v7443
        %7445 = vmatprep.mubr.f32.mxu0 0.0
        %v7446 = vand.u32 %v750, 4294901760
        %7447 = vmatmul.mubr.f32.gmra.mrb[0].mxu0 %v7446
        %v7448 = vpop.f32.mrb[0].mxu0
        %v7449 = vadd.f32 %v6484, %v7448
        %v7450 = vpop.f32.mrb[0].mxu0
        %v7451 = vadd.f32 %v6486, %v7450
        %7452 = vmatprep.mubr.f32.mxu0 0.0
        %v7453 = vand.u32 %v753, 4294901760
        %7454 = vmatmul.mubr.f32.gmra.mrb[0].mxu0 %v7453
        %v7455 = vpop.f32.mrb[0].mxu0
        %v7456 = vadd.f32 %v6491, %v7455
        %v7457 = vpop.f32.mrb[0].mxu0
        %v7458 = vadd.f32 %v6493, %v7457
        %7459 = vmatprep.mubr.f32.mxu0 0.0
        %v7460 = vand.u32 %v756, 4294901760
        %7461 = vmatmul.mubr.f32.gmra.mrb[0].mxu0 %v7460
        %v7462 = vpop.f32.mrb[0].mxu0
        %v7463 = vadd.f32 %v6498, %v7462
        %v7464 = vpop.f32.mrb[0].mxu0
        %v7465 = vadd.f32 %v6500, %v7464
        %7466 = vmatprep.mubr.f32.mxu0 0.0
        %v7467 = vand.u32 %v759, 4294901760
        %7468 = vmatmul.mubr.f32.gmra.mrb[0].mxu0 %v7467
        %v7469 = vpop.f32.mrb[0].mxu0
        %v7470 = vadd.f32 %v6505, %v7469
        %v7471 = vpop.f32.mrb[0].mxu0
        %v7472 = vadd.f32 %v6507, %v7471
        %7473 = vmatprep.mubr.f32.mxu0 0.0
        %v7474 = vand.u32 %v762, 4294901760
        %7475 = vmatmul.mubr.f32.gmra.mrb[0].mxu0 %v7474
        %v7476 = vpop.f32.mrb[0].mxu0
        %v7477 = vadd.f32 %v6512, %v7476
        %v7478 = vpop.f32.mrb[0].mxu0
        %v7479 = vadd.f32 %v6514, %v7478
        %7480 = vmatprep.mubr.f32.mxu0 0.0
        %v7481 = vand.u32 %v765, 4294901760
        %7482 = vmatmul.mubr.f32.gmra.mrb[0].mxu0 %v7481
        %v7483 = vpop.f32.mrb[0].mxu0
        %v7484 = vadd.f32 %v6519, %v7483
        %v7485 = vpop.f32.mrb[0].mxu0
        %v7486 = vadd.f32 %v6521, %v7485
        %7487 = vdwg.mxu0
        %7488 = vst [vmem:[%s222] sm:$0xff] %v6595
        %7489 = vst [vmem:[%s222 + $0x8] sm:$0xff] %v6597
        %7490 = vst [vmem:[%s222 + $0x10] sm:$0xff] %v6602
        %7491 = vst [vmem:[%s222 + $0x18] sm:$0xff] %v6604
        %7492 = vst [vmem:[%s222 + $0x20] sm:$0xff] %v6609
        %7493 = vst [vmem:[%s222 + $0x28] sm:$0xff] %v6611
        %7494 = vst [vmem:[%s222 + $0x30] sm:$0xff] %v6616
        %7495 = vst [vmem:[%s222 + $0x38] sm:$0xff] %v6618
        %7496 = vst [vmem:[%s222 + $0x40] sm:$0xff] %v6623
        %7497 = vst [vmem:[%s222 + $0x48] sm:$0xff] %v6625
        %7498 = vst [vmem:[%s222 + $0x50] sm:$0xff] %v6630
        %7499 = vst [vmem:[%s222 + $0x58] sm:$0xff] %v6632
        %7500 = vst [vmem:[%s222 + $0x60] sm:$0xff] %v6637
        %7501 = vst [vmem:[%s222 + $0x68] sm:$0xff] %v6639
        %7502 = vst [vmem:[%s222 + $0x70] sm:$0xff] %v6644
        %7503 = vst [vmem:[%s222 + $0x78] sm:$0xff] %v6646
        %7504 = vst [vmem:[%s222 + $0x80] sm:$0xff] %v6651
        %7505 = vst [vmem:[%s222 + $0x88] sm:$0xff] %v6653
        %7506 = vst [vmem:[%s222 + $0x90] sm:$0xff] %v6658
        %7507 = vst [vmem:[%s222 + $0x98] sm:$0xff] %v6660
        %7508 = vst [vmem:[%s222 + $0xa0] sm:$0xff] %v6665
        %7509 = vst [vmem:[%s222 + $0xa8] sm:$0xff] %v6667
        %7510 = vst [vmem:[%s222 + $0xb0] sm:$0xff] %v6672
        %7511 = vst [vmem:[%s222 + $0xb8] sm:$0xff] %v6674
        %7512 = vst [vmem:[%s222 + $0xc0] sm:$0xff] %v6679
        %7513 = vst [vmem:[%s222 + $0xc8] sm:$0xff] %v6681
        %7514 = vst [vmem:[%s222 + $0xd0] sm:$0xff] %v6686
        %7515 = vst [vmem:[%s222 + $0xd8] sm:$0xff] %v6688
        %7516 = vst [vmem:[%s222 + $0xe0] sm:$0xff] %v6693
        %7517 = vst [vmem:[%s222 + $0xe8] sm:$0xff] %v6695
        %7518 = vst [vmem:[%s222 + $0xf0] sm:$0xff] %v6700
        %7519 = vst [vmem:[%s222 + $0xf8] sm:$0xff] %v6702
        %7520 = vst [vmem:[%s222 + $0x100] sm:$0xff] %v6707
        %7521 = vst [vmem:[%s222 + $0x108] sm:$0xff] %v6709
        %7522 = vst [vmem:[%s222 + $0x110] sm:$0xff] %v6714
        %7523 = vst [vmem:[%s222 + $0x118] sm:$0xff] %v6716
        %7524 = vst [vmem:[%s222 + $0x120] sm:$0xff] %v6721
        %7525 = vst [vmem:[%s222 + $0x128] sm:$0xff] %v6723
        %7526 = vst [vmem:[%s222 + $0x130] sm:$0xff] %v6728
        %7527 = vst [vmem:[%s222 + $0x138] sm:$0xff] %v6730
        %7528 = vst [vmem:[%s222 + $0x140] sm:$0xff] %v6735
        %7529 = vst [vmem:[%s222 + $0x148] sm:$0xff] %v6737
        %7530 = vst [vmem:[%s222 + $0x150] sm:$0xff] %v6742
        %7531 = vst [vmem:[%s222 + $0x158] sm:$0xff] %v6744
        %7532 = vst [vmem:[%s222 + $0x160] sm:$0xff] %v6749
        %7533 = vst [vmem:[%s222 + $0x168] sm:$0xff] %v6751
        %7534 = vst [vmem:[%s222 + $0x170] sm:$0xff] %v6756
        %7535 = vst [vmem:[%s222 + $0x178] sm:$0xff] %v6758
        %7536 = vst [vmem:[%s222 + $0x180] sm:$0xff] %v6763
        %7537 = vst [vmem:[%s222 + $0x188] sm:$0xff] %v6765
        %7538 = vst [vmem:[%s222 + $0x190] sm:$0xff] %v6770
        %7539 = vst [vmem:[%s222 + $0x198] sm:$0xff] %v6772
        %7540 = vst [vmem:[%s222 + $0x1a0] sm:$0xff] %v6777
        %7541 = vst [vmem:[%s222 + $0x1a8] sm:$0xff] %v6779
        %7542 = vst [vmem:[%s222 + $0x1b0] sm:$0xff] %v6784
        %7543 = vst [vmem:[%s222 + $0x1b8] sm:$0xff] %v6786
        %7544 = vst [vmem:[%s222 + $0x1c0] sm:$0xff] %v6791
        %7545 = vst [vmem:[%s222 + $0x1c8] sm:$0xff] %v6793
        %7546 = vst [vmem:[%s222 + $0x1d0] sm:$0xff] %v6798
        %7547 = vst [vmem:[%s222 + $0x1d8] sm:$0xff] %v6800
        %7548 = vst [vmem:[%s222 + $0x1e0] sm:$0xff] %v6805
        %7549 = vst [vmem:[%s222 + $0x1e8] sm:$0xff] %v6807
        %7550 = vst [vmem:[%s222 + $0x1f0] sm:$0xff] %v6812
        %7551 = vst [vmem:[%s222 + $0x1f8] sm:$0xff] %v6814
        %7552 = vst [vmem:[%s222 + $0x200] sm:$0xff] %v6819
        %7553 = vst [vmem:[%s222 + $0x208] sm:$0xff] %v6821
        %7554 = vst [vmem:[%s222 + $0x210] sm:$0xff] %v6826
        %7555 = vst [vmem:[%s222 + $0x218] sm:$0xff] %v6828
        %7556 = vst [vmem:[%s222 + $0x220] sm:$0xff] %v6833
        %7557 = vst [vmem:[%s222 + $0x228] sm:$0xff] %v6835
        %7558 = vst [vmem:[%s222 + $0x230] sm:$0xff] %v6840
        %7559 = vst [vmem:[%s222 + $0x238] sm:$0xff] %v6842
        %7560 = vst [vmem:[%s222 + $0x240] sm:$0xff] %v6847
        %7561 = vst [vmem:[%s222 + $0x248] sm:$0xff] %v6849
        %7562 = vst [vmem:[%s222 + $0x250] sm:$0xff] %v6854
        %7563 = vst [vmem:[%s222 + $0x258] sm:$0xff] %v6856
        %7564 = vst [vmem:[%s222 + $0x260] sm:$0xff] %v6861
        %7565 = vst [vmem:[%s222 + $0x268] sm:$0xff] %v6863
        %7566 = vst [vmem:[%s222 + $0x270] sm:$0xff] %v6868
        %7567 = vst [vmem:[%s222 + $0x278] sm:$0xff] %v6870
        %7568 = vst [vmem:[%s222 + $0x280] sm:$0xff] %v6875
        %7569 = vst [vmem:[%s222 + $0x288] sm:$0xff] %v6877
        %7570 = vst [vmem:[%s222 + $0x290] sm:$0xff] %v6882
        %7571 = vst [vmem:[%s222 + $0x298] sm:$0xff] %v6884
        %7572 = vst [vmem:[%s222 + $0x2a0] sm:$0xff] %v6889
        %7573 = vst [vmem:[%s222 + $0x2a8] sm:$0xff] %v6891
        %7574 = vst [vmem:[%s222 + $0x2b0] sm:$0xff] %v6896
        %7575 = vst [vmem:[%s222 + $0x2b8] sm:$0xff] %v6898
        %7576 = vst [vmem:[%s222 + $0x2c0] sm:$0xff] %v6903
        %7577 = vst [vmem:[%s222 + $0x2c8] sm:$0xff] %v6905
        %7578 = vst [vmem:[%s222 + $0x2d0] sm:$0xff] %v6910
        %7579 = vst [vmem:[%s222 + $0x2d8] sm:$0xff] %v6912
        %7580 = vst [vmem:[%s222 + $0x2e0] sm:$0xff] %v6917
        %7581 = vst [vmem:[%s222 + $0x2e8] sm:$0xff] %v6919
        %7582 = vst [vmem:[%s222 + $0x2f0] sm:$0xff] %v6924
        %7583 = vst [vmem:[%s222 + $0x2f8] sm:$0xff] %v6926
        %7584 = vst [vmem:[%s222 + $0x300] sm:$0xff] %v6931
        %7585 = vst [vmem:[%s222 + $0x308] sm:$0xff] %v6933
        %7586 = vst [vmem:[%s222 + $0x310] sm:$0xff] %v6938
        %7587 = vst [vmem:[%s222 + $0x318] sm:$0xff] %v6940
        %7588 = vst [vmem:[%s222 + $0x320] sm:$0xff] %v6945
        %7589 = vst [vmem:[%s222 + $0x328] sm:$0xff] %v6947
        %7590 = vst [vmem:[%s222 + $0x330] sm:$0xff] %v6952
        %7591 = vst [vmem:[%s222 + $0x338] sm:$0xff] %v6954
        %7592 = vst [vmem:[%s222 + $0x340] sm:$0xff] %v6959
        %7593 = vst [vmem:[%s222 + $0x348] sm:$0xff] %v6961
        %7594 = vst [vmem:[%s222 + $0x350] sm:$0xff] %v6966
        %7595 = vst [vmem:[%s222 + $0x358] sm:$0xff] %v6968
        %7596 = vst [vmem:[%s222 + $0x360] sm:$0xff] %v6973
        %7597 = vst [vmem:[%s222 + $0x368] sm:$0xff] %v6975
        %7598 = vst [vmem:[%s222 + $0x370] sm:$0xff] %v6980
        %7599 = vst [vmem:[%s222 + $0x378] sm:$0xff] %v6982
        %7600 = vst [vmem:[%s222 + $0x380] sm:$0xff] %v6987
        %7601 = vst [vmem:[%s222 + $0x388] sm:$0xff] %v6989
        %7602 = vst [vmem:[%s222 + $0x390] sm:$0xff] %v6994
        %7603 = vst [vmem:[%s222 + $0x398] sm:$0xff] %v6996
        %7604 = vst [vmem:[%s222 + $0x3a0] sm:$0xff] %v7001
        %7605 = vst [vmem:[%s222 + $0x3a8] sm:$0xff] %v7003
        %7606 = vst [vmem:[%s222 + $0x3b0] sm:$0xff] %v7008
        %7607 = vst [vmem:[%s222 + $0x3b8] sm:$0xff] %v7010
        %7608 = vst [vmem:[%s222 + $0x3c0] sm:$0xff] %v7015
        %7609 = vst [vmem:[%s222 + $0x3c8] sm:$0xff] %v7017
        %7610 = vst [vmem:[%s222 + $0x3d0] sm:$0xff] %v7022
        %7611 = vst [vmem:[%s222 + $0x3d8] sm:$0xff] %v7024
        %7612 = vst [vmem:[%s222 + $0x3e0] sm:$0xff] %v7029
        %7613 = vst [vmem:[%s222 + $0x3e8] sm:$0xff] %v7031
        %7614 = vst [vmem:[%s222 + $0x3f0] sm:$0xff] %v7036
        %7615 = vst [vmem:[%s222 + $0x3f8] sm:$0xff] %v7038
        %7616 = vst [vmem:[%s222 + $0x400] sm:$0xff] %v7043
        %7617 = vst [vmem:[%s222 + $0x408] sm:$0xff] %v7045
        %7618 = vst [vmem:[%s222 + $0x410] sm:$0xff] %v7050
        %7619 = vst [vmem:[%s222 + $0x418] sm:$0xff] %v7052
        %7620 = vst [vmem:[%s222 + $0x420] sm:$0xff] %v7057
        %7621 = vst [vmem:[%s222 + $0x428] sm:$0xff] %v7059
        %7622 = vst [vmem:[%s222 + $0x430] sm:$0xff] %v7064
        %7623 = vst [vmem:[%s222 + $0x438] sm:$0xff] %v7066
        %7624 = vst [vmem:[%s222 + $0x440] sm:$0xff] %v7071
        %7625 = vst [vmem:[%s222 + $0x448] sm:$0xff] %v7073
        %7626 = vst [vmem:[%s222 + $0x450] sm:$0xff] %v7078
        %7627 = vst [vmem:[%s222 + $0x458] sm:$0xff] %v7080
        %7628 = vst [vmem:[%s222 + $0x460] sm:$0xff] %v7085
        %7629 = vst [vmem:[%s222 + $0x468] sm:$0xff] %v7087
        %7630 = vst [vmem:[%s222 + $0x470] sm:$0xff] %v7092
        %7631 = vst [vmem:[%s222 + $0x478] sm:$0xff] %v7094
        %7632 = vst [vmem:[%s222 + $0x480] sm:$0xff] %v7099
        %7633 = vst [vmem:[%s222 + $0x488] sm:$0xff] %v7101
        %7634 = vst [vmem:[%s222 + $0x490] sm:$0xff] %v7106
        %7635 = vst [vmem:[%s222 + $0x498] sm:$0xff] %v7108
        %7636 = vst [vmem:[%s222 + $0x4a0] sm:$0xff] %v7113
        %7637 = vst [vmem:[%s222 + $0x4a8] sm:$0xff] %v7115
        %7638 = vst [vmem:[%s222 + $0x4b0] sm:$0xff] %v7120
        %7639 = vst [vmem:[%s222 + $0x4b8] sm:$0xff] %v7122
        %7640 = vst [vmem:[%s222 + $0x4c0] sm:$0xff] %v7127
        %7641 = vst [vmem:[%s222 + $0x4c8] sm:$0xff] %v7129
        %7642 = vst [vmem:[%s222 + $0x4d0] sm:$0xff] %v7134
        %7643 = vst [vmem:[%s222 + $0x4d8] sm:$0xff] %v7136
        %7644 = vst [vmem:[%s222 + $0x4e0] sm:$0xff] %v7141
        %7645 = vst [vmem:[%s222 + $0x4e8] sm:$0xff] %v7143
        %7646 = vst [vmem:[%s222 + $0x4f0] sm:$0xff] %v7148
        %7647 = vst [vmem:[%s222 + $0x4f8] sm:$0xff] %v7150
        %7648 = vst [vmem:[%s222 + $0x500] sm:$0xff] %v7155
        %7649 = vst [vmem:[%s222 + $0x508] sm:$0xff] %v7157
        %7650 = vst [vmem:[%s222 + $0x510] sm:$0xff] %v7162
        %7651 = vst [vmem:[%s222 + $0x518] sm:$0xff] %v7164
        %7652 = vst [vmem:[%s222 + $0x520] sm:$0xff] %v7169
        %7653 = vst [vmem:[%s222 + $0x528] sm:$0xff] %v7171
        %7654 = vst [vmem:[%s222 + $0x530] sm:$0xff] %v7176
        %7655 = vst [vmem:[%s222 + $0x538] sm:$0xff] %v7178
        %7656 = vst [vmem:[%s222 + $0x540] sm:$0xff] %v7183
        %7657 = vst [vmem:[%s222 + $0x548] sm:$0xff] %v7185
        %7658 = vst [vmem:[%s222 + $0x550] sm:$0xff] %v7190
        %7659 = vst [vmem:[%s222 + $0x558] sm:$0xff] %v7192
        %7660 = vst [vmem:[%s222 + $0x560] sm:$0xff] %v7197
        %7661 = vst [vmem:[%s222 + $0x568] sm:$0xff] %v7199
        %7662 = vst [vmem:[%s222 + $0x570] sm:$0xff] %v7204
        %7663 = vst [vmem:[%s222 + $0x578] sm:$0xff] %v7206
        %7664 = vst [vmem:[%s222 + $0x580] sm:$0xff] %v7211
        %7665 = vst [vmem:[%s222 + $0x588] sm:$0xff] %v7213
        %7666 = vst [vmem:[%s222 + $0x590] sm:$0xff] %v7218
        %7667 = vst [vmem:[%s222 + $0x598] sm:$0xff] %v7220
        %7668 = vst [vmem:[%s222 + $0x5a0] sm:$0xff] %v7225
        %7669 = vst [vmem:[%s222 + $0x5a8] sm:$0xff] %v7227
        %7670 = vst [vmem:[%s222 + $0x5b0] sm:$0xff] %v7232
        %7671 = vst [vmem:[%s222 + $0x5b8] sm:$0xff] %v7234
        %7672 = vst [vmem:[%s222 + $0x5c0] sm:$0xff] %v7239
        %7673 = vst [vmem:[%s222 + $0x5c8] sm:$0xff] %v7241
        %7674 = vst [vmem:[%s222 + $0x5d0] sm:$0xff] %v7246
        %7675 = vst [vmem:[%s222 + $0x5d8] sm:$0xff] %v7248
        %7676 = vst [vmem:[%s222 + $0x5e0] sm:$0xff] %v7253
        %7677 = vst [vmem:[%s222 + $0x5e8] sm:$0xff] %v7255
        %7678 = vst [vmem:[%s222 + $0x5f0] sm:$0xff] %v7260
        %7679 = vst [vmem:[%s222 + $0x5f8] sm:$0xff] %v7262
        %7680 = vst [vmem:[%s222 + $0x600] sm:$0xff] %v7267
        %7681 = vst [vmem:[%s222 + $0x608] sm:$0xff] %v7269
        %7682 = vst [vmem:[%s222 + $0x610] sm:$0xff] %v7274
        %7683 = vst [vmem:[%s222 + $0x618] sm:$0xff] %v7276
        %7684 = vst [vmem:[%s222 + $0x620] sm:$0xff] %v7281
        %7685 = vst [vmem:[%s222 + $0x628] sm:$0xff] %v7283
        %7686 = vst [vmem:[%s222 + $0x630] sm:$0xff] %v7288
        %7687 = vst [vmem:[%s222 + $0x638] sm:$0xff] %v7290
        %7688 = vst [vmem:[%s222 + $0x640] sm:$0xff] %v7295
        %7689 = vst [vmem:[%s222 + $0x648] sm:$0xff] %v7297
        %7690 = vst [vmem:[%s222 + $0x650] sm:$0xff] %v7302
        %7691 = vst [vmem:[%s222 + $0x658] sm:$0xff] %v7304
        %7692 = vst [vmem:[%s222 + $0x660] sm:$0xff] %v7309
        %7693 = vst [vmem:[%s222 + $0x668] sm:$0xff] %v7311
        %7694 = vst [vmem:[%s222 + $0x670] sm:$0xff] %v7316
        %7695 = vst [vmem:[%s222 + $0x678] sm:$0xff] %v7318
        %7696 = vst [vmem:[%s222 + $0x680] sm:$0xff] %v7323
        %7697 = vst [vmem:[%s222 + $0x688] sm:$0xff] %v7325
        %7698 = vst [vmem:[%s222 + $0x690] sm:$0xff] %v7330
        %7699 = vst [vmem:[%s222 + $0x698] sm:$0xff] %v7332
        %7700 = vst [vmem:[%s222 + $0x6a0] sm:$0xff] %v7337
        %7701 = vst [vmem:[%s222 + $0x6a8] sm:$0xff] %v7339
        %7702 = vst [vmem:[%s222 + $0x6b0] sm:$0xff] %v7344
        %7703 = vst [vmem:[%s222 + $0x6b8] sm:$0xff] %v7346
        %7704 = vst [vmem:[%s222 + $0x6c0] sm:$0xff] %v7351
        %7705 = vst [vmem:[%s222 + $0x6c8] sm:$0xff] %v7353
        %7706 = vst [vmem:[%s222 + $0x6d0] sm:$0xff] %v7358
        %7707 = vst [vmem:[%s222 + $0x6d8] sm:$0xff] %v7360
        %7708 = vst [vmem:[%s222 + $0x6e0] sm:$0xff] %v7365
        %7709 = vst [vmem:[%s222 + $0x6e8] sm:$0xff] %v7367
        %7710 = vst [vmem:[%s222 + $0x6f0] sm:$0xff] %v7372
        %7711 = vst [vmem:[%s222 + $0x6f8] sm:$0xff] %v7374
        %7712 = vst [vmem:[%s222 + $0x700] sm:$0xff] %v7379
        %7713 = vst [vmem:[%s222 + $0x708] sm:$0xff] %v7381
        %7714 = vst [vmem:[%s222 + $0x710] sm:$0xff] %v7386
        %7715 = vst [vmem:[%s222 + $0x718] sm:$0xff] %v7388
        %7716 = vst [vmem:[%s222 + $0x720] sm:$0xff] %v7393
        %7717 = vst [vmem:[%s222 + $0x728] sm:$0xff] %v7395
        %7718 = vst [vmem:[%s222 + $0x730] sm:$0xff] %v7400
        %7719 = vst [vmem:[%s222 + $0x738] sm:$0xff] %v7402
        %7720 = vst [vmem:[%s222 + $0x740] sm:$0xff] %v7407
        %7721 = vst [vmem:[%s222 + $0x748] sm:$0xff] %v7409
        %7722 = vst [vmem:[%s222 + $0x750] sm:$0xff] %v7414
        %7723 = vst [vmem:[%s222 + $0x758] sm:$0xff] %v7416
        %7724 = vst [vmem:[%s222 + $0x760] sm:$0xff] %v7421
        %7725 = vst [vmem:[%s222 + $0x768] sm:$0xff] %v7423
        %7726 = vst [vmem:[%s222 + $0x770] sm:$0xff] %v7428
        %7727 = vst [vmem:[%s222 + $0x778] sm:$0xff] %v7430
        %7728 = vst [vmem:[%s222 + $0x780] sm:$0xff] %v7435
        %7729 = vst [vmem:[%s222 + $0x788] sm:$0xff] %v7437
        %7730 = vst [vmem:[%s222 + $0x790] sm:$0xff] %v7442
        %7731 = vst [vmem:[%s222 + $0x798] sm:$0xff] %v7444
        %7732 = vst [vmem:[%s222 + $0x7a0] sm:$0xff] %v7449
        %7733 = vst [vmem:[%s222 + $0x7a8] sm:$0xff] %v7451
        %7734 = vst [vmem:[%s222 + $0x7b0] sm:$0xff] %v7456
        %7735 = vst [vmem:[%s222 + $0x7b8] sm:$0xff] %v7458
        %7736 = vst [vmem:[%s222 + $0x7c0] sm:$0xff] %v7463
        %7737 = vst [vmem:[%s222 + $0x7c8] sm:$0xff] %v7465
        %7738 = vst [vmem:[%s222 + $0x7d0] sm:$0xff] %v7470
        %7739 = vst [vmem:[%s222 + $0x7d8] sm:$0xff] %v7472
        %7740 = vst [vmem:[%s222 + $0x7e0] sm:$0xff] %v7477
        %7741 = vst [vmem:[%s222 + $0x7e8] sm:$0xff] %v7479
        %7742 = vst [vmem:[%s222 + $0x7f0] sm:$0xff] %v7484
        %7743 = vst [vmem:[%s222 + $0x7f8] sm:$0xff] %v7486
        %v7744 = vld [vmem:[#allocation2] sm:$0x3]
        %v7745 = vmax.f32 %v6595, %v6609
        %v7746 = vmax.f32 %v6602, %v6616
        %v7747 = vmax.f32 %v7745, %v6623
        %v7748 = vmax.f32 %v7746, %v6630
        %v7749 = vmax.f32 %v7747, %v6637
        %v7750 = vmax.f32 %v7748, %v6644
        %v7751 = vmax.f32 %v7749, %v6651
        %v7752 = vmax.f32 %v7750, %v6658
        %v7753 = vmax.f32 %v7751, %v6665
        %v7754 = vmax.f32 %v7752, %v6672
        %v7755 = vmax.f32 %v7753, %v6679
        %v7756 = vmax.f32 %v7754, %v6686
        %v7757 = vmax.f32 %v7755, %v6693
        %v7758 = vmax.f32 %v7756, %v6700
        %v7759 = vmax.f32 %v7757, %v6707
        %v7760 = vmax.f32 %v7758, %v6714
        %v7761 = vmax.f32 %v7759, %v6721
        %v7762 = vmax.f32 %v7760, %v6728
        %v7763 = vmax.f32 %v7761, %v6735
        %v7764 = vmax.f32 %v7762, %v6742
        %v7765 = vmax.f32 %v7763, %v6749
        %v7766 = vmax.f32 %v7764, %v6756
        %v7767 = vmax.f32 %v7765, %v6763
        %v7768 = vmax.f32 %v7766, %v6770
        %v7769 = vmax.f32 %v7767, %v6777
        %v7770 = vmax.f32 %v7768, %v6784
        %v7771 = vmax.f32 %v7769, %v6791
        %v7772 = vmax.f32 %v7770, %v6798
        %v7773 = vmax.f32 %v7771, %v6805
        %v7774 = vmax.f32 %v7772, %v6812
        %v7775 = vmax.f32 %v7773, %v6819
        %v7776 = vmax.f32 %v7774, %v6826
        %v7777 = vmax.f32 %v7775, %v6833
        %v7778 = vmax.f32 %v7776, %v6840
        %v7779 = vmax.f32 %v7777, %v6847
        %v7780 = vmax.f32 %v7778, %v6854
        %v7781 = vmax.f32 %v7779, %v6861
        %v7782 = vmax.f32 %v7780, %v6868
        %v7783 = vmax.f32 %v7781, %v6875
        %v7784 = vmax.f32 %v7782, %v6882
        %v7785 = vmax.f32 %v7783, %v6889
        %v7786 = vmax.f32 %v7784, %v6896
        %v7787 = vmax.f32 %v7785, %v6903
        %v7788 = vmax.f32 %v7786, %v6910
        %v7789 = vmax.f32 %v7787, %v6917
        %v7790 = vmax.f32 %v7788, %v6924
        %v7791 = vmax.f32 %v7789, %v6931
        %v7792 = vmax.f32 %v7790, %v6938
        %v7793 = vmax.f32 %v7791, %v6945
        %v7794 = vmax.f32 %v7792, %v6952
        %v7795 = vmax.f32 %v7793, %v6959
        %v7796 = vmax.f32 %v7794, %v6966
        %v7797 = vmax.f32 %v7795, %v6973
        %v7798 = vmax.f32 %v7796, %v6980
        %v7799 = vmax.f32 %v7797, %v6987
        %v7800 = vmax.f32 %v7798, %v6994
        %v7801 = vmax.f32 %v7799, %v7001
        %v7802 = vmax.f32 %v7800, %v7008
        %v7803 = vmax.f32 %v7801, %v7015
        %v7804 = vmax.f32 %v7802, %v7022
        %v7805 = vmax.f32 %v7803, %v7029
        %v7806 = vmax.f32 %v7804, %v7036
        %v7807 = vmax.f32 %v7805, %v7043
        %v7808 = vmax.f32 %v7806, %v7050
        %v7809 = vmax.f32 %v7807, %v7057
        %v7810 = vmax.f32 %v7808, %v7064
        %v7811 = vmax.f32 %v7809, %v7071
        %v7812 = vmax.f32 %v7810, %v7078
        %v7813 = vmax.f32 %v7811, %v7085
        %v7814 = vmax.f32 %v7812, %v7092
        %v7815 = vmax.f32 %v7813, %v7099
        %v7816 = vmax.f32 %v7814, %v7106
        %v7817 = vmax.f32 %v7815, %v7113
        %v7818 = vmax.f32 %v7816, %v7120
        %v7819 = vmax.f32 %v7817, %v7127
        %v7820 = vmax.f32 %v7818, %v7134
        %v7821 = vmax.f32 %v7819, %v7141
        %v7822 = vmax.f32 %v7820, %v7148
        %v7823 = vmax.f32 %v7821, %v7155
        %v7824 = vmax.f32 %v7822, %v7162
        %v7825 = vmax.f32 %v7823, %v7169
        %v7826 = vmax.f32 %v7824, %v7176
        %v7827 = vmax.f32 %v7825, %v7183
        %v7828 = vmax.f32 %v7826, %v7190
        %v7829 = vmax.f32 %v7827, %v7197
        %v7830 = vmax.f32 %v7828, %v7204
        %v7831 = vmax.f32 %v7829, %v7211
        %v7832 = vmax.f32 %v7830, %v7218
        %v7833 = vmax.f32 %v7831, %v7225
        %v7834 = vmax.f32 %v7832, %v7232
        %v7835 = vmax.f32 %v7833, %v7239
        %v7836 = vmax.f32 %v7834, %v7246
        %v7837 = vmax.f32 %v7835, %v7253
        %v7838 = vmax.f32 %v7836, %v7260
        %v7839 = vmax.f32 %v7837, %v7267
        %v7840 = vmax.f32 %v7838, %v7274
        %v7841 = vmax.f32 %v7839, %v7281
        %v7842 = vmax.f32 %v7840, %v7288
        %v7843 = vmax.f32 %v7841, %v7295
        %v7844 = vmax.f32 %v7842, %v7302
        %v7845 = vmax.f32 %v7843, %v7309
        %v7846 = vmax.f32 %v7844, %v7316
        %v7847 = vmax.f32 %v7845, %v7323
        %v7848 = vmax.f32 %v7846, %v7330
        %v7849 = vmax.f32 %v7847, %v7337
        %v7850 = vmax.f32 %v7848, %v7344
        %v7851 = vmax.f32 %v7849, %v7351
        %v7852 = vmax.f32 %v7850, %v7358
        %v7853 = vmax.f32 %v7851, %v7365
        %v7854 = vmax.f32 %v7852, %v7372
        %v7855 = vmax.f32 %v7853, %v7379
        %v7856 = vmax.f32 %v7854, %v7386
        %v7857 = vmax.f32 %v7855, %v7393
        %v7858 = vmax.f32 %v7856, %v7400
        %v7859 = vmax.f32 %v7857, %v7407
        %v7860 = vmax.f32 %v7858, %v7414
        %v7861 = vmax.f32 %v7859, %v7421
        %v7862 = vmax.f32 %v7860, %v7428
        %v7863 = vmax.f32 %v7861, %v7435
        %v7864 = vmax.f32 %v7862, %v7442
        %v7865 = vmax.f32 %v7863, %v7449
        %v7866 = vmax.f32 %v7864, %v7456
        %v7867 = vmax.f32 %v7865, %v7463
        %v7868 = vmax.f32 %v7866, %v7470
        %v7869 = vmax.f32 %v7867, %v7477
        %v7870 = vmax.f32 %v7868, %v7484
        %v7871 = vmax.f32 %v7869, %v7870
        %v7872 = vrot.slane %v7871, 4
        %v7873 = vmax.f32 %v7871, %v7872
        %v7874 = vrot.slane %v7873, 2
        %v7875 = vmax.f32 %v7873, %v7874
        %v7876 = vrot.slane %v7875, 1
        %v7877 = vmax.f32 %v7875, %v7876
        %v7878 = vmax.f32 %v6597, %v6611
        %v7879 = vmax.f32 %v6604, %v6618
        %v7880 = vmax.f32 %v7878, %v6625
        %v7881 = vmax.f32 %v7879, %v6632
        %v7882 = vmax.f32 %v7880, %v6639
        %v7883 = vmax.f32 %v7881, %v6646
        %v7884 = vmax.f32 %v7882, %v6653
        %v7885 = vmax.f32 %v7883, %v6660
        %v7886 = vmax.f32 %v7884, %v6667
        %v7887 = vmax.f32 %v7885, %v6674
        %v7888 = vmax.f32 %v7886, %v6681
        %v7889 = vmax.f32 %v7887, %v6688
        %v7890 = vmax.f32 %v7888, %v6695
        %v7891 = vmax.f32 %v7889, %v6702
        %v7892 = vmax.f32 %v7890, %v6709
        %v7893 = vmax.f32 %v7891, %v6716
        %v7894 = vmax.f32 %v7892, %v6723
        %v7895 = vmax.f32 %v7893, %v6730
        %v7896 = vmax.f32 %v7894, %v6737
        %v7897 = vmax.f32 %v7895, %v6744
        %v7898 = vmax.f32 %v7896, %v6751
        %v7899 = vmax.f32 %v7897, %v6758
        %v7900 = vmax.f32 %v7898, %v6765
        %v7901 = vmax.f32 %v7899, %v6772
        %v7902 = vmax.f32 %v7900, %v6779
        %v7903 = vmax.f32 %v7901, %v6786
        %v7904 = vmax.f32 %v7902, %v6793
        %v7905 = vmax.f32 %v7903, %v6800
        %v7906 = vmax.f32 %v7904, %v6807
        %v7907 = vmax.f32 %v7905, %v6814
        %v7908 = vmax.f32 %v7906, %v6821
        %v7909 = vmax.f32 %v7907, %v6828
        %v7910 = vmax.f32 %v7908, %v6835
        %v7911 = vmax.f32 %v7909, %v6842
        %v7912 = vmax.f32 %v7910, %v6849
        %v7913 = vmax.f32 %v7911, %v6856
        %v7914 = vmax.f32 %v7912, %v6863
        %v7915 = vmax.f32 %v7913, %v6870
        %v7916 = vmax.f32 %v7914, %v6877
        %v7917 = vmax.f32 %v7915, %v6884
        %v7918 = vmax.f32 %v7916, %v6891
        %v7919 = vmax.f32 %v7917, %v6898
        %v7920 = vmax.f32 %v7918, %v6905
        %v7921 = vmax.f32 %v7919, %v6912
        %v7922 = vmax.f32 %v7920, %v6919
        %v7923 = vmax.f32 %v7921, %v6926
        %v7924 = vmax.f32 %v7922, %v6933
        %v7925 = vmax.f32 %v7923, %v6940
        %v7926 = vmax.f32 %v7924, %v6947
        %v7927 = vmax.f32 %v7925, %v6954
        %v7928 = vmax.f32 %v7926, %v6961
        %v7929 = vmax.f32 %v7927, %v6968
        %v7930 = vmax.f32 %v7928, %v6975
        %v7931 = vmax.f32 %v7929, %v6982
        %v7932 = vmax.f32 %v7930, %v6989
        %v7933 = vmax.f32 %v7931, %v6996
        %v7934 = vmax.f32 %v7932, %v7003
        %v7935 = vmax.f32 %v7933, %v7010
        %v7936 = vmax.f32 %v7934, %v7017
        %v7937 = vmax.f32 %v7935, %v7024
        %v7938 = vmax.f32 %v7936, %v7031
        %v7939 = vmax.f32 %v7937, %v7038
        %v7940 = vmax.f32 %v7938, %v7045
        %v7941 = vmax.f32 %v7939, %v7052
        %v7942 = vmax.f32 %v7940, %v7059
        %v7943 = vmax.f32 %v7941, %v7066
        %v7944 = vmax.f32 %v7942, %v7073
        %v7945 = vmax.f32 %v7943, %v7080
        %v7946 = vmax.f32 %v7944, %v7087
        %v7947 = vmax.f32 %v7945, %v7094
        %v7948 = vmax.f32 %v7946, %v7101
        %v7949 = vmax.f32 %v7947, %v7108
        %v7950 = vmax.f32 %v7948, %v7115
        %v7951 = vmax.f32 %v7949, %v7122
        %v7952 = vmax.f32 %v7950, %v7129
        %v7953 = vmax.f32 %v7951, %v7136
        %v7954 = vmax.f32 %v7952, %v7143
        %v7955 = vmax.f32 %v7953, %v7150
        %v7956 = vmax.f32 %v7954, %v7157
        %v7957 = vmax.f32 %v7955, %v7164
        %v7958 = vmax.f32 %v7956, %v7171
        %v7959 = vmax.f32 %v7957, %v7178
        %v7960 = vmax.f32 %v7958, %v7185
        %v7961 = vmax.f32 %v7959, %v7192
        %v7962 = vmax.f32 %v7960, %v7199
        %v7963 = vmax.f32 %v7961, %v7206
        %v7964 = vmax.f32 %v7962, %v7213
        %v7965 = vmax.f32 %v7963, %v7220
        %v7966 = vmax.f32 %v7964, %v7227
        %v7967 = vmax.f32 %v7965, %v7234
        %v7968 = vmax.f32 %v7966, %v7241
        %v7969 = vmax.f32 %v7967, %v7248
        %v7970 = vmax.f32 %v7968, %v7255
        %v7971 = vmax.f32 %v7969, %v7262
        %v7972 = vmax.f32 %v7970, %v7269
        %v7973 = vmax.f32 %v7971, %v7276
        %v7974 = vmax.f32 %v7972, %v7283
        %v7975 = vmax.f32 %v7973, %v7290
        %v7976 = vmax.f32 %v7974, %v7297
        %v7977 = vmax.f32 %v7975, %v7304
        %v7978 = vmax.f32 %v7976, %v7311
        %v7979 = vmax.f32 %v7977, %v7318
        %v7980 = vmax.f32 %v7978, %v7325
        %v7981 = vmax.f32 %v7979, %v7332
        %v7982 = vmax.f32 %v7980, %v7339
        %v7983 = vmax.f32 %v7981, %v7346
        %v7984 = vmax.f32 %v7982, %v7353
        %v7985 = vmax.f32 %v7983, %v7360
        %v7986 = vmax.f32 %v7984, %v7367
        %v7987 = vmax.f32 %v7985, %v7374
        %v7988 = vmax.f32 %v7986, %v7381
        %v7989 = vmax.f32 %v7987, %v7388
        %v7990 = vmax.f32 %v7988, %v7395
        %v7991 = vmax.f32 %v7989, %v7402
        %v7992 = vmax.f32 %v7990, %v7409
        %v7993 = vmax.f32 %v7991, %v7416
        %v7994 = vmax.f32 %v7992, %v7423
        %v7995 = vmax.f32 %v7993, %v7430
        %v7996 = vmax.f32 %v7994, %v7437
        %v7997 = vmax.f32 %v7995, %v7444
        %v7998 = vmax.f32 %v7996, %v7451
        %v7999 = vmax.f32 %v7997, %v7458
        %v8000 = vmax.f32 %v7998, %v7465
        %v8001 = vmax.f32 %v7999, %v7472
        %v8002 = vmax.f32 %v8000, %v7479
        %v8003 = vmax.f32 %v8001, %v7486
        %v8004 = vmax.f32 %v8002, %v8003
        %v8005 = vrot.slane %v8004, 4
        %v8006 = vmax.f32 %v8004, %v8005
        %v8007 = vrot.slane %v8006, 2
        %v8008 = vmax.f32 %v8006, %v8007
        %v8009 = vrot.slane %v8008, 1
        %v8010 = vmax.f32 %v8008, %v8009
        %v8013 = vcombine.low %v7877, %v8010
        %v8015 = vunpack.c.l.s4 1966171168
        %v8016 = vunpack.c.0.s8 %v8015
        %v8017 = vlaneseq
        %v8018 = vshrl.u32 %v8017, 7
        %v8019 = vsub.s32 %v8016, %v8018
        %v8020 = vrot.slane %v8013, %v8019
        %v8022 = vunpack.c.l.s4 1966171168
        %v8023 = vunpack.c.0.s8 %v8022
        %v8024 = vlaneseq
        %v8025 = vshrl.u32 %v8024, 7
        %v8026 = vsub.s32 %v8023, %v8025
        %v8027 = vrot.slane %v8020, %v8026
        %v8029 = vmax.f32 %v7744, %v8027
        %v8030 = vld [vmem:[#allocation3] sm:$0x3]
        %v8031 = vsub.f32 %v7744, %v8029
        %v8032 = vmul.f32 %v8031, 1.442695
        %v8033 = vpow.pop %v8032
        %v8034 = vmul.f32 %v8030, %v8033
        %v8036 = vlaneseq
        %v8037 = vshrl.u32 %v8036, 7
        %v8038 = vsub.s32 0, %v8037
        %v8039 = vrot.slane %v8029, %v8038
        %v8040 = vlaneseq
        %v8041 = vshrl.u32 %v8040, 7
        %v8042 = vsub.s32 1, %v8041
        %v8043 = vrot.slane %v8029, %v8042
        %v8046 = vsub.f32 %v6595, %v8039
        %v8047 = vsub.f32 %v6597, %v8043
        %v8048 = vsub.f32 %v6602, %v8039
        %v8049 = vsub.f32 %v6604, %v8043
        %v8050 = vsub.f32 %v6609, %v8039
        %v8051 = vsub.f32 %v6611, %v8043
        %v8052 = vsub.f32 %v6616, %v8039
        %v8053 = vsub.f32 %v6618, %v8043
        %v8054 = vsub.f32 %v6623, %v8039
        %v8055 = vsub.f32 %v6625, %v8043
        %v8056 = vsub.f32 %v6630, %v8039
        %v8057 = vsub.f32 %v6632, %v8043
        %v8058 = vsub.f32 %v6637, %v8039
        %v8059 = vsub.f32 %v6639, %v8043
        %v8060 = vsub.f32 %v6644, %v8039
        %v8061 = vsub.f32 %v6646, %v8043
        %v8062 = vsub.f32 %v6651, %v8039
        %v8063 = vsub.f32 %v6653, %v8043
        %v8064 = vsub.f32 %v6658, %v8039
        %v8065 = vsub.f32 %v6660, %v8043
        %v8066 = vsub.f32 %v6665, %v8039
        %v8067 = vsub.f32 %v6667, %v8043
        %v8068 = vsub.f32 %v6672, %v8039
        %v8069 = vsub.f32 %v6674, %v8043
        %v8070 = vsub.f32 %v6679, %v8039
        %v8071 = vsub.f32 %v6681, %v8043
        %v8072 = vsub.f32 %v6686, %v8039
        %v8073 = vsub.f32 %v6688, %v8043
        %v8074 = vsub.f32 %v6693, %v8039
        %v8075 = vsub.f32 %v6695, %v8043
        %v8076 = vsub.f32 %v6700, %v8039
        %v8077 = vsub.f32 %v6702, %v8043
        %v8078 = vsub.f32 %v6707, %v8039
        %v8079 = vsub.f32 %v6709, %v8043
        %v8080 = vsub.f32 %v6714, %v8039
        %v8081 = vsub.f32 %v6716, %v8043
        %v8082 = vsub.f32 %v6721, %v8039
        %v8083 = vsub.f32 %v6723, %v8043
        %v8084 = vsub.f32 %v6728, %v8039
        %v8085 = vsub.f32 %v6730, %v8043
        %v8086 = vsub.f32 %v6735, %v8039
        %v8087 = vsub.f32 %v6737, %v8043
        %v8088 = vsub.f32 %v6742, %v8039
        %v8089 = vsub.f32 %v6744, %v8043
        %v8090 = vsub.f32 %v6749, %v8039
        %v8091 = vsub.f32 %v6751, %v8043
        %v8092 = vsub.f32 %v6756, %v8039
        %v8093 = vsub.f32 %v6758, %v8043
        %v8094 = vsub.f32 %v6763, %v8039
        %v8095 = vsub.f32 %v6765, %v8043
        %v8096 = vsub.f32 %v6770, %v8039
        %v8097 = vsub.f32 %v6772, %v8043
        %v8098 = vsub.f32 %v6777, %v8039
        %v8099 = vsub.f32 %v6779, %v8043
        %v8100 = vsub.f32 %v6784, %v8039
        %v8101 = vsub.f32 %v6786, %v8043
        %v8102 = vsub.f32 %v6791, %v8039
        %v8103 = vsub.f32 %v6793, %v8043
        %v8104 = vsub.f32 %v6798, %v8039
        %v8105 = vsub.f32 %v6800, %v8043
        %v8106 = vsub.f32 %v6805, %v8039
        %v8107 = vsub.f32 %v6807, %v8043
        %v8108 = vsub.f32 %v6812, %v8039
        %v8109 = vsub.f32 %v6814, %v8043
        %v8110 = vsub.f32 %v6819, %v8039
        %v8111 = vsub.f32 %v6821, %v8043
        %v8112 = vsub.f32 %v6826, %v8039
        %v8113 = vsub.f32 %v6828, %v8043
        %v8114 = vsub.f32 %v6833, %v8039
        %v8115 = vsub.f32 %v6835, %v8043
        %v8116 = vsub.f32 %v6840, %v8039
        %v8117 = vsub.f32 %v6842, %v8043
        %v8118 = vsub.f32 %v6847, %v8039
        %v8119 = vsub.f32 %v6849, %v8043
        %v8120 = vsub.f32 %v6854, %v8039
        %v8121 = vsub.f32 %v6856, %v8043
        %v8122 = vsub.f32 %v6861, %v8039
        %v8123 = vsub.f32 %v6863, %v8043
        %v8124 = vsub.f32 %v6868, %v8039
        %v8125 = vsub.f32 %v6870, %v8043
        %v8126 = vsub.f32 %v6875, %v8039
        %v8127 = vsub.f32 %v6877, %v8043
        %v8128 = vsub.f32 %v6882, %v8039
        %v8129 = vsub.f32 %v6884, %v8043
        %v8130 = vsub.f32 %v6889, %v8039
        %v8131 = vsub.f32 %v6891, %v8043
        %v8132 = vsub.f32 %v6896, %v8039
        %v8133 = vsub.f32 %v6898, %v8043
        %v8134 = vsub.f32 %v6903, %v8039
        %v8135 = vsub.f32 %v6905, %v8043
        %v8136 = vsub.f32 %v6910, %v8039
        %v8137 = vsub.f32 %v6912, %v8043
        %v8138 = vsub.f32 %v6917, %v8039
        %v8139 = vsub.f32 %v6919, %v8043
        %v8140 = vsub.f32 %v6924, %v8039
        %v8141 = vsub.f32 %v6926, %v8043
        %v8142 = vsub.f32 %v6931, %v8039
        %v8143 = vsub.f32 %v6933, %v8043
        %v8144 = vsub.f32 %v6938, %v8039
        %v8145 = vsub.f32 %v6940, %v8043
        %v8146 = vsub.f32 %v6945, %v8039
        %v8147 = vsub.f32 %v6947, %v8043
        %v8148 = vsub.f32 %v6952, %v8039
        %v8149 = vsub.f32 %v6954, %v8043
        %v8150 = vsub.f32 %v6959, %v8039
        %v8151 = vsub.f32 %v6961, %v8043
        %v8152 = vsub.f32 %v6966, %v8039
        %v8153 = vsub.f32 %v6968, %v8043
        %v8154 = vsub.f32 %v6973, %v8039
        %v8155 = vsub.f32 %v6975, %v8043
        %v8156 = vsub.f32 %v6980, %v8039
        %v8157 = vsub.f32 %v6982, %v8043
        %v8158 = vsub.f32 %v6987, %v8039
        %v8159 = vsub.f32 %v6989, %v8043
        %v8160 = vsub.f32 %v6994, %v8039
        %v8161 = vsub.f32 %v6996, %v8043
        %v8162 = vsub.f32 %v7001, %v8039
        %v8163 = vsub.f32 %v7003, %v8043
        %v8164 = vsub.f32 %v7008, %v8039
        %v8165 = vsub.f32 %v7010, %v8043
        %v8166 = vsub.f32 %v7015, %v8039
        %v8167 = vsub.f32 %v7017, %v8043
        %v8168 = vsub.f32 %v7022, %v8039
        %v8169 = vsub.f32 %v7024, %v8043
        %v8170 = vsub.f32 %v7029, %v8039
        %v8171 = vsub.f32 %v7031, %v8043
        %v8172 = vsub.f32 %v7036, %v8039
        %v8173 = vsub.f32 %v7038, %v8043
        %v8174 = vsub.f32 %v7043, %v8039
        %v8175 = vsub.f32 %v7045, %v8043
        %v8176 = vsub.f32 %v7050, %v8039
        %v8177 = vsub.f32 %v7052, %v8043
        %v8178 = vsub.f32 %v7057, %v8039
        %v8179 = vsub.f32 %v7059, %v8043
        %v8180 = vsub.f32 %v7064, %v8039
        %v8181 = vsub.f32 %v7066, %v8043
        %v8182 = vsub.f32 %v7071, %v8039
        %v8183 = vsub.f32 %v7073, %v8043
        %v8184 = vsub.f32 %v7078, %v8039
        %v8185 = vsub.f32 %v7080, %v8043
        %v8186 = vsub.f32 %v7085, %v8039
        %v8187 = vsub.f32 %v7087, %v8043
        %v8188 = vsub.f32 %v7092, %v8039
        %v8189 = vsub.f32 %v7094, %v8043
        %v8190 = vsub.f32 %v7099, %v8039
        %v8191 = vsub.f32 %v7101, %v8043
        %v8192 = vsub.f32 %v7106, %v8039
        %v8193 = vsub.f32 %v7108, %v8043
        %v8194 = vsub.f32 %v7113, %v8039
        %v8195 = vsub.f32 %v7115, %v8043
        %v8196 = vsub.f32 %v7120, %v8039
        %v8197 = vsub.f32 %v7122, %v8043
        %v8198 = vsub.f32 %v7127, %v8039
        %v8199 = vsub.f32 %v7129, %v8043
        %v8200 = vsub.f32 %v7134, %v8039
        %v8201 = vsub.f32 %v7136, %v8043
        %v8202 = vsub.f32 %v7141, %v8039
        %v8203 = vsub.f32 %v7143, %v8043
        %v8204 = vsub.f32 %v7148, %v8039
        %v8205 = vsub.f32 %v7150, %v8043
        %v8206 = vsub.f32 %v7155, %v8039
        %v8207 = vsub.f32 %v7157, %v8043
        %v8208 = vsub.f32 %v7162, %v8039
        %v8209 = vsub.f32 %v7164, %v8043
        %v8210 = vsub.f32 %v7169, %v8039
        %v8211 = vsub.f32 %v7171, %v8043
        %v8212 = vsub.f32 %v7176, %v8039
        %v8213 = vsub.f32 %v7178, %v8043
        %v8214 = vsub.f32 %v7183, %v8039
        %v8215 = vsub.f32 %v7185, %v8043
        %v8216 = vsub.f32 %v7190, %v8039
        %v8217 = vsub.f32 %v7192, %v8043
        %v8218 = vsub.f32 %v7197, %v8039
        %v8219 = vsub.f32 %v7199, %v8043
        %v8220 = vsub.f32 %v7204, %v8039
        %v8221 = vsub.f32 %v7206, %v8043
        %v8222 = vsub.f32 %v7211, %v8039
        %v8223 = vsub.f32 %v7213, %v8043
        %v8224 = vsub.f32 %v7218, %v8039
        %v8225 = vsub.f32 %v7220, %v8043
        %v8226 = vsub.f32 %v7225, %v8039
        %v8227 = vsub.f32 %v7227, %v8043
        %v8228 = vsub.f32 %v7232, %v8039
        %v8229 = vsub.f32 %v7234, %v8043
        %v8230 = vsub.f32 %v7239, %v8039
        %v8231 = vsub.f32 %v7241, %v8043
        %v8232 = vsub.f32 %v7246, %v8039
        %v8233 = vsub.f32 %v7248, %v8043
        %v8234 = vsub.f32 %v7253, %v8039
        %v8235 = vsub.f32 %v7255, %v8043
        %v8236 = vsub.f32 %v7260, %v8039
        %v8237 = vsub.f32 %v7262, %v8043
        %v8238 = vsub.f32 %v7267, %v8039
        %v8239 = vsub.f32 %v7269, %v8043
        %v8240 = vsub.f32 %v7274, %v8039
        %v8241 = vsub.f32 %v7276, %v8043
        %v8242 = vsub.f32 %v7281, %v8039
        %v8243 = vsub.f32 %v7283, %v8043
        %v8244 = vsub.f32 %v7288, %v8039
        %v8245 = vsub.f32 %v7290, %v8043
        %v8246 = vsub.f32 %v7295, %v8039
        %v8247 = vsub.f32 %v7297, %v8043
        %v8248 = vsub.f32 %v7302, %v8039
        %v8249 = vsub.f32 %v7304, %v8043
        %v8250 = vsub.f32 %v7309, %v8039
        %v8251 = vsub.f32 %v7311, %v8043
        %v8252 = vsub.f32 %v7316, %v8039
        %v8253 = vsub.f32 %v7318, %v8043
        %v8254 = vsub.f32 %v7323, %v8039
        %v8255 = vsub.f32 %v7325, %v8043
        %v8256 = vsub.f32 %v7330, %v8039
        %v8257 = vsub.f32 %v7332, %v8043
        %v8258 = vsub.f32 %v7337, %v8039
        %v8259 = vsub.f32 %v7339, %v8043
        %v8260 = vsub.f32 %v7344, %v8039
        %v8261 = vsub.f32 %v7346, %v8043
        %v8262 = vsub.f32 %v7351, %v8039
        %v8263 = vsub.f32 %v7353, %v8043
        %v8264 = vsub.f32 %v7358, %v8039
        %v8265 = vsub.f32 %v7360, %v8043
        %v8266 = vsub.f32 %v7365, %v8039
        %v8267 = vsub.f32 %v7367, %v8043
        %v8268 = vsub.f32 %v7372, %v8039
        %v8269 = vsub.f32 %v7374, %v8043
        %v8270 = vsub.f32 %v7379, %v8039
        %v8271 = vsub.f32 %v7381, %v8043
        %v8272 = vsub.f32 %v7386, %v8039
        %v8273 = vsub.f32 %v7388, %v8043
        %v8274 = vsub.f32 %v7393, %v8039
        %v8275 = vsub.f32 %v7395, %v8043
        %v8276 = vsub.f32 %v7400, %v8039
        %v8277 = vsub.f32 %v7402, %v8043
        %v8278 = vsub.f32 %v7407, %v8039
        %v8279 = vsub.f32 %v7409, %v8043
        %v8280 = vsub.f32 %v7414, %v8039
        %v8281 = vsub.f32 %v7416, %v8043
        %v8282 = vsub.f32 %v7421, %v8039
        %v8283 = vsub.f32 %v7423, %v8043
        %v8284 = vsub.f32 %v7428, %v8039
        %v8285 = vsub.f32 %v7430, %v8043
        %v8286 = vsub.f32 %v7435, %v8039
        %v8287 = vsub.f32 %v7437, %v8043
        %v8288 = vsub.f32 %v7442, %v8039
        %v8289 = vsub.f32 %v7444, %v8043
        %v8290 = vsub.f32 %v7449, %v8039
        %v8291 = vsub.f32 %v7451, %v8043
        %v8292 = vsub.f32 %v7456, %v8039
        %v8293 = vsub.f32 %v7458, %v8043
        %v8294 = vsub.f32 %v7463, %v8039
        %v8295 = vsub.f32 %v7465, %v8043
        %v8296 = vsub.f32 %v7470, %v8039
        %v8297 = vsub.f32 %v7472, %v8043
        %v8298 = vsub.f32 %v7477, %v8039
        %v8299 = vsub.f32 %v7479, %v8043
        %v8300 = vsub.f32 %v7484, %v8039
        %v8301 = vsub.f32 %v7486, %v8043
        %v8302 = vmul.f32 %v8046, 1.442695
        %v8303 = vpow.pop %v8302
        %v8304 = vmul.f32 %v8047, 1.442695
        %v8305 = vpow.pop %v8304
        %v8306 = vmul.f32 %v8048, 1.442695
        %v8307 = vpow.pop %v8306
        %v8308 = vmul.f32 %v8049, 1.442695
        %v8309 = vpow.pop %v8308
        %v8310 = vmul.f32 %v8050, 1.442695
        %v8311 = vpow.pop %v8310
        %v8312 = vmul.f32 %v8051, 1.442695
        %v8313 = vpow.pop %v8312
        %v8314 = vmul.f32 %v8052, 1.442695
        %v8315 = vpow.pop %v8314
        %v8316 = vmul.f32 %v8053, 1.442695
        %v8317 = vpow.pop %v8316
        %v8318 = vmul.f32 %v8054, 1.442695
        %v8319 = vpow.pop %v8318
        %v8320 = vmul.f32 %v8055, 1.442695
        %v8321 = vpow.pop %v8320
        %v8322 = vmul.f32 %v8056, 1.442695
        %v8323 = vpow.pop %v8322
        %v8324 = vmul.f32 %v8057, 1.442695
        %v8325 = vpow.pop %v8324
        %v8326 = vmul.f32 %v8058, 1.442695
        %v8327 = vpow.pop %v8326
        %v8328 = vmul.f32 %v8059, 1.442695
        %v8329 = vpow.pop %v8328
        %v8330 = vmul.f32 %v8060, 1.442695
        %v8331 = vpow.pop %v8330
        %v8332 = vmul.f32 %v8061, 1.442695
        %v8333 = vpow.pop %v8332
        %v8334 = vmul.f32 %v8062, 1.442695
        %v8335 = vpow.pop %v8334
        %v8336 = vmul.f32 %v8063, 1.442695
        %v8337 = vpow.pop %v8336
        %v8338 = vmul.f32 %v8064, 1.442695
        %v8339 = vpow.pop %v8338
        %v8340 = vmul.f32 %v8065, 1.442695
        %v8341 = vpow.pop %v8340
        %v8342 = vmul.f32 %v8066, 1.442695
        %v8343 = vpow.pop %v8342
        %v8344 = vmul.f32 %v8067, 1.442695
        %v8345 = vpow.pop %v8344
        %v8346 = vmul.f32 %v8068, 1.442695
        %v8347 = vpow.pop %v8346
        %v8348 = vmul.f32 %v8069, 1.442695
        %v8349 = vpow.pop %v8348
        %v8350 = vmul.f32 %v8070, 1.442695
        %v8351 = vpow.pop %v8350
        %v8352 = vmul.f32 %v8071, 1.442695
        %v8353 = vpow.pop %v8352
        %v8354 = vmul.f32 %v8072, 1.442695
        %v8355 = vpow.pop %v8354
        %v8356 = vmul.f32 %v8073, 1.442695
        %v8357 = vpow.pop %v8356
        %v8358 = vmul.f32 %v8074, 1.442695
        %v8359 = vpow.pop %v8358
        %v8360 = vmul.f32 %v8075, 1.442695
        %v8361 = vpow.pop %v8360
        %v8362 = vmul.f32 %v8076, 1.442695
        %v8363 = vpow.pop %v8362
        %v8364 = vmul.f32 %v8077, 1.442695
        %v8365 = vpow.pop %v8364
        %v8366 = vmul.f32 %v8078, 1.442695
        %v8367 = vpow.pop %v8366
        %v8368 = vmul.f32 %v8079, 1.442695
        %v8369 = vpow.pop %v8368
        %v8370 = vmul.f32 %v8080, 1.442695
        %v8371 = vpow.pop %v8370
        %v8372 = vmul.f32 %v8081, 1.442695
        %v8373 = vpow.pop %v8372
        %v8374 = vmul.f32 %v8082, 1.442695
        %v8375 = vpow.pop %v8374
        %v8376 = vmul.f32 %v8083, 1.442695
        %v8377 = vpow.pop %v8376
        %v8378 = vmul.f32 %v8084, 1.442695
        %v8379 = vpow.pop %v8378
        %v8380 = vmul.f32 %v8085, 1.442695
        %v8381 = vpow.pop %v8380
        %v8382 = vmul.f32 %v8086, 1.442695
        %v8383 = vpow.pop %v8382
        %v8384 = vmul.f32 %v8087, 1.442695
        %v8385 = vpow.pop %v8384
        %v8386 = vmul.f32 %v8088, 1.442695
        %v8387 = vpow.pop %v8386
        %v8388 = vmul.f32 %v8089, 1.442695
        %v8389 = vpow.pop %v8388
        %v8390 = vmul.f32 %v8090, 1.442695
        %v8391 = vpow.pop %v8390
        %v8392 = vmul.f32 %v8091, 1.442695
        %v8393 = vpow.pop %v8392
        %v8394 = vmul.f32 %v8092, 1.442695
        %v8395 = vpow.pop %v8394
        %v8396 = vmul.f32 %v8093, 1.442695
        %v8397 = vpow.pop %v8396
        %v8398 = vmul.f32 %v8094, 1.442695
        %v8399 = vpow.pop %v8398
        %v8400 = vmul.f32 %v8095, 1.442695
        %v8401 = vpow.pop %v8400
        %v8402 = vmul.f32 %v8096, 1.442695
        %v8403 = vpow.pop %v8402
        %v8404 = vmul.f32 %v8097, 1.442695
        %v8405 = vpow.pop %v8404
        %v8406 = vmul.f32 %v8098, 1.442695
        %v8407 = vpow.pop %v8406
        %v8408 = vmul.f32 %v8099, 1.442695
        %v8409 = vpow.pop %v8408
        %v8410 = vmul.f32 %v8100, 1.442695
        %v8411 = vpow.pop %v8410
        %v8412 = vmul.f32 %v8101, 1.442695
        %v8413 = vpow.pop %v8412
        %v8414 = vmul.f32 %v8102, 1.442695
        %v8415 = vpow.pop %v8414
        %v8416 = vmul.f32 %v8103, 1.442695
        %v8417 = vpow.pop %v8416
        %v8418 = vmul.f32 %v8104, 1.442695
        %v8419 = vpow.pop %v8418
        %v8420 = vmul.f32 %v8105, 1.442695
        %v8421 = vpow.pop %v8420
        %v8422 = vmul.f32 %v8106, 1.442695
        %v8423 = vpow.pop %v8422
        %v8424 = vmul.f32 %v8107, 1.442695
        %v8425 = vpow.pop %v8424
        %v8426 = vmul.f32 %v8108, 1.442695
        %v8427 = vpow.pop %v8426
        %v8428 = vmul.f32 %v8109, 1.442695
        %v8429 = vpow.pop %v8428
        %v8430 = vmul.f32 %v8110, 1.442695
        %v8431 = vpow.pop %v8430
        %v8432 = vmul.f32 %v8111, 1.442695
        %v8433 = vpow.pop %v8432
        %v8434 = vmul.f32 %v8112, 1.442695
        %v8435 = vpow.pop %v8434
        %v8436 = vmul.f32 %v8113, 1.442695
        %v8437 = vpow.pop %v8436
        %v8438 = vmul.f32 %v8114, 1.442695
        %v8439 = vpow.pop %v8438
        %v8440 = vmul.f32 %v8115, 1.442695
        %v8441 = vpow.pop %v8440
        %v8442 = vmul.f32 %v8116, 1.442695
        %v8443 = vpow.pop %v8442
        %v8444 = vmul.f32 %v8117, 1.442695
        %v8445 = vpow.pop %v8444
        %v8446 = vmul.f32 %v8118, 1.442695
        %v8447 = vpow.pop %v8446
        %v8448 = vmul.f32 %v8119, 1.442695
        %v8449 = vpow.pop %v8448
        %v8450 = vmul.f32 %v8120, 1.442695
        %v8451 = vpow.pop %v8450
        %v8452 = vmul.f32 %v8121, 1.442695
        %v8453 = vpow.pop %v8452
        %v8454 = vmul.f32 %v8122, 1.442695
        %v8455 = vpow.pop %v8454
        %v8456 = vmul.f32 %v8123, 1.442695
        %v8457 = vpow.pop %v8456
        %v8458 = vmul.f32 %v8124, 1.442695
        %v8459 = vpow.pop %v8458
        %v8460 = vmul.f32 %v8125, 1.442695
        %v8461 = vpow.pop %v8460
        %v8462 = vmul.f32 %v8126, 1.442695
        %v8463 = vpow.pop %v8462
        %v8464 = vmul.f32 %v8127, 1.442695
        %v8465 = vpow.pop %v8464
        %v8466 = vmul.f32 %v8128, 1.442695
        %v8467 = vpow.pop %v8466
        %v8468 = vmul.f32 %v8129, 1.442695
        %v8469 = vpow.pop %v8468
        %v8470 = vmul.f32 %v8130, 1.442695
        %v8471 = vpow.pop %v8470
        %v8472 = vmul.f32 %v8131, 1.442695
        %v8473 = vpow.pop %v8472
        %v8474 = vmul.f32 %v8132, 1.442695
        %v8475 = vpow.pop %v8474
        %v8476 = vmul.f32 %v8133, 1.442695
        %v8477 = vpow.pop %v8476
        %v8478 = vmul.f32 %v8134, 1.442695
        %v8479 = vpow.pop %v8478
        %v8480 = vmul.f32 %v8135, 1.442695
        %v8481 = vpow.pop %v8480
        %v8482 = vmul.f32 %v8136, 1.442695
        %v8483 = vpow.pop %v8482
        %v8484 = vmul.f32 %v8137, 1.442695
        %v8485 = vpow.pop %v8484
        %v8486 = vmul.f32 %v8138, 1.442695
        %v8487 = vpow.pop %v8486
        %v8488 = vmul.f32 %v8139, 1.442695
        %v8489 = vpow.pop %v8488
        %v8490 = vmul.f32 %v8140, 1.442695
        %v8491 = vpow.pop %v8490
        %v8492 = vmul.f32 %v8141, 1.442695
        %v8493 = vpow.pop %v8492
        %v8494 = vmul.f32 %v8142, 1.442695
        %v8495 = vpow.pop %v8494
        %v8496 = vmul.f32 %v8143, 1.442695
        %v8497 = vpow.pop %v8496
        %v8498 = vmul.f32 %v8144, 1.442695
        %v8499 = vpow.pop %v8498
        %v8500 = vmul.f32 %v8145, 1.442695
        %v8501 = vpow.pop %v8500
        %v8502 = vmul.f32 %v8146, 1.442695
        %v8503 = vpow.pop %v8502
        %v8504 = vmul.f32 %v8147, 1.442695
        %v8505 = vpow.pop %v8504
        %v8506 = vmul.f32 %v8148, 1.442695
        %v8507 = vpow.pop %v8506
        %v8508 = vmul.f32 %v8149, 1.442695
        %v8509 = vpow.pop %v8508
        %v8510 = vmul.f32 %v8150, 1.442695
        %v8511 = vpow.pop %v8510
        %v8512 = vmul.f32 %v8151, 1.442695
        %v8513 = vpow.pop %v8512
        %v8514 = vmul.f32 %v8152, 1.442695
        %v8515 = vpow.pop %v8514
        %v8516 = vmul.f32 %v8153, 1.442695
        %v8517 = vpow.pop %v8516
        %v8518 = vmul.f32 %v8154, 1.442695
        %v8519 = vpow.pop %v8518
        %v8520 = vmul.f32 %v8155, 1.442695
        %v8521 = vpow.pop %v8520
        %v8522 = vmul.f32 %v8156, 1.442695
        %v8523 = vpow.pop %v8522
        %v8524 = vmul.f32 %v8157, 1.442695
        %v8525 = vpow.pop %v8524
        %v8526 = vmul.f32 %v8158, 1.442695
        %v8527 = vpow.pop %v8526
        %v8528 = vmul.f32 %v8159, 1.442695
        %v8529 = vpow.pop %v8528
        %v8530 = vmul.f32 %v8160, 1.442695
        %v8531 = vpow.pop %v8530
        %v8532 = vmul.f32 %v8161, 1.442695
        %v8533 = vpow.pop %v8532
        %v8534 = vmul.f32 %v8162, 1.442695
        %v8535 = vpow.pop %v8534
        %v8536 = vmul.f32 %v8163, 1.442695
        %v8537 = vpow.pop %v8536
        %v8538 = vmul.f32 %v8164, 1.442695
        %v8539 = vpow.pop %v8538
        %v8540 = vmul.f32 %v8165, 1.442695
        %v8541 = vpow.pop %v8540
        %v8542 = vmul.f32 %v8166, 1.442695
        %v8543 = vpow.pop %v8542
        %v8544 = vmul.f32 %v8167, 1.442695
        %v8545 = vpow.pop %v8544
        %v8546 = vmul.f32 %v8168, 1.442695
        %v8547 = vpow.pop %v8546
        %v8548 = vmul.f32 %v8169, 1.442695
        %v8549 = vpow.pop %v8548
        %v8550 = vmul.f32 %v8170, 1.442695
        %v8551 = vpow.pop %v8550
        %v8552 = vmul.f32 %v8171, 1.442695
        %v8553 = vpow.pop %v8552
        %v8554 = vmul.f32 %v8172, 1.442695
        %v8555 = vpow.pop %v8554
        %v8556 = vmul.f32 %v8173, 1.442695
        %v8557 = vpow.pop %v8556
        %v8558 = vmul.f32 %v8174, 1.442695
        %v8559 = vpow.pop %v8558
        %v8560 = vmul.f32 %v8175, 1.442695
        %v8561 = vpow.pop %v8560
        %v8562 = vmul.f32 %v8176, 1.442695
        %v8563 = vpow.pop %v8562
        %v8564 = vmul.f32 %v8177, 1.442695
        %v8565 = vpow.pop %v8564
        %v8566 = vmul.f32 %v8178, 1.442695
        %v8567 = vpow.pop %v8566
        %v8568 = vmul.f32 %v8179, 1.442695
        %v8569 = vpow.pop %v8568
        %v8570 = vmul.f32 %v8180, 1.442695
        %v8571 = vpow.pop %v8570
        %v8572 = vmul.f32 %v8181, 1.442695
        %v8573 = vpow.pop %v8572
        %v8574 = vmul.f32 %v8182, 1.442695
        %v8575 = vpow.pop %v8574
        %v8576 = vmul.f32 %v8183, 1.442695
        %v8577 = vpow.pop %v8576
        %v8578 = vmul.f32 %v8184, 1.442695
        %v8579 = vpow.pop %v8578
        %v8580 = vmul.f32 %v8185, 1.442695
        %v8581 = vpow.pop %v8580
        %v8582 = vmul.f32 %v8186, 1.442695
        %v8583 = vpow.pop %v8582
        %v8584 = vmul.f32 %v8187, 1.442695
        %v8585 = vpow.pop %v8584
        %v8586 = vmul.f32 %v8188, 1.442695
        %v8587 = vpow.pop %v8586
        %v8588 = vmul.f32 %v8189, 1.442695
        %v8589 = vpow.pop %v8588
        %v8590 = vmul.f32 %v8190, 1.442695
        %v8591 = vpow.pop %v8590
        %v8592 = vmul.f32 %v8191, 1.442695
        %v8593 = vpow.pop %v8592
        %v8594 = vmul.f32 %v8192, 1.442695
        %v8595 = vpow.pop %v8594
        %v8596 = vmul.f32 %v8193, 1.442695
        %v8597 = vpow.pop %v8596
        %v8598 = vmul.f32 %v8194, 1.442695
        %v8599 = vpow.pop %v8598
        %v8600 = vmul.f32 %v8195, 1.442695
        %v8601 = vpow.pop %v8600
        %v8602 = vmul.f32 %v8196, 1.442695
        %v8603 = vpow.pop %v8602
        %v8604 = vmul.f32 %v8197, 1.442695
        %v8605 = vpow.pop %v8604
        %v8606 = vmul.f32 %v8198, 1.442695
        %v8607 = vpow.pop %v8606
        %v8608 = vmul.f32 %v8199, 1.442695
        %v8609 = vpow.pop %v8608
        %v8610 = vmul.f32 %v8200, 1.442695
        %v8611 = vpow.pop %v8610
        %v8612 = vmul.f32 %v8201, 1.442695
        %v8613 = vpow.pop %v8612
        %v8614 = vmul.f32 %v8202, 1.442695
        %v8615 = vpow.pop %v8614
        %v8616 = vmul.f32 %v8203, 1.442695
        %v8617 = vpow.pop %v8616
        %v8618 = vmul.f32 %v8204, 1.442695
        %v8619 = vpow.pop %v8618
        %v8620 = vmul.f32 %v8205, 1.442695
        %v8621 = vpow.pop %v8620
        %v8622 = vmul.f32 %v8206, 1.442695
        %v8623 = vpow.pop %v8622
        %v8624 = vmul.f32 %v8207, 1.442695
        %v8625 = vpow.pop %v8624
        %v8626 = vmul.f32 %v8208, 1.442695
        %v8627 = vpow.pop %v8626
        %v8628 = vmul.f32 %v8209, 1.442695
        %v8629 = vpow.pop %v8628
        %v8630 = vmul.f32 %v8210, 1.442695
        %v8631 = vpow.pop %v8630
        %v8632 = vmul.f32 %v8211, 1.442695
        %v8633 = vpow.pop %v8632
        %v8634 = vmul.f32 %v8212, 1.442695
        %v8635 = vpow.pop %v8634
        %v8636 = vmul.f32 %v8213, 1.442695
        %v8637 = vpow.pop %v8636
        %v8638 = vmul.f32 %v8214, 1.442695
        %v8639 = vpow.pop %v8638
        %v8640 = vmul.f32 %v8215, 1.442695
        %v8641 = vpow.pop %v8640
        %v8642 = vmul.f32 %v8216, 1.442695
        %v8643 = vpow.pop %v8642
        %v8644 = vmul.f32 %v8217, 1.442695
        %v8645 = vpow.pop %v8644
        %v8646 = vmul.f32 %v8218, 1.442695
        %v8647 = vpow.pop %v8646
        %v8648 = vmul.f32 %v8219, 1.442695
        %v8649 = vpow.pop %v8648
        %v8650 = vmul.f32 %v8220, 1.442695
        %v8651 = vpow.pop %v8650
        %v8652 = vmul.f32 %v8221, 1.442695
        %v8653 = vpow.pop %v8652
        %v8654 = vmul.f32 %v8222, 1.442695
        %v8655 = vpow.pop %v8654
        %v8656 = vmul.f32 %v8223, 1.442695
        %v8657 = vpow.pop %v8656
        %v8658 = vmul.f32 %v8224, 1.442695
        %v8659 = vpow.pop %v8658
        %v8660 = vmul.f32 %v8225, 1.442695
        %v8661 = vpow.pop %v8660
        %v8662 = vmul.f32 %v8226, 1.442695
        %v8663 = vpow.pop %v8662
        %v8664 = vmul.f32 %v8227, 1.442695
        %v8665 = vpow.pop %v8664
        %v8666 = vmul.f32 %v8228, 1.442695
        %v8667 = vpow.pop %v8666
        %v8668 = vmul.f32 %v8229, 1.442695
        %v8669 = vpow.pop %v8668
        %v8670 = vmul.f32 %v8230, 1.442695
        %v8671 = vpow.pop %v8670
        %v8672 = vmul.f32 %v8231, 1.442695
        %v8673 = vpow.pop %v8672
        %v8674 = vmul.f32 %v8232, 1.442695
        %v8675 = vpow.pop %v8674
        %v8676 = vmul.f32 %v8233, 1.442695
        %v8677 = vpow.pop %v8676
        %v8678 = vmul.f32 %v8234, 1.442695
        %v8679 = vpow.pop %v8678
        %v8680 = vmul.f32 %v8235, 1.442695
        %v8681 = vpow.pop %v8680
        %v8682 = vmul.f32 %v8236, 1.442695
        %v8683 = vpow.pop %v8682
        %v8684 = vmul.f32 %v8237, 1.442695
        %v8685 = vpow.pop %v8684
        %v8686 = vmul.f32 %v8238, 1.442695
        %v8687 = vpow.pop %v8686
        %v8688 = vmul.f32 %v8239, 1.442695
        %v8689 = vpow.pop %v8688
        %v8690 = vmul.f32 %v8240, 1.442695
        %v8691 = vpow.pop %v8690
        %v8692 = vmul.f32 %v8241, 1.442695
        %v8693 = vpow.pop %v8692
        %v8694 = vmul.f32 %v8242, 1.442695
        %v8695 = vpow.pop %v8694
        %v8696 = vmul.f32 %v8243, 1.442695
        %v8697 = vpow.pop %v8696
        %v8698 = vmul.f32 %v8244, 1.442695
        %v8699 = vpow.pop %v8698
        %v8700 = vmul.f32 %v8245, 1.442695
        %v8701 = vpow.pop %v8700
        %v8702 = vmul.f32 %v8246, 1.442695
        %v8703 = vpow.pop %v8702
        %v8704 = vmul.f32 %v8247, 1.442695
        %v8705 = vpow.pop %v8704
        %v8706 = vmul.f32 %v8248, 1.442695
        %v8707 = vpow.pop %v8706
        %v8708 = vmul.f32 %v8249, 1.442695
        %v8709 = vpow.pop %v8708
        %v8710 = vmul.f32 %v8250, 1.442695
        %v8711 = vpow.pop %v8710
        %v8712 = vmul.f32 %v8251, 1.442695
        %v8713 = vpow.pop %v8712
        %v8714 = vmul.f32 %v8252, 1.442695
        %v8715 = vpow.pop %v8714
        %v8716 = vmul.f32 %v8253, 1.442695
        %v8717 = vpow.pop %v8716
        %v8718 = vmul.f32 %v8254, 1.442695
        %v8719 = vpow.pop %v8718
        %v8720 = vmul.f32 %v8255, 1.442695
        %v8721 = vpow.pop %v8720
        %v8722 = vmul.f32 %v8256, 1.442695
        %v8723 = vpow.pop %v8722
        %v8724 = vmul.f32 %v8257, 1.442695
        %v8725 = vpow.pop %v8724
        %v8726 = vmul.f32 %v8258, 1.442695
        %v8727 = vpow.pop %v8726
        %v8728 = vmul.f32 %v8259, 1.442695
        %v8729 = vpow.pop %v8728
        %v8730 = vmul.f32 %v8260, 1.442695
        %v8731 = vpow.pop %v8730
        %v8732 = vmul.f32 %v8261, 1.442695
        %v8733 = vpow.pop %v8732
        %v8734 = vmul.f32 %v8262, 1.442695
        %v8735 = vpow.pop %v8734
        %v8736 = vmul.f32 %v8263, 1.442695
        %v8737 = vpow.pop %v8736
        %v8738 = vmul.f32 %v8264, 1.442695
        %v8739 = vpow.pop %v8738
        %v8740 = vmul.f32 %v8265, 1.442695
        %v8741 = vpow.pop %v8740
        %v8742 = vmul.f32 %v8266, 1.442695
        %v8743 = vpow.pop %v8742
        %v8744 = vmul.f32 %v8267, 1.442695
        %v8745 = vpow.pop %v8744
        %v8746 = vmul.f32 %v8268, 1.442695
        %v8747 = vpow.pop %v8746
        %v8748 = vmul.f32 %v8269, 1.442695
        %v8749 = vpow.pop %v8748
        %v8750 = vmul.f32 %v8270, 1.442695
        %v8751 = vpow.pop %v8750
        %v8752 = vmul.f32 %v8271, 1.442695
        %v8753 = vpow.pop %v8752
        %v8754 = vmul.f32 %v8272, 1.442695
        %v8755 = vpow.pop %v8754
        %v8756 = vmul.f32 %v8273, 1.442695
        %v8757 = vpow.pop %v8756
        %v8758 = vmul.f32 %v8274, 1.442695
        %v8759 = vpow.pop %v8758
        %v8760 = vmul.f32 %v8275, 1.442695
        %v8761 = vpow.pop %v8760
        %v8762 = vmul.f32 %v8276, 1.442695
        %v8763 = vpow.pop %v8762
        %v8764 = vmul.f32 %v8277, 1.442695
        %v8765 = vpow.pop %v8764
        %v8766 = vmul.f32 %v8278, 1.442695
        %v8767 = vpow.pop %v8766
        %v8768 = vmul.f32 %v8279, 1.442695
        %v8769 = vpow.pop %v8768
        %v8770 = vmul.f32 %v8280, 1.442695
        %v8771 = vpow.pop %v8770
        %v8772 = vmul.f32 %v8281, 1.442695
        %v8773 = vpow.pop %v8772
        %v8774 = vmul.f32 %v8282, 1.442695
        %v8775 = vpow.pop %v8774
        %v8776 = vmul.f32 %v8283, 1.442695
        %v8777 = vpow.pop %v8776
        %v8778 = vmul.f32 %v8284, 1.442695
        %v8779 = vpow.pop %v8778
        %v8780 = vmul.f32 %v8285, 1.442695
        %v8781 = vpow.pop %v8780
        %v8782 = vmul.f32 %v8286, 1.442695
        %v8783 = vpow.pop %v8782
        %v8784 = vmul.f32 %v8287, 1.442695
        %v8785 = vpow.pop %v8784
        %v8786 = vmul.f32 %v8288, 1.442695
        %v8787 = vpow.pop %v8786
        %v8788 = vmul.f32 %v8289, 1.442695
        %v8789 = vpow.pop %v8788
        %v8790 = vmul.f32 %v8290, 1.442695
        %v8791 = vpow.pop %v8790
        %v8792 = vmul.f32 %v8291, 1.442695
        %v8793 = vpow.pop %v8792
        %v8794 = vmul.f32 %v8292, 1.442695
        %v8795 = vpow.pop %v8794
        %v8796 = vmul.f32 %v8293, 1.442695
        %v8797 = vpow.pop %v8796
        %v8798 = vmul.f32 %v8294, 1.442695
        %v8799 = vpow.pop %v8798
        %v8800 = vmul.f32 %v8295, 1.442695
        %v8801 = vpow.pop %v8800
        %v8802 = vmul.f32 %v8296, 1.442695
        %v8803 = vpow.pop %v8802
        %v8804 = vmul.f32 %v8297, 1.442695
        %v8805 = vpow.pop %v8804
        %v8806 = vmul.f32 %v8298, 1.442695
        %v8807 = vpow.pop %v8806
        %v8808 = vmul.f32 %v8299, 1.442695
        %v8809 = vpow.pop %v8808
        %v8810 = vmul.f32 %v8300, 1.442695
        %v8811 = vpow.pop %v8810
        %v8812 = vmul.f32 %v8301, 1.442695
        %v8813 = vpow.pop %v8812
        %v8814 = vadd.f32 %v8303, %v8307
        %v8815 = vadd.f32 %v8814, %v8311
        %v8816 = vadd.f32 %v8815, %v8315
        %v8817 = vadd.f32 %v8816, %v8319
        %v8818 = vadd.f32 %v8817, %v8323
        %v8819 = vadd.f32 %v8818, %v8327
        %v8820 = vadd.f32 %v8819, %v8331
        %v8821 = vadd.f32 %v8820, %v8335
        %v8822 = vadd.f32 %v8821, %v8339
        %v8823 = vadd.f32 %v8822, %v8343
        %v8824 = vadd.f32 %v8823, %v8347
        %v8825 = vadd.f32 %v8824, %v8351
        %v8826 = vadd.f32 %v8825, %v8355
        %v8827 = vadd.f32 %v8826, %v8359
        %v8828 = vadd.f32 %v8827, %v8363
        %v8829 = vadd.f32 %v8828, %v8367
        %v8830 = vadd.f32 %v8829, %v8371
        %v8831 = vadd.f32 %v8830, %v8375
        %v8832 = vadd.f32 %v8831, %v8379
        %v8833 = vadd.f32 %v8832, %v8383
        %v8834 = vadd.f32 %v8833, %v8387
        %v8835 = vadd.f32 %v8834, %v8391
        %v8836 = vadd.f32 %v8835, %v8395
        %v8837 = vadd.f32 %v8836, %v8399
        %v8838 = vadd.f32 %v8837, %v8403
        %v8839 = vadd.f32 %v8838, %v8407
        %v8840 = vadd.f32 %v8839, %v8411
        %v8841 = vadd.f32 %v8840, %v8415
        %v8842 = vadd.f32 %v8841, %v8419
        %v8843 = vadd.f32 %v8842, %v8423
        %v8844 = vadd.f32 %v8843, %v8427
        %v8845 = vadd.f32 %v8844, %v8431
        %v8846 = vadd.f32 %v8845, %v8435
        %v8847 = vadd.f32 %v8846, %v8439
        %v8848 = vadd.f32 %v8847, %v8443
        %v8849 = vadd.f32 %v8848, %v8447
        %v8850 = vadd.f32 %v8849, %v8451
        %v8851 = vadd.f32 %v8850, %v8455
        %v8852 = vadd.f32 %v8851, %v8459
        %v8853 = vadd.f32 %v8852, %v8463
        %v8854 = vadd.f32 %v8853, %v8467
        %v8855 = vadd.f32 %v8854, %v8471
        %v8856 = vadd.f32 %v8855, %v8475
        %v8857 = vadd.f32 %v8856, %v8479
        %v8858 = vadd.f32 %v8857, %v8483
        %v8859 = vadd.f32 %v8858, %v8487
        %v8860 = vadd.f32 %v8859, %v8491
        %v8861 = vadd.f32 %v8860, %v8495
        %v8862 = vadd.f32 %v8861, %v8499
        %v8863 = vadd.f32 %v8862, %v8503
        %v8864 = vadd.f32 %v8863, %v8507
        %v8865 = vadd.f32 %v8864, %v8511
        %v8866 = vadd.f32 %v8865, %v8515
        %v8867 = vadd.f32 %v8866, %v8519
        %v8868 = vadd.f32 %v8867, %v8523
        %v8869 = vadd.f32 %v8868, %v8527
        %v8870 = vadd.f32 %v8869, %v8531
        %v8871 = vadd.f32 %v8870, %v8535
        %v8872 = vadd.f32 %v8871, %v8539
        %v8873 = vadd.f32 %v8872, %v8543
        %v8874 = vadd.f32 %v8873, %v8547
        %v8875 = vadd.f32 %v8874, %v8551
        %v8876 = vadd.f32 %v8875, %v8555
        %v8877 = vadd.f32 %v8876, %v8559
        %v8878 = vadd.f32 %v8877, %v8563
        %v8879 = vadd.f32 %v8878, %v8567
        %v8880 = vadd.f32 %v8879, %v8571
        %v8881 = vadd.f32 %v8880, %v8575
        %v8882 = vadd.f32 %v8881, %v8579
        %v8883 = vadd.f32 %v8882, %v8583
        %v8884 = vadd.f32 %v8883, %v8587
        %v8885 = vadd.f32 %v8884, %v8591
        %v8886 = vadd.f32 %v8885, %v8595
        %v8887 = vadd.f32 %v8886, %v8599
        %v8888 = vadd.f32 %v8887, %v8603
        %v8889 = vadd.f32 %v8888, %v8607
        %v8890 = vadd.f32 %v8889, %v8611
        %v8891 = vadd.f32 %v8890, %v8615
        %v8892 = vadd.f32 %v8891, %v8619
        %v8893 = vadd.f32 %v8892, %v8623
        %v8894 = vadd.f32 %v8893, %v8627
        %v8895 = vadd.f32 %v8894, %v8631
        %v8896 = vadd.f32 %v8895, %v8635
        %v8897 = vadd.f32 %v8896, %v8639
        %v8898 = vadd.f32 %v8897, %v8643
        %v8899 = vadd.f32 %v8898, %v8647
        %v8900 = vadd.f32 %v8899, %v8651
        %v8901 = vadd.f32 %v8900, %v8655
        %v8902 = vadd.f32 %v8901, %v8659
        %v8903 = vadd.f32 %v8902, %v8663
        %v8904 = vadd.f32 %v8903, %v8667
        %v8905 = vadd.f32 %v8904, %v8671
        %v8906 = vadd.f32 %v8905, %v8675
        %v8907 = vadd.f32 %v8906, %v8679
        %v8908 = vadd.f32 %v8907, %v8683
        %v8909 = vadd.f32 %v8908, %v8687
        %v8910 = vadd.f32 %v8909, %v8691
        %v8911 = vadd.f32 %v8910, %v8695
        %v8912 = vadd.f32 %v8911, %v8699
        %v8913 = vadd.f32 %v8912, %v8703
        %v8914 = vadd.f32 %v8913, %v8707
        %v8915 = vadd.f32 %v8914, %v8711
        %v8916 = vadd.f32 %v8915, %v8715
        %v8917 = vadd.f32 %v8916, %v8719
        %v8918 = vadd.f32 %v8917, %v8723
        %v8919 = vadd.f32 %v8918, %v8727
        %v8920 = vadd.f32 %v8919, %v8731
        %v8921 = vadd.f32 %v8920, %v8735
        %v8922 = vadd.f32 %v8921, %v8739
        %v8923 = vadd.f32 %v8922, %v8743
        %v8924 = vadd.f32 %v8923, %v8747
        %v8925 = vadd.f32 %v8924, %v8751
        %v8926 = vadd.f32 %v8925, %v8755
        %v8927 = vadd.f32 %v8926, %v8759
        %v8928 = vadd.f32 %v8927, %v8763
        %v8929 = vadd.f32 %v8928, %v8767
        %v8930 = vadd.f32 %v8929, %v8771
        %v8931 = vadd.f32 %v8930, %v8775
        %v8932 = vadd.f32 %v8931, %v8779
        %v8933 = vadd.f32 %v8932, %v8783
        %v8934 = vadd.f32 %v8933, %v8787
        %v8935 = vadd.f32 %v8934, %v8791
        %v8936 = vadd.f32 %v8935, %v8795
        %v8937 = vadd.f32 %v8936, %v8799
        %v8938 = vadd.f32 %v8937, %v8803
        %v8939 = vadd.f32 %v8938, %v8807
        %v8940 = vadd.f32 %v8939, %v8811
        %v8941 = vrot.slane %v8940, 4
        %v8942 = vadd.f32 %v8940, %v8941
        %v8943 = vrot.slane %v8942, 2
        %v8944 = vadd.f32 %v8942, %v8943
        %v8945 = vrot.slane %v8944, 1
        %v8946 = vadd.f32 %v8944, %v8945
        %v8947 = vadd.f32 %v8305, %v8309
        %v8948 = vadd.f32 %v8947, %v8313
        %v8949 = vadd.f32 %v8948, %v8317
        %v8950 = vadd.f32 %v8949, %v8321
        %v8951 = vadd.f32 %v8950, %v8325
        %v8952 = vadd.f32 %v8951, %v8329
        %v8953 = vadd.f32 %v8952, %v8333
        %v8954 = vadd.f32 %v8953, %v8337
        %v8955 = vadd.f32 %v8954, %v8341
        %v8956 = vadd.f32 %v8955, %v8345
        %v8957 = vadd.f32 %v8956, %v8349
        %v8958 = vadd.f32 %v8957, %v8353
        %v8959 = vadd.f32 %v8958, %v8357
        %v8960 = vadd.f32 %v8959, %v8361
        %v8961 = vadd.f32 %v8960, %v8365
        %v8962 = vadd.f32 %v8961, %v8369
        %v8963 = vadd.f32 %v8962, %v8373
        %v8964 = vadd.f32 %v8963, %v8377
        %v8965 = vadd.f32 %v8964, %v8381
        %v8966 = vadd.f32 %v8965, %v8385
        %v8967 = vadd.f32 %v8966, %v8389
        %v8968 = vadd.f32 %v8967, %v8393
        %v8969 = vadd.f32 %v8968, %v8397
        %v8970 = vadd.f32 %v8969, %v8401
        %v8971 = vadd.f32 %v8970, %v8405
        %v8972 = vadd.f32 %v8971, %v8409
        %v8973 = vadd.f32 %v8972, %v8413
        %v8974 = vadd.f32 %v8973, %v8417
        %v8975 = vadd.f32 %v8974, %v8421
        %v8976 = vadd.f32 %v8975, %v8425
        %v8977 = vadd.f32 %v8976, %v8429
        %v8978 = vadd.f32 %v8977, %v8433
        %v8979 = vadd.f32 %v8978, %v8437
        %v8980 = vadd.f32 %v8979, %v8441
        %v8981 = vadd.f32 %v8980, %v8445
        %v8982 = vadd.f32 %v8981, %v8449
        %v8983 = vadd.f32 %v8982, %v8453
        %v8984 = vadd.f32 %v8983, %v8457
        %v8985 = vadd.f32 %v8984, %v8461
        %v8986 = vadd.f32 %v8985, %v8465
        %v8987 = vadd.f32 %v8986, %v8469
        %v8988 = vadd.f32 %v8987, %v8473
        %v8989 = vadd.f32 %v8988, %v8477
        %v8990 = vadd.f32 %v8989, %v8481
        %v8991 = vadd.f32 %v8990, %v8485
        %v8992 = vadd.f32 %v8991, %v8489
        %v8993 = vadd.f32 %v8992, %v8493
        %v8994 = vadd.f32 %v8993, %v8497
        %v8995 = vadd.f32 %v8994, %v8501
        %v8996 = vadd.f32 %v8995, %v8505
        %v8997 = vadd.f32 %v8996, %v8509
        %v8998 = vadd.f32 %v8997, %v8513
        %v8999 = vadd.f32 %v8998, %v8517
        %v9000 = vadd.f32 %v8999, %v8521
        %v9001 = vadd.f32 %v9000, %v8525
        %v9002 = vadd.f32 %v9001, %v8529
        %v9003 = vadd.f32 %v9002, %v8533
        %v9004 = vadd.f32 %v9003, %v8537
        %v9005 = vadd.f32 %v9004, %v8541
        %v9006 = vadd.f32 %v9005, %v8545
        %v9007 = vadd.f32 %v9006, %v8549
        %v9008 = vadd.f32 %v9007, %v8553
        %v9009 = vadd.f32 %v9008, %v8557
        %v9010 = vadd.f32 %v9009, %v8561
        %v9011 = vadd.f32 %v9010, %v8565
        %v9012 = vadd.f32 %v9011, %v8569
        %v9013 = vadd.f32 %v9012, %v8573
        %v9014 = vadd.f32 %v9013, %v8577
        %v9015 = vadd.f32 %v9014, %v8581
        %v9016 = vadd.f32 %v9015, %v8585
        %v9017 = vadd.f32 %v9016, %v8589
        %v9018 = vadd.f32 %v9017, %v8593
        %v9019 = vadd.f32 %v9018, %v8597
        %v9020 = vadd.f32 %v9019, %v8601
        %v9021 = vadd.f32 %v9020, %v8605
        %v9022 = vadd.f32 %v9021, %v8609
        %v9023 = vadd.f32 %v9022, %v8613
        %v9024 = vadd.f32 %v9023, %v8617
        %v9025 = vadd.f32 %v9024, %v8621
        %v9026 = vadd.f32 %v9025, %v8625
        %v9027 = vadd.f32 %v9026, %v8629
        %v9028 = vadd.f32 %v9027, %v8633
        %v9029 = vadd.f32 %v9028, %v8637
        %v9030 = vadd.f32 %v9029, %v8641
        %v9031 = vadd.f32 %v9030, %v8645
        %v9032 = vadd.f32 %v9031, %v8649
        %v9033 = vadd.f32 %v9032, %v8653
        %v9034 = vadd.f32 %v9033, %v8657
        %v9035 = vadd.f32 %v9034, %v8661
        %v9036 = vadd.f32 %v9035, %v8665
        %v9037 = vadd.f32 %v9036, %v8669
        %v9038 = vadd.f32 %v9037, %v8673
        %v9039 = vadd.f32 %v9038, %v8677
        %v9040 = vadd.f32 %v9039, %v8681
        %v9041 = vadd.f32 %v9040, %v8685
        %v9042 = vadd.f32 %v9041, %v8689
        %v9043 = vadd.f32 %v9042, %v8693
        %v9044 = vadd.f32 %v9043, %v8697
        %v9045 = vadd.f32 %v9044, %v8701
        %v9046 = vadd.f32 %v9045, %v8705
        %v9047 = vadd.f32 %v9046, %v8709
        %v9048 = vadd.f32 %v9047, %v8713
        %v9049 = vadd.f32 %v9048, %v8717
        %v9050 = vadd.f32 %v9049, %v8721
        %v9051 = vadd.f32 %v9050, %v8725
        %v9052 = vadd.f32 %v9051, %v8729
        %v9053 = vadd.f32 %v9052, %v8733
        %v9054 = vadd.f32 %v9053, %v8737
        %v9055 = vadd.f32 %v9054, %v8741
        %v9056 = vadd.f32 %v9055, %v8745
        %v9057 = vadd.f32 %v9056, %v8749
        %v9058 = vadd.f32 %v9057, %v8753
        %v9059 = vadd.f32 %v9058, %v8757
        %v9060 = vadd.f32 %v9059, %v8761
        %v9061 = vadd.f32 %v9060, %v8765
        %v9062 = vadd.f32 %v9061, %v8769
        %v9063 = vadd.f32 %v9062, %v8773
        %v9064 = vadd.f32 %v9063, %v8777
        %v9065 = vadd.f32 %v9064, %v8781
        %v9066 = vadd.f32 %v9065, %v8785
        %v9067 = vadd.f32 %v9066, %v8789
        %v9068 = vadd.f32 %v9067, %v8793
        %v9069 = vadd.f32 %v9068, %v8797
        %v9070 = vadd.f32 %v9069, %v8801
        %v9071 = vadd.f32 %v9070, %v8805
        %v9072 = vadd.f32 %v9071, %v8809
        %v9073 = vadd.f32 %v9072, %v8813
        %v9074 = vrot.slane %v9073, 4
        %v9075 = vadd.f32 %v9073, %v9074
        %v9076 = vrot.slane %v9075, 2
        %v9077 = vadd.f32 %v9075, %v9076
        %v9078 = vrot.slane %v9077, 1
        %v9079 = vadd.f32 %v9077, %v9078
        %v9082 = vcombine.low %v8946, %v9079
        %v9084 = vunpack.c.l.s4 1966171168
        %v9085 = vunpack.c.0.s8 %v9084
        %v9086 = vlaneseq
        %v9087 = vshrl.u32 %v9086, 7
        %v9088 = vsub.s32 %v9085, %v9087
        %v9089 = vrot.slane %v9082, %v9088
        %v9091 = vunpack.c.l.s4 1966171168
        %v9092 = vunpack.c.0.s8 %v9091
        %v9093 = vlaneseq
        %v9094 = vshrl.u32 %v9093, 7
        %v9095 = vsub.s32 %v9092, %v9094
        %v9096 = vrot.slane %v9089, %v9095
        %v9098 = vadd.f32 %v8034, %v9096
        %v9099 = vlaneseq
        %vm9100 = vcmp.ge.s32.totalorder %v9099, 0
        %vm9101 = vcmp.lt.s32.totalorder %v9099, 256
        %vm9102 = vmand %vm9100, %vm9101
        %9103 = vst.msk [vmem:[#allocation3] sm:$0x3] %vm9102, %v9098
        %9104 = vst.msk [vmem:[#allocation2] sm:$0x3] %vm9102, %v8029
        %p9105 = scmp.eq.s32.totalorder %s29, 1
        // Predicated region
        $region37: #{tpu_custom_call.1} parent=27 // pred_check
          %p9106 = pneg %p9105
        $region38: #{tpu_custom_call.1} parent=27 // pred_check_branch
          %9108 = sbr.rel (%p9106) target = $region40
        $region39: #{tpu_custom_call.1} parent=27 // pred_region
          %v9109 = vld [vmem:[#allocation2] sm:$0x3]
          %v9110 = vld [vmem:[#allocation3] sm:$0x3]
          %v9111 = vlog2.pop %v9110
          %v9112 = vmul.f32 %v9111, 0.6931472
          %v9113 = vadd.f32 %v9109, %v9112
          %9114 = vst.msk [vmem:[%s229] sm:$0x3] %vm9102, %v9113
        $region40: #{tpu_custom_call.1} parent=27 // pred_fallthru
          _
        %s9115 = sand.u32 %s98, 1
        %s9116 = scalar_lea.sflag [#allocation6], %s9115
        %s9117 = sand.u32 %s98, 1
        %s9118 = smul.addr %s9117, 2048
        %s9119 = scalar_lea.vmem [#allocation7], %s9118
        %s9120 = sand.u32 %s124, 1
        %s9121 = scalar_lea.sflag [#allocation9], %s9120
        %s9122 = sand.u32 %s124, 1
        %s9123 = smul.addr %s9122, 2
        %s9124 = scalar_lea.vmem [#allocation8], %s9123
        // Predicated region
        $region41: #{tpu_custom_call.1} parent=27 // pred_check
          %p9125 = pneg %p108
        $region42: #{tpu_custom_call.1} parent=27 // pred_check_branch
          %9127 = sbr.rel (%p9125) target = $region44
        $region43: #{tpu_custom_call.1} parent=27 // pred_region
          %s9128 = smul.u32 128, %s29
          %s9129 = smul.u32 2, %s28
          %s9131 = ssub.s32 32768, 32768
          %9132 = vsyncadd %s9116, %s9131
          %s9133 = smul.addr %s9128, 4
          %s9134 = sadd.s32 %s9129, %s9133
          %s9135 = smul.addr %s9134, 128
          %s9136 = scalar_lea.hbm %s2, %s9135
          %s9137 = sshll.u32 %s9119, 4
          %s9138 = int_to_ptr.vmem [resolvable:$true] %s9137
          %9143 = dma.vmem_to_hbm [thread:$0]  %s9138, 32768, %s9136, %s9116, 256, 512, 16
        $region44: #{tpu_custom_call.1} parent=27 // pred_fallthru
          _
        // Predicated region
        $region45: #{tpu_custom_call.1} parent=27 // pred_check
          %p9144 = pneg %p134
        $region46: #{tpu_custom_call.1} parent=27 // pred_check_branch
          %9146 = sbr.rel (%p9144) target = $region48
        $region47: #{tpu_custom_call.1} parent=27 // pred_region
          %s9147 = smul.u32 2, %s28
          %s9149 = ssub.s32 32, 32
          %9150 = vsyncadd %s9121, %s9149
          %s9151 = smul.addr %s9147, 16
          %s9152 = scalar_lea.hbm %s3, %s9151
          %s9154 = sshll.u32 %s9124, 4
          %s9155 = int_to_ptr.vmem [resolvable:$true] %s9154
          %9157 = dma.vmem_to_hbm [thread:$0]  %s9155, 32, %s9152, %s9121
        $region48: #{tpu_custom_call.1} parent=27 // pred_fallthru
          _
      $region28: #{tpu_custom_call.1} parent=5 // pred_fallthru
        _
      %p9158 = scmp.le.s32.totalorder 2, %s19
      // Predicated region
      $region49: #{tpu_custom_call.1} parent=5 // pred_check
        %p9159 = pneg %p9158
      $region50: #{tpu_custom_call.1} parent=5 // pred_check_branch
        %9161 = sbr.rel (%p9159) target = $region52
      $region51: #{tpu_custom_call.1} parent=5 // pred_region
        %s9162 = ssub.s32 %s19, 2
        // Predicated region
        $region53: #{tpu_custom_call.1} parent=51 // pred_check
          %p9163 = pneg %p114
        $region54: #{tpu_custom_call.1} parent=51 // pred_check_branch
          %9165 = sbr.rel (%p9163) target = $region56
        $region55: #{tpu_custom_call.1} parent=51 // pred_region
          %s9166 = sand.u32 %s99, 1
          %s9167 = scalar_lea.sflag [#allocation6], %s9166
          %s9168 = sand.u32 %s99, 1
          %s9169 = smul.addr %s9168, 2048
          %s9170 = scalar_lea.vmem [#allocation7], %s9169
          %9171 = dma.done %s9167, 32768
        $region56: #{tpu_custom_call.1} parent=51 // pred_fallthru
          _
        // Predicated region
        $region57: #{tpu_custom_call.1} parent=51 // pred_check
          %p9172 = pneg %p140
        $region58: #{tpu_custom_call.1} parent=51 // pred_check_branch
          %9174 = sbr.rel (%p9172) target = $region60
        $region59: #{tpu_custom_call.1} parent=51 // pred_region
          %s9175 = sand.u32 %s125, 1
          %s9176 = scalar_lea.sflag [#allocation9], %s9175
          %s9177 = sand.u32 %s125, 1
          %s9178 = smul.addr %s9177, 2
          %s9179 = scalar_lea.vmem [#allocation8], %s9178
          %9180 = dma.done %s9176, 32
        $region60: #{tpu_custom_call.1} parent=51 // pred_fallthru
          _
      $region52: #{tpu_custom_call.1} parent=5 // pred_fallthru
        _
    $region6: #{tpu_custom_call.1} parent=1 // loop_footer
      %s23 = sadd.s32 1, %s19
    $region7: #{tpu_custom_call.1} parent=1 // loop_footer_branch
      %18 = sbr.rel target = $region3
    $region8: #{tpu_custom_call.1} parent=1 // loop_exit
      _
    %9181 = vsyncpa [#allocation5], 1
    %s9182 = scalar_lea.sflag [#allocation5], 1
    %9183 = vsyncpa %s9182, 1
    %9184 = vsyncpa [#allocation6], 1
    %s9185 = scalar_lea.sflag [#allocation6], 1
    %9186 = vsyncpa %s9185, 1
    %9187 = vsyncpa [#allocation9], 1
    %s9188 = scalar_lea.sflag [#allocation9], 1
    %9189 = vsyncpa %s9188, 1

</llo_original>
